<compile_context>
chip_gen: v6e
topology: v6e:2x2x1
jax: 0.10.0
libtpu: 0.0.40
codegen_flags: <defaults>
</compile_context>

<pallas_src>
import jax
import jax.numpy as jnp
import numpy as np
from jax.experimental import pallas as pl
from jax.experimental.pallas import tpu as pltpu

# ----------------------------- config ---------------------------------------
MODEL_PARAMETERS = {
    "msi_dim": 16,
    "msi_channels": 4,
    "encoder_filters": [8, 16, 32],
    "encoder_kernel_size": 3,
    "num_conv": 1,
    "encoder_normalization": "instance",
    "encoder_dropout_prob": 0.1,
    "ds_stride": 2,
    "attention_type": 0,          # mask/attention branch disabled (module skips it)
    "imag_fcn": [16, 8],
    "imag_dropout_prob": 0.1,
    "mixed_fcn": [8],
    "mixed_dropout_prob": 0.1,
    "dfu_classes": 2,
}
NUM_CLINICAL_FEATURES = 6

LEAKY_SLOPE = 0.01
NORM_EPS = 1e-5
BN1D_EVAL_SCALE = float(1.0 / np.sqrt(1.0 + 1e-5))   # BatchNorm1d eval, default running stats

assert MODEL_PARAMETERS["encoder_kernel_size"] == 3
assert MODEL_PARAMETERS["num_conv"] == 1
assert MODEL_PARAMETERS["ds_stride"] == 2
assert MODEL_PARAMETERS["encoder_normalization"] == "instance"
assert MODEL_PARAMETERS["attention_type"] == 0
assert len(MODEL_PARAMETERS["encoder_filters"]) == 3
assert len(MODEL_PARAMETERS["imag_fcn"]) == 2
assert len(MODEL_PARAMETERS["mixed_fcn"]) == 1


# ----------------------------- static shape derivation -----------------------
def _encoder_level_dims():
    mp = MODEL_PARAMETERS
    h = w = mp["msi_dim"]
    cin = mp["msi_channels"]
    dims = []
    for cout in mp["encoder_filters"]:
        dims.append((h, w, cin, cout))
        # conv k=3, s=1, p=1 keeps spatial; maxpool k=3, s=2, p=0 downsamples
        h = (h - 3) // 2 + 1
        w = (w - 3) // 2 + 1
        cin = cout
    return dims, (h, w, cin)


LEVEL_DIMS, FINAL_DIMS = _encoder_level_dims()          # [(16,16,4,8),(7,7,8,16),(3,3,16,32)]
OUT_ENCODER_FEATS = FINAL_DIMS[0] * FINAL_DIMS[1] * FINAL_DIMS[2]
# TODO(synk): if the final spatial size were > 1x1, matching torch's NCHW flatten order would
# need a channel-major transpose of the last pooled activation; with this config it is 1x1.
assert FINAL_DIMS[0] == 1 and FINAL_DIMS[1] == 1


def _pool_select_matrix(h, w):
    """0/1 matrix that picks the stride-2 rows of the sliding-max buffer (MaxPool k=3,s=2,p=0)."""
    ho = (h - 3) // 2 + 1
    wo = (w - 3) // 2 + 1
    length = (h - 2) * w - 2
    s = np.zeros((ho * wo, length), np.float32)
    for i in range(ho):
        for j in range(wo):
            s[i * wo + j, 2 * i * w + 2 * j] = 1.0
    return s


_POOL_SELECT = [_pool_select_matrix(h, w) for (h, w, _, _) in LEVEL_DIMS]


# ----------------------------- fused Pallas kernel ---------------------------
def _leaky(z):
    return jnp.where(z > 0, z, LEAKY_SLOPE * z)


def _conv_in_pool(x, w_ref, b_ref, s_ref, ext, an, vv, h, w, cin, cout):
    """One encoder level (Conv3x3 + bias + LeakyReLU + InstanceNorm + MaxPool3x3/2) per sample.

    x: (h*w, cin) activation, spatial-major rows, channels in lanes.  Returns (ho*wo, cout).
    """
    hw = h * w
    pad = w + 1                                       # zero halo rows handle dy = +/-1

    # Only the halo rows need zeroing; the data rows are fully overwritten right below.
    zero_halo = jnp.zeros((pad, cin), jnp.float32)
    ext[pl.ds(0, pad), :] = zero_halo
    ext[pl.ds(pad + hw, pad), :] = zero_halo
    ext[pl.ds(pad, hw), :] = x

    # horizontal-wrap masks (only needed for dx != 0 taps)
    col = jax.lax.broadcasted_iota(jnp.int32, (hw, cin), 0) % w
    mask_l = col >= 1                                 # dx = -1 stays inside the image row
    mask_r = col <= w - 2                             # dx = +1 stays inside the image row

    # Conv2d as 9 shifted-slab MXU matmuls, accumulated in f32
    z = None
    for t in range(9):
        dy, dx = t // 3 - 1, t % 3 - 1
        slab = ext[pl.ds(pad + dy * w + dx, hw), :]
        if dx == -1:
            slab = jnp.where(mask_l, slab, 0.0)
        elif dx == 1:
            slab = jnp.where(mask_r, slab, 0.0)
        p = jnp.dot(slab, w_ref[t], preferred_element_type=jnp.float32)
        z = p if z is None else z + p
    z = z + b_ref[...]

    # LeakyReLU(0.01) + InstanceNorm2d (no affine), one-pass statistics over spatial axis
    a = _leaky(z)
    s1 = jnp.sum(a, axis=0, keepdims=True)
    s2 = jnp.sum(a * a, axis=0, keepdims=True)
    mean = s1 * (1.0 / hw)
    var = s2 * (1.0 / hw) - mean * mean
    an[...] = (a - mean) * jax.lax.rsqrt(var + NORM_EPS)
    # Dropout(encoder_dropout_prob) is identity in eval mode.

    # MaxPool2d k=3, s=2, p=0: 3-row max + 3-col sliding max (VPU), then a stride-2
    # row subsample via one constant 0/1 selection matmul (MXU) -> no gathers.
    length = (h - 2) * w
    vv[...] = jnp.maximum(
        jnp.maximum(an[pl.ds(0, length), :], an[pl.ds(w, length), :]),
        an[pl.ds(2 * w, length), :])
    hm = jnp.maximum(
        jnp.maximum(vv[pl.ds(0, length - 2), :], vv[pl.ds(1, length - 2), :]),
        vv[pl.ds(2, length - 2), :])
    return jnp.dot(s_ref[...], hm, preferred_element_type=jnp.float32)


def fused_forward_kernel(
        ximg_ref, xclin_ref,
        w1_ref, b1_ref, s1_ref, w2_ref, b2_ref, s2_ref, w3_ref, b3_ref, s3_ref,
        iw1_ref, ib1_ref, iw2_ref, ib2_ref,
        mwi_ref, mwc_ref, mb_ref, hw_ref, hb_ref,
        out_ref,
        ext1, an1, v1, ext2, an2, v2, ext3, an3, v3):
    (h1, w1, c1, f1), (h2, w2, c2, f2), (h3, w3, c3, f3) = LEVEL_DIMS

    # ---------------- encoder (all VMEM resident) ----------------
    x = ximg_ref[0]                                                  # (h1*w1, c1)
    x = _conv_in_pool(x, w1_ref, b1_ref, s1_ref, ext1, an1, v1, h1, w1, c1, f1)
    x = _conv_in_pool(x, w2_ref, b2_ref, s2_ref, ext2, an2, v2, h2, w2, c2, f2)
    x = _conv_in_pool(x, w3_ref, b3_ref, s3_ref, ext3, an3, v3, h3, w3, c3, f3)
    # final spatial is 1x1 -> x is (1, 32) = flattened encoder features (channel order)

    # ---------------- image branch FCN ----------------
    # eval BatchNorm1d scale is pre-folded into the weights/biases; Dropout is identity.
    h = _leaky(jnp.dot(x, iw1_ref[...], preferred_element_type=jnp.float32) + ib1_ref[...])
    h = _leaky(jnp.dot(h, iw2_ref[...], preferred_element_type=jnp.float32) + ib2_ref[...])

    # ---------------- mixed branch: concat(img, clin) folded into a split-weight matmul ------
    clin = xclin_ref[0]                                              # (1, NUM_CLINICAL_FEATURES)
    m = (jnp.dot(h, mwi_ref[...], preferred_element_type=jnp.float32)
         + jnp.dot(clin, mwc_ref[...], preferred_element_type=jnp.float32)
         + mb_ref[...])
    m = _leaky(m)

    # ---------------- classification head ----------------
    out_ref[0] = jnp.dot(m, hw_ref[...], preferred_element_type=jnp.float32) + hb_ref[...]


# ----------------------------- wrapper ---------------------------------------
def _const_spec(shape):
    zeros = (0,) * len(shape)
    return pl.BlockSpec(shape, lambda i, _z=zeros: _z)


@jax.jit
def baseline_forward(params, x_clin, x_img_nchw, x_msk_nchw):
    mp = MODEL_PARAMETERS
    del x_msk_nchw                     # attention_type == 0: the module never uses the mask
    n = x_img_nchw.shape[0]
    (h1, w1, c1, f1), (h2, w2, c2, f2), (h3, w3, c3, f3) = LEVEL_DIMS
    n_clin = NUM_CLINICAL_FEATURES
    n_cls = mp["dfu_classes"]

    # layout glue (inside the same jit program; negligible)
    ximg = jnp.transpose(x_img_nchw, (0, 2, 3, 1)).reshape(n, h1 * w1, c1)
    xclin = x_clin.reshape(n, 1, n_clin)

    # conv weights HWIO -> per-tap (9, Cin, Cout); biases -> (1, Cout)
    cw1 = params["conv1_w"].reshape(9, c1, f1); cb1 = params["conv1_b"].reshape(1, f1)
    cw2 = params["conv2_w"].reshape(9, c2, f2); cb2 = params["conv2_b"].reshape(1, f2)
    cw3 = params["conv3_w"].reshape(9, c3, f3); cb3 = params["conv3_b"].reshape(1, f3)
    s1, s2, s3 = (jnp.asarray(s) for s in _POOL_SELECT)

    # FC weights: fold the eval BatchNorm1d scale (LeakyReLU is positively homogeneous, so
    # s * leaky(Wx + b) == leaky((sW)x + sb)) -> one fewer vector multiply per FC layer.
    sbn = BN1D_EVAL_SCALE
    iw1 = params["img_w1"] * sbn; ib1 = (params["img_b1"] * sbn).reshape(1, -1)
    iw2 = params["img_w2"] * sbn; ib2 = (params["img_b2"] * sbn).reshape(1, -1)
    mw = params["mix_w1"] * sbn                        # (imag_fcn[-1] + n_clin, mixed_fcn[0])
    n_img_feat = params["img_w2"].shape[1]
    mwi, mwc = mw[:n_img_feat], mw[n_img_feat:]        # split concat -> two matmuls
    mb = (params["mix_b1"] * sbn).reshape(1, -1)
    hdw = params["head_w"]; hdb = params["head_b"].reshape(1, -1)

    # VMEM scratch: per level [halo-padded input rows, normalized activation, 3-row-max buffer]
    scratch = []
    for (h, w, cin, cout) in LEVEL_DIMS:
        scratch += [
            pltpu.VMEM((h * w + 2 * w + 2, cin), jnp.float32),
            pltpu.VMEM((h * w, cout), jnp.float32),
            pltpu.VMEM(((h - 2) * w, cout), jnp.float32),
        ]

    out = pl.pallas_call(
        fused_forward_kernel,
        out_shape=jax.ShapeDtypeStruct((n, 1, n_cls), jnp.float32),
        grid=(n,),
        in_specs=[
            pl.BlockSpec((1, h1 * w1, c1), lambda i: (i, 0, 0)),
            pl.BlockSpec((1, 1, n_clin), lambda i: (i, 0, 0)),
            _const_spec(cw1.shape), _const_spec(cb1.shape), _const_spec(s1.shape),
            _const_spec(cw2.shape), _const_spec(cb2.shape), _const_spec(s2.shape),
            _const_spec(cw3.shape), _const_spec(cb3.shape), _const_spec(s3.shape),
            _const_spec(iw1.shape), _const_spec(ib1.shape),
            _const_spec(iw2.shape), _const_spec(ib2.shape),
            _const_spec(mwi.shape), _const_spec(mwc.shape), _const_spec(mb.shape),
            _const_spec(hdw.shape), _const_spec(hdb.shape),
        ],
        out_specs=pl.BlockSpec((1, 1, n_cls), lambda i: (i, 0, 0)),
        scratch_shapes=scratch,
        compiler_params=pltpu.CompilerParams(dimension_semantics=("parallel",)),
    )(ximg, xclin,
      cw1, cb1, s1, cw2, cb2, s2, cw3, cb3, s3,
      iw1, ib1, iw2, ib2, mwi, mwc, mb, hdw, hdb)
    return out.reshape(n, n_cls)


# ----------------------------- parameters ------------------------------------
def init_params(key):
    mp = MODEL_PARAMETERS
    keys = iter(jax.random.split(key, 32))
    params = {}

    def dense(kk, shape, scale=0.1):
        return scale * jax.random.normal(kk, shape, jnp.float32)

    prev = mp["msi_channels"]
    for i, cout in enumerate(mp["encoder_filters"]):
        params[f"conv{i+1}_w"] = dense(next(keys), (3, 3, prev, cout))     # HWIO
        params[f"conv{i+1}_b"] = dense(next(keys), (cout,), 0.05)
        prev = cout

    din = OUT_ENCODER_FEATS
    for j, dout in enumerate(mp["imag_fcn"]):
        params[f"img_w{j+1}"] = dense(next(keys), (din, dout))
        params[f"img_b{j+1}"] = dense(next(keys), (dout,), 0.05)
        din = dout

    din = mp["imag_fcn"][-1] + NUM_CLINICAL_FEATURES
    for j, dout in enumerate(mp["mixed_fcn"]):
        params[f"mix_w{j+1}"] = dense(next(keys), (din, dout))
        params[f"mix_b{j+1}"] = dense(next(keys), (dout,), 0.05)
        din = dout
    params["head_w"] = dense(next(keys), (din, mp["dfu_classes"]))
    params["head_b"] = dense(next(keys), (mp["dfu_classes"],), 0.05)
    return params


# ----------------------------- main -------------------------------------------
if __name__ == "__main__":
    key = jax.random.PRNGKey(0)
    k_clin, k_img, k_msk, k_param = jax.random.split(key, 4)

    batch = 2
    mp = MODEL_PARAMETERS
    x_clin = jax.random.normal(k_clin, (batch, NUM_CLINICAL_FEATURES), jnp.float32)
    x_img = jax.random.normal(
        k_img, (batch, mp["msi_channels"], mp["msi_dim"], mp["msi_dim"]), jnp.float32)
    x_msk = (jax.random.uniform(k_msk, (batch, 1, mp["msi_dim"], mp["msi_dim"])) > 0.5
             ).astype(jnp.float32)

    params = init_params(k_param)

    out = baseline_forward(params, x_clin, x_img, x_msk)
    out = jax.block_until_ready(out)
    assert out.shape == (batch, mp["dfu_classes"]), out.shape
    print("KERNEL_OK")
</pallas_src>

<mosaic_0001>
module attributes {stable_mosaic.version = 11 : i64} {
  func.func @fused_forward_kernel(%arg0: i32, %arg1: memref<1x256x4xf32, #tpu.memory_space<vmem>>, %arg2: memref<1x1x6xf32, #tpu.memory_space<vmem>>, %arg3: memref<9x4x8xf32, #tpu.memory_space<vmem>>, %arg4: memref<1x8xf32, #tpu.memory_space<vmem>>, %arg5: memref<49x222xf32, #tpu.memory_space<vmem>>, %arg6: memref<9x8x16xf32, #tpu.memory_space<vmem>>, %arg7: memref<1x16xf32, #tpu.memory_space<vmem>>, %arg8: memref<9x33xf32, #tpu.memory_space<vmem>>, %arg9: memref<9x16x32xf32, #tpu.memory_space<vmem>>, %arg10: memref<1x32xf32, #tpu.memory_space<vmem>>, %arg11: memref<1x1xf32, #tpu.memory_space<vmem>>, %arg12: memref<32x16xf32, #tpu.memory_space<vmem>>, %arg13: memref<1x16xf32, #tpu.memory_space<vmem>>, %arg14: memref<16x8xf32, #tpu.memory_space<vmem>>, %arg15: memref<1x8xf32, #tpu.memory_space<vmem>>, %arg16: memref<8x8xf32, #tpu.memory_space<vmem>>, %arg17: memref<6x8xf32, #tpu.memory_space<vmem>>, %arg18: memref<1x8xf32, #tpu.memory_space<vmem>>, %arg19: memref<8x2xf32, #tpu.memory_space<vmem>>, %arg20: memref<1x2xf32, #tpu.memory_space<vmem>>, %arg21: memref<1x1x2xf32, #tpu.memory_space<vmem>>, %arg22: memref<290x4xf32, #tpu.memory_space<vmem>>, %arg23: memref<256x8xf32, #tpu.memory_space<vmem>>, %arg24: memref<224x8xf32, #tpu.memory_space<vmem>>, %arg25: memref<65x8xf32, #tpu.memory_space<vmem>>, %arg26: memref<49x16xf32, #tpu.memory_space<vmem>>, %arg27: memref<35x16xf32, #tpu.memory_space<vmem>>, %arg28: memref<17x16xf32, #tpu.memory_space<vmem>>, %arg29: memref<9x32xf32, #tpu.memory_space<vmem>>, %arg30: memref<3x32xf32, #tpu.memory_space<vmem>>) attributes {dimension_semantics = [#tpu.dimension_semantics<parallel>], iteration_bounds = array<i64: 2>, scalar_prefetch = 0 : i64, scratch_operands = 9 : i64, tpu.core_type = #tpu.core_type<tc>, window_params = [{transform_indices = @transform_0, window_bounds = array<i64: 1, 256, 4>}, {transform_indices = @transform_1, window_bounds = array<i64: 1, 1, 6>}, {pipeline_mode = #tpu.pipeline_mode<synchronous>, transform_indices = @transform_2, window_bounds = array<i64: 9, 4, 8>}, {pipeline_mode = #tpu.pipeline_mode<synchronous>, transform_indices = @transform_3, window_bounds = array<i64: 1, 8>}, {pipeline_mode = #tpu.pipeline_mode<synchronous>, transform_indices = @transform_4, window_bounds = array<i64: 49, 222>}, {pipeline_mode = #tpu.pipeline_mode<synchronous>, transform_indices = @transform_5, window_bounds = array<i64: 9, 8, 16>}, {pipeline_mode = #tpu.pipeline_mode<synchronous>, transform_indices = @transform_6, window_bounds = array<i64: 1, 16>}, {pipeline_mode = #tpu.pipeline_mode<synchronous>, transform_indices = @transform_7, window_bounds = array<i64: 9, 33>}, {pipeline_mode = #tpu.pipeline_mode<synchronous>, transform_indices = @transform_8, window_bounds = array<i64: 9, 16, 32>}, {pipeline_mode = #tpu.pipeline_mode<synchronous>, transform_indices = @transform_9, window_bounds = array<i64: 1, 32>}, {pipeline_mode = #tpu.pipeline_mode<synchronous>, transform_indices = @transform_10, window_bounds = array<i64: 1, 1>}, {pipeline_mode = #tpu.pipeline_mode<synchronous>, transform_indices = @transform_11, window_bounds = array<i64: 32, 16>}, {pipeline_mode = #tpu.pipeline_mode<synchronous>, transform_indices = @transform_12, window_bounds = array<i64: 1, 16>}, {pipeline_mode = #tpu.pipeline_mode<synchronous>, transform_indices = @transform_13, window_bounds = array<i64: 16, 8>}, {pipeline_mode = #tpu.pipeline_mode<synchronous>, transform_indices = @transform_14, window_bounds = array<i64: 1, 8>}, {pipeline_mode = #tpu.pipeline_mode<synchronous>, transform_indices = @transform_15, window_bounds = array<i64: 8, 8>}, {pipeline_mode = #tpu.pipeline_mode<synchronous>, transform_indices = @transform_16, window_bounds = array<i64: 6, 8>}, {pipeline_mode = #tpu.pipeline_mode<synchronous>, transform_indices = @transform_17, window_bounds = array<i64: 1, 8>}, {pipeline_mode = #tpu.pipeline_mode<synchronous>, transform_indices = @transform_18, window_bounds = array<i64: 8, 2>}, {pipeline_mode = #tpu.pipeline_mode<synchronous>, transform_indices = @transform_19, window_bounds = array<i64: 1, 2>}, {transform_indices = @transform_20, window_bounds = array<i64: 1, 1, 2>}]} {
    %c0 = arith.constant 0 : index
    %c0_0 = arith.constant 0 : index
    %c0_1 = arith.constant 0 : index
    %0 = vector.load %arg1[%c0, %c0_0, %c0_1] : memref<1x256x4xf32, #tpu.memory_space<vmem>>, vector<1x256x4xf32>
    %1 = vector.shape_cast %0 : vector<1x256x4xf32> to vector<256x4xf32>
    %cst = arith.constant 0.000000e+00 : f32
    %2 = vector.broadcast %cst : f32 to vector<17x4xf32>
    %c0_2 = arith.constant 0 : index
    %c0_3 = arith.constant 0 : index
    %3 = vector.load %arg22[%c0_2, %c0_3] : memref<290x4xf32, #tpu.memory_space<vmem>>, vector<17x4xf32>
    tpu.vector_store %arg22[%c0_2, %c0_3], %2 {strides = array<i32>} : memref<290x4xf32, #tpu.memory_space<vmem>>, vector<17x4xf32>,
    %c273 = arith.constant 273 : index
    %c0_4 = arith.constant 0 : index
    %4 = vector.load %arg22[%c273, %c0_4] : memref<290x4xf32, #tpu.memory_space<vmem>>, vector<17x4xf32>
    tpu.vector_store %arg22[%c273, %c0_4], %2 {strides = array<i32>} : memref<290x4xf32, #tpu.memory_space<vmem>>, vector<17x4xf32>,
    %c17 = arith.constant 17 : index
    %c0_5 = arith.constant 0 : index
    %5 = vector.load %arg22[%c17, %c0_5] : memref<290x4xf32, #tpu.memory_space<vmem>>, vector<256x4xf32>
    tpu.vector_store %arg22[%c17, %c0_5], %1 {strides = array<i32>} : memref<290x4xf32, #tpu.memory_space<vmem>>, vector<256x4xf32>,
    %6 = tpu.iota {dimensions = array<i32: 0>} : vector<256x4xi32>
    %c16_i32 = arith.constant 16 : i32
    %c0_i32 = arith.constant 0 : i32
    %7 = arith.cmpi eq, %c16_i32, %c0_i32 : i32
    %c1_i32 = arith.constant 1 : i32
    %8 = arith.select %7, %c1_i32, %c16_i32 : i32
    %9 = vector.broadcast %8 : i32 to vector<256x4xi32>
    %10 = arith.remsi %6, %9 : vector<256x4xi32>
    %c0_i32_6 = arith.constant 0 : i32
    %11 = vector.broadcast %c0_i32_6 : i32 to vector<256x4xi32>
    %12 = arith.cmpi ne, %10, %11 : vector<256x4xi32>
    %c0_i32_7 = arith.constant 0 : i32
    %13 = vector.broadcast %c0_i32_7 : i32 to vector<256x4xi32>
    %14 = arith.cmpi slt, %10, %13 : vector<256x4xi32>
    %c0_i32_8 = arith.constant 0 : i32
    %15 = arith.cmpi slt, %8, %c0_i32_8 : i32
    %16 = vector.broadcast %15 : i1 to vector<256x4xi1>
    %17 = vector.broadcast %16 : vector<256x4xi1> to vector<256x4xi1>
    %18 = arith.xori %14, %17 : vector<256x4xi1>
    %19 = arith.andi %18, %12 : vector<256x4xi1>
    %20 = vector.broadcast %8 : i32 to vector<256x4xi32>
    %21 = arith.addi %10, %20 : vector<256x4xi32>
    %22 = arith.select %19, %21, %10 : vector<256x4xi1>, vector<256x4xi32>
    %c1_i32_9 = arith.constant 1 : i32
    %23 = vector.broadcast %c1_i32_9 : i32 to vector<256x4xi32>
    %24 = arith.cmpi sge, %22, %23 : vector<256x4xi32>
    %c14_i32 = arith.constant 14 : i32
    %25 = vector.broadcast %c14_i32 : i32 to vector<256x4xi32>
    %26 = arith.cmpi sle, %22, %25 : vector<256x4xi32>
    %c0_10 = arith.constant 0 : index
    %c0_11 = arith.constant 0 : index
    %27 = vector.load %arg22[%c0_10, %c0_11] : memref<290x4xf32, #tpu.memory_space<vmem>>, vector<256x4xf32>
    %cst_12 = arith.constant 0.000000e+00 : f32
    %28 = vector.broadcast %cst_12 : f32 to vector<256x4xf32>
    %29 = arith.select %24, %27, %28 : vector<256x4xi1>, vector<256x4xf32>
    %c0_13 = arith.constant 0 : index
    %c0_14 = arith.constant 0 : index
    %c0_15 = arith.constant 0 : index
    %30 = vector.load %arg3[%c0_13, %c0_14, %c0_15] : memref<9x4x8xf32, #tpu.memory_space<vmem>>, vector<1x4x8xf32>
    %31 = vector.shape_cast %30 : vector<1x4x8xf32> to vector<4x8xf32>
    %cst_16 = arith.constant dense<0.000000e+00> : vector<256x8xf32>
    %32 = tpu.matmul %29, %31, %cst_16 {dimension_numbers = #tpu.dot_dimension_numbers<[1], [0], [0], [1], [0, 0, 1, 1], [], []>} : vector<256x4xf32>, vector<4x8xf32>, vector<256x8xf32> -> vector<256x8xf32>
    %c1 = arith.constant 1 : index
    %c0_17 = arith.constant 0 : index
    %33 = vector.load %arg22[%c1, %c0_17] : memref<290x4xf32, #tpu.memory_space<vmem>>, vector<256x4xf32>
    %c1_18 = arith.constant 1 : index
    %c0_19 = arith.constant 0 : index
    %c0_20 = arith.constant 0 : index
    %34 = vector.load %arg3[%c1_18, %c0_19, %c0_20] : memref<9x4x8xf32, #tpu.memory_space<vmem>>, vector<1x4x8xf32>
    %35 = vector.shape_cast %34 : vector<1x4x8xf32> to vector<4x8xf32>
    %cst_21 = arith.constant dense<0.000000e+00> : vector<256x8xf32>
    %36 = tpu.matmul %33, %35, %cst_21 {dimension_numbers = #tpu.dot_dimension_numbers<[1], [0], [0], [1], [0, 0, 1, 1], [], []>} : vector<256x4xf32>, vector<4x8xf32>, vector<256x8xf32> -> vector<256x8xf32>
    %37 = arith.addf %32, %36 : vector<256x8xf32>
    %c2 = arith.constant 2 : index
    %c0_22 = arith.constant 0 : index
    %38 = vector.load %arg22[%c2, %c0_22] : memref<290x4xf32, #tpu.memory_space<vmem>>, vector<256x4xf32>
    %cst_23 = arith.constant 0.000000e+00 : f32
    %39 = vector.broadcast %cst_23 : f32 to vector<256x4xf32>
    %40 = arith.select %26, %38, %39 : vector<256x4xi1>, vector<256x4xf32>
    %c2_24 = arith.constant 2 : index
    %c0_25 = arith.constant 0 : index
    %c0_26 = arith.constant 0 : index
    %41 = vector.load %arg3[%c2_24, %c0_25, %c0_26] : memref<9x4x8xf32, #tpu.memory_space<vmem>>, vector<1x4x8xf32>
    %42 = vector.shape_cast %41 : vector<1x4x8xf32> to vector<4x8xf32>
    %cst_27 = arith.constant dense<0.000000e+00> : vector<256x8xf32>
    %43 = tpu.matmul %40, %42, %cst_27 {dimension_numbers = #tpu.dot_dimension_numbers<[1], [0], [0], [1], [0, 0, 1, 1], [], []>} : vector<256x4xf32>, vector<4x8xf32>, vector<256x8xf32> -> vector<256x8xf32>
    %44 = arith.addf %37, %43 : vector<256x8xf32>
    %c16 = arith.constant 16 : index
    %c0_28 = arith.constant 0 : index
    %45 = vector.load %arg22[%c16, %c0_28] : memref<290x4xf32, #tpu.memory_space<vmem>>, vector<256x4xf32>
    %cst_29 = arith.constant 0.000000e+00 : f32
    %46 = vector.broadcast %cst_29 : f32 to vector<256x4xf32>
    %47 = arith.select %24, %45, %46 : vector<256x4xi1>, vector<256x4xf32>
    %c3 = arith.constant 3 : index
    %c0_30 = arith.constant 0 : index
    %c0_31 = arith.constant 0 : index
    %48 = vector.load %arg3[%c3, %c0_30, %c0_31] : memref<9x4x8xf32, #tpu.memory_space<vmem>>, vector<1x4x8xf32>
    %49 = vector.shape_cast %48 : vector<1x4x8xf32> to vector<4x8xf32>
    %cst_32 = arith.constant dense<0.000000e+00> : vector<256x8xf32>
    %50 = tpu.matmul %47, %49, %cst_32 {dimension_numbers = #tpu.dot_dimension_numbers<[1], [0], [0], [1], [0, 0, 1, 1], [], []>} : vector<256x4xf32>, vector<4x8xf32>, vector<256x8xf32> -> vector<256x8xf32>
    %51 = arith.addf %44, %50 : vector<256x8xf32>
    %c17_33 = arith.constant 17 : index
    %c0_34 = arith.constant 0 : index
    %52 = vector.load %arg22[%c17_33, %c0_34] : memref<290x4xf32, #tpu.memory_space<vmem>>, vector<256x4xf32>
    %c4 = arith.constant 4 : index
    %c0_35 = arith.constant 0 : index
    %c0_36 = arith.constant 0 : index
    %53 = vector.load %arg3[%c4, %c0_35, %c0_36] : memref<9x4x8xf32, #tpu.memory_space<vmem>>, vector<1x4x8xf32>
    %54 = vector.shape_cast %53 : vector<1x4x8xf32> to vector<4x8xf32>
    %cst_37 = arith.constant dense<0.000000e+00> : vector<256x8xf32>
    %55 = tpu.matmul %52, %54, %cst_37 {dimension_numbers = #tpu.dot_dimension_numbers<[1], [0], [0], [1], [0, 0, 1, 1], [], []>} : vector<256x4xf32>, vector<4x8xf32>, vector<256x8xf32> -> vector<256x8xf32>
    %56 = arith.addf %51, %55 : vector<256x8xf32>
    %c18 = arith.constant 18 : index
    %c0_38 = arith.constant 0 : index
    %57 = vector.load %arg22[%c18, %c0_38] : memref<290x4xf32, #tpu.memory_space<vmem>>, vector<256x4xf32>
    %cst_39 = arith.constant 0.000000e+00 : f32
    %58 = vector.broadcast %cst_39 : f32 to vector<256x4xf32>
    %59 = arith.select %26, %57, %58 : vector<256x4xi1>, vector<256x4xf32>
    %c5 = arith.constant 5 : index
    %c0_40 = arith.constant 0 : index
    %c0_41 = arith.constant 0 : index
    %60 = vector.load %arg3[%c5, %c0_40, %c0_41] : memref<9x4x8xf32, #tpu.memory_space<vmem>>, vector<1x4x8xf32>
    %61 = vector.shape_cast %60 : vector<1x4x8xf32> to vector<4x8xf32>
    %cst_42 = arith.constant dense<0.000000e+00> : vector<256x8xf32>
    %62 = tpu.matmul %59, %61, %cst_42 {dimension_numbers = #tpu.dot_dimension_numbers<[1], [0], [0], [1], [0, 0, 1, 1], [], []>} : vector<256x4xf32>, vector<4x8xf32>, vector<256x8xf32> -> vector<256x8xf32>
    %63 = arith.addf %56, %62 : vector<256x8xf32>
    %c32 = arith.constant 32 : index
    %c0_43 = arith.constant 0 : index
    %64 = vector.load %arg22[%c32, %c0_43] : memref<290x4xf32, #tpu.memory_space<vmem>>, vector<256x4xf32>
    %cst_44 = arith.constant 0.000000e+00 : f32
    %65 = vector.broadcast %cst_44 : f32 to vector<256x4xf32>
    %66 = arith.select %24, %64, %65 : vector<256x4xi1>, vector<256x4xf32>
    %c6 = arith.constant 6 : index
    %c0_45 = arith.constant 0 : index
    %c0_46 = arith.constant 0 : index
    %67 = vector.load %arg3[%c6, %c0_45, %c0_46] : memref<9x4x8xf32, #tpu.memory_space<vmem>>, vector<1x4x8xf32>
    %68 = vector.shape_cast %67 : vector<1x4x8xf32> to vector<4x8xf32>
    %cst_47 = arith.constant dense<0.000000e+00> : vector<256x8xf32>
    %69 = tpu.matmul %66, %68, %cst_47 {dimension_numbers = #tpu.dot_dimension_numbers<[1], [0], [0], [1], [0, 0, 1, 1], [], []>} : vector<256x4xf32>, vector<4x8xf32>, vector<256x8xf32> -> vector<256x8xf32>
    %70 = arith.addf %63, %69 : vector<256x8xf32>
    %c33 = arith.constant 33 : index
    %c0_48 = arith.constant 0 : index
    %71 = vector.load %arg22[%c33, %c0_48] : memref<290x4xf32, #tpu.memory_space<vmem>>, vector<256x4xf32>
    %c7 = arith.constant 7 : index
    %c0_49 = arith.constant 0 : index
    %c0_50 = arith.constant 0 : index
    %72 = vector.load %arg3[%c7, %c0_49, %c0_50] : memref<9x4x8xf32, #tpu.memory_space<vmem>>, vector<1x4x8xf32>
    %73 = vector.shape_cast %72 : vector<1x4x8xf32> to vector<4x8xf32>
    %cst_51 = arith.constant dense<0.000000e+00> : vector<256x8xf32>
    %74 = tpu.matmul %71, %73, %cst_51 {dimension_numbers = #tpu.dot_dimension_numbers<[1], [0], [0], [1], [0, 0, 1, 1], [], []>} : vector<256x4xf32>, vector<4x8xf32>, vector<256x8xf32> -> vector<256x8xf32>
    %75 = arith.addf %70, %74 : vector<256x8xf32>
    %c34 = arith.constant 34 : index
    %c0_52 = arith.constant 0 : index
    %76 = vector.load %arg22[%c34, %c0_52] : memref<290x4xf32, #tpu.memory_space<vmem>>, vector<256x4xf32>
    %cst_53 = arith.constant 0.000000e+00 : f32
    %77 = vector.broadcast %cst_53 : f32 to vector<256x4xf32>
    %78 = arith.select %26, %76, %77 : vector<256x4xi1>, vector<256x4xf32>
    %c8 = arith.constant 8 : index
    %c0_54 = arith.constant 0 : index
    %c0_55 = arith.constant 0 : index
    %79 = vector.load %arg3[%c8, %c0_54, %c0_55] : memref<9x4x8xf32, #tpu.memory_space<vmem>>, vector<1x4x8xf32>
    %80 = vector.shape_cast %79 : vector<1x4x8xf32> to vector<4x8xf32>
    %cst_56 = arith.constant dense<0.000000e+00> : vector<256x8xf32>
    %81 = tpu.matmul %78, %80, %cst_56 {dimension_numbers = #tpu.dot_dimension_numbers<[1], [0], [0], [1], [0, 0, 1, 1], [], []>} : vector<256x4xf32>, vector<4x8xf32>, vector<256x8xf32> -> vector<256x8xf32>
    %82 = arith.addf %75, %81 : vector<256x8xf32>
    %c0_57 = arith.constant 0 : index
    %c0_58 = arith.constant 0 : index
    %83 = vector.load %arg4[%c0_57, %c0_58] : memref<1x8xf32, #tpu.memory_space<vmem>>, vector<1x8xf32>
    %84 = vector.broadcast %83 : vector<1x8xf32> to vector<256x8xf32>
    %85 = arith.addf %82, %84 : vector<256x8xf32>
    %cst_59 = arith.constant 0.000000e+00 : f32
    %86 = vector.broadcast %cst_59 : f32 to vector<256x8xf32>
    %87 = arith.cmpf ogt, %85, %86 : vector<256x8xf32>
    %cst_60 = arith.constant 0.00999999977 : f32
    %88 = vector.broadcast %cst_60 : f32 to vector<256x8xf32>
    %89 = arith.mulf %88, %85 : vector<256x8xf32>
    %90 = arith.select %87, %85, %89 : vector<256x8xi1>, vector<256x8xf32>
    %cst_61 = arith.constant dense<0.000000e+00> : vector<8xf32>
    %91 = vector.multi_reduction <add>, %90, %cst_61 [0] : vector<256x8xf32> to vector<8xf32>
    %92 = vector.shape_cast %91 : vector<8xf32> to vector<1x8xf32>
    %93 = arith.mulf %90, %90 : vector<256x8xf32>
    %cst_62 = arith.constant dense<0.000000e+00> : vector<8xf32>
    %94 = vector.multi_reduction <add>, %93, %cst_62 [0] : vector<256x8xf32> to vector<8xf32>
    %95 = vector.shape_cast %94 : vector<8xf32> to vector<1x8xf32>
    %cst_63 = arith.constant 3.906250e-03 : f32
    %96 = vector.broadcast %cst_63 : f32 to vector<1x8xf32>
    %97 = arith.mulf %92, %96 : vector<1x8xf32>
    %cst_64 = arith.constant 3.906250e-03 : f32
    %98 = vector.broadcast %cst_64 : f32 to vector<1x8xf32>
    %99 = arith.mulf %95, %98 : vector<1x8xf32>
    %100 = arith.mulf %97, %97 : vector<1x8xf32>
    %101 = arith.subf %99, %100 : vector<1x8xf32>
    %102 = vector.broadcast %97 : vector<1x8xf32> to vector<256x8xf32>
    %103 = arith.subf %90, %102 : vector<256x8xf32>
    %cst_65 = arith.constant 9.99999974E-6 : f32
    %104 = vector.broadcast %cst_65 : f32 to vector<1x8xf32>
    %105 = arith.addf %101, %104 : vector<1x8xf32>
    %106 = math.rsqrt %105 : vector<1x8xf32>
    %107 = vector.broadcast %106 : vector<1x8xf32> to vector<256x8xf32>
    %108 = arith.mulf %103, %107 : vector<256x8xf32>
    %c0_66 = arith.constant 0 : index
    %c0_67 = arith.constant 0 : index
    %109 = vector.load %arg23[%c0_66, %c0_67] : memref<256x8xf32, #tpu.memory_space<vmem>>, vector<256x8xf32>
    tpu.vector_store %arg23[%c0_66, %c0_67], %108 {strides = array<i32>} : memref<256x8xf32, #tpu.memory_space<vmem>>, vector<256x8xf32>,
    %c0_68 = arith.constant 0 : index
    %c0_69 = arith.constant 0 : index
    %110 = vector.load %arg23[%c0_68, %c0_69] : memref<256x8xf32, #tpu.memory_space<vmem>>, vector<224x8xf32>
    %c16_70 = arith.constant 16 : index
    %c0_71 = arith.constant 0 : index
    %111 = vector.load %arg23[%c16_70, %c0_71] : memref<256x8xf32, #tpu.memory_space<vmem>>, vector<224x8xf32>
    %112 = arith.maximumf %110, %111 : vector<224x8xf32>
    %c32_72 = arith.constant 32 : index
    %c0_73 = arith.constant 0 : index
    %113 = vector.load %arg23[%c32_72, %c0_73] : memref<256x8xf32, #tpu.memory_space<vmem>>, vector<224x8xf32>
    %114 = arith.maximumf %112, %113 : vector<224x8xf32>
    %c0_74 = arith.constant 0 : index
    %c0_75 = arith.constant 0 : index
    %115 = vector.load %arg24[%c0_74, %c0_75] : memref<224x8xf32, #tpu.memory_space<vmem>>, vector<224x8xf32>
    tpu.vector_store %arg24[%c0_74, %c0_75], %114 {strides = array<i32>} : memref<224x8xf32, #tpu.memory_space<vmem>>, vector<224x8xf32>,
    %c0_76 = arith.constant 0 : index
    %c0_77 = arith.constant 0 : index
    %116 = vector.load %arg24[%c0_76, %c0_77] : memref<224x8xf32, #tpu.memory_space<vmem>>, vector<222x8xf32>
    %c1_78 = arith.constant 1 : index
    %c0_79 = arith.constant 0 : index
    %117 = vector.load %arg24[%c1_78, %c0_79] : memref<224x8xf32, #tpu.memory_space<vmem>>, vector<222x8xf32>
    %118 = arith.maximumf %116, %117 : vector<222x8xf32>
    %c2_80 = arith.constant 2 : index
    %c0_81 = arith.constant 0 : index
    %119 = vector.load %arg24[%c2_80, %c0_81] : memref<224x8xf32, #tpu.memory_space<vmem>>, vector<222x8xf32>
    %120 = arith.maximumf %118, %119 : vector<222x8xf32>
    %c0_82 = arith.constant 0 : index
    %c0_83 = arith.constant 0 : index
    %121 = vector.load %arg5[%c0_82, %c0_83] : memref<49x222xf32, #tpu.memory_space<vmem>>, vector<49x222xf32>
    %cst_84 = arith.constant dense<0.000000e+00> : vector<49x8xf32>
    %122 = tpu.matmul %121, %120, %cst_84 {dimension_numbers = #tpu.dot_dimension_numbers<[1], [0], [0], [1], [0, 0, 1, 1], [], []>} : vector<49x222xf32>, vector<222x8xf32>, vector<49x8xf32> -> vector<49x8xf32>
    %cst_85 = arith.constant 0.000000e+00 : f32
    %123 = vector.broadcast %cst_85 : f32 to vector<8x8xf32>
    %c0_86 = arith.constant 0 : index
    %c0_87 = arith.constant 0 : index
    %124 = vector.load %arg25[%c0_86, %c0_87] : memref<65x8xf32, #tpu.memory_space<vmem>>, vector<8x8xf32>
    tpu.vector_store %arg25[%c0_86, %c0_87], %123 {strides = array<i32>} : memref<65x8xf32, #tpu.memory_space<vmem>>, vector<8x8xf32>,
    %c57 = arith.constant 57 : index
    %c0_88 = arith.constant 0 : index
    %125 = vector.load %arg25[%c57, %c0_88] : memref<65x8xf32, #tpu.memory_space<vmem>>, vector<8x8xf32>
    tpu.vector_store %arg25[%c57, %c0_88], %123 {strides = array<i32>} : memref<65x8xf32, #tpu.memory_space<vmem>>, vector<8x8xf32>,
    %c8_89 = arith.constant 8 : index
    %c0_90 = arith.constant 0 : index
    %126 = vector.load %arg25[%c8_89, %c0_90] : memref<65x8xf32, #tpu.memory_space<vmem>>, vector<49x8xf32>
    tpu.vector_store %arg25[%c8_89, %c0_90], %122 {strides = array<i32>} : memref<65x8xf32, #tpu.memory_space<vmem>>, vector<49x8xf32>,
    %127 = tpu.iota {dimensions = array<i32: 0>} : vector<49x8xi32>
    %c7_i32 = arith.constant 7 : i32
    %c0_i32_91 = arith.constant 0 : i32
    %128 = arith.cmpi eq, %c7_i32, %c0_i32_91 : i32
    %c1_i32_92 = arith.constant 1 : i32
    %129 = arith.select %128, %c1_i32_92, %c7_i32 : i32
    %130 = vector.broadcast %129 : i32 to vector<49x8xi32>
    %131 = arith.remsi %127, %130 : vector<49x8xi32>
    %c0_i32_93 = arith.constant 0 : i32
    %132 = vector.broadcast %c0_i32_93 : i32 to vector<49x8xi32>
    %133 = arith.cmpi ne, %131, %132 : vector<49x8xi32>
    %c0_i32_94 = arith.constant 0 : i32
    %134 = vector.broadcast %c0_i32_94 : i32 to vector<49x8xi32>
    %135 = arith.cmpi slt, %131, %134 : vector<49x8xi32>
    %c0_i32_95 = arith.constant 0 : i32
    %136 = arith.cmpi slt, %129, %c0_i32_95 : i32
    %137 = vector.broadcast %136 : i1 to vector<49x8xi1>
    %138 = vector.broadcast %137 : vector<49x8xi1> to vector<49x8xi1>
    %139 = arith.xori %135, %138 : vector<49x8xi1>
    %140 = arith.andi %139, %133 : vector<49x8xi1>
    %141 = vector.broadcast %129 : i32 to vector<49x8xi32>
    %142 = arith.addi %131, %141 : vector<49x8xi32>
    %143 = arith.select %140, %142, %131 : vector<49x8xi1>, vector<49x8xi32>
    %c1_i32_96 = arith.constant 1 : i32
    %144 = vector.broadcast %c1_i32_96 : i32 to vector<49x8xi32>
    %145 = arith.cmpi sge, %143, %144 : vector<49x8xi32>
    %c5_i32 = arith.constant 5 : i32
    %146 = vector.broadcast %c5_i32 : i32 to vector<49x8xi32>
    %147 = arith.cmpi sle, %143, %146 : vector<49x8xi32>
    %c0_97 = arith.constant 0 : index
    %c0_98 = arith.constant 0 : index
    %148 = vector.load %arg25[%c0_97, %c0_98] : memref<65x8xf32, #tpu.memory_space<vmem>>, vector<49x8xf32>
    %cst_99 = arith.constant 0.000000e+00 : f32
    %149 = vector.broadcast %cst_99 : f32 to vector<49x8xf32>
    %150 = arith.select %145, %148, %149 : vector<49x8xi1>, vector<49x8xf32>
    %c0_100 = arith.constant 0 : index
    %c0_101 = arith.constant 0 : index
    %c0_102 = arith.constant 0 : index
    %151 = vector.load %arg6[%c0_100, %c0_101, %c0_102] : memref<9x8x16xf32, #tpu.memory_space<vmem>>, vector<1x8x16xf32>
    %152 = vector.shape_cast %151 : vector<1x8x16xf32> to vector<8x16xf32>
    %cst_103 = arith.constant dense<0.000000e+00> : vector<49x16xf32>
    %153 = tpu.matmul %150, %152, %cst_103 {dimension_numbers = #tpu.dot_dimension_numbers<[1], [0], [0], [1], [0, 0, 1, 1], [], []>} : vector<49x8xf32>, vector<8x16xf32>, vector<49x16xf32> -> vector<49x16xf32>
    %c1_104 = arith.constant 1 : index
    %c0_105 = arith.constant 0 : index
    %154 = vector.load %arg25[%c1_104, %c0_105] : memref<65x8xf32, #tpu.memory_space<vmem>>, vector<49x8xf32>
    %c1_106 = arith.constant 1 : index
    %c0_107 = arith.constant 0 : index
    %c0_108 = arith.constant 0 : index
    %155 = vector.load %arg6[%c1_106, %c0_107, %c0_108] : memref<9x8x16xf32, #tpu.memory_space<vmem>>, vector<1x8x16xf32>
    %156 = vector.shape_cast %155 : vector<1x8x16xf32> to vector<8x16xf32>
    %cst_109 = arith.constant dense<0.000000e+00> : vector<49x16xf32>
    %157 = tpu.matmul %154, %156, %cst_109 {dimension_numbers = #tpu.dot_dimension_numbers<[1], [0], [0], [1], [0, 0, 1, 1], [], []>} : vector<49x8xf32>, vector<8x16xf32>, vector<49x16xf32> -> vector<49x16xf32>
    %158 = arith.addf %153, %157 : vector<49x16xf32>
    %c2_110 = arith.constant 2 : index
    %c0_111 = arith.constant 0 : index
    %159 = vector.load %arg25[%c2_110, %c0_111] : memref<65x8xf32, #tpu.memory_space<vmem>>, vector<49x8xf32>
    %cst_112 = arith.constant 0.000000e+00 : f32
    %160 = vector.broadcast %cst_112 : f32 to vector<49x8xf32>
    %161 = arith.select %147, %159, %160 : vector<49x8xi1>, vector<49x8xf32>
    %c2_113 = arith.constant 2 : index
    %c0_114 = arith.constant 0 : index
    %c0_115 = arith.constant 0 : index
    %162 = vector.load %arg6[%c2_113, %c0_114, %c0_115] : memref<9x8x16xf32, #tpu.memory_space<vmem>>, vector<1x8x16xf32>
    %163 = vector.shape_cast %162 : vector<1x8x16xf32> to vector<8x16xf32>
    %cst_116 = arith.constant dense<0.000000e+00> : vector<49x16xf32>
    %164 = tpu.matmul %161, %163, %cst_116 {dimension_numbers = #tpu.dot_dimension_numbers<[1], [0], [0], [1], [0, 0, 1, 1], [], []>} : vector<49x8xf32>, vector<8x16xf32>, vector<49x16xf32> -> vector<49x16xf32>
    %165 = arith.addf %158, %164 : vector<49x16xf32>
    %c7_117 = arith.constant 7 : index
    %c0_118 = arith.constant 0 : index
    %166 = vector.load %arg25[%c7_117, %c0_118] : memref<65x8xf32, #tpu.memory_space<vmem>>, vector<49x8xf32>
    %cst_119 = arith.constant 0.000000e+00 : f32
    %167 = vector.broadcast %cst_119 : f32 to vector<49x8xf32>
    %168 = arith.select %145, %166, %167 : vector<49x8xi1>, vector<49x8xf32>
    %c3_120 = arith.constant 3 : index
    %c0_121 = arith.constant 0 : index
    %c0_122 = arith.constant 0 : index
    %169 = vector.load %arg6[%c3_120, %c0_121, %c0_122] : memref<9x8x16xf32, #tpu.memory_space<vmem>>, vector<1x8x16xf32>
    %170 = vector.shape_cast %169 : vector<1x8x16xf32> to vector<8x16xf32>
    %cst_123 = arith.constant dense<0.000000e+00> : vector<49x16xf32>
    %171 = tpu.matmul %168, %170, %cst_123 {dimension_numbers = #tpu.dot_dimension_numbers<[1], [0], [0], [1], [0, 0, 1, 1], [], []>} : vector<49x8xf32>, vector<8x16xf32>, vector<49x16xf32> -> vector<49x16xf32>
    %172 = arith.addf %165, %171 : vector<49x16xf32>
    %c8_124 = arith.constant 8 : index
    %c0_125 = arith.constant 0 : index
    %173 = vector.load %arg25[%c8_124, %c0_125] : memref<65x8xf32, #tpu.memory_space<vmem>>, vector<49x8xf32>
    %c4_126 = arith.constant 4 : index
    %c0_127 = arith.constant 0 : index
    %c0_128 = arith.constant 0 : index
    %174 = vector.load %arg6[%c4_126, %c0_127, %c0_128] : memref<9x8x16xf32, #tpu.memory_space<vmem>>, vector<1x8x16xf32>
    %175 = vector.shape_cast %174 : vector<1x8x16xf32> to vector<8x16xf32>
    %cst_129 = arith.constant dense<0.000000e+00> : vector<49x16xf32>
    %176 = tpu.matmul %173, %175, %cst_129 {dimension_numbers = #tpu.dot_dimension_numbers<[1], [0], [0], [1], [0, 0, 1, 1], [], []>} : vector<49x8xf32>, vector<8x16xf32>, vector<49x16xf32> -> vector<49x16xf32>
    %177 = arith.addf %172, %176 : vector<49x16xf32>
    %c9 = arith.constant 9 : index
    %c0_130 = arith.constant 0 : index
    %178 = vector.load %arg25[%c9, %c0_130] : memref<65x8xf32, #tpu.memory_space<vmem>>, vector<49x8xf32>
    %cst_131 = arith.constant 0.000000e+00 : f32
    %179 = vector.broadcast %cst_131 : f32 to vector<49x8xf32>
    %180 = arith.select %147, %178, %179 : vector<49x8xi1>, vector<49x8xf32>
    %c5_132 = arith.constant 5 : index
    %c0_133 = arith.constant 0 : index
    %c0_134 = arith.constant 0 : index
    %181 = vector.load %arg6[%c5_132, %c0_133, %c0_134] : memref<9x8x16xf32, #tpu.memory_space<vmem>>, vector<1x8x16xf32>
    %182 = vector.shape_cast %181 : vector<1x8x16xf32> to vector<8x16xf32>
    %cst_135 = arith.constant dense<0.000000e+00> : vector<49x16xf32>
    %183 = tpu.matmul %180, %182, %cst_135 {dimension_numbers = #tpu.dot_dimension_numbers<[1], [0], [0], [1], [0, 0, 1, 1], [], []>} : vector<49x8xf32>, vector<8x16xf32>, vector<49x16xf32> -> vector<49x16xf32>
    %184 = arith.addf %177, %183 : vector<49x16xf32>
    %c14 = arith.constant 14 : index
    %c0_136 = arith.constant 0 : index
    %185 = vector.load %arg25[%c14, %c0_136] : memref<65x8xf32, #tpu.memory_space<vmem>>, vector<49x8xf32>
    %cst_137 = arith.constant 0.000000e+00 : f32
    %186 = vector.broadcast %cst_137 : f32 to vector<49x8xf32>
    %187 = arith.select %145, %185, %186 : vector<49x8xi1>, vector<49x8xf32>
    %c6_138 = arith.constant 6 : index
    %c0_139 = arith.constant 0 : index
    %c0_140 = arith.constant 0 : index
    %188 = vector.load %arg6[%c6_138, %c0_139, %c0_140] : memref<9x8x16xf32, #tpu.memory_space<vmem>>, vector<1x8x16xf32>
    %189 = vector.shape_cast %188 : vector<1x8x16xf32> to vector<8x16xf32>
    %cst_141 = arith.constant dense<0.000000e+00> : vector<49x16xf32>
    %190 = tpu.matmul %187, %189, %cst_141 {dimension_numbers = #tpu.dot_dimension_numbers<[1], [0], [0], [1], [0, 0, 1, 1], [], []>} : vector<49x8xf32>, vector<8x16xf32>, vector<49x16xf32> -> vector<49x16xf32>
    %191 = arith.addf %184, %190 : vector<49x16xf32>
    %c15 = arith.constant 15 : index
    %c0_142 = arith.constant 0 : index
    %192 = vector.load %arg25[%c15, %c0_142] : memref<65x8xf32, #tpu.memory_space<vmem>>, vector<49x8xf32>
    %c7_143 = arith.constant 7 : index
    %c0_144 = arith.constant 0 : index
    %c0_145 = arith.constant 0 : index
    %193 = vector.load %arg6[%c7_143, %c0_144, %c0_145] : memref<9x8x16xf32, #tpu.memory_space<vmem>>, vector<1x8x16xf32>
    %194 = vector.shape_cast %193 : vector<1x8x16xf32> to vector<8x16xf32>
    %cst_146 = arith.constant dense<0.000000e+00> : vector<49x16xf32>
    %195 = tpu.matmul %192, %194, %cst_146 {dimension_numbers = #tpu.dot_dimension_numbers<[1], [0], [0], [1], [0, 0, 1, 1], [], []>} : vector<49x8xf32>, vector<8x16xf32>, vector<49x16xf32> -> vector<49x16xf32>
    %196 = arith.addf %191, %195 : vector<49x16xf32>
    %c16_147 = arith.constant 16 : index
    %c0_148 = arith.constant 0 : index
    %197 = vector.load %arg25[%c16_147, %c0_148] : memref<65x8xf32, #tpu.memory_space<vmem>>, vector<49x8xf32>
    %cst_149 = arith.constant 0.000000e+00 : f32
    %198 = vector.broadcast %cst_149 : f32 to vector<49x8xf32>
    %199 = arith.select %147, %197, %198 : vector<49x8xi1>, vector<49x8xf32>
    %c8_150 = arith.constant 8 : index
    %c0_151 = arith.constant 0 : index
    %c0_152 = arith.constant 0 : index
    %200 = vector.load %arg6[%c8_150, %c0_151, %c0_152] : memref<9x8x16xf32, #tpu.memory_space<vmem>>, vector<1x8x16xf32>
    %201 = vector.shape_cast %200 : vector<1x8x16xf32> to vector<8x16xf32>
    %cst_153 = arith.constant dense<0.000000e+00> : vector<49x16xf32>
    %202 = tpu.matmul %199, %201, %cst_153 {dimension_numbers = #tpu.dot_dimension_numbers<[1], [0], [0], [1], [0, 0, 1, 1], [], []>} : vector<49x8xf32>, vector<8x16xf32>, vector<49x16xf32> -> vector<49x16xf32>
    %203 = arith.addf %196, %202 : vector<49x16xf32>
    %c0_154 = arith.constant 0 : index
    %c0_155 = arith.constant 0 : index
    %204 = vector.load %arg7[%c0_154, %c0_155] : memref<1x16xf32, #tpu.memory_space<vmem>>, vector<1x16xf32>
    %205 = vector.broadcast %204 : vector<1x16xf32> to vector<49x16xf32>
    %206 = arith.addf %203, %205 : vector<49x16xf32>
    %cst_156 = arith.constant 0.000000e+00 : f32
    %207 = vector.broadcast %cst_156 : f32 to vector<49x16xf32>
    %208 = arith.cmpf ogt, %206, %207 : vector<49x16xf32>
    %cst_157 = arith.constant 0.00999999977 : f32
    %209 = vector.broadcast %cst_157 : f32 to vector<49x16xf32>
    %210 = arith.mulf %209, %206 : vector<49x16xf32>
    %211 = arith.select %208, %206, %210 : vector<49x16xi1>, vector<49x16xf32>
    %cst_158 = arith.constant dense<0.000000e+00> : vector<16xf32>
    %212 = vector.multi_reduction <add>, %211, %cst_158 [0] : vector<49x16xf32> to vector<16xf32>
    %213 = vector.shape_cast %212 : vector<16xf32> to vector<1x16xf32>
    %214 = arith.mulf %211, %211 : vector<49x16xf32>
    %cst_159 = arith.constant dense<0.000000e+00> : vector<16xf32>
    %215 = vector.multi_reduction <add>, %214, %cst_159 [0] : vector<49x16xf32> to vector<16xf32>
    %216 = vector.shape_cast %215 : vector<16xf32> to vector<1x16xf32>
    %cst_160 = arith.constant 0.0204081628 : f32
    %217 = vector.broadcast %cst_160 : f32 to vector<1x16xf32>
    %218 = arith.mulf %213, %217 : vector<1x16xf32>
    %cst_161 = arith.constant 0.0204081628 : f32
    %219 = vector.broadcast %cst_161 : f32 to vector<1x16xf32>
    %220 = arith.mulf %216, %219 : vector<1x16xf32>
    %221 = arith.mulf %218, %218 : vector<1x16xf32>
    %222 = arith.subf %220, %221 : vector<1x16xf32>
    %223 = vector.broadcast %218 : vector<1x16xf32> to vector<49x16xf32>
    %224 = arith.subf %211, %223 : vector<49x16xf32>
    %cst_162 = arith.constant 9.99999974E-6 : f32
    %225 = vector.broadcast %cst_162 : f32 to vector<1x16xf32>
    %226 = arith.addf %222, %225 : vector<1x16xf32>
    %227 = math.rsqrt %226 : vector<1x16xf32>
    %228 = vector.broadcast %227 : vector<1x16xf32> to vector<49x16xf32>
    %229 = arith.mulf %224, %228 : vector<49x16xf32>
    %c0_163 = arith.constant 0 : index
    %c0_164 = arith.constant 0 : index
    %230 = vector.load %arg26[%c0_163, %c0_164] : memref<49x16xf32, #tpu.memory_space<vmem>>, vector<49x16xf32>
    tpu.vector_store %arg26[%c0_163, %c0_164], %229 {strides = array<i32>} : memref<49x16xf32, #tpu.memory_space<vmem>>, vector<49x16xf32>,
    %c0_165 = arith.constant 0 : index
    %c0_166 = arith.constant 0 : index
    %231 = vector.load %arg26[%c0_165, %c0_166] : memref<49x16xf32, #tpu.memory_space<vmem>>, vector<35x16xf32>
    %c7_167 = arith.constant 7 : index
    %c0_168 = arith.constant 0 : index
    %232 = vector.load %arg26[%c7_167, %c0_168] : memref<49x16xf32, #tpu.memory_space<vmem>>, vector<35x16xf32>
    %233 = arith.maximumf %231, %232 : vector<35x16xf32>
    %c14_169 = arith.constant 14 : index
    %c0_170 = arith.constant 0 : index
    %234 = vector.load %arg26[%c14_169, %c0_170] : memref<49x16xf32, #tpu.memory_space<vmem>>, vector<35x16xf32>
    %235 = arith.maximumf %233, %234 : vector<35x16xf32>
    %c0_171 = arith.constant 0 : index
    %c0_172 = arith.constant 0 : index
    %236 = vector.load %arg27[%c0_171, %c0_172] : memref<35x16xf32, #tpu.memory_space<vmem>>, vector<35x16xf32>
    tpu.vector_store %arg27[%c0_171, %c0_172], %235 {strides = array<i32>} : memref<35x16xf32, #tpu.memory_space<vmem>>, vector<35x16xf32>,
    %c0_173 = arith.constant 0 : index
    %c0_174 = arith.constant 0 : index
    %237 = vector.load %arg27[%c0_173, %c0_174] : memref<35x16xf32, #tpu.memory_space<vmem>>, vector<33x16xf32>
    %c1_175 = arith.constant 1 : index
    %c0_176 = arith.constant 0 : index
    %238 = vector.load %arg27[%c1_175, %c0_176] : memref<35x16xf32, #tpu.memory_space<vmem>>, vector<33x16xf32>
    %239 = arith.maximumf %237, %238 : vector<33x16xf32>
    %c2_177 = arith.constant 2 : index
    %c0_178 = arith.constant 0 : index
    %240 = vector.load %arg27[%c2_177, %c0_178] : memref<35x16xf32, #tpu.memory_space<vmem>>, vector<33x16xf32>
    %241 = arith.maximumf %239, %240 : vector<33x16xf32>
    %c0_179 = arith.constant 0 : index
    %c0_180 = arith.constant 0 : index
    %242 = vector.load %arg8[%c0_179, %c0_180] : memref<9x33xf32, #tpu.memory_space<vmem>>, vector<9x33xf32>
    %cst_181 = arith.constant dense<0.000000e+00> : vector<9x16xf32>
    %243 = tpu.matmul %242, %241, %cst_181 {dimension_numbers = #tpu.dot_dimension_numbers<[1], [0], [0], [1], [0, 0, 1, 1], [], []>} : vector<9x33xf32>, vector<33x16xf32>, vector<9x16xf32> -> vector<9x16xf32>
    %cst_182 = arith.constant 0.000000e+00 : f32
    %244 = vector.broadcast %cst_182 : f32 to vector<4x16xf32>
    %c0_183 = arith.constant 0 : index
    %c0_184 = arith.constant 0 : index
    %245 = vector.load %arg28[%c0_183, %c0_184] : memref<17x16xf32, #tpu.memory_space<vmem>>, vector<4x16xf32>
    tpu.vector_store %arg28[%c0_183, %c0_184], %244 {strides = array<i32>} : memref<17x16xf32, #tpu.memory_space<vmem>>, vector<4x16xf32>,
    %c13 = arith.constant 13 : index
    %c0_185 = arith.constant 0 : index
    %246 = vector.load %arg28[%c13, %c0_185] : memref<17x16xf32, #tpu.memory_space<vmem>>, vector<4x16xf32>
    tpu.vector_store %arg28[%c13, %c0_185], %244 {strides = array<i32>} : memref<17x16xf32, #tpu.memory_space<vmem>>, vector<4x16xf32>,
    %c4_186 = arith.constant 4 : index
    %c0_187 = arith.constant 0 : index
    %247 = vector.load %arg28[%c4_186, %c0_187] : memref<17x16xf32, #tpu.memory_space<vmem>>, vector<9x16xf32>
    tpu.vector_store %arg28[%c4_186, %c0_187], %243 {strides = array<i32>} : memref<17x16xf32, #tpu.memory_space<vmem>>, vector<9x16xf32>,
    %248 = tpu.iota {dimensions = array<i32: 0>} : vector<9x16xi32>
    %c3_i32 = arith.constant 3 : i32
    %c0_i32_188 = arith.constant 0 : i32
    %249 = arith.cmpi eq, %c3_i32, %c0_i32_188 : i32
    %c1_i32_189 = arith.constant 1 : i32
    %250 = arith.select %249, %c1_i32_189, %c3_i32 : i32
    %251 = vector.broadcast %250 : i32 to vector<9x16xi32>
    %252 = arith.remsi %248, %251 : vector<9x16xi32>
    %c0_i32_190 = arith.constant 0 : i32
    %253 = vector.broadcast %c0_i32_190 : i32 to vector<9x16xi32>
    %254 = arith.cmpi ne, %252, %253 : vector<9x16xi32>
    %c0_i32_191 = arith.constant 0 : i32
    %255 = vector.broadcast %c0_i32_191 : i32 to vector<9x16xi32>
    %256 = arith.cmpi slt, %252, %255 : vector<9x16xi32>
    %c0_i32_192 = arith.constant 0 : i32
    %257 = arith.cmpi slt, %250, %c0_i32_192 : i32
    %258 = vector.broadcast %257 : i1 to vector<9x16xi1>
    %259 = vector.broadcast %258 : vector<9x16xi1> to vector<9x16xi1>
    %260 = arith.xori %256, %259 : vector<9x16xi1>
    %261 = arith.andi %260, %254 : vector<9x16xi1>
    %262 = vector.broadcast %250 : i32 to vector<9x16xi32>
    %263 = arith.addi %252, %262 : vector<9x16xi32>
    %264 = arith.select %261, %263, %252 : vector<9x16xi1>, vector<9x16xi32>
    %c1_i32_193 = arith.constant 1 : i32
    %265 = vector.broadcast %c1_i32_193 : i32 to vector<9x16xi32>
    %266 = arith.cmpi sge, %264, %265 : vector<9x16xi32>
    %c1_i32_194 = arith.constant 1 : i32
    %267 = vector.broadcast %c1_i32_194 : i32 to vector<9x16xi32>
    %268 = arith.cmpi sle, %264, %267 : vector<9x16xi32>
    %c0_195 = arith.constant 0 : index
    %c0_196 = arith.constant 0 : index
    %269 = vector.load %arg28[%c0_195, %c0_196] : memref<17x16xf32, #tpu.memory_space<vmem>>, vector<9x16xf32>
    %cst_197 = arith.constant 0.000000e+00 : f32
    %270 = vector.broadcast %cst_197 : f32 to vector<9x16xf32>
    %271 = arith.select %266, %269, %270 : vector<9x16xi1>, vector<9x16xf32>
    %c0_198 = arith.constant 0 : index
    %c0_199 = arith.constant 0 : index
    %c0_200 = arith.constant 0 : index
    %272 = vector.load %arg9[%c0_198, %c0_199, %c0_200] : memref<9x16x32xf32, #tpu.memory_space<vmem>>, vector<1x16x32xf32>
    %273 = vector.shape_cast %272 : vector<1x16x32xf32> to vector<16x32xf32>
    %cst_201 = arith.constant dense<0.000000e+00> : vector<9x32xf32>
    %274 = tpu.matmul %271, %273, %cst_201 {dimension_numbers = #tpu.dot_dimension_numbers<[1], [0], [0], [1], [0, 0, 1, 1], [], []>} : vector<9x16xf32>, vector<16x32xf32>, vector<9x32xf32> -> vector<9x32xf32>
    %c1_202 = arith.constant 1 : index
    %c0_203 = arith.constant 0 : index
    %275 = vector.load %arg28[%c1_202, %c0_203] : memref<17x16xf32, #tpu.memory_space<vmem>>, vector<9x16xf32>
    %c1_204 = arith.constant 1 : index
    %c0_205 = arith.constant 0 : index
    %c0_206 = arith.constant 0 : index
    %276 = vector.load %arg9[%c1_204, %c0_205, %c0_206] : memref<9x16x32xf32, #tpu.memory_space<vmem>>, vector<1x16x32xf32>
    %277 = vector.shape_cast %276 : vector<1x16x32xf32> to vector<16x32xf32>
    %cst_207 = arith.constant dense<0.000000e+00> : vector<9x32xf32>
    %278 = tpu.matmul %275, %277, %cst_207 {dimension_numbers = #tpu.dot_dimension_numbers<[1], [0], [0], [1], [0, 0, 1, 1], [], []>} : vector<9x16xf32>, vector<16x32xf32>, vector<9x32xf32> -> vector<9x32xf32>
    %279 = arith.addf %274, %278 : vector<9x32xf32>
    %c2_208 = arith.constant 2 : index
    %c0_209 = arith.constant 0 : index
    %280 = vector.load %arg28[%c2_208, %c0_209] : memref<17x16xf32, #tpu.memory_space<vmem>>, vector<9x16xf32>
    %cst_210 = arith.constant 0.000000e+00 : f32
    %281 = vector.broadcast %cst_210 : f32 to vector<9x16xf32>
    %282 = arith.select %268, %280, %281 : vector<9x16xi1>, vector<9x16xf32>
    %c2_211 = arith.constant 2 : index
    %c0_212 = arith.constant 0 : index
    %c0_213 = arith.constant 0 : index
    %283 = vector.load %arg9[%c2_211, %c0_212, %c0_213] : memref<9x16x32xf32, #tpu.memory_space<vmem>>, vector<1x16x32xf32>
    %284 = vector.shape_cast %283 : vector<1x16x32xf32> to vector<16x32xf32>
    %cst_214 = arith.constant dense<0.000000e+00> : vector<9x32xf32>
    %285 = tpu.matmul %282, %284, %cst_214 {dimension_numbers = #tpu.dot_dimension_numbers<[1], [0], [0], [1], [0, 0, 1, 1], [], []>} : vector<9x16xf32>, vector<16x32xf32>, vector<9x32xf32> -> vector<9x32xf32>
    %286 = arith.addf %279, %285 : vector<9x32xf32>
    %c3_215 = arith.constant 3 : index
    %c0_216 = arith.constant 0 : index
    %287 = vector.load %arg28[%c3_215, %c0_216] : memref<17x16xf32, #tpu.memory_space<vmem>>, vector<9x16xf32>
    %cst_217 = arith.constant 0.000000e+00 : f32
    %288 = vector.broadcast %cst_217 : f32 to vector<9x16xf32>
    %289 = arith.select %266, %287, %288 : vector<9x16xi1>, vector<9x16xf32>
    %c3_218 = arith.constant 3 : index
    %c0_219 = arith.constant 0 : index
    %c0_220 = arith.constant 0 : index
    %290 = vector.load %arg9[%c3_218, %c0_219, %c0_220] : memref<9x16x32xf32, #tpu.memory_space<vmem>>, vector<1x16x32xf32>
    %291 = vector.shape_cast %290 : vector<1x16x32xf32> to vector<16x32xf32>
    %cst_221 = arith.constant dense<0.000000e+00> : vector<9x32xf32>
    %292 = tpu.matmul %289, %291, %cst_221 {dimension_numbers = #tpu.dot_dimension_numbers<[1], [0], [0], [1], [0, 0, 1, 1], [], []>} : vector<9x16xf32>, vector<16x32xf32>, vector<9x32xf32> -> vector<9x32xf32>
    %293 = arith.addf %286, %292 : vector<9x32xf32>
    %c4_222 = arith.constant 4 : index
    %c0_223 = arith.constant 0 : index
    %294 = vector.load %arg28[%c4_222, %c0_223] : memref<17x16xf32, #tpu.memory_space<vmem>>, vector<9x16xf32>
    %c4_224 = arith.constant 4 : index
    %c0_225 = arith.constant 0 : index
    %c0_226 = arith.constant 0 : index
    %295 = vector.load %arg9[%c4_224, %c0_225, %c0_226] : memref<9x16x32xf32, #tpu.memory_space<vmem>>, vector<1x16x32xf32>
    %296 = vector.shape_cast %295 : vector<1x16x32xf32> to vector<16x32xf32>
    %cst_227 = arith.constant dense<0.000000e+00> : vector<9x32xf32>
    %297 = tpu.matmul %294, %296, %cst_227 {dimension_numbers = #tpu.dot_dimension_numbers<[1], [0], [0], [1], [0, 0, 1, 1], [], []>} : vector<9x16xf32>, vector<16x32xf32>, vector<9x32xf32> -> vector<9x32xf32>
    %298 = arith.addf %293, %297 : vector<9x32xf32>
    %c5_228 = arith.constant 5 : index
    %c0_229 = arith.constant 0 : index
    %299 = vector.load %arg28[%c5_228, %c0_229] : memref<17x16xf32, #tpu.memory_space<vmem>>, vector<9x16xf32>
    %cst_230 = arith.constant 0.000000e+00 : f32
    %300 = vector.broadcast %cst_230 : f32 to vector<9x16xf32>
    %301 = arith.select %268, %299, %300 : vector<9x16xi1>, vector<9x16xf32>
    %c5_231 = arith.constant 5 : index
    %c0_232 = arith.constant 0 : index
    %c0_233 = arith.constant 0 : index
    %302 = vector.load %arg9[%c5_231, %c0_232, %c0_233] : memref<9x16x32xf32, #tpu.memory_space<vmem>>, vector<1x16x32xf32>
    %303 = vector.shape_cast %302 : vector<1x16x32xf32> to vector<16x32xf32>
    %cst_234 = arith.constant dense<0.000000e+00> : vector<9x32xf32>
    %304 = tpu.matmul %301, %303, %cst_234 {dimension_numbers = #tpu.dot_dimension_numbers<[1], [0], [0], [1], [0, 0, 1, 1], [], []>} : vector<9x16xf32>, vector<16x32xf32>, vector<9x32xf32> -> vector<9x32xf32>
    %305 = arith.addf %298, %304 : vector<9x32xf32>
    %c6_235 = arith.constant 6 : index
    %c0_236 = arith.constant 0 : index
    %306 = vector.load %arg28[%c6_235, %c0_236] : memref<17x16xf32, #tpu.memory_space<vmem>>, vector<9x16xf32>
    %cst_237 = arith.constant 0.000000e+00 : f32
    %307 = vector.broadcast %cst_237 : f32 to vector<9x16xf32>
    %308 = arith.select %266, %306, %307 : vector<9x16xi1>, vector<9x16xf32>
    %c6_238 = arith.constant 6 : index
    %c0_239 = arith.constant 0 : index
    %c0_240 = arith.constant 0 : index
    %309 = vector.load %arg9[%c6_238, %c0_239, %c0_240] : memref<9x16x32xf32, #tpu.memory_space<vmem>>, vector<1x16x32xf32>
    %310 = vector.shape_cast %309 : vector<1x16x32xf32> to vector<16x32xf32>
    %cst_241 = arith.constant dense<0.000000e+00> : vector<9x32xf32>
    %311 = tpu.matmul %308, %310, %cst_241 {dimension_numbers = #tpu.dot_dimension_numbers<[1], [0], [0], [1], [0, 0, 1, 1], [], []>} : vector<9x16xf32>, vector<16x32xf32>, vector<9x32xf32> -> vector<9x32xf32>
    %312 = arith.addf %305, %311 : vector<9x32xf32>
    %c7_242 = arith.constant 7 : index
    %c0_243 = arith.constant 0 : index
    %313 = vector.load %arg28[%c7_242, %c0_243] : memref<17x16xf32, #tpu.memory_space<vmem>>, vector<9x16xf32>
    %c7_244 = arith.constant 7 : index
    %c0_245 = arith.constant 0 : index
    %c0_246 = arith.constant 0 : index
    %314 = vector.load %arg9[%c7_244, %c0_245, %c0_246] : memref<9x16x32xf32, #tpu.memory_space<vmem>>, vector<1x16x32xf32>
    %315 = vector.shape_cast %314 : vector<1x16x32xf32> to vector<16x32xf32>
    %cst_247 = arith.constant dense<0.000000e+00> : vector<9x32xf32>
    %316 = tpu.matmul %313, %315, %cst_247 {dimension_numbers = #tpu.dot_dimension_numbers<[1], [0], [0], [1], [0, 0, 1, 1], [], []>} : vector<9x16xf32>, vector<16x32xf32>, vector<9x32xf32> -> vector<9x32xf32>
    %317 = arith.addf %312, %316 : vector<9x32xf32>
    %c8_248 = arith.constant 8 : index
    %c0_249 = arith.constant 0 : index
    %318 = vector.load %arg28[%c8_248, %c0_249] : memref<17x16xf32, #tpu.memory_space<vmem>>, vector<9x16xf32>
    %cst_250 = arith.constant 0.000000e+00 : f32
    %319 = vector.broadcast %cst_250 : f32 to vector<9x16xf32>
    %320 = arith.select %268, %318, %319 : vector<9x16xi1>, vector<9x16xf32>
    %c8_251 = arith.constant 8 : index
    %c0_252 = arith.constant 0 : index
    %c0_253 = arith.constant 0 : index
    %321 = vector.load %arg9[%c8_251, %c0_252, %c0_253] : memref<9x16x32xf32, #tpu.memory_space<vmem>>, vector<1x16x32xf32>
    %322 = vector.shape_cast %321 : vector<1x16x32xf32> to vector<16x32xf32>
    %cst_254 = arith.constant dense<0.000000e+00> : vector<9x32xf32>
    %323 = tpu.matmul %320, %322, %cst_254 {dimension_numbers = #tpu.dot_dimension_numbers<[1], [0], [0], [1], [0, 0, 1, 1], [], []>} : vector<9x16xf32>, vector<16x32xf32>, vector<9x32xf32> -> vector<9x32xf32>
    %324 = arith.addf %317, %323 : vector<9x32xf32>
    %c0_255 = arith.constant 0 : index
    %c0_256 = arith.constant 0 : index
    %325 = vector.load %arg10[%c0_255, %c0_256] : memref<1x32xf32, #tpu.memory_space<vmem>>, vector<1x32xf32>
    %326 = vector.broadcast %325 : vector<1x32xf32> to vector<9x32xf32>
    %327 = arith.addf %324, %326 : vector<9x32xf32>
    %cst_257 = arith.constant 0.000000e+00 : f32
    %328 = vector.broadcast %cst_257 : f32 to vector<9x32xf32>
    %329 = arith.cmpf ogt, %327, %328 : vector<9x32xf32>
    %cst_258 = arith.constant 0.00999999977 : f32
    %330 = vector.broadcast %cst_258 : f32 to vector<9x32xf32>
    %331 = arith.mulf %330, %327 : vector<9x32xf32>
    %332 = arith.select %329, %327, %331 : vector<9x32xi1>, vector<9x32xf32>
    %cst_259 = arith.constant dense<0.000000e+00> : vector<32xf32>
    %333 = vector.multi_reduction <add>, %332, %cst_259 [0] : vector<9x32xf32> to vector<32xf32>
    %334 = vector.shape_cast %333 : vector<32xf32> to vector<1x32xf32>
    %335 = arith.mulf %332, %332 : vector<9x32xf32>
    %cst_260 = arith.constant dense<0.000000e+00> : vector<32xf32>
    %336 = vector.multi_reduction <add>, %335, %cst_260 [0] : vector<9x32xf32> to vector<32xf32>
    %337 = vector.shape_cast %336 : vector<32xf32> to vector<1x32xf32>
    %cst_261 = arith.constant 0.111111112 : f32
    %338 = vector.broadcast %cst_261 : f32 to vector<1x32xf32>
    %339 = arith.mulf %334, %338 : vector<1x32xf32>
    %cst_262 = arith.constant 0.111111112 : f32
    %340 = vector.broadcast %cst_262 : f32 to vector<1x32xf32>
    %341 = arith.mulf %337, %340 : vector<1x32xf32>
    %342 = arith.mulf %339, %339 : vector<1x32xf32>
    %343 = arith.subf %341, %342 : vector<1x32xf32>
    %344 = vector.broadcast %339 : vector<1x32xf32> to vector<9x32xf32>
    %345 = arith.subf %332, %344 : vector<9x32xf32>
    %cst_263 = arith.constant 9.99999974E-6 : f32
    %346 = vector.broadcast %cst_263 : f32 to vector<1x32xf32>
    %347 = arith.addf %343, %346 : vector<1x32xf32>
    %348 = math.rsqrt %347 : vector<1x32xf32>
    %349 = vector.broadcast %348 : vector<1x32xf32> to vector<9x32xf32>
    %350 = arith.mulf %345, %349 : vector<9x32xf32>
    %c0_264 = arith.constant 0 : index
    %c0_265 = arith.constant 0 : index
    %351 = vector.load %arg29[%c0_264, %c0_265] : memref<9x32xf32, #tpu.memory_space<vmem>>, vector<9x32xf32>
    tpu.vector_store %arg29[%c0_264, %c0_265], %350 {strides = array<i32>} : memref<9x32xf32, #tpu.memory_space<vmem>>, vector<9x32xf32>,
    %c0_266 = arith.constant 0 : index
    %c0_267 = arith.constant 0 : index
    %352 = vector.load %arg29[%c0_266, %c0_267] : memref<9x32xf32, #tpu.memory_space<vmem>>, vector<3x32xf32>
    %c3_268 = arith.constant 3 : index
    %c0_269 = arith.constant 0 : index
    %353 = vector.load %arg29[%c3_268, %c0_269] : memref<9x32xf32, #tpu.memory_space<vmem>>, vector<3x32xf32>
    %354 = arith.maximumf %352, %353 : vector<3x32xf32>
    %c6_270 = arith.constant 6 : index
    %c0_271 = arith.constant 0 : index
    %355 = vector.load %arg29[%c6_270, %c0_271] : memref<9x32xf32, #tpu.memory_space<vmem>>, vector<3x32xf32>
    %356 = arith.maximumf %354, %355 : vector<3x32xf32>
    %c0_272 = arith.constant 0 : index
    %c0_273 = arith.constant 0 : index
    %357 = vector.load %arg30[%c0_272, %c0_273] : memref<3x32xf32, #tpu.memory_space<vmem>>, vector<3x32xf32>
    tpu.vector_store %arg30[%c0_272, %c0_273], %356 {strides = array<i32>} : memref<3x32xf32, #tpu.memory_space<vmem>>, vector<3x32xf32>,
    %c0_274 = arith.constant 0 : index
    %c0_275 = arith.constant 0 : index
    %358 = vector.load %arg30[%c0_274, %c0_275] : memref<3x32xf32, #tpu.memory_space<vmem>>, vector<1x32xf32>
    %c1_276 = arith.constant 1 : index
    %c0_277 = arith.constant 0 : index
    %359 = vector.load %arg30[%c1_276, %c0_277] : memref<3x32xf32, #tpu.memory_space<vmem>>, vector<1x32xf32>
    %360 = arith.maximumf %358, %359 : vector<1x32xf32>
    %c2_278 = arith.constant 2 : index
    %c0_279 = arith.constant 0 : index
    %361 = vector.load %arg30[%c2_278, %c0_279] : memref<3x32xf32, #tpu.memory_space<vmem>>, vector<1x32xf32>
    %362 = arith.maximumf %360, %361 : vector<1x32xf32>
    %c0_280 = arith.constant 0 : index
    %c0_281 = arith.constant 0 : index
    %363 = vector.load %arg11[%c0_280, %c0_281] : memref<1x1xf32, #tpu.memory_space<vmem>>, vector<1x1xf32>
    %cst_282 = arith.constant dense<0.000000e+00> : vector<1x32xf32>
    %364 = tpu.matmul %363, %362, %cst_282 {dimension_numbers = #tpu.dot_dimension_numbers<[1], [0], [0], [1], [0, 0, 1, 1], [], []>} : vector<1x1xf32>, vector<1x32xf32>, vector<1x32xf32> -> vector<1x32xf32>
    %c0_283 = arith.constant 0 : index
    %c0_284 = arith.constant 0 : index
    %365 = vector.load %arg12[%c0_283, %c0_284] : memref<32x16xf32, #tpu.memory_space<vmem>>, vector<32x16xf32>
    %cst_285 = arith.constant dense<0.000000e+00> : vector<1x16xf32>
    %366 = tpu.matmul %364, %365, %cst_285 {dimension_numbers = #tpu.dot_dimension_numbers<[1], [0], [0], [1], [0, 0, 1, 1], [], []>} : vector<1x32xf32>, vector<32x16xf32>, vector<1x16xf32> -> vector<1x16xf32>
    %c0_286 = arith.constant 0 : index
    %c0_287 = arith.constant 0 : index
    %367 = vector.load %arg13[%c0_286, %c0_287] : memref<1x16xf32, #tpu.memory_space<vmem>>, vector<1x16xf32>
    %368 = arith.addf %366, %367 : vector<1x16xf32>
    %cst_288 = arith.constant 0.000000e+00 : f32
    %369 = vector.broadcast %cst_288 : f32 to vector<1x16xf32>
    %370 = arith.cmpf ogt, %368, %369 : vector<1x16xf32>
    %cst_289 = arith.constant 0.00999999977 : f32
    %371 = vector.broadcast %cst_289 : f32 to vector<1x16xf32>
    %372 = arith.mulf %371, %368 : vector<1x16xf32>
    %373 = arith.select %370, %368, %372 : vector<1x16xi1>, vector<1x16xf32>
    %c0_290 = arith.constant 0 : index
    %c0_291 = arith.constant 0 : index
    %374 = vector.load %arg14[%c0_290, %c0_291] : memref<16x8xf32, #tpu.memory_space<vmem>>, vector<16x8xf32>
    %cst_292 = arith.constant dense<0.000000e+00> : vector<1x8xf32>
    %375 = tpu.matmul %373, %374, %cst_292 {dimension_numbers = #tpu.dot_dimension_numbers<[1], [0], [0], [1], [0, 0, 1, 1], [], []>} : vector<1x16xf32>, vector<16x8xf32>, vector<1x8xf32> -> vector<1x8xf32>
    %c0_293 = arith.constant 0 : index
    %c0_294 = arith.constant 0 : index
    %376 = vector.load %arg15[%c0_293, %c0_294] : memref<1x8xf32, #tpu.memory_space<vmem>>, vector<1x8xf32>
    %377 = arith.addf %375, %376 : vector<1x8xf32>
    %cst_295 = arith.constant 0.000000e+00 : f32
    %378 = vector.broadcast %cst_295 : f32 to vector<1x8xf32>
    %379 = arith.cmpf ogt, %377, %378 : vector<1x8xf32>
    %cst_296 = arith.constant 0.00999999977 : f32
    %380 = vector.broadcast %cst_296 : f32 to vector<1x8xf32>
    %381 = arith.mulf %380, %377 : vector<1x8xf32>
    %382 = arith.select %379, %377, %381 : vector<1x8xi1>, vector<1x8xf32>
    %c0_297 = arith.constant 0 : index
    %c0_298 = arith.constant 0 : index
    %c0_299 = arith.constant 0 : index
    %383 = vector.load %arg2[%c0_297, %c0_298, %c0_299] : memref<1x1x6xf32, #tpu.memory_space<vmem>>, vector<1x1x6xf32>
    %384 = vector.shape_cast %383 : vector<1x1x6xf32> to vector<1x6xf32>
    %c0_300 = arith.constant 0 : index
    %c0_301 = arith.constant 0 : index
    %385 = vector.load %arg16[%c0_300, %c0_301] : memref<8x8xf32, #tpu.memory_space<vmem>>, vector<8x8xf32>
    %cst_302 = arith.constant dense<0.000000e+00> : vector<1x8xf32>
    %386 = tpu.matmul %382, %385, %cst_302 {dimension_numbers = #tpu.dot_dimension_numbers<[1], [0], [0], [1], [0, 0, 1, 1], [], []>} : vector<1x8xf32>, vector<8x8xf32>, vector<1x8xf32> -> vector<1x8xf32>
    %c0_303 = arith.constant 0 : index
    %c0_304 = arith.constant 0 : index
    %387 = vector.load %arg17[%c0_303, %c0_304] : memref<6x8xf32, #tpu.memory_space<vmem>>, vector<6x8xf32>
    %cst_305 = arith.constant dense<0.000000e+00> : vector<1x8xf32>
    %388 = tpu.matmul %384, %387, %cst_305 {dimension_numbers = #tpu.dot_dimension_numbers<[1], [0], [0], [1], [0, 0, 1, 1], [], []>} : vector<1x6xf32>, vector<6x8xf32>, vector<1x8xf32> -> vector<1x8xf32>
    %389 = arith.addf %386, %388 : vector<1x8xf32>
    %c0_306 = arith.constant 0 : index
    %c0_307 = arith.constant 0 : index
    %390 = vector.load %arg18[%c0_306, %c0_307] : memref<1x8xf32, #tpu.memory_space<vmem>>, vector<1x8xf32>
    %391 = arith.addf %389, %390 : vector<1x8xf32>
    %cst_308 = arith.constant 0.000000e+00 : f32
    %392 = vector.broadcast %cst_308 : f32 to vector<1x8xf32>
    %393 = arith.cmpf ogt, %391, %392 : vector<1x8xf32>
    %cst_309 = arith.constant 0.00999999977 : f32
    %394 = vector.broadcast %cst_309 : f32 to vector<1x8xf32>
    %395 = arith.mulf %394, %391 : vector<1x8xf32>
    %396 = arith.select %393, %391, %395 : vector<1x8xi1>, vector<1x8xf32>
    %c0_310 = arith.constant 0 : index
    %c0_311 = arith.constant 0 : index
    %397 = vector.load %arg19[%c0_310, %c0_311] : memref<8x2xf32, #tpu.memory_space<vmem>>, vector<8x2xf32>
    %cst_312 = arith.constant dense<0.000000e+00> : vector<1x2xf32>
    %398 = tpu.matmul %396, %397, %cst_312 {dimension_numbers = #tpu.dot_dimension_numbers<[1], [0], [0], [1], [0, 0, 1, 1], [], []>} : vector<1x8xf32>, vector<8x2xf32>, vector<1x2xf32> -> vector<1x2xf32>
    %c0_313 = arith.constant 0 : index
    %c0_314 = arith.constant 0 : index
    %399 = vector.load %arg20[%c0_313, %c0_314] : memref<1x2xf32, #tpu.memory_space<vmem>>, vector<1x2xf32>
    %400 = arith.addf %398, %399 : vector<1x2xf32>
    %c0_315 = arith.constant 0 : index
    %c0_316 = arith.constant 0 : index
    %c0_317 = arith.constant 0 : index
    %401 = vector.load %arg21[%c0_315, %c0_316, %c0_317] : memref<1x1x2xf32, #tpu.memory_space<vmem>>, vector<1x1x2xf32>
    %402 = vector.shape_cast %401 : vector<1x1x2xf32> to vector<1x2xf32>
    %403 = vector.shape_cast %400 : vector<1x2xf32> to vector<1x1x2xf32>
    tpu.vector_store %arg21[%c0_315, %c0_316, %c0_317], %403 {strides = array<i32>} : memref<1x1x2xf32, #tpu.memory_space<vmem>>, vector<1x1x2xf32>,
    return
  }
  func.func @transform_0(%arg0: i32) -> (i32, i32, i32) {
    %c0_i32 = arith.constant 0 : i32
    %c0_i32_0 = arith.constant 0 : i32
    %c0_i32_1 = arith.constant 0 : i32
    return %arg0, %c0_i32, %c0_i32_0 : i32, i32, i32
  }
  func.func @transform_1(%arg0: i32) -> (i32, i32, i32) {
    %c0_i32 = arith.constant 0 : i32
    %c0_i32_0 = arith.constant 0 : i32
    %c0_i32_1 = arith.constant 0 : i32
    return %arg0, %c0_i32, %c0_i32_0 : i32, i32, i32
  }
  func.func @transform_2(%arg0: i32) -> (i32, i32, i32) {
    %c0_i32 = arith.constant 0 : i32
    %c0_i32_0 = arith.constant 0 : i32
    %c0_i32_1 = arith.constant 0 : i32
    %c0_i32_2 = arith.constant 0 : i32
    return %c0_i32, %c0_i32_0, %c0_i32_1 : i32, i32, i32
  }
  func.func @transform_3(%arg0: i32) -> (i32, i32) {
    %c0_i32 = arith.constant 0 : i32
    %c0_i32_0 = arith.constant 0 : i32
    %c0_i32_1 = arith.constant 0 : i32
    return %c0_i32, %c0_i32_0 : i32, i32
  }
  func.func @transform_4(%arg0: i32) -> (i32, i32) {
    %c0_i32 = arith.constant 0 : i32
    %c0_i32_0 = arith.constant 0 : i32
    %c0_i32_1 = arith.constant 0 : i32
    return %c0_i32, %c0_i32_0 : i32, i32
  }
  func.func @transform_5(%arg0: i32) -> (i32, i32, i32) {
    %c0_i32 = arith.constant 0 : i32
    %c0_i32_0 = arith.constant 0 : i32
    %c0_i32_1 = arith.constant 0 : i32
    %c0_i32_2 = arith.constant 0 : i32
    return %c0_i32, %c0_i32_0, %c0_i32_1 : i32, i32, i32
  }
  func.func @transform_6(%arg0: i32) -> (i32, i32) {
    %c0_i32 = arith.constant 0 : i32
    %c0_i32_0 = arith.constant 0 : i32
    %c0_i32_1 = arith.constant 0 : i32
    return %c0_i32, %c0_i32_0 : i32, i32
  }
  func.func @transform_7(%arg0: i32) -> (i32, i32) {
    %c0_i32 = arith.constant 0 : i32
    %c0_i32_0 = arith.constant 0 : i32
    %c0_i32_1 = arith.constant 0 : i32
    return %c0_i32, %c0_i32_0 : i32, i32
  }
  func.func @transform_8(%arg0: i32) -> (i32, i32, i32) {
    %c0_i32 = arith.constant 0 : i32
    %c0_i32_0 = arith.constant 0 : i32
    %c0_i32_1 = arith.constant 0 : i32
    %c0_i32_2 = arith.constant 0 : i32
    return %c0_i32, %c0_i32_0, %c0_i32_1 : i32, i32, i32
  }
  func.func @transform_9(%arg0: i32) -> (i32, i32) {
    %c0_i32 = arith.constant 0 : i32
    %c0_i32_0 = arith.constant 0 : i32
    %c0_i32_1 = arith.constant 0 : i32
    return %c0_i32, %c0_i32_0 : i32, i32
  }
  func.func @transform_10(%arg0: i32) -> (i32, i32) {
    %c0_i32 = arith.constant 0 : i32
    %c0_i32_0 = arith.constant 0 : i32
    %c0_i32_1 = arith.constant 0 : i32
    return %c0_i32, %c0_i32_0 : i32, i32
  }
  func.func @transform_11(%arg0: i32) -> (i32, i32) {
    %c0_i32 = arith.constant 0 : i32
    %c0_i32_0 = arith.constant 0 : i32
    %c0_i32_1 = arith.constant 0 : i32
    return %c0_i32, %c0_i32_0 : i32, i32
  }
  func.func @transform_12(%arg0: i32) -> (i32, i32) {
    %c0_i32 = arith.constant 0 : i32
    %c0_i32_0 = arith.constant 0 : i32
    %c0_i32_1 = arith.constant 0 : i32
    return %c0_i32, %c0_i32_0 : i32, i32
  }
  func.func @transform_13(%arg0: i32) -> (i32, i32) {
    %c0_i32 = arith.constant 0 : i32
    %c0_i32_0 = arith.constant 0 : i32
    %c0_i32_1 = arith.constant 0 : i32
    return %c0_i32, %c0_i32_0 : i32, i32
  }
  func.func @transform_14(%arg0: i32) -> (i32, i32) {
    %c0_i32 = arith.constant 0 : i32
    %c0_i32_0 = arith.constant 0 : i32
    %c0_i32_1 = arith.constant 0 : i32
    return %c0_i32, %c0_i32_0 : i32, i32
  }
  func.func @transform_15(%arg0: i32) -> (i32, i32) {
    %c0_i32 = arith.constant 0 : i32
    %c0_i32_0 = arith.constant 0 : i32
    %c0_i32_1 = arith.constant 0 : i32
    return %c0_i32, %c0_i32_0 : i32, i32
  }
  func.func @transform_16(%arg0: i32) -> (i32, i32) {
    %c0_i32 = arith.constant 0 : i32
    %c0_i32_0 = arith.constant 0 : i32
    %c0_i32_1 = arith.constant 0 : i32
    return %c0_i32, %c0_i32_0 : i32, i32
  }
  func.func @transform_17(%arg0: i32) -> (i32, i32) {
    %c0_i32 = arith.constant 0 : i32
    %c0_i32_0 = arith.constant 0 : i32
    %c0_i32_1 = arith.constant 0 : i32
    return %c0_i32, %c0_i32_0 : i32, i32
  }
  func.func @transform_18(%arg0: i32) -> (i32, i32) {
    %c0_i32 = arith.constant 0 : i32
    %c0_i32_0 = arith.constant 0 : i32
    %c0_i32_1 = arith.constant 0 : i32
    return %c0_i32, %c0_i32_0 : i32, i32
  }
  func.func @transform_19(%arg0: i32) -> (i32, i32) {
    %c0_i32 = arith.constant 0 : i32
    %c0_i32_0 = arith.constant 0 : i32
    %c0_i32_1 = arith.constant 0 : i32
    return %c0_i32, %c0_i32_0 : i32, i32
  }
  func.func @transform_20(%arg0: i32) -> (i32, i32, i32) {
    %c0_i32 = arith.constant 0 : i32
    %c0_i32_0 = arith.constant 0 : i32
    %c0_i32_1 = arith.constant 0 : i32
    return %arg0, %c0_i32, %c0_i32_0 : i32, i32, i32
  }
}

</mosaic_0001>

<llo_original>
// kernel: baseline_forward.1
$region0: #{baseline_forward.1}
  #allocation0 [shape = 'u32[]', space=smem, size = 0x4, offset = 0x4, fixed_abs, tag = 'smem constant byte address 0x4 - core index']
  #allocation1 [shape = 'u32[144,128]{1,0:T(1,128)}', space=vmem, size = 0x12000, scoped, tag = 'internal scratch']
  #allocation2 [shape = 'f32[290,4]{1,0:T(8,128)}', space=vmem, size = 0x25000, scoped, tag = 'scratch operand']
  #allocation3 [shape = 'f32[256,8]{1,0:T(8,128)}', space=vmem, size = 0x20000, scoped, tag = 'scratch operand']
  #allocation4 [shape = 'f32[224,8]{1,0:T(8,128)}', space=vmem, size = 0x1c000, scoped, tag = 'scratch operand']
  #allocation5 [shape = 'f32[65,8]{1,0:T(8,128)}', space=vmem, size = 0x9000, scoped, tag = 'scratch operand']
  #allocation6 [shape = 'f32[49,16]{1,0:T(8,128)}', space=vmem, size = 0x7000, scoped, tag = 'scratch operand']
  #allocation7 [shape = 'f32[35,16]{1,0:T(8,128)}', space=vmem, size = 0x5000, scoped, tag = 'scratch operand']
  #allocation8 [shape = 'f32[17,16]{1,0:T(8,128)}', space=vmem, size = 0x3000, scoped, tag = 'scratch operand']
  #allocation9 [shape = 'f32[9,32]{1,0:T(8,128)}', space=vmem, size = 0x2000, scoped, tag = 'scratch operand']
  #allocation10 [shape = 'f32[3,32]{1,0:T(4,128)}', space=vmem, size = 0x800, scoped, tag = 'scratch operand']
  #allocation11 [shape = 'f32[1,1]{1,0:T(1,128)S(1)}', space=vmem, size = 0x200, scoped, tag = 'scoped memory for baseline_forward.1']
  %s0 = inlined_call_operand.vmem [shape: f32[2,256,4], index: 0, kind: input, shape index: {}]
  %s1 = inlined_call_operand.vmem [shape: f32[2,1,6], index: 1, kind: input, shape index: {}]
  %s2 = inlined_call_operand.vmem [shape: f32[9,4,8], index: 2, kind: input, shape index: {}]
  %s3 = inlined_call_operand.vmem [shape: f32[1,8], index: 3, kind: input, shape index: {}]
  %s4 = inlined_call_operand.vmem [shape: f32[49,222], index: 4, kind: input, shape index: {}]
  %s5 = inlined_call_operand.vmem [shape: f32[9,8,16], index: 5, kind: input, shape index: {}]
  %s6 = inlined_call_operand.vmem [shape: f32[1,16], index: 6, kind: input, shape index: {}]
  %s7 = inlined_call_operand.vmem [shape: f32[9,33], index: 7, kind: input, shape index: {}]
  %s8 = inlined_call_operand.vmem [shape: f32[9,16,32], index: 8, kind: input, shape index: {}]
  %s9 = inlined_call_operand.vmem [shape: f32[1,32], index: 9, kind: input, shape index: {}]
  %s10 = inlined_call_operand.<no memory space> [shape: f32[1,1], index: 10, kind: input, shape index: {}]
  %s11 = inlined_call_operand.vmem [shape: f32[32,16], index: 11, kind: input, shape index: {}]
  %s12 = inlined_call_operand.vmem [shape: f32[1,16], index: 12, kind: input, shape index: {}]
  %s13 = inlined_call_operand.vmem [shape: f32[16,8], index: 13, kind: input, shape index: {}]
  %s14 = inlined_call_operand.vmem [shape: f32[1,8], index: 14, kind: input, shape index: {}]
  %s15 = inlined_call_operand.vmem [shape: f32[8,8], index: 15, kind: input, shape index: {}]
  %s16 = inlined_call_operand.vmem [shape: f32[6,8], index: 16, kind: input, shape index: {}]
  %s17 = inlined_call_operand.vmem [shape: f32[1,8], index: 17, kind: input, shape index: {}]
  %s18 = inlined_call_operand.vmem [shape: f32[8,2], index: 18, kind: input, shape index: {}]
  %s19 = inlined_call_operand.vmem [shape: f32[1,2], index: 19, kind: input, shape index: {}]
  %s20 = inlined_call_operand.hbm [shape: f32[2,1,2], index: 20, kind: output, shape index: {}]
  %s21 = sld [smem:[#allocation0]]
  $region113: #{baseline_forward.1} parent=0
    _
  %s23 = ssub.s32 1, %s21
  %s24 = scalar_select 0, %s23, %s21
  %v25 = vstv %s10
  %26 = vst [vmem:[#allocation11] sm:$0x1] %v25
  $region1: #{baseline_forward.1} parent=0
    #allocation12 [shape = 'u8[1024]{0}', space=vmem, size = 0x400, scoped, tag = 'output window, operand 0']
    #allocation13 [shape = 's32[2]{0}', space=sflag, size = 0x8, scoped, tag = 'scoped memory for baseline_forward.1']
    %27 = vsyncpa [#allocation13], 0
    %s28 = scalar_lea.sflag [#allocation13], 1
    %29 = vsyncpa %s28, 0
    loop: start=0, step=1, limit=4
    $region2: #{baseline_forward.1} parent=1 // loop_pre_header
      _
    $region3: #{baseline_forward.1} parent=1 // loop_header
      %s31 = sphi 0, %s35
      %p32 = scmp.ge.s32.totalorder %s31, 4
      %s41 = sphi 0, %s43
      %s44 = sphi 0, %s41
      %s45 = sphi 0, %s44
      %s61 = sphi 0, %s45
      %s67 = sphi 0, %s69
      %s70 = sphi 0, %s67
      %s71 = sphi 0, %s70
      %s87 = sphi 0, %s71
      %s91 = sphi 0, %s91
      %s93 = sphi 0, %s91
      %s94 = sphi 0, %s93
      %s108 = sphi 0, %s94
      %s112 = sphi 0, %s112
      %s114 = sphi 0, %s112
      %s115 = sphi 0, %s114
      %s129 = sphi 0, %s115
      %s133 = sphi 0, %s133
      %s135 = sphi 0, %s133
      %s136 = sphi 0, %s135
      %s150 = sphi 0, %s136
      %s154 = sphi 0, %s154
      %s156 = sphi 0, %s154
      %s157 = sphi 0, %s156
      %s171 = sphi 0, %s157
      %s175 = sphi 0, %s175
      %s177 = sphi 0, %s175
      %s178 = sphi 0, %s177
      %s192 = sphi 0, %s178
      %s196 = sphi 0, %s196
      %s198 = sphi 0, %s196
      %s199 = sphi 0, %s198
      %s213 = sphi 0, %s199
      %s217 = sphi 0, %s217
      %s219 = sphi 0, %s217
      %s220 = sphi 0, %s219
      %s234 = sphi 0, %s220
      %s238 = sphi 0, %s238
      %s240 = sphi 0, %s238
      %s241 = sphi 0, %s240
      %s255 = sphi 0, %s241
      %s259 = sphi 0, %s259
      %s261 = sphi 0, %s259
      %s262 = sphi 0, %s261
      %s276 = sphi 0, %s262
      %s280 = sphi 0, %s280
      %s282 = sphi 0, %s280
      %s283 = sphi 0, %s282
      %s297 = sphi 0, %s283
      %s301 = sphi 0, %s301
      %s303 = sphi 0, %s301
      %s304 = sphi 0, %s303
      %s318 = sphi 0, %s304
      %s322 = sphi 0, %s322
      %s324 = sphi 0, %s322
      %s325 = sphi 0, %s324
      %s339 = sphi 0, %s325
      %s343 = sphi 0, %s343
      %s345 = sphi 0, %s343
      %s346 = sphi 0, %s345
      %s360 = sphi 0, %s346
      %s364 = sphi 0, %s364
      %s366 = sphi 0, %s364
      %s367 = sphi 0, %s366
      %s381 = sphi 0, %s367
      %s385 = sphi 0, %s385
      %s387 = sphi 0, %s385
      %s388 = sphi 0, %s387
      %s402 = sphi 0, %s388
      %s406 = sphi 0, %s406
      %s408 = sphi 0, %s406
      %s409 = sphi 0, %s408
      %s423 = sphi 0, %s409
      %s427 = sphi 0, %s427
      %s429 = sphi 0, %s427
      %s430 = sphi 0, %s429
      %s444 = sphi 0, %s430
      %s448 = sphi 0, %s448
      %s450 = sphi 0, %s448
      %s451 = sphi 0, %s450
      %s465 = sphi 0, %s451
      %s471 = sphi 0, %s473
      %s474 = sphi 0, %s471
      %s475 = sphi 0, %s474
      %s491 = sphi 0, %s475
    $region4: #{baseline_forward.1} parent=1 // loop_header_branch
      %34 = sbr.rel (%p32) target = $region8
    $region5: #{baseline_forward.1} parent=1 // loop_body
      %s36 = ssub.s32 %s31, 1
      %s37 = ssub.s32 %s31, 2
      %s38 = sadd.s32 %s31, 1
      %s39 = ssub.s32 %s31, %s38
      %p40 = scmp.eq.s32.totalorder %s39, 0
      %s42 = sadd.s32 %s41, 1
      %s43 = scalar_select %p40, %s41, %s42
      %p46 = pneg %p40
      %p47 = scmp.eq.s32.totalorder %s31, 1
      %p48 = por %p46, %p47
      %p49 = scmp.ne.s32.totalorder %s41, %s44
      %p50 = scmp.eq.s32.totalorder %s31, 0
      %p51 = por %p49, %p50
      %p52 = scmp.ne.s32.totalorder %s41, %s44
      %p53 = scmp.eq.s32.totalorder %s36, 1
      %p54 = por %p52, %p53
      %p55 = scmp.ne.s32.totalorder %s44, %s45
      %p56 = scmp.eq.s32.totalorder %s36, 0
      %p57 = por %p55, %p56
      %p58 = scmp.ne.s32.totalorder %s44, %s45
      %p59 = scmp.eq.s32.totalorder %s37, 1
      %p60 = por %p58, %p59
      %p62 = scmp.ne.s32.totalorder %s45, %s61
      %p63 = scmp.eq.s32.totalorder %s37, 0
      %p64 = por %p62, %p63
      %s65 = ssub.s32 %s31, %s38
      %p66 = scmp.eq.s32.totalorder %s65, 0
      %s68 = sadd.s32 %s67, 1
      %s69 = scalar_select %p66, %s67, %s68
      %p72 = pneg %p66
      %p73 = scmp.eq.s32.totalorder %s31, 1
      %p74 = por %p72, %p73
      %p75 = scmp.ne.s32.totalorder %s67, %s70
      %p76 = scmp.eq.s32.totalorder %s31, 0
      %p77 = por %p75, %p76
      %p78 = scmp.ne.s32.totalorder %s67, %s70
      %p79 = scmp.eq.s32.totalorder %s36, 1
      %p80 = por %p78, %p79
      %p81 = scmp.ne.s32.totalorder %s70, %s71
      %p82 = scmp.eq.s32.totalorder %s36, 0
      %p83 = por %p81, %p82
      %p84 = scmp.ne.s32.totalorder %s70, %s71
      %p85 = scmp.eq.s32.totalorder %s37, 1
      %p86 = por %p84, %p85
      %p88 = scmp.ne.s32.totalorder %s71, %s87
      %p89 = scmp.eq.s32.totalorder %s37, 0
      %p90 = por %p88, %p89
      %s92 = sadd.s32 %s91, 1
      %p95 = scmp.eq.s32.totalorder %s31, 1
      %p96 = scmp.ne.s32.totalorder %s91, %s93
      %p97 = scmp.eq.s32.totalorder %s31, 0
      %p98 = por %p96, %p97
      %p99 = scmp.ne.s32.totalorder %s91, %s93
      %p100 = scmp.eq.s32.totalorder %s36, 1
      %p101 = por %p99, %p100
      %p102 = scmp.ne.s32.totalorder %s93, %s94
      %p103 = scmp.eq.s32.totalorder %s36, 0
      %p104 = por %p102, %p103
      %p105 = scmp.ne.s32.totalorder %s93, %s94
      %p106 = scmp.eq.s32.totalorder %s37, 1
      %p107 = por %p105, %p106
      %p109 = scmp.ne.s32.totalorder %s94, %s108
      %p110 = scmp.eq.s32.totalorder %s37, 0
      %p111 = por %p109, %p110
      %s113 = sadd.s32 %s112, 1
      %p116 = scmp.eq.s32.totalorder %s31, 1
      %p117 = scmp.ne.s32.totalorder %s112, %s114
      %p118 = scmp.eq.s32.totalorder %s31, 0
      %p119 = por %p117, %p118
      %p120 = scmp.ne.s32.totalorder %s112, %s114
      %p121 = scmp.eq.s32.totalorder %s36, 1
      %p122 = por %p120, %p121
      %p123 = scmp.ne.s32.totalorder %s114, %s115
      %p124 = scmp.eq.s32.totalorder %s36, 0
      %p125 = por %p123, %p124
      %p126 = scmp.ne.s32.totalorder %s114, %s115
      %p127 = scmp.eq.s32.totalorder %s37, 1
      %p128 = por %p126, %p127
      %p130 = scmp.ne.s32.totalorder %s115, %s129
      %p131 = scmp.eq.s32.totalorder %s37, 0
      %p132 = por %p130, %p131
      %s134 = sadd.s32 %s133, 1
      %p137 = scmp.eq.s32.totalorder %s31, 1
      %p138 = scmp.ne.s32.totalorder %s133, %s135
      %p139 = scmp.eq.s32.totalorder %s31, 0
      %p140 = por %p138, %p139
      %p141 = scmp.ne.s32.totalorder %s133, %s135
      %p142 = scmp.eq.s32.totalorder %s36, 1
      %p143 = por %p141, %p142
      %p144 = scmp.ne.s32.totalorder %s135, %s136
      %p145 = scmp.eq.s32.totalorder %s36, 0
      %p146 = por %p144, %p145
      %p147 = scmp.ne.s32.totalorder %s135, %s136
      %p148 = scmp.eq.s32.totalorder %s37, 1
      %p149 = por %p147, %p148
      %p151 = scmp.ne.s32.totalorder %s136, %s150
      %p152 = scmp.eq.s32.totalorder %s37, 0
      %p153 = por %p151, %p152
      %s155 = sadd.s32 %s154, 1
      %p158 = scmp.eq.s32.totalorder %s31, 1
      %p159 = scmp.ne.s32.totalorder %s154, %s156
      %p160 = scmp.eq.s32.totalorder %s31, 0
      %p161 = por %p159, %p160
      %p162 = scmp.ne.s32.totalorder %s154, %s156
      %p163 = scmp.eq.s32.totalorder %s36, 1
      %p164 = por %p162, %p163
      %p165 = scmp.ne.s32.totalorder %s156, %s157
      %p166 = scmp.eq.s32.totalorder %s36, 0
      %p167 = por %p165, %p166
      %p168 = scmp.ne.s32.totalorder %s156, %s157
      %p169 = scmp.eq.s32.totalorder %s37, 1
      %p170 = por %p168, %p169
      %p172 = scmp.ne.s32.totalorder %s157, %s171
      %p173 = scmp.eq.s32.totalorder %s37, 0
      %p174 = por %p172, %p173
      %s176 = sadd.s32 %s175, 1
      %p179 = scmp.eq.s32.totalorder %s31, 1
      %p180 = scmp.ne.s32.totalorder %s175, %s177
      %p181 = scmp.eq.s32.totalorder %s31, 0
      %p182 = por %p180, %p181
      %p183 = scmp.ne.s32.totalorder %s175, %s177
      %p184 = scmp.eq.s32.totalorder %s36, 1
      %p185 = por %p183, %p184
      %p186 = scmp.ne.s32.totalorder %s177, %s178
      %p187 = scmp.eq.s32.totalorder %s36, 0
      %p188 = por %p186, %p187
      %p189 = scmp.ne.s32.totalorder %s177, %s178
      %p190 = scmp.eq.s32.totalorder %s37, 1
      %p191 = por %p189, %p190
      %p193 = scmp.ne.s32.totalorder %s178, %s192
      %p194 = scmp.eq.s32.totalorder %s37, 0
      %p195 = por %p193, %p194
      %s197 = sadd.s32 %s196, 1
      %p200 = scmp.eq.s32.totalorder %s31, 1
      %p201 = scmp.ne.s32.totalorder %s196, %s198
      %p202 = scmp.eq.s32.totalorder %s31, 0
      %p203 = por %p201, %p202
      %p204 = scmp.ne.s32.totalorder %s196, %s198
      %p205 = scmp.eq.s32.totalorder %s36, 1
      %p206 = por %p204, %p205
      %p207 = scmp.ne.s32.totalorder %s198, %s199
      %p208 = scmp.eq.s32.totalorder %s36, 0
      %p209 = por %p207, %p208
      %p210 = scmp.ne.s32.totalorder %s198, %s199
      %p211 = scmp.eq.s32.totalorder %s37, 1
      %p212 = por %p210, %p211
      %p214 = scmp.ne.s32.totalorder %s199, %s213
      %p215 = scmp.eq.s32.totalorder %s37, 0
      %p216 = por %p214, %p215
      %s218 = sadd.s32 %s217, 1
      %p221 = scmp.eq.s32.totalorder %s31, 1
      %p222 = scmp.ne.s32.totalorder %s217, %s219
      %p223 = scmp.eq.s32.totalorder %s31, 0
      %p224 = por %p222, %p223
      %p225 = scmp.ne.s32.totalorder %s217, %s219
      %p226 = scmp.eq.s32.totalorder %s36, 1
      %p227 = por %p225, %p226
      %p228 = scmp.ne.s32.totalorder %s219, %s220
      %p229 = scmp.eq.s32.totalorder %s36, 0
      %p230 = por %p228, %p229
      %p231 = scmp.ne.s32.totalorder %s219, %s220
      %p232 = scmp.eq.s32.totalorder %s37, 1
      %p233 = por %p231, %p232
      %p235 = scmp.ne.s32.totalorder %s220, %s234
      %p236 = scmp.eq.s32.totalorder %s37, 0
      %p237 = por %p235, %p236
      %s239 = sadd.s32 %s238, 1
      %p242 = scmp.eq.s32.totalorder %s31, 1
      %p243 = scmp.ne.s32.totalorder %s238, %s240
      %p244 = scmp.eq.s32.totalorder %s31, 0
      %p245 = por %p243, %p244
      %p246 = scmp.ne.s32.totalorder %s238, %s240
      %p247 = scmp.eq.s32.totalorder %s36, 1
      %p248 = por %p246, %p247
      %p249 = scmp.ne.s32.totalorder %s240, %s241
      %p250 = scmp.eq.s32.totalorder %s36, 0
      %p251 = por %p249, %p250
      %p252 = scmp.ne.s32.totalorder %s240, %s241
      %p253 = scmp.eq.s32.totalorder %s37, 1
      %p254 = por %p252, %p253
      %p256 = scmp.ne.s32.totalorder %s241, %s255
      %p257 = scmp.eq.s32.totalorder %s37, 0
      %p258 = por %p256, %p257
      %s260 = sadd.s32 %s259, 1
      %p263 = scmp.eq.s32.totalorder %s31, 1
      %p264 = scmp.ne.s32.totalorder %s259, %s261
      %p265 = scmp.eq.s32.totalorder %s31, 0
      %p266 = por %p264, %p265
      %p267 = scmp.ne.s32.totalorder %s259, %s261
      %p268 = scmp.eq.s32.totalorder %s36, 1
      %p269 = por %p267, %p268
      %p270 = scmp.ne.s32.totalorder %s261, %s262
      %p271 = scmp.eq.s32.totalorder %s36, 0
      %p272 = por %p270, %p271
      %p273 = scmp.ne.s32.totalorder %s261, %s262
      %p274 = scmp.eq.s32.totalorder %s37, 1
      %p275 = por %p273, %p274
      %p277 = scmp.ne.s32.totalorder %s262, %s276
      %p278 = scmp.eq.s32.totalorder %s37, 0
      %p279 = por %p277, %p278
      %s281 = sadd.s32 %s280, 1
      %p284 = scmp.eq.s32.totalorder %s31, 1
      %p285 = scmp.ne.s32.totalorder %s280, %s282
      %p286 = scmp.eq.s32.totalorder %s31, 0
      %p287 = por %p285, %p286
      %p288 = scmp.ne.s32.totalorder %s280, %s282
      %p289 = scmp.eq.s32.totalorder %s36, 1
      %p290 = por %p288, %p289
      %p291 = scmp.ne.s32.totalorder %s282, %s283
      %p292 = scmp.eq.s32.totalorder %s36, 0
      %p293 = por %p291, %p292
      %p294 = scmp.ne.s32.totalorder %s282, %s283
      %p295 = scmp.eq.s32.totalorder %s37, 1
      %p296 = por %p294, %p295
      %p298 = scmp.ne.s32.totalorder %s283, %s297
      %p299 = scmp.eq.s32.totalorder %s37, 0
      %p300 = por %p298, %p299
      %s302 = sadd.s32 %s301, 1
      %p305 = scmp.eq.s32.totalorder %s31, 1
      %p306 = scmp.ne.s32.totalorder %s301, %s303
      %p307 = scmp.eq.s32.totalorder %s31, 0
      %p308 = por %p306, %p307
      %p309 = scmp.ne.s32.totalorder %s301, %s303
      %p310 = scmp.eq.s32.totalorder %s36, 1
      %p311 = por %p309, %p310
      %p312 = scmp.ne.s32.totalorder %s303, %s304
      %p313 = scmp.eq.s32.totalorder %s36, 0
      %p314 = por %p312, %p313
      %p315 = scmp.ne.s32.totalorder %s303, %s304
      %p316 = scmp.eq.s32.totalorder %s37, 1
      %p317 = por %p315, %p316
      %p319 = scmp.ne.s32.totalorder %s304, %s318
      %p320 = scmp.eq.s32.totalorder %s37, 0
      %p321 = por %p319, %p320
      %s323 = sadd.s32 %s322, 1
      %p326 = scmp.eq.s32.totalorder %s31, 1
      %p327 = scmp.ne.s32.totalorder %s322, %s324
      %p328 = scmp.eq.s32.totalorder %s31, 0
      %p329 = por %p327, %p328
      %p330 = scmp.ne.s32.totalorder %s322, %s324
      %p331 = scmp.eq.s32.totalorder %s36, 1
      %p332 = por %p330, %p331
      %p333 = scmp.ne.s32.totalorder %s324, %s325
      %p334 = scmp.eq.s32.totalorder %s36, 0
      %p335 = por %p333, %p334
      %p336 = scmp.ne.s32.totalorder %s324, %s325
      %p337 = scmp.eq.s32.totalorder %s37, 1
      %p338 = por %p336, %p337
      %p340 = scmp.ne.s32.totalorder %s325, %s339
      %p341 = scmp.eq.s32.totalorder %s37, 0
      %p342 = por %p340, %p341
      %s344 = sadd.s32 %s343, 1
      %p347 = scmp.eq.s32.totalorder %s31, 1
      %p348 = scmp.ne.s32.totalorder %s343, %s345
      %p349 = scmp.eq.s32.totalorder %s31, 0
      %p350 = por %p348, %p349
      %p351 = scmp.ne.s32.totalorder %s343, %s345
      %p352 = scmp.eq.s32.totalorder %s36, 1
      %p353 = por %p351, %p352
      %p354 = scmp.ne.s32.totalorder %s345, %s346
      %p355 = scmp.eq.s32.totalorder %s36, 0
      %p356 = por %p354, %p355
      %p357 = scmp.ne.s32.totalorder %s345, %s346
      %p358 = scmp.eq.s32.totalorder %s37, 1
      %p359 = por %p357, %p358
      %p361 = scmp.ne.s32.totalorder %s346, %s360
      %p362 = scmp.eq.s32.totalorder %s37, 0
      %p363 = por %p361, %p362
      %s365 = sadd.s32 %s364, 1
      %p368 = scmp.eq.s32.totalorder %s31, 1
      %p369 = scmp.ne.s32.totalorder %s364, %s366
      %p370 = scmp.eq.s32.totalorder %s31, 0
      %p371 = por %p369, %p370
      %p372 = scmp.ne.s32.totalorder %s364, %s366
      %p373 = scmp.eq.s32.totalorder %s36, 1
      %p374 = por %p372, %p373
      %p375 = scmp.ne.s32.totalorder %s366, %s367
      %p376 = scmp.eq.s32.totalorder %s36, 0
      %p377 = por %p375, %p376
      %p378 = scmp.ne.s32.totalorder %s366, %s367
      %p379 = scmp.eq.s32.totalorder %s37, 1
      %p380 = por %p378, %p379
      %p382 = scmp.ne.s32.totalorder %s367, %s381
      %p383 = scmp.eq.s32.totalorder %s37, 0
      %p384 = por %p382, %p383
      %s386 = sadd.s32 %s385, 1
      %p389 = scmp.eq.s32.totalorder %s31, 1
      %p390 = scmp.ne.s32.totalorder %s385, %s387
      %p391 = scmp.eq.s32.totalorder %s31, 0
      %p392 = por %p390, %p391
      %p393 = scmp.ne.s32.totalorder %s385, %s387
      %p394 = scmp.eq.s32.totalorder %s36, 1
      %p395 = por %p393, %p394
      %p396 = scmp.ne.s32.totalorder %s387, %s388
      %p397 = scmp.eq.s32.totalorder %s36, 0
      %p398 = por %p396, %p397
      %p399 = scmp.ne.s32.totalorder %s387, %s388
      %p400 = scmp.eq.s32.totalorder %s37, 1
      %p401 = por %p399, %p400
      %p403 = scmp.ne.s32.totalorder %s388, %s402
      %p404 = scmp.eq.s32.totalorder %s37, 0
      %p405 = por %p403, %p404
      %s407 = sadd.s32 %s406, 1
      %p410 = scmp.eq.s32.totalorder %s31, 1
      %p411 = scmp.ne.s32.totalorder %s406, %s408
      %p412 = scmp.eq.s32.totalorder %s31, 0
      %p413 = por %p411, %p412
      %p414 = scmp.ne.s32.totalorder %s406, %s408
      %p415 = scmp.eq.s32.totalorder %s36, 1
      %p416 = por %p414, %p415
      %p417 = scmp.ne.s32.totalorder %s408, %s409
      %p418 = scmp.eq.s32.totalorder %s36, 0
      %p419 = por %p417, %p418
      %p420 = scmp.ne.s32.totalorder %s408, %s409
      %p421 = scmp.eq.s32.totalorder %s37, 1
      %p422 = por %p420, %p421
      %p424 = scmp.ne.s32.totalorder %s409, %s423
      %p425 = scmp.eq.s32.totalorder %s37, 0
      %p426 = por %p424, %p425
      %s428 = sadd.s32 %s427, 1
      %p431 = scmp.eq.s32.totalorder %s31, 1
      %p432 = scmp.ne.s32.totalorder %s427, %s429
      %p433 = scmp.eq.s32.totalorder %s31, 0
      %p434 = por %p432, %p433
      %p435 = scmp.ne.s32.totalorder %s427, %s429
      %p436 = scmp.eq.s32.totalorder %s36, 1
      %p437 = por %p435, %p436
      %p438 = scmp.ne.s32.totalorder %s429, %s430
      %p439 = scmp.eq.s32.totalorder %s36, 0
      %p440 = por %p438, %p439
      %p441 = scmp.ne.s32.totalorder %s429, %s430
      %p442 = scmp.eq.s32.totalorder %s37, 1
      %p443 = por %p441, %p442
      %p445 = scmp.ne.s32.totalorder %s430, %s444
      %p446 = scmp.eq.s32.totalorder %s37, 0
      %p447 = por %p445, %p446
      %s449 = sadd.s32 %s448, 1
      %p452 = scmp.eq.s32.totalorder %s31, 1
      %p453 = scmp.ne.s32.totalorder %s448, %s450
      %p454 = scmp.eq.s32.totalorder %s31, 0
      %p455 = por %p453, %p454
      %p456 = scmp.ne.s32.totalorder %s448, %s450
      %p457 = scmp.eq.s32.totalorder %s36, 1
      %p458 = por %p456, %p457
      %p459 = scmp.ne.s32.totalorder %s450, %s451
      %p460 = scmp.eq.s32.totalorder %s36, 0
      %p461 = por %p459, %p460
      %p462 = scmp.ne.s32.totalorder %s450, %s451
      %p463 = scmp.eq.s32.totalorder %s37, 1
      %p464 = por %p462, %p463
      %p466 = scmp.ne.s32.totalorder %s451, %s465
      %p467 = scmp.eq.s32.totalorder %s37, 0
      %p468 = por %p466, %p467
      %s469 = ssub.s32 %s31, %s38
      %p470 = scmp.eq.s32.totalorder %s469, 0
      %s472 = sadd.s32 %s471, 1
      %s473 = scalar_select %p470, %s471, %s472
      %p476 = pneg %p470
      %p477 = scmp.eq.s32.totalorder %s31, 1
      %p478 = por %p476, %p477
      %p479 = scmp.ne.s32.totalorder %s471, %s474
      %p480 = scmp.eq.s32.totalorder %s31, 0
      %p481 = por %p479, %p480
      %p482 = scmp.ne.s32.totalorder %s471, %s474
      %p483 = scmp.eq.s32.totalorder %s36, 1
      %p484 = por %p482, %p483
      %p485 = scmp.ne.s32.totalorder %s474, %s475
      %p486 = scmp.eq.s32.totalorder %s36, 0
      %p487 = por %p485, %p486
      %p488 = scmp.ne.s32.totalorder %s474, %s475
      %p489 = scmp.eq.s32.totalorder %s37, 1
      %p490 = por %p488, %p489
      %p492 = scmp.ne.s32.totalorder %s475, %s491
      %p493 = scmp.eq.s32.totalorder %s37, 0
      %p494 = por %p492, %p493
      %p495 = scmp.le.s32.totalorder 1, %s31
      %p496 = scmp.lt.s32.totalorder %s31, 3
      %p497 = pnand %p495, %p496
      %p498 = pneg %p497
      // Predicated region
      $region9: #{baseline_forward.1} parent=5 // pred_check
        _
      $region10: #{baseline_forward.1} parent=5 // pred_check_branch
        %500 = sbr.rel (%p497) target = $region12
      $region11: #{baseline_forward.1} parent=5 // pred_region
        %s501 = ssub.s32 %s31, 1
        // Predicated region
        $region13: #{baseline_forward.1} parent=11 // pred_check
          %p502 = pneg %p104
        $region14: #{baseline_forward.1} parent=11 // pred_check_branch
          %504 = sbr.rel (%p502) target = $region16
        $region15: #{baseline_forward.1} parent=11 // pred_region
          _
        $region16: #{baseline_forward.1} parent=11 // pred_fallthru
          _
        // Predicated region
        $region17: #{baseline_forward.1} parent=11 // pred_check
          %p505 = pneg %p125
        $region18: #{baseline_forward.1} parent=11 // pred_check_branch
          %507 = sbr.rel (%p505) target = $region20
        $region19: #{baseline_forward.1} parent=11 // pred_region
          _
        $region20: #{baseline_forward.1} parent=11 // pred_fallthru
          _
        // Predicated region
        $region21: #{baseline_forward.1} parent=11 // pred_check
          %p508 = pneg %p146
        $region22: #{baseline_forward.1} parent=11 // pred_check_branch
          %510 = sbr.rel (%p508) target = $region24
        $region23: #{baseline_forward.1} parent=11 // pred_region
          _
        $region24: #{baseline_forward.1} parent=11 // pred_fallthru
          _
        // Predicated region
        $region25: #{baseline_forward.1} parent=11 // pred_check
          %p511 = pneg %p167
        $region26: #{baseline_forward.1} parent=11 // pred_check_branch
          %513 = sbr.rel (%p511) target = $region28
        $region27: #{baseline_forward.1} parent=11 // pred_region
          _
        $region28: #{baseline_forward.1} parent=11 // pred_fallthru
          _
        // Predicated region
        $region29: #{baseline_forward.1} parent=11 // pred_check
          %p514 = pneg %p188
        $region30: #{baseline_forward.1} parent=11 // pred_check_branch
          %516 = sbr.rel (%p514) target = $region32
        $region31: #{baseline_forward.1} parent=11 // pred_region
          _
        $region32: #{baseline_forward.1} parent=11 // pred_fallthru
          _
        // Predicated region
        $region33: #{baseline_forward.1} parent=11 // pred_check
          %p517 = pneg %p209
        $region34: #{baseline_forward.1} parent=11 // pred_check_branch
          %519 = sbr.rel (%p517) target = $region36
        $region35: #{baseline_forward.1} parent=11 // pred_region
          _
        $region36: #{baseline_forward.1} parent=11 // pred_fallthru
          _
        // Predicated region
        $region37: #{baseline_forward.1} parent=11 // pred_check
          %p520 = pneg %p230
        $region38: #{baseline_forward.1} parent=11 // pred_check_branch
          %522 = sbr.rel (%p520) target = $region40
        $region39: #{baseline_forward.1} parent=11 // pred_region
          _
        $region40: #{baseline_forward.1} parent=11 // pred_fallthru
          _
        // Predicated region
        $region41: #{baseline_forward.1} parent=11 // pred_check
          %p523 = pneg %p251
        $region42: #{baseline_forward.1} parent=11 // pred_check_branch
          %525 = sbr.rel (%p523) target = $region44
        $region43: #{baseline_forward.1} parent=11 // pred_region
          _
        $region44: #{baseline_forward.1} parent=11 // pred_fallthru
          _
        // Predicated region
        $region45: #{baseline_forward.1} parent=11 // pred_check
          %p526 = pneg %p272
        $region46: #{baseline_forward.1} parent=11 // pred_check_branch
          %528 = sbr.rel (%p526) target = $region48
        $region47: #{baseline_forward.1} parent=11 // pred_region
          _
        $region48: #{baseline_forward.1} parent=11 // pred_fallthru
          _
        // Predicated region
        $region49: #{baseline_forward.1} parent=11 // pred_check
          %p529 = pneg %p293
        $region50: #{baseline_forward.1} parent=11 // pred_check_branch
          %531 = sbr.rel (%p529) target = $region52
        $region51: #{baseline_forward.1} parent=11 // pred_region
          _
        $region52: #{baseline_forward.1} parent=11 // pred_fallthru
          _
        // Predicated region
        $region53: #{baseline_forward.1} parent=11 // pred_check
          %p532 = pneg %p314
        $region54: #{baseline_forward.1} parent=11 // pred_check_branch
          %534 = sbr.rel (%p532) target = $region56
        $region55: #{baseline_forward.1} parent=11 // pred_region
          _
        $region56: #{baseline_forward.1} parent=11 // pred_fallthru
          _
        // Predicated region
        $region57: #{baseline_forward.1} parent=11 // pred_check
          %p535 = pneg %p335
        $region58: #{baseline_forward.1} parent=11 // pred_check_branch
          %537 = sbr.rel (%p535) target = $region60
        $region59: #{baseline_forward.1} parent=11 // pred_region
          _
        $region60: #{baseline_forward.1} parent=11 // pred_fallthru
          _
        // Predicated region
        $region61: #{baseline_forward.1} parent=11 // pred_check
          %p538 = pneg %p356
        $region62: #{baseline_forward.1} parent=11 // pred_check_branch
          %540 = sbr.rel (%p538) target = $region64
        $region63: #{baseline_forward.1} parent=11 // pred_region
          _
        $region64: #{baseline_forward.1} parent=11 // pred_fallthru
          _
        // Predicated region
        $region65: #{baseline_forward.1} parent=11 // pred_check
          %p541 = pneg %p377
        $region66: #{baseline_forward.1} parent=11 // pred_check_branch
          %543 = sbr.rel (%p541) target = $region68
        $region67: #{baseline_forward.1} parent=11 // pred_region
          _
        $region68: #{baseline_forward.1} parent=11 // pred_fallthru
          _
        // Predicated region
        $region69: #{baseline_forward.1} parent=11 // pred_check
          %p544 = pneg %p398
        $region70: #{baseline_forward.1} parent=11 // pred_check_branch
          %546 = sbr.rel (%p544) target = $region72
        $region71: #{baseline_forward.1} parent=11 // pred_region
          _
        $region72: #{baseline_forward.1} parent=11 // pred_fallthru
          _
        // Predicated region
        $region73: #{baseline_forward.1} parent=11 // pred_check
          %p547 = pneg %p419
        $region74: #{baseline_forward.1} parent=11 // pred_check_branch
          %549 = sbr.rel (%p547) target = $region76
        $region75: #{baseline_forward.1} parent=11 // pred_region
          _
        $region76: #{baseline_forward.1} parent=11 // pred_fallthru
          _
        // Predicated region
        $region77: #{baseline_forward.1} parent=11 // pred_check
          %p550 = pneg %p440
        $region78: #{baseline_forward.1} parent=11 // pred_check_branch
          %552 = sbr.rel (%p550) target = $region80
        $region79: #{baseline_forward.1} parent=11 // pred_region
          _
        $region80: #{baseline_forward.1} parent=11 // pred_fallthru
          _
        // Predicated region
        $region81: #{baseline_forward.1} parent=11 // pred_check
          %p553 = pneg %p461
        $region82: #{baseline_forward.1} parent=11 // pred_check_branch
          %555 = sbr.rel (%p553) target = $region84
        $region83: #{baseline_forward.1} parent=11 // pred_region
          _
        $region84: #{baseline_forward.1} parent=11 // pred_fallthru
          _
      $region12: #{baseline_forward.1} parent=5 // pred_fallthru
        _
      %p556 = scmp.lt.s32.totalorder %s31, 2
      // Predicated region
      $region85: #{baseline_forward.1} parent=5 // pred_check
        %p557 = pneg %p556
      $region86: #{baseline_forward.1} parent=5 // pred_check_branch
        %559 = sbr.rel (%p557) target = $region88
      $region87: #{baseline_forward.1} parent=5 // pred_region
        // Predicated region
        $region89: #{baseline_forward.1} parent=87 // pred_check
          %p560 = pneg %p51
        $region90: #{baseline_forward.1} parent=87 // pred_check_branch
          %562 = sbr.rel (%p560) target = $region92
        $region91: #{baseline_forward.1} parent=87 // pred_region
          %p563 = scmp.lt.s32.totalorder %s31, 1
          %s564 = scalar_select %p563, %s31, 1
          %s565 = smul.addr %s564, 32
          %s566 = smul.addr %s565, 8
          %s567 = scalar_lea.vmem %s0, %s566
        $region92: #{baseline_forward.1} parent=87 // pred_fallthru
          _
        // Predicated region
        $region93: #{baseline_forward.1} parent=87 // pred_check
          %p568 = pneg %p77
        $region94: #{baseline_forward.1} parent=87 // pred_check_branch
          %570 = sbr.rel (%p568) target = $region96
        $region95: #{baseline_forward.1} parent=87 // pred_region
          %p571 = scmp.lt.s32.totalorder %s31, 1
          %s572 = scalar_select %p571, %s31, 1
          %s573 = scalar_lea.vmem %s1, %s572
        $region96: #{baseline_forward.1} parent=87 // pred_fallthru
          _
      $region88: #{baseline_forward.1} parent=5 // pred_fallthru
        _
      %p574 = scmp.le.s32.totalorder 1, %s31
      %p575 = scmp.lt.s32.totalorder %s31, 3
      %p576 = pnand %p574, %p575
      %p577 = pneg %p576
      // Predicated region
      $region97: #{baseline_forward.1} parent=5 // pred_check
        _
      $region98: #{baseline_forward.1} parent=5 // pred_check_branch
        %579 = sbr.rel (%p576) target = $region100
      $region99: #{baseline_forward.1} parent=5 // pred_region
        %s580 = ssub.s32 %s31, 1
        %p581 = scmp.lt.s32.totalorder %s36, 1
        %s582 = scalar_select %p581, %s36, 1
        %s583 = smul.addr %s582, 32
        %s584 = smul.addr %s583, 8
        %s585 = scalar_lea.vmem %s0, %s584
        %p586 = pneg %p57
        %p587 = pneg %p54
        %p588 = scmp.lt.s32.totalorder %s36, 1
        %s589 = scalar_select %p588, %s36, 1
        %s590 = scalar_lea.vmem %s1, %s589
        %p591 = pneg %p83
        %p592 = pneg %p80
        %p593 = pneg %p104
        %p594 = pneg %p101
        %p595 = pneg %p125
        %p596 = pneg %p122
        %p597 = pneg %p146
        %p598 = pneg %p143
        %p599 = pneg %p167
        %p600 = pneg %p164
        %p601 = pneg %p188
        %p602 = pneg %p185
        %p603 = pneg %p209
        %p604 = pneg %p206
        %p605 = pneg %p230
        %p606 = pneg %p227
        %p607 = pneg %p251
        %p608 = pneg %p248
        %p609 = pneg %p272
        %p610 = pneg %p269
        %p611 = pneg %p293
        %p612 = pneg %p290
        %p613 = pneg %p314
        %p614 = pneg %p311
        %p615 = pneg %p335
        %p616 = pneg %p332
        %p617 = pneg %p356
        %p618 = pneg %p353
        %p619 = pneg %p377
        %p620 = pneg %p374
        %p621 = pneg %p398
        %p622 = pneg %p395
        %p623 = pneg %p419
        %p624 = pneg %p416
        %p625 = pneg %p440
        %p626 = pneg %p437
        %p627 = pneg %p461
        %p628 = pneg %p458
        %p629 = pneg %p487
        %p630 = pneg %p484
        %s631 = sand.u32 %s474, 1
        %s632 = scalar_lea.sflag [#allocation13], %s631
        %s633 = sand.u32 %s474, 1
        %s634 = scalar_lea.vmem [#allocation12], %s633
        %p635 = scmp.lt.s32.totalorder %s36, 1
        %s636 = scalar_select %p635, %s36, 1
        %s637 = smul.addr %s636, 32
        %s638 = smul.addr %s637, 8
        %s639 = scalar_lea.vmem %s0, %s638
        %p640 = scmp.lt.s32.totalorder %s36, 1
        %s641 = scalar_select %p640, %s36, 1
        %s642 = scalar_lea.vmem %s1, %s641
        %v643 = vld [vmem:[%s639] sm:$0xff]
        %v644 = vld [vmem:[%s639 + $0x8] sm:$0xff]
        %v645 = vld [vmem:[%s639 + $0x10] sm:$0xff]
        %v646 = vld [vmem:[%s639 + $0x18] sm:$0xff]
        %v647 = vld [vmem:[%s639 + $0x20] sm:$0xff]
        %v648 = vld [vmem:[%s639 + $0x28] sm:$0xff]
        %v649 = vld [vmem:[%s639 + $0x30] sm:$0xff]
        %v650 = vld [vmem:[%s639 + $0x38] sm:$0xff]
        %v651 = vld [vmem:[%s639 + $0x40] sm:$0xff]
        %v652 = vld [vmem:[%s639 + $0x48] sm:$0xff]
        %v653 = vld [vmem:[%s639 + $0x50] sm:$0xff]
        %v654 = vld [vmem:[%s639 + $0x58] sm:$0xff]
        %v655 = vld [vmem:[%s639 + $0x60] sm:$0xff]
        %v656 = vld [vmem:[%s639 + $0x68] sm:$0xff]
        %v657 = vld [vmem:[%s639 + $0x70] sm:$0xff]
        %v658 = vld [vmem:[%s639 + $0x78] sm:$0xff]
        %v659 = vld [vmem:[%s639 + $0x80] sm:$0xff]
        %v660 = vld [vmem:[%s639 + $0x88] sm:$0xff]
        %v661 = vld [vmem:[%s639 + $0x90] sm:$0xff]
        %v662 = vld [vmem:[%s639 + $0x98] sm:$0xff]
        %v663 = vld [vmem:[%s639 + $0xa0] sm:$0xff]
        %v664 = vld [vmem:[%s639 + $0xa8] sm:$0xff]
        %v665 = vld [vmem:[%s639 + $0xb0] sm:$0xff]
        %v666 = vld [vmem:[%s639 + $0xb8] sm:$0xff]
        %v667 = vld [vmem:[%s639 + $0xc0] sm:$0xff]
        %v668 = vld [vmem:[%s639 + $0xc8] sm:$0xff]
        %v669 = vld [vmem:[%s639 + $0xd0] sm:$0xff]
        %v670 = vld [vmem:[%s639 + $0xd8] sm:$0xff]
        %v671 = vld [vmem:[%s639 + $0xe0] sm:$0xff]
        %v672 = vld [vmem:[%s639 + $0xe8] sm:$0xff]
        %v673 = vld [vmem:[%s639 + $0xf0] sm:$0xff]
        %v674 = vld [vmem:[%s639 + $0xf8] sm:$0xff]
        %vm675 = vcmask 31744
        %676 = vst.msk [vmem:[#allocation2] sm:$0xff] %vm675, 0.0
        %677 = vst.msk [vmem:[#allocation2 + $0x8] sm:$0xff] %vm675, 0.0
        %vm678 = vcmask 24576
        %679 = vst.msk [vmem:[#allocation2 + $0x10] sm:$0x1] %vm678, 0.0
        %680 = vst.msk [vmem:[#allocation2 + $0x111] sm:$0xff] %vm675, 0.0
        %681 = vst.msk [vmem:[#allocation2 + $0x119] sm:$0xff] %vm675, 0.0
        %682 = vst.msk [vmem:[#allocation2 + $0x121] sm:$0x1] %vm678, 0.0
        %683 = vst.msk [vmem:[#allocation2 + $0x11] sm:$0xff] %vm675, %v643
        %684 = vst.msk [vmem:[#allocation2 + $0x19] sm:$0xff] %vm675, %v644
        %685 = vst.msk [vmem:[#allocation2 + $0x21] sm:$0xff] %vm675, %v645
        %686 = vst.msk [vmem:[#allocation2 + $0x29] sm:$0xff] %vm675, %v646
        %687 = vst.msk [vmem:[#allocation2 + $0x31] sm:$0xff] %vm675, %v647
        %688 = vst.msk [vmem:[#allocation2 + $0x39] sm:$0xff] %vm675, %v648
        %689 = vst.msk [vmem:[#allocation2 + $0x41] sm:$0xff] %vm675, %v649
        %690 = vst.msk [vmem:[#allocation2 + $0x49] sm:$0xff] %vm675, %v650
        %691 = vst.msk [vmem:[#allocation2 + $0x51] sm:$0xff] %vm675, %v651
        %692 = vst.msk [vmem:[#allocation2 + $0x59] sm:$0xff] %vm675, %v652
        %693 = vst.msk [vmem:[#allocation2 + $0x61] sm:$0xff] %vm675, %v653
        %694 = vst.msk [vmem:[#allocation2 + $0x69] sm:$0xff] %vm675, %v654
        %695 = vst.msk [vmem:[#allocation2 + $0x71] sm:$0xff] %vm675, %v655
        %696 = vst.msk [vmem:[#allocation2 + $0x79] sm:$0xff] %vm675, %v656
        %697 = vst.msk [vmem:[#allocation2 + $0x81] sm:$0xff] %vm675, %v657
        %698 = vst.msk [vmem:[#allocation2 + $0x89] sm:$0xff] %vm675, %v658
        %699 = vst.msk [vmem:[#allocation2 + $0x91] sm:$0xff] %vm675, %v659
        %700 = vst.msk [vmem:[#allocation2 + $0x99] sm:$0xff] %vm675, %v660
        %701 = vst.msk [vmem:[#allocation2 + $0xa1] sm:$0xff] %vm675, %v661
        %702 = vst.msk [vmem:[#allocation2 + $0xa9] sm:$0xff] %vm675, %v662
        %703 = vst.msk [vmem:[#allocation2 + $0xb1] sm:$0xff] %vm675, %v663
        %704 = vst.msk [vmem:[#allocation2 + $0xb9] sm:$0xff] %vm675, %v664
        %705 = vst.msk [vmem:[#allocation2 + $0xc1] sm:$0xff] %vm675, %v665
        %706 = vst.msk [vmem:[#allocation2 + $0xc9] sm:$0xff] %vm675, %v666
        %707 = vst.msk [vmem:[#allocation2 + $0xd1] sm:$0xff] %vm675, %v667
        %708 = vst.msk [vmem:[#allocation2 + $0xd9] sm:$0xff] %vm675, %v668
        %709 = vst.msk [vmem:[#allocation2 + $0xe1] sm:$0xff] %vm675, %v669
        %710 = vst.msk [vmem:[#allocation2 + $0xe9] sm:$0xff] %vm675, %v670
        %711 = vst.msk [vmem:[#allocation2 + $0xf1] sm:$0xff] %vm675, %v671
        %712 = vst.msk [vmem:[#allocation2 + $0xf9] sm:$0xff] %vm675, %v672
        %713 = vst.msk [vmem:[#allocation2 + $0x101] sm:$0xff] %vm675, %v673
        %714 = vst.msk [vmem:[#allocation2 + $0x109] sm:$0xff] %vm675, %v674
        %v715 = vlaneseq
        %v716 = vshrl.u32 %v715, 7
        %v717 = vadd.s32 %v716, 8
        %v718 = vadd.s32 %v716, 16
        %v719 = vadd.s32 %v716, 24
        %v720 = vadd.s32 %v716, 32
        %v721 = vadd.s32 %v716, 40
        %v722 = vadd.s32 %v716, 48
        %v723 = vadd.s32 %v716, 56
        %v724 = vadd.s32 %v716, 64
        %v725 = vadd.s32 %v716, 72
        %v726 = vadd.s32 %v716, 80
        %v727 = vadd.s32 %v716, 88
        %v728 = vadd.s32 %v716, 96
        %v729 = vadd.s32 %v716, 104
        %v730 = vadd.s32 %v716, 112
        %v731 = vadd.s32 %v716, 120
        %v732 = vadd.s32 %v716, 128
        %v733 = vadd.s32 %v716, 136
        %v734 = vadd.s32 %v716, 144
        %v735 = vadd.s32 %v716, 152
        %v736 = vadd.s32 %v716, 160
        %v737 = vadd.s32 %v716, 168
        %v738 = vadd.s32 %v716, 176
        %v739 = vadd.s32 %v716, 184
        %v740 = vadd.s32 %v716, 192
        %v741 = vadd.s32 %v716, 200
        %v742 = vadd.s32 %v716, 208
        %v743 = vadd.s32 %v716, 216
        %v744 = vadd.s32 %v716, 224
        %v745 = vadd.s32 %v716, 232
        %v746 = vadd.s32 %v716, 240
        %v747 = vadd.s32 %v716, 248
        %vm748 = vcmp.lt.s32.totalorder %v716, 0
        %v749 = vsub.s32 0, %v716
        %v750 = vsel %vm748, %v749, %v716
        %v751 = vshrl.u32 %v750, 4
        %v752 = vand.u32 %v750, 15
        %v753 = vsub.s32 0, %v752
        %v754 = vsel %vm748, %v753, %v752
        %vm755 = vcmp.lt.s32.totalorder %v717, 0
        %v756 = vsub.s32 0, %v717
        %v757 = vsel %vm755, %v756, %v717
        %v758 = vshrl.u32 %v757, 4
        %v759 = vand.u32 %v757, 15
        %v760 = vsub.s32 0, %v759
        %v761 = vsel %vm755, %v760, %v759
        %vm762 = vcmp.lt.s32.totalorder %v718, 0
        %v763 = vsub.s32 0, %v718
        %v764 = vsel %vm762, %v763, %v718
        %v765 = vshrl.u32 %v764, 4
        %v766 = vand.u32 %v764, 15
        %v767 = vsub.s32 0, %v766
        %v768 = vsel %vm762, %v767, %v766
        %vm769 = vcmp.lt.s32.totalorder %v719, 0
        %v770 = vsub.s32 0, %v719
        %v771 = vsel %vm769, %v770, %v719
        %v772 = vshrl.u32 %v771, 4
        %v773 = vand.u32 %v771, 15
        %v774 = vsub.s32 0, %v773
        %v775 = vsel %vm769, %v774, %v773
        %vm776 = vcmp.lt.s32.totalorder %v720, 0
        %v777 = vsub.s32 0, %v720
        %v778 = vsel %vm776, %v777, %v720
        %v779 = vshrl.u32 %v778, 4
        %v780 = vand.u32 %v778, 15
        %v781 = vsub.s32 0, %v780
        %v782 = vsel %vm776, %v781, %v780
        %vm783 = vcmp.lt.s32.totalorder %v721, 0
        %v784 = vsub.s32 0, %v721
        %v785 = vsel %vm783, %v784, %v721
        %v786 = vshrl.u32 %v785, 4
        %v787 = vand.u32 %v785, 15
        %v788 = vsub.s32 0, %v787
        %v789 = vsel %vm783, %v788, %v787
        %vm790 = vcmp.lt.s32.totalorder %v722, 0
        %v791 = vsub.s32 0, %v722
        %v792 = vsel %vm790, %v791, %v722
        %v793 = vshrl.u32 %v792, 4
        %v794 = vand.u32 %v792, 15
        %v795 = vsub.s32 0, %v794
        %v796 = vsel %vm790, %v795, %v794
        %vm797 = vcmp.lt.s32.totalorder %v723, 0
        %v798 = vsub.s32 0, %v723
        %v799 = vsel %vm797, %v798, %v723
        %v800 = vshrl.u32 %v799, 4
        %v801 = vand.u32 %v799, 15
        %v802 = vsub.s32 0, %v801
        %v803 = vsel %vm797, %v802, %v801
        %vm804 = vcmp.lt.s32.totalorder %v724, 0
        %v805 = vsub.s32 0, %v724
        %v806 = vsel %vm804, %v805, %v724
        %v807 = vshrl.u32 %v806, 4
        %v808 = vand.u32 %v806, 15
        %v809 = vsub.s32 0, %v808
        %v810 = vsel %vm804, %v809, %v808
        %vm811 = vcmp.lt.s32.totalorder %v725, 0
        %v812 = vsub.s32 0, %v725
        %v813 = vsel %vm811, %v812, %v725
        %v814 = vshrl.u32 %v813, 4
        %v815 = vand.u32 %v813, 15
        %v816 = vsub.s32 0, %v815
        %v817 = vsel %vm811, %v816, %v815
        %vm818 = vcmp.lt.s32.totalorder %v726, 0
        %v819 = vsub.s32 0, %v726
        %v820 = vsel %vm818, %v819, %v726
        %v821 = vshrl.u32 %v820, 4
        %v822 = vand.u32 %v820, 15
        %v823 = vsub.s32 0, %v822
        %v824 = vsel %vm818, %v823, %v822
        %vm825 = vcmp.lt.s32.totalorder %v727, 0
        %v826 = vsub.s32 0, %v727
        %v827 = vsel %vm825, %v826, %v727
        %v828 = vshrl.u32 %v827, 4
        %v829 = vand.u32 %v827, 15
        %v830 = vsub.s32 0, %v829
        %v831 = vsel %vm825, %v830, %v829
        %vm832 = vcmp.lt.s32.totalorder %v728, 0
        %v833 = vsub.s32 0, %v728
        %v834 = vsel %vm832, %v833, %v728
        %v835 = vshrl.u32 %v834, 4
        %v836 = vand.u32 %v834, 15
        %v837 = vsub.s32 0, %v836
        %v838 = vsel %vm832, %v837, %v836
        %vm839 = vcmp.lt.s32.totalorder %v729, 0
        %v840 = vsub.s32 0, %v729
        %v841 = vsel %vm839, %v840, %v729
        %v842 = vshrl.u32 %v841, 4
        %v843 = vand.u32 %v841, 15
        %v844 = vsub.s32 0, %v843
        %v845 = vsel %vm839, %v844, %v843
        %vm846 = vcmp.lt.s32.totalorder %v730, 0
        %v847 = vsub.s32 0, %v730
        %v848 = vsel %vm846, %v847, %v730
        %v849 = vshrl.u32 %v848, 4
        %v850 = vand.u32 %v848, 15
        %v851 = vsub.s32 0, %v850
        %v852 = vsel %vm846, %v851, %v850
        %vm853 = vcmp.lt.s32.totalorder %v731, 0
        %v854 = vsub.s32 0, %v731
        %v855 = vsel %vm853, %v854, %v731
        %v856 = vshrl.u32 %v855, 4
        %v857 = vand.u32 %v855, 15
        %v858 = vsub.s32 0, %v857
        %v859 = vsel %vm853, %v858, %v857
        %vm860 = vcmp.lt.s32.totalorder %v732, 0
        %v861 = vsub.s32 0, %v732
        %v862 = vsel %vm860, %v861, %v732
        %v863 = vshrl.u32 %v862, 4
        %v864 = vand.u32 %v862, 15
        %v865 = vsub.s32 0, %v864
        %v866 = vsel %vm860, %v865, %v864
        %vm867 = vcmp.lt.s32.totalorder %v733, 0
        %v868 = vsub.s32 0, %v733
        %v869 = vsel %vm867, %v868, %v733
        %v870 = vshrl.u32 %v869, 4
        %v871 = vand.u32 %v869, 15
        %v872 = vsub.s32 0, %v871
        %v873 = vsel %vm867, %v872, %v871
        %vm874 = vcmp.lt.s32.totalorder %v734, 0
        %v875 = vsub.s32 0, %v734
        %v876 = vsel %vm874, %v875, %v734
        %v877 = vshrl.u32 %v876, 4
        %v878 = vand.u32 %v876, 15
        %v879 = vsub.s32 0, %v878
        %v880 = vsel %vm874, %v879, %v878
        %vm881 = vcmp.lt.s32.totalorder %v735, 0
        %v882 = vsub.s32 0, %v735
        %v883 = vsel %vm881, %v882, %v735
        %v884 = vshrl.u32 %v883, 4
        %v885 = vand.u32 %v883, 15
        %v886 = vsub.s32 0, %v885
        %v887 = vsel %vm881, %v886, %v885
        %vm888 = vcmp.lt.s32.totalorder %v736, 0
        %v889 = vsub.s32 0, %v736
        %v890 = vsel %vm888, %v889, %v736
        %v891 = vshrl.u32 %v890, 4
        %v892 = vand.u32 %v890, 15
        %v893 = vsub.s32 0, %v892
        %v894 = vsel %vm888, %v893, %v892
        %vm895 = vcmp.lt.s32.totalorder %v737, 0
        %v896 = vsub.s32 0, %v737
        %v897 = vsel %vm895, %v896, %v737
        %v898 = vshrl.u32 %v897, 4
        %v899 = vand.u32 %v897, 15
        %v900 = vsub.s32 0, %v899
        %v901 = vsel %vm895, %v900, %v899
        %vm902 = vcmp.lt.s32.totalorder %v738, 0
        %v903 = vsub.s32 0, %v738
        %v904 = vsel %vm902, %v903, %v738
        %v905 = vshrl.u32 %v904, 4
        %v906 = vand.u32 %v904, 15
        %v907 = vsub.s32 0, %v906
        %v908 = vsel %vm902, %v907, %v906
        %vm909 = vcmp.lt.s32.totalorder %v739, 0
        %v910 = vsub.s32 0, %v739
        %v911 = vsel %vm909, %v910, %v739
        %v912 = vshrl.u32 %v911, 4
        %v913 = vand.u32 %v911, 15
        %v914 = vsub.s32 0, %v913
        %v915 = vsel %vm909, %v914, %v913
        %vm916 = vcmp.lt.s32.totalorder %v740, 0
        %v917 = vsub.s32 0, %v740
        %v918 = vsel %vm916, %v917, %v740
        %v919 = vshrl.u32 %v918, 4
        %v920 = vand.u32 %v918, 15
        %v921 = vsub.s32 0, %v920
        %v922 = vsel %vm916, %v921, %v920
        %vm923 = vcmp.lt.s32.totalorder %v741, 0
        %v924 = vsub.s32 0, %v741
        %v925 = vsel %vm923, %v924, %v741
        %v926 = vshrl.u32 %v925, 4
        %v927 = vand.u32 %v925, 15
        %v928 = vsub.s32 0, %v927
        %v929 = vsel %vm923, %v928, %v927
        %vm930 = vcmp.lt.s32.totalorder %v742, 0
        %v931 = vsub.s32 0, %v742
        %v932 = vsel %vm930, %v931, %v742
        %v933 = vshrl.u32 %v932, 4
        %v934 = vand.u32 %v932, 15
        %v935 = vsub.s32 0, %v934
        %v936 = vsel %vm930, %v935, %v934
        %vm937 = vcmp.lt.s32.totalorder %v743, 0
        %v938 = vsub.s32 0, %v743
        %v939 = vsel %vm937, %v938, %v743
        %v940 = vshrl.u32 %v939, 4
        %v941 = vand.u32 %v939, 15
        %v942 = vsub.s32 0, %v941
        %v943 = vsel %vm937, %v942, %v941
        %vm944 = vcmp.lt.s32.totalorder %v744, 0
        %v945 = vsub.s32 0, %v744
        %v946 = vsel %vm944, %v945, %v744
        %v947 = vshrl.u32 %v946, 4
        %v948 = vand.u32 %v946, 15
        %v949 = vsub.s32 0, %v948
        %v950 = vsel %vm944, %v949, %v948
        %vm951 = vcmp.lt.s32.totalorder %v745, 0
        %v952 = vsub.s32 0, %v745
        %v953 = vsel %vm951, %v952, %v745
        %v954 = vshrl.u32 %v953, 4
        %v955 = vand.u32 %v953, 15
        %v956 = vsub.s32 0, %v955
        %v957 = vsel %vm951, %v956, %v955
        %vm958 = vcmp.lt.s32.totalorder %v746, 0
        %v959 = vsub.s32 0, %v746
        %v960 = vsel %vm958, %v959, %v746
        %v961 = vshrl.u32 %v960, 4
        %v962 = vand.u32 %v960, 15
        %v963 = vsub.s32 0, %v962
        %v964 = vsel %vm958, %v963, %v962
        %vm965 = vcmp.lt.s32.totalorder %v747, 0
        %v966 = vsub.s32 0, %v747
        %v967 = vsel %vm965, %v966, %v747
        %v968 = vshrl.u32 %v967, 4
        %v969 = vand.u32 %v967, 15
        %v970 = vsub.s32 0, %v969
        %v971 = vsel %vm965, %v970, %v969
        %vm972 = vcmp.ne.s32.totalorder %v754, 0
        %vm973 = vcmp.ne.s32.totalorder %v761, 0
        %vm974 = vcmp.ne.s32.totalorder %v768, 0
        %vm975 = vcmp.ne.s32.totalorder %v775, 0
        %vm976 = vcmp.ne.s32.totalorder %v782, 0
        %vm977 = vcmp.ne.s32.totalorder %v789, 0
        %vm978 = vcmp.ne.s32.totalorder %v796, 0
        %vm979 = vcmp.ne.s32.totalorder %v803, 0
        %vm980 = vcmp.ne.s32.totalorder %v810, 0
        %vm981 = vcmp.ne.s32.totalorder %v817, 0
        %vm982 = vcmp.ne.s32.totalorder %v824, 0
        %vm983 = vcmp.ne.s32.totalorder %v831, 0
        %vm984 = vcmp.ne.s32.totalorder %v838, 0
        %vm985 = vcmp.ne.s32.totalorder %v845, 0
        %vm986 = vcmp.ne.s32.totalorder %v852, 0
        %vm987 = vcmp.ne.s32.totalorder %v859, 0
        %vm988 = vcmp.ne.s32.totalorder %v866, 0
        %vm989 = vcmp.ne.s32.totalorder %v873, 0
        %vm990 = vcmp.ne.s32.totalorder %v880, 0
        %vm991 = vcmp.ne.s32.totalorder %v887, 0
        %vm992 = vcmp.ne.s32.totalorder %v894, 0
        %vm993 = vcmp.ne.s32.totalorder %v901, 0
        %vm994 = vcmp.ne.s32.totalorder %v908, 0
        %vm995 = vcmp.ne.s32.totalorder %v915, 0
        %vm996 = vcmp.ne.s32.totalorder %v922, 0
        %vm997 = vcmp.ne.s32.totalorder %v929, 0
        %vm998 = vcmp.ne.s32.totalorder %v936, 0
        %vm999 = vcmp.ne.s32.totalorder %v943, 0
        %vm1000 = vcmp.ne.s32.totalorder %v950, 0
        %vm1001 = vcmp.ne.s32.totalorder %v957, 0
        %vm1002 = vcmp.ne.s32.totalorder %v964, 0
        %vm1003 = vcmp.ne.s32.totalorder %v971, 0
        %vm1004 = vcmp.lt.s32.totalorder %v754, 0
        %vm1005 = vcmp.lt.s32.totalorder %v761, 0
        %vm1006 = vcmp.lt.s32.totalorder %v768, 0
        %vm1007 = vcmp.lt.s32.totalorder %v775, 0
        %vm1008 = vcmp.lt.s32.totalorder %v782, 0
        %vm1009 = vcmp.lt.s32.totalorder %v789, 0
        %vm1010 = vcmp.lt.s32.totalorder %v796, 0
        %vm1011 = vcmp.lt.s32.totalorder %v803, 0
        %vm1012 = vcmp.lt.s32.totalorder %v810, 0
        %vm1013 = vcmp.lt.s32.totalorder %v817, 0
        %vm1014 = vcmp.lt.s32.totalorder %v824, 0
        %vm1015 = vcmp.lt.s32.totalorder %v831, 0
        %vm1016 = vcmp.lt.s32.totalorder %v838, 0
        %vm1017 = vcmp.lt.s32.totalorder %v845, 0
        %vm1018 = vcmp.lt.s32.totalorder %v852, 0
        %vm1019 = vcmp.lt.s32.totalorder %v859, 0
        %vm1020 = vcmp.lt.s32.totalorder %v866, 0
        %vm1021 = vcmp.lt.s32.totalorder %v873, 0
        %vm1022 = vcmp.lt.s32.totalorder %v880, 0
        %vm1023 = vcmp.lt.s32.totalorder %v887, 0
        %vm1024 = vcmp.lt.s32.totalorder %v894, 0
        %vm1025 = vcmp.lt.s32.totalorder %v901, 0
        %vm1026 = vcmp.lt.s32.totalorder %v908, 0
        %vm1027 = vcmp.lt.s32.totalorder %v915, 0
        %vm1028 = vcmp.lt.s32.totalorder %v922, 0
        %vm1029 = vcmp.lt.s32.totalorder %v929, 0
        %vm1030 = vcmp.lt.s32.totalorder %v936, 0
        %vm1031 = vcmp.lt.s32.totalorder %v943, 0
        %vm1032 = vcmp.lt.s32.totalorder %v950, 0
        %vm1033 = vcmp.lt.s32.totalorder %v957, 0
        %vm1034 = vcmp.lt.s32.totalorder %v964, 0
        %vm1035 = vcmp.lt.s32.totalorder %v971, 0
        %vm1036 = vmand %vm1004, %vm972
        %vm1037 = vmand %vm1005, %vm973
        %vm1038 = vmand %vm1006, %vm974
        %vm1039 = vmand %vm1007, %vm975
        %vm1040 = vmand %vm1008, %vm976
        %vm1041 = vmand %vm1009, %vm977
        %vm1042 = vmand %vm1010, %vm978
        %vm1043 = vmand %vm1011, %vm979
        %vm1044 = vmand %vm1012, %vm980
        %vm1045 = vmand %vm1013, %vm981
        %vm1046 = vmand %vm1014, %vm982
        %vm1047 = vmand %vm1015, %vm983
        %vm1048 = vmand %vm1016, %vm984
        %vm1049 = vmand %vm1017, %vm985
        %vm1050 = vmand %vm1018, %vm986
        %vm1051 = vmand %vm1019, %vm987
        %vm1052 = vmand %vm1020, %vm988
        %vm1053 = vmand %vm1021, %vm989
        %vm1054 = vmand %vm1022, %vm990
        %vm1055 = vmand %vm1023, %vm991
        %vm1056 = vmand %vm1024, %vm992
        %vm1057 = vmand %vm1025, %vm993
        %vm1058 = vmand %vm1026, %vm994
        %vm1059 = vmand %vm1027, %vm995
        %vm1060 = vmand %vm1028, %vm996
        %vm1061 = vmand %vm1029, %vm997
        %vm1062 = vmand %vm1030, %vm998
        %vm1063 = vmand %vm1031, %vm999
        %vm1064 = vmand %vm1032, %vm1000
        %vm1065 = vmand %vm1033, %vm1001
        %vm1066 = vmand %vm1034, %vm1002
        %vm1067 = vmand %vm1035, %vm1003
        %v1068 = vadd.s32 %v754, 16
        %v1069 = vadd.s32 %v761, 16
        %v1070 = vadd.s32 %v768, 16
        %v1071 = vadd.s32 %v775, 16
        %v1072 = vadd.s32 %v782, 16
        %v1073 = vadd.s32 %v789, 16
        %v1074 = vadd.s32 %v796, 16
        %v1075 = vadd.s32 %v803, 16
        %v1076 = vadd.s32 %v810, 16
        %v1077 = vadd.s32 %v817, 16
        %v1078 = vadd.s32 %v824, 16
        %v1079 = vadd.s32 %v831, 16
        %v1080 = vadd.s32 %v838, 16
        %v1081 = vadd.s32 %v845, 16
        %v1082 = vadd.s32 %v852, 16
        %v1083 = vadd.s32 %v859, 16
        %v1084 = vadd.s32 %v866, 16
        %v1085 = vadd.s32 %v873, 16
        %v1086 = vadd.s32 %v880, 16
        %v1087 = vadd.s32 %v887, 16
        %v1088 = vadd.s32 %v894, 16
        %v1089 = vadd.s32 %v901, 16
        %v1090 = vadd.s32 %v908, 16
        %v1091 = vadd.s32 %v915, 16
        %v1092 = vadd.s32 %v922, 16
        %v1093 = vadd.s32 %v929, 16
        %v1094 = vadd.s32 %v936, 16
        %v1095 = vadd.s32 %v943, 16
        %v1096 = vadd.s32 %v950, 16
        %v1097 = vadd.s32 %v957, 16
        %v1098 = vadd.s32 %v964, 16
        %v1099 = vadd.s32 %v971, 16
        %v1100 = vsel %vm1036, %v1068, %v754
        %v1101 = vsel %vm1037, %v1069, %v761
        %v1102 = vsel %vm1038, %v1070, %v768
        %v1103 = vsel %vm1039, %v1071, %v775
        %v1104 = vsel %vm1040, %v1072, %v782
        %v1105 = vsel %vm1041, %v1073, %v789
        %v1106 = vsel %vm1042, %v1074, %v796
        %v1107 = vsel %vm1043, %v1075, %v803
        %v1108 = vsel %vm1044, %v1076, %v810
        %v1109 = vsel %vm1045, %v1077, %v817
        %v1110 = vsel %vm1046, %v1078, %v824
        %v1111 = vsel %vm1047, %v1079, %v831
        %v1112 = vsel %vm1048, %v1080, %v838
        %v1113 = vsel %vm1049, %v1081, %v845
        %v1114 = vsel %vm1050, %v1082, %v852
        %v1115 = vsel %vm1051, %v1083, %v859
        %v1116 = vsel %vm1052, %v1084, %v866
        %v1117 = vsel %vm1053, %v1085, %v873
        %v1118 = vsel %vm1054, %v1086, %v880
        %v1119 = vsel %vm1055, %v1087, %v887
        %v1120 = vsel %vm1056, %v1088, %v894
        %v1121 = vsel %vm1057, %v1089, %v901
        %v1122 = vsel %vm1058, %v1090, %v908
        %v1123 = vsel %vm1059, %v1091, %v915
        %v1124 = vsel %vm1060, %v1092, %v922
        %v1125 = vsel %vm1061, %v1093, %v929
        %v1126 = vsel %vm1062, %v1094, %v936
        %v1127 = vsel %vm1063, %v1095, %v943
        %v1128 = vsel %vm1064, %v1096, %v950
        %v1129 = vsel %vm1065, %v1097, %v957
        %v1130 = vsel %vm1066, %v1098, %v964
        %v1131 = vsel %vm1067, %v1099, %v971
        %vm1132 = vcmp.ge.s32.totalorder %v1100, 1
        %vm1133 = vcmp.ge.s32.totalorder %v1101, 1
        %vm1134 = vcmp.ge.s32.totalorder %v1102, 1
        %vm1135 = vcmp.ge.s32.totalorder %v1103, 1
        %vm1136 = vcmp.ge.s32.totalorder %v1104, 1
        %vm1137 = vcmp.ge.s32.totalorder %v1105, 1
        %vm1138 = vcmp.ge.s32.totalorder %v1106, 1
        %vm1139 = vcmp.ge.s32.totalorder %v1107, 1
        %vm1140 = vcmp.ge.s32.totalorder %v1108, 1
        %vm1141 = vcmp.ge.s32.totalorder %v1109, 1
        %vm1142 = vcmp.ge.s32.totalorder %v1110, 1
        %vm1143 = vcmp.ge.s32.totalorder %v1111, 1
        %vm1144 = vcmp.ge.s32.totalorder %v1112, 1
        %vm1145 = vcmp.ge.s32.totalorder %v1113, 1
        %vm1146 = vcmp.ge.s32.totalorder %v1114, 1
        %vm1147 = vcmp.ge.s32.totalorder %v1115, 1
        %vm1148 = vcmp.ge.s32.totalorder %v1116, 1
        %vm1149 = vcmp.ge.s32.totalorder %v1117, 1
        %vm1150 = vcmp.ge.s32.totalorder %v1118, 1
        %vm1151 = vcmp.ge.s32.totalorder %v1119, 1
        %vm1152 = vcmp.ge.s32.totalorder %v1120, 1
        %vm1153 = vcmp.ge.s32.totalorder %v1121, 1
        %vm1154 = vcmp.ge.s32.totalorder %v1122, 1
        %vm1155 = vcmp.ge.s32.totalorder %v1123, 1
        %vm1156 = vcmp.ge.s32.totalorder %v1124, 1
        %vm1157 = vcmp.ge.s32.totalorder %v1125, 1
        %vm1158 = vcmp.ge.s32.totalorder %v1126, 1
        %vm1159 = vcmp.ge.s32.totalorder %v1127, 1
        %vm1160 = vcmp.ge.s32.totalorder %v1128, 1
        %vm1161 = vcmp.ge.s32.totalorder %v1129, 1
        %vm1162 = vcmp.ge.s32.totalorder %v1130, 1
        %vm1163 = vcmp.ge.s32.totalorder %v1131, 1
        %vm1164 = vcmp.le.s32.totalorder %v1100, 14
        %vm1165 = vcmp.le.s32.totalorder %v1101, 14
        %vm1166 = vcmp.le.s32.totalorder %v1102, 14
        %vm1167 = vcmp.le.s32.totalorder %v1103, 14
        %vm1168 = vcmp.le.s32.totalorder %v1104, 14
        %vm1169 = vcmp.le.s32.totalorder %v1105, 14
        %vm1170 = vcmp.le.s32.totalorder %v1106, 14
        %vm1171 = vcmp.le.s32.totalorder %v1107, 14
        %vm1172 = vcmp.le.s32.totalorder %v1108, 14
        %vm1173 = vcmp.le.s32.totalorder %v1109, 14
        %vm1174 = vcmp.le.s32.totalorder %v1110, 14
        %vm1175 = vcmp.le.s32.totalorder %v1111, 14
        %vm1176 = vcmp.le.s32.totalorder %v1112, 14
        %vm1177 = vcmp.le.s32.totalorder %v1113, 14
        %vm1178 = vcmp.le.s32.totalorder %v1114, 14
        %vm1179 = vcmp.le.s32.totalorder %v1115, 14
        %vm1180 = vcmp.le.s32.totalorder %v1116, 14
        %vm1181 = vcmp.le.s32.totalorder %v1117, 14
        %vm1182 = vcmp.le.s32.totalorder %v1118, 14
        %vm1183 = vcmp.le.s32.totalorder %v1119, 14
        %vm1184 = vcmp.le.s32.totalorder %v1120, 14
        %vm1185 = vcmp.le.s32.totalorder %v1121, 14
        %vm1186 = vcmp.le.s32.totalorder %v1122, 14
        %vm1187 = vcmp.le.s32.totalorder %v1123, 14
        %vm1188 = vcmp.le.s32.totalorder %v1124, 14
        %vm1189 = vcmp.le.s32.totalorder %v1125, 14
        %vm1190 = vcmp.le.s32.totalorder %v1126, 14
        %vm1191 = vcmp.le.s32.totalorder %v1127, 14
        %vm1192 = vcmp.le.s32.totalorder %v1128, 14
        %vm1193 = vcmp.le.s32.totalorder %v1129, 14
        %vm1194 = vcmp.le.s32.totalorder %v1130, 14
        %vm1195 = vcmp.le.s32.totalorder %v1131, 14
        %v1196 = vld [vmem:[#allocation2] sm:$0xff]
        %v1197 = vld [vmem:[#allocation2 + $0x8] sm:$0xff]
        %v1198 = vld [vmem:[#allocation2 + $0x10] sm:$0xff]
        %v1199 = vld [vmem:[#allocation2 + $0x18] sm:$0xff]
        %v1200 = vld [vmem:[#allocation2 + $0x20] sm:$0xff]
        %v1201 = vld [vmem:[#allocation2 + $0x28] sm:$0xff]
        %v1202 = vld [vmem:[#allocation2 + $0x30] sm:$0xff]
        %v1203 = vld [vmem:[#allocation2 + $0x38] sm:$0xff]
        %v1204 = vld [vmem:[#allocation2 + $0x40] sm:$0xff]
        %v1205 = vld [vmem:[#allocation2 + $0x48] sm:$0xff]
        %v1206 = vld [vmem:[#allocation2 + $0x50] sm:$0xff]
        %v1207 = vld [vmem:[#allocation2 + $0x58] sm:$0xff]
        %v1208 = vld [vmem:[#allocation2 + $0x60] sm:$0xff]
        %v1209 = vld [vmem:[#allocation2 + $0x68] sm:$0xff]
        %v1210 = vld [vmem:[#allocation2 + $0x70] sm:$0xff]
        %v1211 = vld [vmem:[#allocation2 + $0x78] sm:$0xff]
        %v1212 = vld [vmem:[#allocation2 + $0x80] sm:$0xff]
        %v1213 = vld [vmem:[#allocation2 + $0x88] sm:$0xff]
        %v1214 = vld [vmem:[#allocation2 + $0x90] sm:$0xff]
        %v1215 = vld [vmem:[#allocation2 + $0x98] sm:$0xff]
        %v1216 = vld [vmem:[#allocation2 + $0xa0] sm:$0xff]
        %v1217 = vld [vmem:[#allocation2 + $0xa8] sm:$0xff]
        %v1218 = vld [vmem:[#allocation2 + $0xb0] sm:$0xff]
        %v1219 = vld [vmem:[#allocation2 + $0xb8] sm:$0xff]
        %v1220 = vld [vmem:[#allocation2 + $0xc0] sm:$0xff]
        %v1221 = vld [vmem:[#allocation2 + $0xc8] sm:$0xff]
        %v1222 = vld [vmem:[#allocation2 + $0xd0] sm:$0xff]
        %v1223 = vld [vmem:[#allocation2 + $0xd8] sm:$0xff]
        %v1224 = vld [vmem:[#allocation2 + $0xe0] sm:$0xff]
        %v1225 = vld [vmem:[#allocation2 + $0xe8] sm:$0xff]
        %v1226 = vld [vmem:[#allocation2 + $0xf0] sm:$0xff]
        %v1227 = vld [vmem:[#allocation2 + $0xf8] sm:$0xff]
        %v1228 = vsel %vm1132, %v1196, 0.0
        %v1229 = vsel %vm1133, %v1197, 0.0
        %v1230 = vsel %vm1134, %v1198, 0.0
        %v1231 = vsel %vm1135, %v1199, 0.0
        %v1232 = vsel %vm1136, %v1200, 0.0
        %v1233 = vsel %vm1137, %v1201, 0.0
        %v1234 = vsel %vm1138, %v1202, 0.0
        %v1235 = vsel %vm1139, %v1203, 0.0
        %v1236 = vsel %vm1140, %v1204, 0.0
        %v1237 = vsel %vm1141, %v1205, 0.0
        %v1238 = vsel %vm1142, %v1206, 0.0
        %v1239 = vsel %vm1143, %v1207, 0.0
        %v1240 = vsel %vm1144, %v1208, 0.0
        %v1241 = vsel %vm1145, %v1209, 0.0
        %v1242 = vsel %vm1146, %v1210, 0.0
        %v1243 = vsel %vm1147, %v1211, 0.0
        %v1244 = vsel %vm1148, %v1212, 0.0
        %v1245 = vsel %vm1149, %v1213, 0.0
        %v1246 = vsel %vm1150, %v1214, 0.0
        %v1247 = vsel %vm1151, %v1215, 0.0
        %v1248 = vsel %vm1152, %v1216, 0.0
        %v1249 = vsel %vm1153, %v1217, 0.0
        %v1250 = vsel %vm1154, %v1218, 0.0
        %v1251 = vsel %vm1155, %v1219, 0.0
        %v1252 = vsel %vm1156, %v1220, 0.0
        %v1253 = vsel %vm1157, %v1221, 0.0
        %v1254 = vsel %vm1158, %v1222, 0.0
        %v1255 = vsel %vm1159, %v1223, 0.0
        %v1256 = vsel %vm1160, %v1224, 0.0
        %v1257 = vsel %vm1161, %v1225, 0.0
        %v1258 = vsel %vm1162, %v1226, 0.0
        %v1259 = vsel %vm1163, %v1227, 0.0
        %v1260 = vld [vmem:[%s2] sm:$0xf]
        %v1261 = vld [vmem:[#allocation2 + $0x1] sm:$0xff]
        %v1262 = vld [vmem:[#allocation2 + $0x9] sm:$0xff]
        %v1263 = vld [vmem:[#allocation2 + $0x11] sm:$0xff]
        %v1264 = vld [vmem:[#allocation2 + $0x19] sm:$0xff]
        %v1265 = vld [vmem:[#allocation2 + $0x21] sm:$0xff]
        %v1266 = vld [vmem:[#allocation2 + $0x29] sm:$0xff]
        %v1267 = vld [vmem:[#allocation2 + $0x31] sm:$0xff]
        %v1268 = vld [vmem:[#allocation2 + $0x39] sm:$0xff]
        %v1269 = vld [vmem:[#allocation2 + $0x41] sm:$0xff]
        %v1270 = vld [vmem:[#allocation2 + $0x49] sm:$0xff]
        %v1271 = vld [vmem:[#allocation2 + $0x51] sm:$0xff]
        %v1272 = vld [vmem:[#allocation2 + $0x59] sm:$0xff]
        %v1273 = vld [vmem:[#allocation2 + $0x61] sm:$0xff]
        %v1274 = vld [vmem:[#allocation2 + $0x69] sm:$0xff]
        %v1275 = vld [vmem:[#allocation2 + $0x71] sm:$0xff]
        %v1276 = vld [vmem:[#allocation2 + $0x79] sm:$0xff]
        %v1277 = vld [vmem:[#allocation2 + $0x81] sm:$0xff]
        %v1278 = vld [vmem:[#allocation2 + $0x89] sm:$0xff]
        %v1279 = vld [vmem:[#allocation2 + $0x91] sm:$0xff]
        %v1280 = vld [vmem:[#allocation2 + $0x99] sm:$0xff]
        %v1281 = vld [vmem:[#allocation2 + $0xa1] sm:$0xff]
        %v1282 = vld [vmem:[#allocation2 + $0xa9] sm:$0xff]
        %v1283 = vld [vmem:[#allocation2 + $0xb1] sm:$0xff]
        %v1284 = vld [vmem:[#allocation2 + $0xb9] sm:$0xff]
        %v1285 = vld [vmem:[#allocation2 + $0xc1] sm:$0xff]
        %v1286 = vld [vmem:[#allocation2 + $0xc9] sm:$0xff]
        %v1287 = vld [vmem:[#allocation2 + $0xd1] sm:$0xff]
        %v1288 = vld [vmem:[#allocation2 + $0xd9] sm:$0xff]
        %v1289 = vld [vmem:[#allocation2 + $0xe1] sm:$0xff]
        %v1290 = vld [vmem:[#allocation2 + $0xe9] sm:$0xff]
        %v1291 = vld [vmem:[#allocation2 + $0xf1] sm:$0xff]
        %v1292 = vld [vmem:[#allocation2 + $0xf9] sm:$0xff]
        %s1293 = scalar_lea.vmem %s2, 4
        %v1294 = vld [vmem:[%s1293] sm:$0xf]
        %v1296 = vsel %vm675, %v1261, 0
        %v1299 = vsel %vm675, %v1262, 0
        %v1302 = vsel %vm675, %v1263, 0
        %v1305 = vsel %vm675, %v1264, 0
        %v1308 = vsel %vm675, %v1265, 0
        %v1311 = vsel %vm675, %v1266, 0
        %v1314 = vsel %vm675, %v1267, 0
        %v1317 = vsel %vm675, %v1268, 0
        %v1320 = vsel %vm675, %v1269, 0
        %v1323 = vsel %vm675, %v1270, 0
        %v1326 = vsel %vm675, %v1271, 0
        %v1329 = vsel %vm675, %v1272, 0
        %v1332 = vsel %vm675, %v1273, 0
        %v1335 = vsel %vm675, %v1274, 0
        %v1338 = vsel %vm675, %v1275, 0
        %v1341 = vsel %vm675, %v1276, 0
        %v1344 = vsel %vm675, %v1277, 0
        %v1347 = vsel %vm675, %v1278, 0
        %v1350 = vsel %vm675, %v1279, 0
        %v1353 = vsel %vm675, %v1280, 0
        %v1356 = vsel %vm675, %v1281, 0
        %v1359 = vsel %vm675, %v1282, 0
        %v1362 = vsel %vm675, %v1283, 0
        %v1365 = vsel %vm675, %v1284, 0
        %v1368 = vsel %vm675, %v1285, 0
        %v1371 = vsel %vm675, %v1286, 0
        %v1374 = vsel %vm675, %v1287, 0
        %v1377 = vsel %vm675, %v1288, 0
        %v1380 = vsel %vm675, %v1289, 0
        %v1383 = vsel %vm675, %v1290, 0
        %v1386 = vsel %vm675, %v1291, 0
        %v1389 = vsel %vm675, %v1292, 0
        %vm1391 = vcmask 1043456
        %v1393 = vsel %vm1391, %v1294, 0
        %1395 = vmatprep.subr.mxu0 0.0
        %1396 = vmatpush1.msra.mxu0 0.0
        %1397 = vmatprep.subr.mxu0 0.0
        %1398 = vmatpush1.msra.mxu0 0.0
        %1399 = vmatprep.subr.mxu0 0.0
        %1400 = vmatpush1.msra.mxu0 0.0
        %1401 = vmatprep.subr.mxu0 0.0
        %1402 = vmatpush1.msra.mxu0 0.0
        %1403 = vmatprep.subr.mxu0 0.0
        %1404 = vmatpush1.msra.mxu0 0.0
        %1405 = vmatprep.subr.mxu0 0.0
        %1406 = vmatpush1.msra.mxu0 0.0
        %1407 = vmatprep.subr.mxu0 0.0
        %1408 = vmatpush1.msra.mxu0 0.0
        %1409 = vmatprep.subr.mxu0 0.0
        %1410 = vmatpush1.msra.mxu0 0.0
        %1411 = vmatprep.subr.mxu0 0.0
        %1412 = vmatpush1.msra.mxu0 0.0
        %1413 = vmatprep.subr.mxu0 0.0
        %1414 = vmatpush1.msra.mxu0 0.0
        %1415 = vmatprep.subr.mxu0 0.0
        %1416 = vmatpush1.msra.mxu0 0.0
        %1417 = vmatprep.subr.mxu0 0.0
        %1418 = vmatpush1.msra.mxu0 0.0
        %1419 = vmatprep.subr.mxu0 0.0
        %1420 = vmatpush1.msra.mxu0 0.0
        %1421 = vmatprep.subr.mxu0 0.0
        %1422 = vmatpush1.msra.mxu0 0.0
        %1423 = vmatprep.subr.mxu0 0.0
        %1424 = vmatpush1.msra.mxu0 0.0
        %1425 = vmatprep.subr.mxu0 0.0
        %1426 = vmatpush1.msra.mxu0 %v1393
        %1427 = vmatprep.subr.mxu0 0.0
        %1428 = vmatpush2.msra.mxu0 0.0
        %1429 = vmatprep.subr.mxu0 0.0
        %1430 = vmatpush2.msra.mxu0 0.0
        %1431 = vmatprep.subr.mxu0 0.0
        %1432 = vmatpush2.msra.mxu0 0.0
        %1433 = vmatprep.subr.mxu0 0.0
        %1434 = vmatpush2.msra.mxu0 0.0
        %1435 = vmatprep.subr.mxu0 0.0
        %1436 = vmatpush2.msra.mxu0 0.0
        %1437 = vmatprep.subr.mxu0 0.0
        %1438 = vmatpush2.msra.mxu0 0.0
        %1439 = vmatprep.subr.mxu0 0.0
        %1440 = vmatpush2.msra.mxu0 0.0
        %1441 = vmatprep.subr.mxu0 0.0
        %1442 = vmatpush2.msra.mxu0 0.0
        %1443 = vmatprep.subr.mxu0 0.0
        %1444 = vmatpush2.msra.mxu0 0.0
        %1445 = vmatprep.subr.mxu0 0.0
        %1446 = vmatpush2.msra.mxu0 0.0
        %1447 = vmatprep.subr.mxu0 0.0
        %1448 = vmatpush2.msra.mxu0 0.0
        %1449 = vmatprep.subr.mxu0 0.0
        %1450 = vmatpush2.msra.mxu0 0.0
        %1451 = vmatprep.subr.mxu0 0.0
        %1452 = vmatpush2.msra.mxu0 0.0
        %1453 = vmatprep.subr.mxu0 0.0
        %1454 = vmatpush2.msra.mxu0 0.0
        %1455 = vmatprep.subr.mxu0 0.0
        %1456 = vmatpush2.msra.mxu0 0.0
        %1457 = vmatprep.subr.mxu0 0.0
        %1458 = vmatpush2.msra.mxu0 0.0
        %1459 = vmatprep.mubr.f32.mxu0 0.0
        %1460 = vmatmul.mubr.f32.gmra.mxu0 %v1296
        %v1461 = vpop.f32.mrf.mxu0
        %v1462 = vadd.f32 0.0, %v1461
        %v1463 = vpop.f32.mrf.mxu0
        %1464 = vmatprep.mubr.f32.mxu0 0.0
        %1465 = vmatmul.mubr.f32.gmra.mxu0 %v1299
        %v1466 = vpop.f32.mrf.mxu0
        %v1467 = vadd.f32 0.0, %v1466
        %v1468 = vpop.f32.mrf.mxu0
        %1469 = vmatprep.mubr.f32.mxu0 0.0
        %1470 = vmatmul.mubr.f32.gmra.mxu0 %v1302
        %v1471 = vpop.f32.mrf.mxu0
        %v1472 = vadd.f32 0.0, %v1471
        %v1473 = vpop.f32.mrf.mxu0
        %1474 = vmatprep.mubr.f32.mxu0 0.0
        %1475 = vmatmul.mubr.f32.gmra.mxu0 %v1305
        %v1476 = vpop.f32.mrf.mxu0
        %v1477 = vadd.f32 0.0, %v1476
        %v1478 = vpop.f32.mrf.mxu0
        %1479 = vmatprep.mubr.f32.mxu0 0.0
        %1480 = vmatmul.mubr.f32.gmra.mxu0 %v1308
        %v1481 = vpop.f32.mrf.mxu0
        %v1482 = vadd.f32 0.0, %v1481
        %v1483 = vpop.f32.mrf.mxu0
        %1484 = vmatprep.mubr.f32.mxu0 0.0
        %1485 = vmatmul.mubr.f32.gmra.mxu0 %v1311
        %v1486 = vpop.f32.mrf.mxu0
        %v1487 = vadd.f32 0.0, %v1486
        %v1488 = vpop.f32.mrf.mxu0
        %1489 = vmatprep.mubr.f32.mxu0 0.0
        %1490 = vmatmul.mubr.f32.gmra.mxu0 %v1314
        %v1491 = vpop.f32.mrf.mxu0
        %v1492 = vadd.f32 0.0, %v1491
        %v1493 = vpop.f32.mrf.mxu0
        %1494 = vmatprep.mubr.f32.mxu0 0.0
        %1495 = vmatmul.mubr.f32.gmra.mxu0 %v1317
        %v1496 = vpop.f32.mrf.mxu0
        %v1497 = vadd.f32 0.0, %v1496
        %v1498 = vpop.f32.mrf.mxu0
        %1499 = vmatprep.mubr.f32.mxu0 0.0
        %1500 = vmatmul.mubr.f32.gmra.mxu0 %v1320
        %v1501 = vpop.f32.mrf.mxu0
        %v1502 = vadd.f32 0.0, %v1501
        %v1503 = vpop.f32.mrf.mxu0
        %1504 = vmatprep.mubr.f32.mxu0 0.0
        %1505 = vmatmul.mubr.f32.gmra.mxu0 %v1323
        %v1506 = vpop.f32.mrf.mxu0
        %v1507 = vadd.f32 0.0, %v1506
        %v1508 = vpop.f32.mrf.mxu0
        %1509 = vmatprep.mubr.f32.mxu0 0.0
        %1510 = vmatmul.mubr.f32.gmra.mxu0 %v1326
        %v1511 = vpop.f32.mrf.mxu0
        %v1512 = vadd.f32 0.0, %v1511
        %v1513 = vpop.f32.mrf.mxu0
        %1514 = vmatprep.mubr.f32.mxu0 0.0
        %1515 = vmatmul.mubr.f32.gmra.mxu0 %v1329
        %v1516 = vpop.f32.mrf.mxu0
        %v1517 = vadd.f32 0.0, %v1516
        %v1518 = vpop.f32.mrf.mxu0
        %1519 = vmatprep.mubr.f32.mxu0 0.0
        %1520 = vmatmul.mubr.f32.gmra.mxu0 %v1332
        %v1521 = vpop.f32.mrf.mxu0
        %v1522 = vadd.f32 0.0, %v1521
        %v1523 = vpop.f32.mrf.mxu0
        %1524 = vmatprep.mubr.f32.mxu0 0.0
        %1525 = vmatmul.mubr.f32.gmra.mxu0 %v1335
        %v1526 = vpop.f32.mrf.mxu0
        %v1527 = vadd.f32 0.0, %v1526
        %v1528 = vpop.f32.mrf.mxu0
        %1529 = vmatprep.mubr.f32.mxu0 0.0
        %1530 = vmatmul.mubr.f32.gmra.mxu0 %v1338
        %v1531 = vpop.f32.mrf.mxu0
        %v1532 = vadd.f32 0.0, %v1531
        %v1533 = vpop.f32.mrf.mxu0
        %1534 = vmatprep.mubr.f32.mxu0 0.0
        %1535 = vmatmul.mubr.f32.gmra.mxu0 %v1341
        %v1536 = vpop.f32.mrf.mxu0
        %v1537 = vadd.f32 0.0, %v1536
        %v1538 = vpop.f32.mrf.mxu0
        %1539 = vmatprep.mubr.f32.mxu0 0.0
        %1540 = vmatmul.mubr.f32.gmra.mxu0 %v1344
        %v1541 = vpop.f32.mrf.mxu0
        %v1542 = vadd.f32 0.0, %v1541
        %v1543 = vpop.f32.mrf.mxu0
        %1544 = vmatprep.mubr.f32.mxu0 0.0
        %1545 = vmatmul.mubr.f32.gmra.mxu0 %v1347
        %v1546 = vpop.f32.mrf.mxu0
        %v1547 = vadd.f32 0.0, %v1546
        %v1548 = vpop.f32.mrf.mxu0
        %1549 = vmatprep.mubr.f32.mxu0 0.0
        %1550 = vmatmul.mubr.f32.gmra.mxu0 %v1350
        %v1551 = vpop.f32.mrf.mxu0
        %v1552 = vadd.f32 0.0, %v1551
        %v1553 = vpop.f32.mrf.mxu0
        %1554 = vmatprep.mubr.f32.mxu0 0.0
        %1555 = vmatmul.mubr.f32.gmra.mxu0 %v1353
        %v1556 = vpop.f32.mrf.mxu0
        %v1557 = vadd.f32 0.0, %v1556
        %v1558 = vpop.f32.mrf.mxu0
        %1559 = vmatprep.mubr.f32.mxu0 0.0
        %1560 = vmatmul.mubr.f32.gmra.mxu0 %v1356
        %v1561 = vpop.f32.mrf.mxu0
        %v1562 = vadd.f32 0.0, %v1561
        %v1563 = vpop.f32.mrf.mxu0
        %1564 = vmatprep.mubr.f32.mxu0 0.0
        %1565 = vmatmul.mubr.f32.gmra.mxu0 %v1359
        %v1566 = vpop.f32.mrf.mxu0
        %v1567 = vadd.f32 0.0, %v1566
        %v1568 = vpop.f32.mrf.mxu0
        %1569 = vmatprep.mubr.f32.mxu0 0.0
        %1570 = vmatmul.mubr.f32.gmra.mxu0 %v1362
        %v1571 = vpop.f32.mrf.mxu0
        %v1572 = vadd.f32 0.0, %v1571
        %v1573 = vpop.f32.mrf.mxu0
        %1574 = vmatprep.mubr.f32.mxu0 0.0
        %1575 = vmatmul.mubr.f32.gmra.mxu0 %v1365
        %v1576 = vpop.f32.mrf.mxu0
        %v1577 = vadd.f32 0.0, %v1576
        %v1578 = vpop.f32.mrf.mxu0
        %1579 = vmatprep.mubr.f32.mxu0 0.0
        %1580 = vmatmul.mubr.f32.gmra.mxu0 %v1368
        %v1581 = vpop.f32.mrf.mxu0
        %v1582 = vadd.f32 0.0, %v1581
        %v1583 = vpop.f32.mrf.mxu0
        %1584 = vmatprep.mubr.f32.mxu0 0.0
        %1585 = vmatmul.mubr.f32.gmra.mxu0 %v1371
        %v1586 = vpop.f32.mrf.mxu0
        %v1587 = vadd.f32 0.0, %v1586
        %v1588 = vpop.f32.mrf.mxu0
        %1589 = vmatprep.mubr.f32.mxu0 0.0
        %1590 = vmatmul.mubr.f32.gmra.mxu0 %v1374
        %v1591 = vpop.f32.mrf.mxu0
        %v1592 = vadd.f32 0.0, %v1591
        %v1593 = vpop.f32.mrf.mxu0
        %1594 = vmatprep.mubr.f32.mxu0 0.0
        %1595 = vmatmul.mubr.f32.gmra.mxu0 %v1377
        %v1596 = vpop.f32.mrf.mxu0
        %v1597 = vadd.f32 0.0, %v1596
        %v1598 = vpop.f32.mrf.mxu0
        %1599 = vmatprep.mubr.f32.mxu0 0.0
        %1600 = vmatmul.mubr.f32.gmra.mxu0 %v1380
        %v1601 = vpop.f32.mrf.mxu0
        %v1602 = vadd.f32 0.0, %v1601
        %v1603 = vpop.f32.mrf.mxu0
        %1604 = vmatprep.mubr.f32.mxu0 0.0
        %1605 = vmatmul.mubr.f32.gmra.mxu0 %v1383
        %v1606 = vpop.f32.mrf.mxu0
        %v1607 = vadd.f32 0.0, %v1606
        %v1608 = vpop.f32.mrf.mxu0
        %1609 = vmatprep.mubr.f32.mxu0 0.0
        %1610 = vmatmul.mubr.f32.gmra.mxu0 %v1386
        %v1611 = vpop.f32.mrf.mxu0
        %v1612 = vadd.f32 0.0, %v1611
        %v1613 = vpop.f32.mrf.mxu0
        %1614 = vmatprep.mubr.f32.mxu0 0.0
        %1615 = vmatmul.mubr.f32.gmra.mxu0 %v1389
        %v1616 = vpop.f32.mrf.mxu0
        %v1617 = vadd.f32 0.0, %v1616
        %v1618 = vpop.f32.mrf.mxu0
        %1619 = vdwg.mxu0
        %v1621 = vsel %vm675, %v1228, 0
        %v1624 = vsel %vm675, %v1229, 0
        %v1627 = vsel %vm675, %v1230, 0
        %v1630 = vsel %vm675, %v1231, 0
        %v1633 = vsel %vm675, %v1232, 0
        %v1636 = vsel %vm675, %v1233, 0
        %v1639 = vsel %vm675, %v1234, 0
        %v1642 = vsel %vm675, %v1235, 0
        %v1645 = vsel %vm675, %v1236, 0
        %v1648 = vsel %vm675, %v1237, 0
        %v1651 = vsel %vm675, %v1238, 0
        %v1654 = vsel %vm675, %v1239, 0
        %v1657 = vsel %vm675, %v1240, 0
        %v1660 = vsel %vm675, %v1241, 0
        %v1663 = vsel %vm675, %v1242, 0
        %v1666 = vsel %vm675, %v1243, 0
        %v1669 = vsel %vm675, %v1244, 0
        %v1672 = vsel %vm675, %v1245, 0
        %v1675 = vsel %vm675, %v1246, 0
        %v1678 = vsel %vm675, %v1247, 0
        %v1681 = vsel %vm675, %v1248, 0
        %v1684 = vsel %vm675, %v1249, 0
        %v1687 = vsel %vm675, %v1250, 0
        %v1690 = vsel %vm675, %v1251, 0
        %v1693 = vsel %vm675, %v1252, 0
        %v1696 = vsel %vm675, %v1253, 0
        %v1699 = vsel %vm675, %v1254, 0
        %v1702 = vsel %vm675, %v1255, 0
        %v1705 = vsel %vm675, %v1256, 0
        %v1708 = vsel %vm675, %v1257, 0
        %v1711 = vsel %vm675, %v1258, 0
        %v1714 = vsel %vm675, %v1259, 0
        %v1717 = vsel %vm1391, %v1260, 0
        %1719 = vmatprep.subr.mxu0 0.0
        %1720 = vmatpush1.msra.mxu0 0.0
        %1721 = vmatprep.subr.mxu0 0.0
        %1722 = vmatpush1.msra.mxu0 0.0
        %1723 = vmatprep.subr.mxu0 0.0
        %1724 = vmatpush1.msra.mxu0 0.0
        %1725 = vmatprep.subr.mxu0 0.0
        %1726 = vmatpush1.msra.mxu0 0.0
        %1727 = vmatprep.subr.mxu0 0.0
        %1728 = vmatpush1.msra.mxu0 0.0
        %1729 = vmatprep.subr.mxu0 0.0
        %1730 = vmatpush1.msra.mxu0 0.0
        %1731 = vmatprep.subr.mxu0 0.0
        %1732 = vmatpush1.msra.mxu0 0.0
        %1733 = vmatprep.subr.mxu0 0.0
        %1734 = vmatpush1.msra.mxu0 0.0
        %1735 = vmatprep.subr.mxu0 0.0
        %1736 = vmatpush1.msra.mxu0 0.0
        %1737 = vmatprep.subr.mxu0 0.0
        %1738 = vmatpush1.msra.mxu0 0.0
        %1739 = vmatprep.subr.mxu0 0.0
        %1740 = vmatpush1.msra.mxu0 0.0
        %1741 = vmatprep.subr.mxu0 0.0
        %1742 = vmatpush1.msra.mxu0 0.0
        %1743 = vmatprep.subr.mxu0 0.0
        %1744 = vmatpush1.msra.mxu0 0.0
        %1745 = vmatprep.subr.mxu0 0.0
        %1746 = vmatpush1.msra.mxu0 0.0
        %1747 = vmatprep.subr.mxu0 0.0
        %1748 = vmatpush1.msra.mxu0 0.0
        %1749 = vmatprep.subr.mxu0 0.0
        %1750 = vmatpush1.msra.mxu0 %v1717
        %1751 = vmatprep.subr.mxu0 0.0
        %1752 = vmatpush2.msra.mxu0 0.0
        %1753 = vmatprep.subr.mxu0 0.0
        %1754 = vmatpush2.msra.mxu0 0.0
        %1755 = vmatprep.subr.mxu0 0.0
        %1756 = vmatpush2.msra.mxu0 0.0
        %1757 = vmatprep.subr.mxu0 0.0
        %1758 = vmatpush2.msra.mxu0 0.0
        %1759 = vmatprep.subr.mxu0 0.0
        %1760 = vmatpush2.msra.mxu0 0.0
        %1761 = vmatprep.subr.mxu0 0.0
        %1762 = vmatpush2.msra.mxu0 0.0
        %1763 = vmatprep.subr.mxu0 0.0
        %1764 = vmatpush2.msra.mxu0 0.0
        %1765 = vmatprep.subr.mxu0 0.0
        %1766 = vmatpush2.msra.mxu0 0.0
        %1767 = vmatprep.subr.mxu0 0.0
        %1768 = vmatpush2.msra.mxu0 0.0
        %1769 = vmatprep.subr.mxu0 0.0
        %1770 = vmatpush2.msra.mxu0 0.0
        %1771 = vmatprep.subr.mxu0 0.0
        %1772 = vmatpush2.msra.mxu0 0.0
        %1773 = vmatprep.subr.mxu0 0.0
        %1774 = vmatpush2.msra.mxu0 0.0
        %1775 = vmatprep.subr.mxu0 0.0
        %1776 = vmatpush2.msra.mxu0 0.0
        %1777 = vmatprep.subr.mxu0 0.0
        %1778 = vmatpush2.msra.mxu0 0.0
        %1779 = vmatprep.subr.mxu0 0.0
        %1780 = vmatpush2.msra.mxu0 0.0
        %1781 = vmatprep.subr.mxu0 0.0
        %1782 = vmatpush2.msra.mxu0 0.0
        %1783 = vmatprep.mubr.f32.mxu0 0.0
        %1784 = vmatmul.mubr.f32.gmra.mxu0 %v1621
        %v1785 = vpop.f32.mrf.mxu0
        %v1786 = vadd.f32 %v1462, %v1785
        %v1787 = vpop.f32.mrf.mxu0
        %1788 = vmatprep.mubr.f32.mxu0 0.0
        %1789 = vmatmul.mubr.f32.gmra.mxu0 %v1624
        %v1790 = vpop.f32.mrf.mxu0
        %v1791 = vadd.f32 %v1467, %v1790
        %v1792 = vpop.f32.mrf.mxu0
        %1793 = vmatprep.mubr.f32.mxu0 0.0
        %1794 = vmatmul.mubr.f32.gmra.mxu0 %v1627
        %v1795 = vpop.f32.mrf.mxu0
        %v1796 = vadd.f32 %v1472, %v1795
        %v1797 = vpop.f32.mrf.mxu0
        %1798 = vmatprep.mubr.f32.mxu0 0.0
        %1799 = vmatmul.mubr.f32.gmra.mxu0 %v1630
        %v1800 = vpop.f32.mrf.mxu0
        %v1801 = vadd.f32 %v1477, %v1800
        %v1802 = vpop.f32.mrf.mxu0
        %1803 = vmatprep.mubr.f32.mxu0 0.0
        %1804 = vmatmul.mubr.f32.gmra.mxu0 %v1633
        %v1805 = vpop.f32.mrf.mxu0
        %v1806 = vadd.f32 %v1482, %v1805
        %v1807 = vpop.f32.mrf.mxu0
        %1808 = vmatprep.mubr.f32.mxu0 0.0
        %1809 = vmatmul.mubr.f32.gmra.mxu0 %v1636
        %v1810 = vpop.f32.mrf.mxu0
        %v1811 = vadd.f32 %v1487, %v1810
        %v1812 = vpop.f32.mrf.mxu0
        %1813 = vmatprep.mubr.f32.mxu0 0.0
        %1814 = vmatmul.mubr.f32.gmra.mxu0 %v1639
        %v1815 = vpop.f32.mrf.mxu0
        %v1816 = vadd.f32 %v1492, %v1815
        %v1817 = vpop.f32.mrf.mxu0
        %1818 = vmatprep.mubr.f32.mxu0 0.0
        %1819 = vmatmul.mubr.f32.gmra.mxu0 %v1642
        %v1820 = vpop.f32.mrf.mxu0
        %v1821 = vadd.f32 %v1497, %v1820
        %v1822 = vpop.f32.mrf.mxu0
        %1823 = vmatprep.mubr.f32.mxu0 0.0
        %1824 = vmatmul.mubr.f32.gmra.mxu0 %v1645
        %v1825 = vpop.f32.mrf.mxu0
        %v1826 = vadd.f32 %v1502, %v1825
        %v1827 = vpop.f32.mrf.mxu0
        %1828 = vmatprep.mubr.f32.mxu0 0.0
        %1829 = vmatmul.mubr.f32.gmra.mxu0 %v1648
        %v1830 = vpop.f32.mrf.mxu0
        %v1831 = vadd.f32 %v1507, %v1830
        %v1832 = vpop.f32.mrf.mxu0
        %1833 = vmatprep.mubr.f32.mxu0 0.0
        %1834 = vmatmul.mubr.f32.gmra.mxu0 %v1651
        %v1835 = vpop.f32.mrf.mxu0
        %v1836 = vadd.f32 %v1512, %v1835
        %v1837 = vpop.f32.mrf.mxu0
        %1838 = vmatprep.mubr.f32.mxu0 0.0
        %1839 = vmatmul.mubr.f32.gmra.mxu0 %v1654
        %v1840 = vpop.f32.mrf.mxu0
        %v1841 = vadd.f32 %v1517, %v1840
        %v1842 = vpop.f32.mrf.mxu0
        %1843 = vmatprep.mubr.f32.mxu0 0.0
        %1844 = vmatmul.mubr.f32.gmra.mxu0 %v1657
        %v1845 = vpop.f32.mrf.mxu0
        %v1846 = vadd.f32 %v1522, %v1845
        %v1847 = vpop.f32.mrf.mxu0
        %1848 = vmatprep.mubr.f32.mxu0 0.0
        %1849 = vmatmul.mubr.f32.gmra.mxu0 %v1660
        %v1850 = vpop.f32.mrf.mxu0
        %v1851 = vadd.f32 %v1527, %v1850
        %v1852 = vpop.f32.mrf.mxu0
        %1853 = vmatprep.mubr.f32.mxu0 0.0
        %1854 = vmatmul.mubr.f32.gmra.mxu0 %v1663
        %v1855 = vpop.f32.mrf.mxu0
        %v1856 = vadd.f32 %v1532, %v1855
        %v1857 = vpop.f32.mrf.mxu0
        %1858 = vmatprep.mubr.f32.mxu0 0.0
        %1859 = vmatmul.mubr.f32.gmra.mxu0 %v1666
        %v1860 = vpop.f32.mrf.mxu0
        %v1861 = vadd.f32 %v1537, %v1860
        %v1862 = vpop.f32.mrf.mxu0
        %1863 = vmatprep.mubr.f32.mxu0 0.0
        %1864 = vmatmul.mubr.f32.gmra.mxu0 %v1669
        %v1865 = vpop.f32.mrf.mxu0
        %v1866 = vadd.f32 %v1542, %v1865
        %v1867 = vpop.f32.mrf.mxu0
        %1868 = vmatprep.mubr.f32.mxu0 0.0
        %1869 = vmatmul.mubr.f32.gmra.mxu0 %v1672
        %v1870 = vpop.f32.mrf.mxu0
        %v1871 = vadd.f32 %v1547, %v1870
        %v1872 = vpop.f32.mrf.mxu0
        %1873 = vmatprep.mubr.f32.mxu0 0.0
        %1874 = vmatmul.mubr.f32.gmra.mxu0 %v1675
        %v1875 = vpop.f32.mrf.mxu0
        %v1876 = vadd.f32 %v1552, %v1875
        %v1877 = vpop.f32.mrf.mxu0
        %1878 = vmatprep.mubr.f32.mxu0 0.0
        %1879 = vmatmul.mubr.f32.gmra.mxu0 %v1678
        %v1880 = vpop.f32.mrf.mxu0
        %v1881 = vadd.f32 %v1557, %v1880
        %v1882 = vpop.f32.mrf.mxu0
        %1883 = vmatprep.mubr.f32.mxu0 0.0
        %1884 = vmatmul.mubr.f32.gmra.mxu0 %v1681
        %v1885 = vpop.f32.mrf.mxu0
        %v1886 = vadd.f32 %v1562, %v1885
        %v1887 = vpop.f32.mrf.mxu0
        %1888 = vmatprep.mubr.f32.mxu0 0.0
        %1889 = vmatmul.mubr.f32.gmra.mxu0 %v1684
        %v1890 = vpop.f32.mrf.mxu0
        %v1891 = vadd.f32 %v1567, %v1890
        %v1892 = vpop.f32.mrf.mxu0
        %1893 = vmatprep.mubr.f32.mxu0 0.0
        %1894 = vmatmul.mubr.f32.gmra.mxu0 %v1687
        %v1895 = vpop.f32.mrf.mxu0
        %v1896 = vadd.f32 %v1572, %v1895
        %v1897 = vpop.f32.mrf.mxu0
        %1898 = vmatprep.mubr.f32.mxu0 0.0
        %1899 = vmatmul.mubr.f32.gmra.mxu0 %v1690
        %v1900 = vpop.f32.mrf.mxu0
        %v1901 = vadd.f32 %v1577, %v1900
        %v1902 = vpop.f32.mrf.mxu0
        %1903 = vmatprep.mubr.f32.mxu0 0.0
        %1904 = vmatmul.mubr.f32.gmra.mxu0 %v1693
        %v1905 = vpop.f32.mrf.mxu0
        %v1906 = vadd.f32 %v1582, %v1905
        %v1907 = vpop.f32.mrf.mxu0
        %1908 = vmatprep.mubr.f32.mxu0 0.0
        %1909 = vmatmul.mubr.f32.gmra.mxu0 %v1696
        %v1910 = vpop.f32.mrf.mxu0
        %v1911 = vadd.f32 %v1587, %v1910
        %v1912 = vpop.f32.mrf.mxu0
        %1913 = vmatprep.mubr.f32.mxu0 0.0
        %1914 = vmatmul.mubr.f32.gmra.mxu0 %v1699
        %v1915 = vpop.f32.mrf.mxu0
        %v1916 = vadd.f32 %v1592, %v1915
        %v1917 = vpop.f32.mrf.mxu0
        %1918 = vmatprep.mubr.f32.mxu0 0.0
        %1919 = vmatmul.mubr.f32.gmra.mxu0 %v1702
        %v1920 = vpop.f32.mrf.mxu0
        %v1921 = vadd.f32 %v1597, %v1920
        %v1922 = vpop.f32.mrf.mxu0
        %1923 = vmatprep.mubr.f32.mxu0 0.0
        %1924 = vmatmul.mubr.f32.gmra.mxu0 %v1705
        %v1925 = vpop.f32.mrf.mxu0
        %v1926 = vadd.f32 %v1602, %v1925
        %v1927 = vpop.f32.mrf.mxu0
        %1928 = vmatprep.mubr.f32.mxu0 0.0
        %1929 = vmatmul.mubr.f32.gmra.mxu0 %v1708
        %v1930 = vpop.f32.mrf.mxu0
        %v1931 = vadd.f32 %v1607, %v1930
        %v1932 = vpop.f32.mrf.mxu0
        %1933 = vmatprep.mubr.f32.mxu0 0.0
        %1934 = vmatmul.mubr.f32.gmra.mxu0 %v1711
        %v1935 = vpop.f32.mrf.mxu0
        %v1936 = vadd.f32 %v1612, %v1935
        %v1937 = vpop.f32.mrf.mxu0
        %1938 = vmatprep.mubr.f32.mxu0 0.0
        %1939 = vmatmul.mubr.f32.gmra.mxu0 %v1714
        %v1940 = vpop.f32.mrf.mxu0
        %v1941 = vadd.f32 %v1617, %v1940
        %v1942 = vpop.f32.mrf.mxu0
        %1943 = vdwg.mxu0
        %v1944 = vld [vmem:[#allocation2 + $0x2] sm:$0xff]
        %v1945 = vld [vmem:[#allocation2 + $0xa] sm:$0xff]
        %v1946 = vld [vmem:[#allocation2 + $0x12] sm:$0xff]
        %v1947 = vld [vmem:[#allocation2 + $0x1a] sm:$0xff]
        %v1948 = vld [vmem:[#allocation2 + $0x22] sm:$0xff]
        %v1949 = vld [vmem:[#allocation2 + $0x2a] sm:$0xff]
        %v1950 = vld [vmem:[#allocation2 + $0x32] sm:$0xff]
        %v1951 = vld [vmem:[#allocation2 + $0x3a] sm:$0xff]
        %v1952 = vld [vmem:[#allocation2 + $0x42] sm:$0xff]
        %v1953 = vld [vmem:[#allocation2 + $0x4a] sm:$0xff]
        %v1954 = vld [vmem:[#allocation2 + $0x52] sm:$0xff]
        %v1955 = vld [vmem:[#allocation2 + $0x5a] sm:$0xff]
        %v1956 = vld [vmem:[#allocation2 + $0x62] sm:$0xff]
        %v1957 = vld [vmem:[#allocation2 + $0x6a] sm:$0xff]
        %v1958 = vld [vmem:[#allocation2 + $0x72] sm:$0xff]
        %v1959 = vld [vmem:[#allocation2 + $0x7a] sm:$0xff]
        %v1960 = vld [vmem:[#allocation2 + $0x82] sm:$0xff]
        %v1961 = vld [vmem:[#allocation2 + $0x8a] sm:$0xff]
        %v1962 = vld [vmem:[#allocation2 + $0x92] sm:$0xff]
        %v1963 = vld [vmem:[#allocation2 + $0x9a] sm:$0xff]
        %v1964 = vld [vmem:[#allocation2 + $0xa2] sm:$0xff]
        %v1965 = vld [vmem:[#allocation2 + $0xaa] sm:$0xff]
        %v1966 = vld [vmem:[#allocation2 + $0xb2] sm:$0xff]
        %v1967 = vld [vmem:[#allocation2 + $0xba] sm:$0xff]
        %v1968 = vld [vmem:[#allocation2 + $0xc2] sm:$0xff]
        %v1969 = vld [vmem:[#allocation2 + $0xca] sm:$0xff]
        %v1970 = vld [vmem:[#allocation2 + $0xd2] sm:$0xff]
        %v1971 = vld [vmem:[#allocation2 + $0xda] sm:$0xff]
        %v1972 = vld [vmem:[#allocation2 + $0xe2] sm:$0xff]
        %v1973 = vld [vmem:[#allocation2 + $0xea] sm:$0xff]
        %v1974 = vld [vmem:[#allocation2 + $0xf2] sm:$0xff]
        %v1975 = vld [vmem:[#allocation2 + $0xfa] sm:$0xff]
        %v1976 = vsel %vm1164, %v1944, 0.0
        %v1977 = vsel %vm1165, %v1945, 0.0
        %v1978 = vsel %vm1166, %v1946, 0.0
        %v1979 = vsel %vm1167, %v1947, 0.0
        %v1980 = vsel %vm1168, %v1948, 0.0
        %v1981 = vsel %vm1169, %v1949, 0.0
        %v1982 = vsel %vm1170, %v1950, 0.0
        %v1983 = vsel %vm1171, %v1951, 0.0
        %v1984 = vsel %vm1172, %v1952, 0.0
        %v1985 = vsel %vm1173, %v1953, 0.0
        %v1986 = vsel %vm1174, %v1954, 0.0
        %v1987 = vsel %vm1175, %v1955, 0.0
        %v1988 = vsel %vm1176, %v1956, 0.0
        %v1989 = vsel %vm1177, %v1957, 0.0
        %v1990 = vsel %vm1178, %v1958, 0.0
        %v1991 = vsel %vm1179, %v1959, 0.0
        %v1992 = vsel %vm1180, %v1960, 0.0
        %v1993 = vsel %vm1181, %v1961, 0.0
        %v1994 = vsel %vm1182, %v1962, 0.0
        %v1995 = vsel %vm1183, %v1963, 0.0
        %v1996 = vsel %vm1184, %v1964, 0.0
        %v1997 = vsel %vm1185, %v1965, 0.0
        %v1998 = vsel %vm1186, %v1966, 0.0
        %v1999 = vsel %vm1187, %v1967, 0.0
        %v2000 = vsel %vm1188, %v1968, 0.0
        %v2001 = vsel %vm1189, %v1969, 0.0
        %v2002 = vsel %vm1190, %v1970, 0.0
        %v2003 = vsel %vm1191, %v1971, 0.0
        %v2004 = vsel %vm1192, %v1972, 0.0
        %v2005 = vsel %vm1193, %v1973, 0.0
        %v2006 = vsel %vm1194, %v1974, 0.0
        %v2007 = vsel %vm1195, %v1975, 0.0
        %s2008 = scalar_lea.vmem %s2, 8
        %v2009 = vld [vmem:[%s2008] sm:$0xf]
        %v2011 = vsel %vm675, %v1976, 0
        %v2014 = vsel %vm675, %v1977, 0
        %v2017 = vsel %vm675, %v1978, 0
        %v2020 = vsel %vm675, %v1979, 0
        %v2023 = vsel %vm675, %v1980, 0
        %v2026 = vsel %vm675, %v1981, 0
        %v2029 = vsel %vm675, %v1982, 0
        %v2032 = vsel %vm675, %v1983, 0
        %v2035 = vsel %vm675, %v1984, 0
        %v2038 = vsel %vm675, %v1985, 0
        %v2041 = vsel %vm675, %v1986, 0
        %v2044 = vsel %vm675, %v1987, 0
        %v2047 = vsel %vm675, %v1988, 0
        %v2050 = vsel %vm675, %v1989, 0
        %v2053 = vsel %vm675, %v1990, 0
        %v2056 = vsel %vm675, %v1991, 0
        %v2059 = vsel %vm675, %v1992, 0
        %v2062 = vsel %vm675, %v1993, 0
        %v2065 = vsel %vm675, %v1994, 0
        %v2068 = vsel %vm675, %v1995, 0
        %v2071 = vsel %vm675, %v1996, 0
        %v2074 = vsel %vm675, %v1997, 0
        %v2077 = vsel %vm675, %v1998, 0
        %v2080 = vsel %vm675, %v1999, 0
        %v2083 = vsel %vm675, %v2000, 0
        %v2086 = vsel %vm675, %v2001, 0
        %v2089 = vsel %vm675, %v2002, 0
        %v2092 = vsel %vm675, %v2003, 0
        %v2095 = vsel %vm675, %v2004, 0
        %v2098 = vsel %vm675, %v2005, 0
        %v2101 = vsel %vm675, %v2006, 0
        %v2104 = vsel %vm675, %v2007, 0
        %v2107 = vsel %vm1391, %v2009, 0
        %2109 = vmatprep.subr.mxu0 0.0
        %2110 = vmatpush1.msra.mxu0 0.0
        %2111 = vmatprep.subr.mxu0 0.0
        %2112 = vmatpush1.msra.mxu0 0.0
        %2113 = vmatprep.subr.mxu0 0.0
        %2114 = vmatpush1.msra.mxu0 0.0
        %2115 = vmatprep.subr.mxu0 0.0
        %2116 = vmatpush1.msra.mxu0 0.0
        %2117 = vmatprep.subr.mxu0 0.0
        %2118 = vmatpush1.msra.mxu0 0.0
        %2119 = vmatprep.subr.mxu0 0.0
        %2120 = vmatpush1.msra.mxu0 0.0
        %2121 = vmatprep.subr.mxu0 0.0
        %2122 = vmatpush1.msra.mxu0 0.0
        %2123 = vmatprep.subr.mxu0 0.0
        %2124 = vmatpush1.msra.mxu0 0.0
        %2125 = vmatprep.subr.mxu0 0.0
        %2126 = vmatpush1.msra.mxu0 0.0
        %2127 = vmatprep.subr.mxu0 0.0
        %2128 = vmatpush1.msra.mxu0 0.0
        %2129 = vmatprep.subr.mxu0 0.0
        %2130 = vmatpush1.msra.mxu0 0.0
        %2131 = vmatprep.subr.mxu0 0.0
        %2132 = vmatpush1.msra.mxu0 0.0
        %2133 = vmatprep.subr.mxu0 0.0
        %2134 = vmatpush1.msra.mxu0 0.0
        %2135 = vmatprep.subr.mxu0 0.0
        %2136 = vmatpush1.msra.mxu0 0.0
        %2137 = vmatprep.subr.mxu0 0.0
        %2138 = vmatpush1.msra.mxu0 0.0
        %2139 = vmatprep.subr.mxu0 0.0
        %2140 = vmatpush1.msra.mxu0 %v2107
        %2141 = vmatprep.subr.mxu0 0.0
        %2142 = vmatpush2.msra.mxu0 0.0
        %2143 = vmatprep.subr.mxu0 0.0
        %2144 = vmatpush2.msra.mxu0 0.0
        %2145 = vmatprep.subr.mxu0 0.0
        %2146 = vmatpush2.msra.mxu0 0.0
        %2147 = vmatprep.subr.mxu0 0.0
        %2148 = vmatpush2.msra.mxu0 0.0
        %2149 = vmatprep.subr.mxu0 0.0
        %2150 = vmatpush2.msra.mxu0 0.0
        %2151 = vmatprep.subr.mxu0 0.0
        %2152 = vmatpush2.msra.mxu0 0.0
        %2153 = vmatprep.subr.mxu0 0.0
        %2154 = vmatpush2.msra.mxu0 0.0
        %2155 = vmatprep.subr.mxu0 0.0
        %2156 = vmatpush2.msra.mxu0 0.0
        %2157 = vmatprep.subr.mxu0 0.0
        %2158 = vmatpush2.msra.mxu0 0.0
        %2159 = vmatprep.subr.mxu0 0.0
        %2160 = vmatpush2.msra.mxu0 0.0
        %2161 = vmatprep.subr.mxu0 0.0
        %2162 = vmatpush2.msra.mxu0 0.0
        %2163 = vmatprep.subr.mxu0 0.0
        %2164 = vmatpush2.msra.mxu0 0.0
        %2165 = vmatprep.subr.mxu0 0.0
        %2166 = vmatpush2.msra.mxu0 0.0
        %2167 = vmatprep.subr.mxu0 0.0
        %2168 = vmatpush2.msra.mxu0 0.0
        %2169 = vmatprep.subr.mxu0 0.0
        %2170 = vmatpush2.msra.mxu0 0.0
        %2171 = vmatprep.subr.mxu0 0.0
        %2172 = vmatpush2.msra.mxu0 0.0
        %2173 = vmatprep.mubr.f32.mxu0 0.0
        %2174 = vmatmul.mubr.f32.gmra.mxu0 %v2011
        %v2175 = vpop.f32.mrf.mxu0
        %v2176 = vadd.f32 0.0, %v2175
        %v2177 = vpop.f32.mrf.mxu0
        %2178 = vmatprep.mubr.f32.mxu0 0.0
        %2179 = vmatmul.mubr.f32.gmra.mxu0 %v2014
        %v2180 = vpop.f32.mrf.mxu0
        %v2181 = vadd.f32 0.0, %v2180
        %v2182 = vpop.f32.mrf.mxu0
        %2183 = vmatprep.mubr.f32.mxu0 0.0
        %2184 = vmatmul.mubr.f32.gmra.mxu0 %v2017
        %v2185 = vpop.f32.mrf.mxu0
        %v2186 = vadd.f32 0.0, %v2185
        %v2187 = vpop.f32.mrf.mxu0
        %2188 = vmatprep.mubr.f32.mxu0 0.0
        %2189 = vmatmul.mubr.f32.gmra.mxu0 %v2020
        %v2190 = vpop.f32.mrf.mxu0
        %v2191 = vadd.f32 0.0, %v2190
        %v2192 = vpop.f32.mrf.mxu0
        %2193 = vmatprep.mubr.f32.mxu0 0.0
        %2194 = vmatmul.mubr.f32.gmra.mxu0 %v2023
        %v2195 = vpop.f32.mrf.mxu0
        %v2196 = vadd.f32 0.0, %v2195
        %v2197 = vpop.f32.mrf.mxu0
        %2198 = vmatprep.mubr.f32.mxu0 0.0
        %2199 = vmatmul.mubr.f32.gmra.mxu0 %v2026
        %v2200 = vpop.f32.mrf.mxu0
        %v2201 = vadd.f32 0.0, %v2200
        %v2202 = vpop.f32.mrf.mxu0
        %2203 = vmatprep.mubr.f32.mxu0 0.0
        %2204 = vmatmul.mubr.f32.gmra.mxu0 %v2029
        %v2205 = vpop.f32.mrf.mxu0
        %v2206 = vadd.f32 0.0, %v2205
        %v2207 = vpop.f32.mrf.mxu0
        %2208 = vmatprep.mubr.f32.mxu0 0.0
        %2209 = vmatmul.mubr.f32.gmra.mxu0 %v2032
        %v2210 = vpop.f32.mrf.mxu0
        %v2211 = vadd.f32 0.0, %v2210
        %v2212 = vpop.f32.mrf.mxu0
        %2213 = vmatprep.mubr.f32.mxu0 0.0
        %2214 = vmatmul.mubr.f32.gmra.mxu0 %v2035
        %v2215 = vpop.f32.mrf.mxu0
        %v2216 = vadd.f32 0.0, %v2215
        %v2217 = vpop.f32.mrf.mxu0
        %2218 = vmatprep.mubr.f32.mxu0 0.0
        %2219 = vmatmul.mubr.f32.gmra.mxu0 %v2038
        %v2220 = vpop.f32.mrf.mxu0
        %v2221 = vadd.f32 0.0, %v2220
        %v2222 = vpop.f32.mrf.mxu0
        %2223 = vmatprep.mubr.f32.mxu0 0.0
        %2224 = vmatmul.mubr.f32.gmra.mxu0 %v2041
        %v2225 = vpop.f32.mrf.mxu0
        %v2226 = vadd.f32 0.0, %v2225
        %v2227 = vpop.f32.mrf.mxu0
        %2228 = vmatprep.mubr.f32.mxu0 0.0
        %2229 = vmatmul.mubr.f32.gmra.mxu0 %v2044
        %v2230 = vpop.f32.mrf.mxu0
        %v2231 = vadd.f32 0.0, %v2230
        %v2232 = vpop.f32.mrf.mxu0
        %2233 = vmatprep.mubr.f32.mxu0 0.0
        %2234 = vmatmul.mubr.f32.gmra.mxu0 %v2047
        %v2235 = vpop.f32.mrf.mxu0
        %v2236 = vadd.f32 0.0, %v2235
        %v2237 = vpop.f32.mrf.mxu0
        %2238 = vmatprep.mubr.f32.mxu0 0.0
        %2239 = vmatmul.mubr.f32.gmra.mxu0 %v2050
        %v2240 = vpop.f32.mrf.mxu0
        %v2241 = vadd.f32 0.0, %v2240
        %v2242 = vpop.f32.mrf.mxu0
        %2243 = vmatprep.mubr.f32.mxu0 0.0
        %2244 = vmatmul.mubr.f32.gmra.mxu0 %v2053
        %v2245 = vpop.f32.mrf.mxu0
        %v2246 = vadd.f32 0.0, %v2245
        %v2247 = vpop.f32.mrf.mxu0
        %2248 = vmatprep.mubr.f32.mxu0 0.0
        %2249 = vmatmul.mubr.f32.gmra.mxu0 %v2056
        %v2250 = vpop.f32.mrf.mxu0
        %v2251 = vadd.f32 0.0, %v2250
        %v2252 = vpop.f32.mrf.mxu0
        %2253 = vmatprep.mubr.f32.mxu0 0.0
        %2254 = vmatmul.mubr.f32.gmra.mxu0 %v2059
        %v2255 = vpop.f32.mrf.mxu0
        %v2256 = vadd.f32 0.0, %v2255
        %v2257 = vpop.f32.mrf.mxu0
        %2258 = vmatprep.mubr.f32.mxu0 0.0
        %2259 = vmatmul.mubr.f32.gmra.mxu0 %v2062
        %v2260 = vpop.f32.mrf.mxu0
        %v2261 = vadd.f32 0.0, %v2260
        %v2262 = vpop.f32.mrf.mxu0
        %2263 = vmatprep.mubr.f32.mxu0 0.0
        %2264 = vmatmul.mubr.f32.gmra.mxu0 %v2065
        %v2265 = vpop.f32.mrf.mxu0
        %v2266 = vadd.f32 0.0, %v2265
        %v2267 = vpop.f32.mrf.mxu0
        %2268 = vmatprep.mubr.f32.mxu0 0.0
        %2269 = vmatmul.mubr.f32.gmra.mxu0 %v2068
        %v2270 = vpop.f32.mrf.mxu0
        %v2271 = vadd.f32 0.0, %v2270
        %v2272 = vpop.f32.mrf.mxu0
        %2273 = vmatprep.mubr.f32.mxu0 0.0
        %2274 = vmatmul.mubr.f32.gmra.mxu0 %v2071
        %v2275 = vpop.f32.mrf.mxu0
        %v2276 = vadd.f32 0.0, %v2275
        %v2277 = vpop.f32.mrf.mxu0
        %2278 = vmatprep.mubr.f32.mxu0 0.0
        %2279 = vmatmul.mubr.f32.gmra.mxu0 %v2074
        %v2280 = vpop.f32.mrf.mxu0
        %v2281 = vadd.f32 0.0, %v2280
        %v2282 = vpop.f32.mrf.mxu0
        %2283 = vmatprep.mubr.f32.mxu0 0.0
        %2284 = vmatmul.mubr.f32.gmra.mxu0 %v2077
        %v2285 = vpop.f32.mrf.mxu0
        %v2286 = vadd.f32 0.0, %v2285
        %v2287 = vpop.f32.mrf.mxu0
        %2288 = vmatprep.mubr.f32.mxu0 0.0
        %2289 = vmatmul.mubr.f32.gmra.mxu0 %v2080
        %v2290 = vpop.f32.mrf.mxu0
        %v2291 = vadd.f32 0.0, %v2290
        %v2292 = vpop.f32.mrf.mxu0
        %2293 = vmatprep.mubr.f32.mxu0 0.0
        %2294 = vmatmul.mubr.f32.gmra.mxu0 %v2083
        %v2295 = vpop.f32.mrf.mxu0
        %v2296 = vadd.f32 0.0, %v2295
        %v2297 = vpop.f32.mrf.mxu0
        %2298 = vmatprep.mubr.f32.mxu0 0.0
        %2299 = vmatmul.mubr.f32.gmra.mxu0 %v2086
        %v2300 = vpop.f32.mrf.mxu0
        %v2301 = vadd.f32 0.0, %v2300
        %v2302 = vpop.f32.mrf.mxu0
        %2303 = vmatprep.mubr.f32.mxu0 0.0
        %2304 = vmatmul.mubr.f32.gmra.mxu0 %v2089
        %v2305 = vpop.f32.mrf.mxu0
        %v2306 = vadd.f32 0.0, %v2305
        %v2307 = vpop.f32.mrf.mxu0
        %2308 = vmatprep.mubr.f32.mxu0 0.0
        %2309 = vmatmul.mubr.f32.gmra.mxu0 %v2092
        %v2310 = vpop.f32.mrf.mxu0
        %v2311 = vadd.f32 0.0, %v2310
        %v2312 = vpop.f32.mrf.mxu0
        %2313 = vmatprep.mubr.f32.mxu0 0.0
        %2314 = vmatmul.mubr.f32.gmra.mxu0 %v2095
        %v2315 = vpop.f32.mrf.mxu0
        %v2316 = vadd.f32 0.0, %v2315
        %v2317 = vpop.f32.mrf.mxu0
        %2318 = vmatprep.mubr.f32.mxu0 0.0
        %2319 = vmatmul.mubr.f32.gmra.mxu0 %v2098
        %v2320 = vpop.f32.mrf.mxu0
        %v2321 = vadd.f32 0.0, %v2320
        %v2322 = vpop.f32.mrf.mxu0
        %2323 = vmatprep.mubr.f32.mxu0 0.0
        %2324 = vmatmul.mubr.f32.gmra.mxu0 %v2101
        %v2325 = vpop.f32.mrf.mxu0
        %v2326 = vadd.f32 0.0, %v2325
        %v2327 = vpop.f32.mrf.mxu0
        %2328 = vmatprep.mubr.f32.mxu0 0.0
        %2329 = vmatmul.mubr.f32.gmra.mxu0 %v2104
        %v2330 = vpop.f32.mrf.mxu0
        %v2331 = vadd.f32 0.0, %v2330
        %v2332 = vpop.f32.mrf.mxu0
        %2333 = vdwg.mxu0
        %v2334 = vadd.f32 %v1786, %v2176
        %v2335 = vadd.f32 %v1791, %v2181
        %v2336 = vadd.f32 %v1796, %v2186
        %v2337 = vadd.f32 %v1801, %v2191
        %v2338 = vadd.f32 %v1806, %v2196
        %v2339 = vadd.f32 %v1811, %v2201
        %v2340 = vadd.f32 %v1816, %v2206
        %v2341 = vadd.f32 %v1821, %v2211
        %v2342 = vadd.f32 %v1826, %v2216
        %v2343 = vadd.f32 %v1831, %v2221
        %v2344 = vadd.f32 %v1836, %v2226
        %v2345 = vadd.f32 %v1841, %v2231
        %v2346 = vadd.f32 %v1846, %v2236
        %v2347 = vadd.f32 %v1851, %v2241
        %v2348 = vadd.f32 %v1856, %v2246
        %v2349 = vadd.f32 %v1861, %v2251
        %v2350 = vadd.f32 %v1866, %v2256
        %v2351 = vadd.f32 %v1871, %v2261
        %v2352 = vadd.f32 %v1876, %v2266
        %v2353 = vadd.f32 %v1881, %v2271
        %v2354 = vadd.f32 %v1886, %v2276
        %v2355 = vadd.f32 %v1891, %v2281
        %v2356 = vadd.f32 %v1896, %v2286
        %v2357 = vadd.f32 %v1901, %v2291
        %v2358 = vadd.f32 %v1906, %v2296
        %v2359 = vadd.f32 %v1911, %v2301
        %v2360 = vadd.f32 %v1916, %v2306
        %v2361 = vadd.f32 %v1921, %v2311
        %v2362 = vadd.f32 %v1926, %v2316
        %v2363 = vadd.f32 %v1931, %v2321
        %v2364 = vadd.f32 %v1936, %v2326
        %v2365 = vadd.f32 %v1941, %v2331
        %v2366 = vld [vmem:[#allocation2 + $0x10] sm:$0xff]
        %v2367 = vld [vmem:[#allocation2 + $0x18] sm:$0xff]
        %v2368 = vld [vmem:[#allocation2 + $0x20] sm:$0xff]
        %v2369 = vld [vmem:[#allocation2 + $0x28] sm:$0xff]
        %v2370 = vld [vmem:[#allocation2 + $0x30] sm:$0xff]
        %v2371 = vld [vmem:[#allocation2 + $0x38] sm:$0xff]
        %v2372 = vld [vmem:[#allocation2 + $0x40] sm:$0xff]
        %v2373 = vld [vmem:[#allocation2 + $0x48] sm:$0xff]
        %v2374 = vld [vmem:[#allocation2 + $0x50] sm:$0xff]
        %v2375 = vld [vmem:[#allocation2 + $0x58] sm:$0xff]
        %v2376 = vld [vmem:[#allocation2 + $0x60] sm:$0xff]
        %v2377 = vld [vmem:[#allocation2 + $0x68] sm:$0xff]
        %v2378 = vld [vmem:[#allocation2 + $0x70] sm:$0xff]
        %v2379 = vld [vmem:[#allocation2 + $0x78] sm:$0xff]
        %v2380 = vld [vmem:[#allocation2 + $0x80] sm:$0xff]
        %v2381 = vld [vmem:[#allocation2 + $0x88] sm:$0xff]
        %v2382 = vld [vmem:[#allocation2 + $0x90] sm:$0xff]
        %v2383 = vld [vmem:[#allocation2 + $0x98] sm:$0xff]
        %v2384 = vld [vmem:[#allocation2 + $0xa0] sm:$0xff]
        %v2385 = vld [vmem:[#allocation2 + $0xa8] sm:$0xff]
        %v2386 = vld [vmem:[#allocation2 + $0xb0] sm:$0xff]
        %v2387 = vld [vmem:[#allocation2 + $0xb8] sm:$0xff]
        %v2388 = vld [vmem:[#allocation2 + $0xc0] sm:$0xff]
        %v2389 = vld [vmem:[#allocation2 + $0xc8] sm:$0xff]
        %v2390 = vld [vmem:[#allocation2 + $0xd0] sm:$0xff]
        %v2391 = vld [vmem:[#allocation2 + $0xd8] sm:$0xff]
        %v2392 = vld [vmem:[#allocation2 + $0xe0] sm:$0xff]
        %v2393 = vld [vmem:[#allocation2 + $0xe8] sm:$0xff]
        %v2394 = vld [vmem:[#allocation2 + $0xf0] sm:$0xff]
        %v2395 = vld [vmem:[#allocation2 + $0xf8] sm:$0xff]
        %v2396 = vld [vmem:[#allocation2 + $0x100] sm:$0xff]
        %v2397 = vld [vmem:[#allocation2 + $0x108] sm:$0xff]
        %v2398 = vsel %vm1132, %v2366, 0.0
        %v2399 = vsel %vm1133, %v2367, 0.0
        %v2400 = vsel %vm1134, %v2368, 0.0
        %v2401 = vsel %vm1135, %v2369, 0.0
        %v2402 = vsel %vm1136, %v2370, 0.0
        %v2403 = vsel %vm1137, %v2371, 0.0
        %v2404 = vsel %vm1138, %v2372, 0.0
        %v2405 = vsel %vm1139, %v2373, 0.0
        %v2406 = vsel %vm1140, %v2374, 0.0
        %v2407 = vsel %vm1141, %v2375, 0.0
        %v2408 = vsel %vm1142, %v2376, 0.0
        %v2409 = vsel %vm1143, %v2377, 0.0
        %v2410 = vsel %vm1144, %v2378, 0.0
        %v2411 = vsel %vm1145, %v2379, 0.0
        %v2412 = vsel %vm1146, %v2380, 0.0
        %v2413 = vsel %vm1147, %v2381, 0.0
        %v2414 = vsel %vm1148, %v2382, 0.0
        %v2415 = vsel %vm1149, %v2383, 0.0
        %v2416 = vsel %vm1150, %v2384, 0.0
        %v2417 = vsel %vm1151, %v2385, 0.0
        %v2418 = vsel %vm1152, %v2386, 0.0
        %v2419 = vsel %vm1153, %v2387, 0.0
        %v2420 = vsel %vm1154, %v2388, 0.0
        %v2421 = vsel %vm1155, %v2389, 0.0
        %v2422 = vsel %vm1156, %v2390, 0.0
        %v2423 = vsel %vm1157, %v2391, 0.0
        %v2424 = vsel %vm1158, %v2392, 0.0
        %v2425 = vsel %vm1159, %v2393, 0.0
        %v2426 = vsel %vm1160, %v2394, 0.0
        %v2427 = vsel %vm1161, %v2395, 0.0
        %v2428 = vsel %vm1162, %v2396, 0.0
        %v2429 = vsel %vm1163, %v2397, 0.0
        %s2430 = scalar_lea.vmem %s2, 12
        %v2431 = vld [vmem:[%s2430] sm:$0xf]
        %v2433 = vsel %vm675, %v2398, 0
        %v2436 = vsel %vm675, %v2399, 0
        %v2439 = vsel %vm675, %v2400, 0
        %v2442 = vsel %vm675, %v2401, 0
        %v2445 = vsel %vm675, %v2402, 0
        %v2448 = vsel %vm675, %v2403, 0
        %v2451 = vsel %vm675, %v2404, 0
        %v2454 = vsel %vm675, %v2405, 0
        %v2457 = vsel %vm675, %v2406, 0
        %v2460 = vsel %vm675, %v2407, 0
        %v2463 = vsel %vm675, %v2408, 0
        %v2466 = vsel %vm675, %v2409, 0
        %v2469 = vsel %vm675, %v2410, 0
        %v2472 = vsel %vm675, %v2411, 0
        %v2475 = vsel %vm675, %v2412, 0
        %v2478 = vsel %vm675, %v2413, 0
        %v2481 = vsel %vm675, %v2414, 0
        %v2484 = vsel %vm675, %v2415, 0
        %v2487 = vsel %vm675, %v2416, 0
        %v2490 = vsel %vm675, %v2417, 0
        %v2493 = vsel %vm675, %v2418, 0
        %v2496 = vsel %vm675, %v2419, 0
        %v2499 = vsel %vm675, %v2420, 0
        %v2502 = vsel %vm675, %v2421, 0
        %v2505 = vsel %vm675, %v2422, 0
        %v2508 = vsel %vm675, %v2423, 0
        %v2511 = vsel %vm675, %v2424, 0
        %v2514 = vsel %vm675, %v2425, 0
        %v2517 = vsel %vm675, %v2426, 0
        %v2520 = vsel %vm675, %v2427, 0
        %v2523 = vsel %vm675, %v2428, 0
        %v2526 = vsel %vm675, %v2429, 0
        %v2529 = vsel %vm1391, %v2431, 0
        %2531 = vmatprep.subr.mxu0 0.0
        %2532 = vmatpush1.msra.mxu0 0.0
        %2533 = vmatprep.subr.mxu0 0.0
        %2534 = vmatpush1.msra.mxu0 0.0
        %2535 = vmatprep.subr.mxu0 0.0
        %2536 = vmatpush1.msra.mxu0 0.0
        %2537 = vmatprep.subr.mxu0 0.0
        %2538 = vmatpush1.msra.mxu0 0.0
        %2539 = vmatprep.subr.mxu0 0.0
        %2540 = vmatpush1.msra.mxu0 0.0
        %2541 = vmatprep.subr.mxu0 0.0
        %2542 = vmatpush1.msra.mxu0 0.0
        %2543 = vmatprep.subr.mxu0 0.0
        %2544 = vmatpush1.msra.mxu0 0.0
        %2545 = vmatprep.subr.mxu0 0.0
        %2546 = vmatpush1.msra.mxu0 0.0
        %2547 = vmatprep.subr.mxu0 0.0
        %2548 = vmatpush1.msra.mxu0 0.0
        %2549 = vmatprep.subr.mxu0 0.0
        %2550 = vmatpush1.msra.mxu0 0.0
        %2551 = vmatprep.subr.mxu0 0.0
        %2552 = vmatpush1.msra.mxu0 0.0
        %2553 = vmatprep.subr.mxu0 0.0
        %2554 = vmatpush1.msra.mxu0 0.0
        %2555 = vmatprep.subr.mxu0 0.0
        %2556 = vmatpush1.msra.mxu0 0.0
        %2557 = vmatprep.subr.mxu0 0.0
        %2558 = vmatpush1.msra.mxu0 0.0
        %2559 = vmatprep.subr.mxu0 0.0
        %2560 = vmatpush1.msra.mxu0 0.0
        %2561 = vmatprep.subr.mxu0 0.0
        %2562 = vmatpush1.msra.mxu0 %v2529
        %2563 = vmatprep.subr.mxu0 0.0
        %2564 = vmatpush2.msra.mxu0 0.0
        %2565 = vmatprep.subr.mxu0 0.0
        %2566 = vmatpush2.msra.mxu0 0.0
        %2567 = vmatprep.subr.mxu0 0.0
        %2568 = vmatpush2.msra.mxu0 0.0
        %2569 = vmatprep.subr.mxu0 0.0
        %2570 = vmatpush2.msra.mxu0 0.0
        %2571 = vmatprep.subr.mxu0 0.0
        %2572 = vmatpush2.msra.mxu0 0.0
        %2573 = vmatprep.subr.mxu0 0.0
        %2574 = vmatpush2.msra.mxu0 0.0
        %2575 = vmatprep.subr.mxu0 0.0
        %2576 = vmatpush2.msra.mxu0 0.0
        %2577 = vmatprep.subr.mxu0 0.0
        %2578 = vmatpush2.msra.mxu0 0.0
        %2579 = vmatprep.subr.mxu0 0.0
        %2580 = vmatpush2.msra.mxu0 0.0
        %2581 = vmatprep.subr.mxu0 0.0
        %2582 = vmatpush2.msra.mxu0 0.0
        %2583 = vmatprep.subr.mxu0 0.0
        %2584 = vmatpush2.msra.mxu0 0.0
        %2585 = vmatprep.subr.mxu0 0.0
        %2586 = vmatpush2.msra.mxu0 0.0
        %2587 = vmatprep.subr.mxu0 0.0
        %2588 = vmatpush2.msra.mxu0 0.0
        %2589 = vmatprep.subr.mxu0 0.0
        %2590 = vmatpush2.msra.mxu0 0.0
        %2591 = vmatprep.subr.mxu0 0.0
        %2592 = vmatpush2.msra.mxu0 0.0
        %2593 = vmatprep.subr.mxu0 0.0
        %2594 = vmatpush2.msra.mxu0 0.0
        %2595 = vmatprep.mubr.f32.mxu0 0.0
        %2596 = vmatmul.mubr.f32.gmra.mxu0 %v2433
        %v2597 = vpop.f32.mrf.mxu0
        %v2598 = vadd.f32 0.0, %v2597
        %v2599 = vpop.f32.mrf.mxu0
        %2600 = vmatprep.mubr.f32.mxu0 0.0
        %2601 = vmatmul.mubr.f32.gmra.mxu0 %v2436
        %v2602 = vpop.f32.mrf.mxu0
        %v2603 = vadd.f32 0.0, %v2602
        %v2604 = vpop.f32.mrf.mxu0
        %2605 = vmatprep.mubr.f32.mxu0 0.0
        %2606 = vmatmul.mubr.f32.gmra.mxu0 %v2439
        %v2607 = vpop.f32.mrf.mxu0
        %v2608 = vadd.f32 0.0, %v2607
        %v2609 = vpop.f32.mrf.mxu0
        %2610 = vmatprep.mubr.f32.mxu0 0.0
        %2611 = vmatmul.mubr.f32.gmra.mxu0 %v2442
        %v2612 = vpop.f32.mrf.mxu0
        %v2613 = vadd.f32 0.0, %v2612
        %v2614 = vpop.f32.mrf.mxu0
        %2615 = vmatprep.mubr.f32.mxu0 0.0
        %2616 = vmatmul.mubr.f32.gmra.mxu0 %v2445
        %v2617 = vpop.f32.mrf.mxu0
        %v2618 = vadd.f32 0.0, %v2617
        %v2619 = vpop.f32.mrf.mxu0
        %2620 = vmatprep.mubr.f32.mxu0 0.0
        %2621 = vmatmul.mubr.f32.gmra.mxu0 %v2448
        %v2622 = vpop.f32.mrf.mxu0
        %v2623 = vadd.f32 0.0, %v2622
        %v2624 = vpop.f32.mrf.mxu0
        %2625 = vmatprep.mubr.f32.mxu0 0.0
        %2626 = vmatmul.mubr.f32.gmra.mxu0 %v2451
        %v2627 = vpop.f32.mrf.mxu0
        %v2628 = vadd.f32 0.0, %v2627
        %v2629 = vpop.f32.mrf.mxu0
        %2630 = vmatprep.mubr.f32.mxu0 0.0
        %2631 = vmatmul.mubr.f32.gmra.mxu0 %v2454
        %v2632 = vpop.f32.mrf.mxu0
        %v2633 = vadd.f32 0.0, %v2632
        %v2634 = vpop.f32.mrf.mxu0
        %2635 = vmatprep.mubr.f32.mxu0 0.0
        %2636 = vmatmul.mubr.f32.gmra.mxu0 %v2457
        %v2637 = vpop.f32.mrf.mxu0
        %v2638 = vadd.f32 0.0, %v2637
        %v2639 = vpop.f32.mrf.mxu0
        %2640 = vmatprep.mubr.f32.mxu0 0.0
        %2641 = vmatmul.mubr.f32.gmra.mxu0 %v2460
        %v2642 = vpop.f32.mrf.mxu0
        %v2643 = vadd.f32 0.0, %v2642
        %v2644 = vpop.f32.mrf.mxu0
        %2645 = vmatprep.mubr.f32.mxu0 0.0
        %2646 = vmatmul.mubr.f32.gmra.mxu0 %v2463
        %v2647 = vpop.f32.mrf.mxu0
        %v2648 = vadd.f32 0.0, %v2647
        %v2649 = vpop.f32.mrf.mxu0
        %2650 = vmatprep.mubr.f32.mxu0 0.0
        %2651 = vmatmul.mubr.f32.gmra.mxu0 %v2466
        %v2652 = vpop.f32.mrf.mxu0
        %v2653 = vadd.f32 0.0, %v2652
        %v2654 = vpop.f32.mrf.mxu0
        %2655 = vmatprep.mubr.f32.mxu0 0.0
        %2656 = vmatmul.mubr.f32.gmra.mxu0 %v2469
        %v2657 = vpop.f32.mrf.mxu0
        %v2658 = vadd.f32 0.0, %v2657
        %v2659 = vpop.f32.mrf.mxu0
        %2660 = vmatprep.mubr.f32.mxu0 0.0
        %2661 = vmatmul.mubr.f32.gmra.mxu0 %v2472
        %v2662 = vpop.f32.mrf.mxu0
        %v2663 = vadd.f32 0.0, %v2662
        %v2664 = vpop.f32.mrf.mxu0
        %2665 = vmatprep.mubr.f32.mxu0 0.0
        %2666 = vmatmul.mubr.f32.gmra.mxu0 %v2475
        %v2667 = vpop.f32.mrf.mxu0
        %v2668 = vadd.f32 0.0, %v2667
        %v2669 = vpop.f32.mrf.mxu0
        %2670 = vmatprep.mubr.f32.mxu0 0.0
        %2671 = vmatmul.mubr.f32.gmra.mxu0 %v2478
        %v2672 = vpop.f32.mrf.mxu0
        %v2673 = vadd.f32 0.0, %v2672
        %v2674 = vpop.f32.mrf.mxu0
        %2675 = vmatprep.mubr.f32.mxu0 0.0
        %2676 = vmatmul.mubr.f32.gmra.mxu0 %v2481
        %v2677 = vpop.f32.mrf.mxu0
        %v2678 = vadd.f32 0.0, %v2677
        %v2679 = vpop.f32.mrf.mxu0
        %2680 = vmatprep.mubr.f32.mxu0 0.0
        %2681 = vmatmul.mubr.f32.gmra.mxu0 %v2484
        %v2682 = vpop.f32.mrf.mxu0
        %v2683 = vadd.f32 0.0, %v2682
        %v2684 = vpop.f32.mrf.mxu0
        %2685 = vmatprep.mubr.f32.mxu0 0.0
        %2686 = vmatmul.mubr.f32.gmra.mxu0 %v2487
        %v2687 = vpop.f32.mrf.mxu0
        %v2688 = vadd.f32 0.0, %v2687
        %v2689 = vpop.f32.mrf.mxu0
        %2690 = vmatprep.mubr.f32.mxu0 0.0
        %2691 = vmatmul.mubr.f32.gmra.mxu0 %v2490
        %v2692 = vpop.f32.mrf.mxu0
        %v2693 = vadd.f32 0.0, %v2692
        %v2694 = vpop.f32.mrf.mxu0
        %2695 = vmatprep.mubr.f32.mxu0 0.0
        %2696 = vmatmul.mubr.f32.gmra.mxu0 %v2493
        %v2697 = vpop.f32.mrf.mxu0
        %v2698 = vadd.f32 0.0, %v2697
        %v2699 = vpop.f32.mrf.mxu0
        %2700 = vmatprep.mubr.f32.mxu0 0.0
        %2701 = vmatmul.mubr.f32.gmra.mxu0 %v2496
        %v2702 = vpop.f32.mrf.mxu0
        %v2703 = vadd.f32 0.0, %v2702
        %v2704 = vpop.f32.mrf.mxu0
        %2705 = vmatprep.mubr.f32.mxu0 0.0
        %2706 = vmatmul.mubr.f32.gmra.mxu0 %v2499
        %v2707 = vpop.f32.mrf.mxu0
        %v2708 = vadd.f32 0.0, %v2707
        %v2709 = vpop.f32.mrf.mxu0
        %2710 = vmatprep.mubr.f32.mxu0 0.0
        %2711 = vmatmul.mubr.f32.gmra.mxu0 %v2502
        %v2712 = vpop.f32.mrf.mxu0
        %v2713 = vadd.f32 0.0, %v2712
        %v2714 = vpop.f32.mrf.mxu0
        %2715 = vmatprep.mubr.f32.mxu0 0.0
        %2716 = vmatmul.mubr.f32.gmra.mxu0 %v2505
        %v2717 = vpop.f32.mrf.mxu0
        %v2718 = vadd.f32 0.0, %v2717
        %v2719 = vpop.f32.mrf.mxu0
        %2720 = vmatprep.mubr.f32.mxu0 0.0
        %2721 = vmatmul.mubr.f32.gmra.mxu0 %v2508
        %v2722 = vpop.f32.mrf.mxu0
        %v2723 = vadd.f32 0.0, %v2722
        %v2724 = vpop.f32.mrf.mxu0
        %2725 = vmatprep.mubr.f32.mxu0 0.0
        %2726 = vmatmul.mubr.f32.gmra.mxu0 %v2511
        %v2727 = vpop.f32.mrf.mxu0
        %v2728 = vadd.f32 0.0, %v2727
        %v2729 = vpop.f32.mrf.mxu0
        %2730 = vmatprep.mubr.f32.mxu0 0.0
        %2731 = vmatmul.mubr.f32.gmra.mxu0 %v2514
        %v2732 = vpop.f32.mrf.mxu0
        %v2733 = vadd.f32 0.0, %v2732
        %v2734 = vpop.f32.mrf.mxu0
        %2735 = vmatprep.mubr.f32.mxu0 0.0
        %2736 = vmatmul.mubr.f32.gmra.mxu0 %v2517
        %v2737 = vpop.f32.mrf.mxu0
        %v2738 = vadd.f32 0.0, %v2737
        %v2739 = vpop.f32.mrf.mxu0
        %2740 = vmatprep.mubr.f32.mxu0 0.0
        %2741 = vmatmul.mubr.f32.gmra.mxu0 %v2520
        %v2742 = vpop.f32.mrf.mxu0
        %v2743 = vadd.f32 0.0, %v2742
        %v2744 = vpop.f32.mrf.mxu0
        %2745 = vmatprep.mubr.f32.mxu0 0.0
        %2746 = vmatmul.mubr.f32.gmra.mxu0 %v2523
        %v2747 = vpop.f32.mrf.mxu0
        %v2748 = vadd.f32 0.0, %v2747
        %v2749 = vpop.f32.mrf.mxu0
        %2750 = vmatprep.mubr.f32.mxu0 0.0
        %2751 = vmatmul.mubr.f32.gmra.mxu0 %v2526
        %v2752 = vpop.f32.mrf.mxu0
        %v2753 = vadd.f32 0.0, %v2752
        %v2754 = vpop.f32.mrf.mxu0
        %2755 = vdwg.mxu0
        %v2756 = vadd.f32 %v2334, %v2598
        %v2757 = vadd.f32 %v2335, %v2603
        %v2758 = vadd.f32 %v2336, %v2608
        %v2759 = vadd.f32 %v2337, %v2613
        %v2760 = vadd.f32 %v2338, %v2618
        %v2761 = vadd.f32 %v2339, %v2623
        %v2762 = vadd.f32 %v2340, %v2628
        %v2763 = vadd.f32 %v2341, %v2633
        %v2764 = vadd.f32 %v2342, %v2638
        %v2765 = vadd.f32 %v2343, %v2643
        %v2766 = vadd.f32 %v2344, %v2648
        %v2767 = vadd.f32 %v2345, %v2653
        %v2768 = vadd.f32 %v2346, %v2658
        %v2769 = vadd.f32 %v2347, %v2663
        %v2770 = vadd.f32 %v2348, %v2668
        %v2771 = vadd.f32 %v2349, %v2673
        %v2772 = vadd.f32 %v2350, %v2678
        %v2773 = vadd.f32 %v2351, %v2683
        %v2774 = vadd.f32 %v2352, %v2688
        %v2775 = vadd.f32 %v2353, %v2693
        %v2776 = vadd.f32 %v2354, %v2698
        %v2777 = vadd.f32 %v2355, %v2703
        %v2778 = vadd.f32 %v2356, %v2708
        %v2779 = vadd.f32 %v2357, %v2713
        %v2780 = vadd.f32 %v2358, %v2718
        %v2781 = vadd.f32 %v2359, %v2723
        %v2782 = vadd.f32 %v2360, %v2728
        %v2783 = vadd.f32 %v2361, %v2733
        %v2784 = vadd.f32 %v2362, %v2738
        %v2785 = vadd.f32 %v2363, %v2743
        %v2786 = vadd.f32 %v2364, %v2748
        %v2787 = vadd.f32 %v2365, %v2753
        %v2788 = vld [vmem:[#allocation2 + $0x11] sm:$0xff]
        %v2789 = vld [vmem:[#allocation2 + $0x19] sm:$0xff]
        %v2790 = vld [vmem:[#allocation2 + $0x21] sm:$0xff]
        %v2791 = vld [vmem:[#allocation2 + $0x29] sm:$0xff]
        %v2792 = vld [vmem:[#allocation2 + $0x31] sm:$0xff]
        %v2793 = vld [vmem:[#allocation2 + $0x39] sm:$0xff]
        %v2794 = vld [vmem:[#allocation2 + $0x41] sm:$0xff]
        %v2795 = vld [vmem:[#allocation2 + $0x49] sm:$0xff]
        %v2796 = vld [vmem:[#allocation2 + $0x51] sm:$0xff]
        %v2797 = vld [vmem:[#allocation2 + $0x59] sm:$0xff]
        %v2798 = vld [vmem:[#allocation2 + $0x61] sm:$0xff]
        %v2799 = vld [vmem:[#allocation2 + $0x69] sm:$0xff]
        %v2800 = vld [vmem:[#allocation2 + $0x71] sm:$0xff]
        %v2801 = vld [vmem:[#allocation2 + $0x79] sm:$0xff]
        %v2802 = vld [vmem:[#allocation2 + $0x81] sm:$0xff]
        %v2803 = vld [vmem:[#allocation2 + $0x89] sm:$0xff]
        %v2804 = vld [vmem:[#allocation2 + $0x91] sm:$0xff]
        %v2805 = vld [vmem:[#allocation2 + $0x99] sm:$0xff]
        %v2806 = vld [vmem:[#allocation2 + $0xa1] sm:$0xff]
        %v2807 = vld [vmem:[#allocation2 + $0xa9] sm:$0xff]
        %v2808 = vld [vmem:[#allocation2 + $0xb1] sm:$0xff]
        %v2809 = vld [vmem:[#allocation2 + $0xb9] sm:$0xff]
        %v2810 = vld [vmem:[#allocation2 + $0xc1] sm:$0xff]
        %v2811 = vld [vmem:[#allocation2 + $0xc9] sm:$0xff]
        %v2812 = vld [vmem:[#allocation2 + $0xd1] sm:$0xff]
        %v2813 = vld [vmem:[#allocation2 + $0xd9] sm:$0xff]
        %v2814 = vld [vmem:[#allocation2 + $0xe1] sm:$0xff]
        %v2815 = vld [vmem:[#allocation2 + $0xe9] sm:$0xff]
        %v2816 = vld [vmem:[#allocation2 + $0xf1] sm:$0xff]
        %v2817 = vld [vmem:[#allocation2 + $0xf9] sm:$0xff]
        %v2818 = vld [vmem:[#allocation2 + $0x101] sm:$0xff]
        %v2819 = vld [vmem:[#allocation2 + $0x109] sm:$0xff]
        %s2820 = scalar_lea.vmem %s2, 16
        %v2821 = vld [vmem:[%s2820] sm:$0xf]
        %v2823 = vsel %vm675, %v2788, 0
        %v2826 = vsel %vm675, %v2789, 0
        %v2829 = vsel %vm675, %v2790, 0
        %v2832 = vsel %vm675, %v2791, 0
        %v2835 = vsel %vm675, %v2792, 0
        %v2838 = vsel %vm675, %v2793, 0
        %v2841 = vsel %vm675, %v2794, 0
        %v2844 = vsel %vm675, %v2795, 0
        %v2847 = vsel %vm675, %v2796, 0
        %v2850 = vsel %vm675, %v2797, 0
        %v2853 = vsel %vm675, %v2798, 0
        %v2856 = vsel %vm675, %v2799, 0
        %v2859 = vsel %vm675, %v2800, 0
        %v2862 = vsel %vm675, %v2801, 0
        %v2865 = vsel %vm675, %v2802, 0
        %v2868 = vsel %vm675, %v2803, 0
        %v2871 = vsel %vm675, %v2804, 0
        %v2874 = vsel %vm675, %v2805, 0
        %v2877 = vsel %vm675, %v2806, 0
        %v2880 = vsel %vm675, %v2807, 0
        %v2883 = vsel %vm675, %v2808, 0
        %v2886 = vsel %vm675, %v2809, 0
        %v2889 = vsel %vm675, %v2810, 0
        %v2892 = vsel %vm675, %v2811, 0
        %v2895 = vsel %vm675, %v2812, 0
        %v2898 = vsel %vm675, %v2813, 0
        %v2901 = vsel %vm675, %v2814, 0
        %v2904 = vsel %vm675, %v2815, 0
        %v2907 = vsel %vm675, %v2816, 0
        %v2910 = vsel %vm675, %v2817, 0
        %v2913 = vsel %vm675, %v2818, 0
        %v2916 = vsel %vm675, %v2819, 0
        %v2919 = vsel %vm1391, %v2821, 0
        %2921 = vmatprep.subr.mxu0 0.0
        %2922 = vmatpush1.msra.mxu0 0.0
        %2923 = vmatprep.subr.mxu0 0.0
        %2924 = vmatpush1.msra.mxu0 0.0
        %2925 = vmatprep.subr.mxu0 0.0
        %2926 = vmatpush1.msra.mxu0 0.0
        %2927 = vmatprep.subr.mxu0 0.0
        %2928 = vmatpush1.msra.mxu0 0.0
        %2929 = vmatprep.subr.mxu0 0.0
        %2930 = vmatpush1.msra.mxu0 0.0
        %2931 = vmatprep.subr.mxu0 0.0
        %2932 = vmatpush1.msra.mxu0 0.0
        %2933 = vmatprep.subr.mxu0 0.0
        %2934 = vmatpush1.msra.mxu0 0.0
        %2935 = vmatprep.subr.mxu0 0.0
        %2936 = vmatpush1.msra.mxu0 0.0
        %2937 = vmatprep.subr.mxu0 0.0
        %2938 = vmatpush1.msra.mxu0 0.0
        %2939 = vmatprep.subr.mxu0 0.0
        %2940 = vmatpush1.msra.mxu0 0.0
        %2941 = vmatprep.subr.mxu0 0.0
        %2942 = vmatpush1.msra.mxu0 0.0
        %2943 = vmatprep.subr.mxu0 0.0
        %2944 = vmatpush1.msra.mxu0 0.0
        %2945 = vmatprep.subr.mxu0 0.0
        %2946 = vmatpush1.msra.mxu0 0.0
        %2947 = vmatprep.subr.mxu0 0.0
        %2948 = vmatpush1.msra.mxu0 0.0
        %2949 = vmatprep.subr.mxu0 0.0
        %2950 = vmatpush1.msra.mxu0 0.0
        %2951 = vmatprep.subr.mxu0 0.0
        %2952 = vmatpush1.msra.mxu0 %v2919
        %2953 = vmatprep.subr.mxu0 0.0
        %2954 = vmatpush2.msra.mxu0 0.0
        %2955 = vmatprep.subr.mxu0 0.0
        %2956 = vmatpush2.msra.mxu0 0.0
        %2957 = vmatprep.subr.mxu0 0.0
        %2958 = vmatpush2.msra.mxu0 0.0
        %2959 = vmatprep.subr.mxu0 0.0
        %2960 = vmatpush2.msra.mxu0 0.0
        %2961 = vmatprep.subr.mxu0 0.0
        %2962 = vmatpush2.msra.mxu0 0.0
        %2963 = vmatprep.subr.mxu0 0.0
        %2964 = vmatpush2.msra.mxu0 0.0
        %2965 = vmatprep.subr.mxu0 0.0
        %2966 = vmatpush2.msra.mxu0 0.0
        %2967 = vmatprep.subr.mxu0 0.0
        %2968 = vmatpush2.msra.mxu0 0.0
        %2969 = vmatprep.subr.mxu0 0.0
        %2970 = vmatpush2.msra.mxu0 0.0
        %2971 = vmatprep.subr.mxu0 0.0
        %2972 = vmatpush2.msra.mxu0 0.0
        %2973 = vmatprep.subr.mxu0 0.0
        %2974 = vmatpush2.msra.mxu0 0.0
        %2975 = vmatprep.subr.mxu0 0.0
        %2976 = vmatpush2.msra.mxu0 0.0
        %2977 = vmatprep.subr.mxu0 0.0
        %2978 = vmatpush2.msra.mxu0 0.0
        %2979 = vmatprep.subr.mxu0 0.0
        %2980 = vmatpush2.msra.mxu0 0.0
        %2981 = vmatprep.subr.mxu0 0.0
        %2982 = vmatpush2.msra.mxu0 0.0
        %2983 = vmatprep.subr.mxu0 0.0
        %2984 = vmatpush2.msra.mxu0 0.0
        %2985 = vmatprep.mubr.f32.mxu0 0.0
        %2986 = vmatmul.mubr.f32.gmra.mxu0 %v2823
        %v2987 = vpop.f32.mrf.mxu0
        %v2988 = vadd.f32 0.0, %v2987
        %v2989 = vpop.f32.mrf.mxu0
        %2990 = vmatprep.mubr.f32.mxu0 0.0
        %2991 = vmatmul.mubr.f32.gmra.mxu0 %v2826
        %v2992 = vpop.f32.mrf.mxu0
        %v2993 = vadd.f32 0.0, %v2992
        %v2994 = vpop.f32.mrf.mxu0
        %2995 = vmatprep.mubr.f32.mxu0 0.0
        %2996 = vmatmul.mubr.f32.gmra.mxu0 %v2829
        %v2997 = vpop.f32.mrf.mxu0
        %v2998 = vadd.f32 0.0, %v2997
        %v2999 = vpop.f32.mrf.mxu0
        %3000 = vmatprep.mubr.f32.mxu0 0.0
        %3001 = vmatmul.mubr.f32.gmra.mxu0 %v2832
        %v3002 = vpop.f32.mrf.mxu0
        %v3003 = vadd.f32 0.0, %v3002
        %v3004 = vpop.f32.mrf.mxu0
        %3005 = vmatprep.mubr.f32.mxu0 0.0
        %3006 = vmatmul.mubr.f32.gmra.mxu0 %v2835
        %v3007 = vpop.f32.mrf.mxu0
        %v3008 = vadd.f32 0.0, %v3007
        %v3009 = vpop.f32.mrf.mxu0
        %3010 = vmatprep.mubr.f32.mxu0 0.0
        %3011 = vmatmul.mubr.f32.gmra.mxu0 %v2838
        %v3012 = vpop.f32.mrf.mxu0
        %v3013 = vadd.f32 0.0, %v3012
        %v3014 = vpop.f32.mrf.mxu0
        %3015 = vmatprep.mubr.f32.mxu0 0.0
        %3016 = vmatmul.mubr.f32.gmra.mxu0 %v2841
        %v3017 = vpop.f32.mrf.mxu0
        %v3018 = vadd.f32 0.0, %v3017
        %v3019 = vpop.f32.mrf.mxu0
        %3020 = vmatprep.mubr.f32.mxu0 0.0
        %3021 = vmatmul.mubr.f32.gmra.mxu0 %v2844
        %v3022 = vpop.f32.mrf.mxu0
        %v3023 = vadd.f32 0.0, %v3022
        %v3024 = vpop.f32.mrf.mxu0
        %3025 = vmatprep.mubr.f32.mxu0 0.0
        %3026 = vmatmul.mubr.f32.gmra.mxu0 %v2847
        %v3027 = vpop.f32.mrf.mxu0
        %v3028 = vadd.f32 0.0, %v3027
        %v3029 = vpop.f32.mrf.mxu0
        %3030 = vmatprep.mubr.f32.mxu0 0.0
        %3031 = vmatmul.mubr.f32.gmra.mxu0 %v2850
        %v3032 = vpop.f32.mrf.mxu0
        %v3033 = vadd.f32 0.0, %v3032
        %v3034 = vpop.f32.mrf.mxu0
        %3035 = vmatprep.mubr.f32.mxu0 0.0
        %3036 = vmatmul.mubr.f32.gmra.mxu0 %v2853
        %v3037 = vpop.f32.mrf.mxu0
        %v3038 = vadd.f32 0.0, %v3037
        %v3039 = vpop.f32.mrf.mxu0
        %3040 = vmatprep.mubr.f32.mxu0 0.0
        %3041 = vmatmul.mubr.f32.gmra.mxu0 %v2856
        %v3042 = vpop.f32.mrf.mxu0
        %v3043 = vadd.f32 0.0, %v3042
        %v3044 = vpop.f32.mrf.mxu0
        %3045 = vmatprep.mubr.f32.mxu0 0.0
        %3046 = vmatmul.mubr.f32.gmra.mxu0 %v2859
        %v3047 = vpop.f32.mrf.mxu0
        %v3048 = vadd.f32 0.0, %v3047
        %v3049 = vpop.f32.mrf.mxu0
        %3050 = vmatprep.mubr.f32.mxu0 0.0
        %3051 = vmatmul.mubr.f32.gmra.mxu0 %v2862
        %v3052 = vpop.f32.mrf.mxu0
        %v3053 = vadd.f32 0.0, %v3052
        %v3054 = vpop.f32.mrf.mxu0
        %3055 = vmatprep.mubr.f32.mxu0 0.0
        %3056 = vmatmul.mubr.f32.gmra.mxu0 %v2865
        %v3057 = vpop.f32.mrf.mxu0
        %v3058 = vadd.f32 0.0, %v3057
        %v3059 = vpop.f32.mrf.mxu0
        %3060 = vmatprep.mubr.f32.mxu0 0.0
        %3061 = vmatmul.mubr.f32.gmra.mxu0 %v2868
        %v3062 = vpop.f32.mrf.mxu0
        %v3063 = vadd.f32 0.0, %v3062
        %v3064 = vpop.f32.mrf.mxu0
        %3065 = vmatprep.mubr.f32.mxu0 0.0
        %3066 = vmatmul.mubr.f32.gmra.mxu0 %v2871
        %v3067 = vpop.f32.mrf.mxu0
        %v3068 = vadd.f32 0.0, %v3067
        %v3069 = vpop.f32.mrf.mxu0
        %3070 = vmatprep.mubr.f32.mxu0 0.0
        %3071 = vmatmul.mubr.f32.gmra.mxu0 %v2874
        %v3072 = vpop.f32.mrf.mxu0
        %v3073 = vadd.f32 0.0, %v3072
        %v3074 = vpop.f32.mrf.mxu0
        %3075 = vmatprep.mubr.f32.mxu0 0.0
        %3076 = vmatmul.mubr.f32.gmra.mxu0 %v2877
        %v3077 = vpop.f32.mrf.mxu0
        %v3078 = vadd.f32 0.0, %v3077
        %v3079 = vpop.f32.mrf.mxu0
        %3080 = vmatprep.mubr.f32.mxu0 0.0
        %3081 = vmatmul.mubr.f32.gmra.mxu0 %v2880
        %v3082 = vpop.f32.mrf.mxu0
        %v3083 = vadd.f32 0.0, %v3082
        %v3084 = vpop.f32.mrf.mxu0
        %3085 = vmatprep.mubr.f32.mxu0 0.0
        %3086 = vmatmul.mubr.f32.gmra.mxu0 %v2883
        %v3087 = vpop.f32.mrf.mxu0
        %v3088 = vadd.f32 0.0, %v3087
        %v3089 = vpop.f32.mrf.mxu0
        %3090 = vmatprep.mubr.f32.mxu0 0.0
        %3091 = vmatmul.mubr.f32.gmra.mxu0 %v2886
        %v3092 = vpop.f32.mrf.mxu0
        %v3093 = vadd.f32 0.0, %v3092
        %v3094 = vpop.f32.mrf.mxu0
        %3095 = vmatprep.mubr.f32.mxu0 0.0
        %3096 = vmatmul.mubr.f32.gmra.mxu0 %v2889
        %v3097 = vpop.f32.mrf.mxu0
        %v3098 = vadd.f32 0.0, %v3097
        %v3099 = vpop.f32.mrf.mxu0
        %3100 = vmatprep.mubr.f32.mxu0 0.0
        %3101 = vmatmul.mubr.f32.gmra.mxu0 %v2892
        %v3102 = vpop.f32.mrf.mxu0
        %v3103 = vadd.f32 0.0, %v3102
        %v3104 = vpop.f32.mrf.mxu0
        %3105 = vmatprep.mubr.f32.mxu0 0.0
        %3106 = vmatmul.mubr.f32.gmra.mxu0 %v2895
        %v3107 = vpop.f32.mrf.mxu0
        %v3108 = vadd.f32 0.0, %v3107
        %v3109 = vpop.f32.mrf.mxu0
        %3110 = vmatprep.mubr.f32.mxu0 0.0
        %3111 = vmatmul.mubr.f32.gmra.mxu0 %v2898
        %v3112 = vpop.f32.mrf.mxu0
        %v3113 = vadd.f32 0.0, %v3112
        %v3114 = vpop.f32.mrf.mxu0
        %3115 = vmatprep.mubr.f32.mxu0 0.0
        %3116 = vmatmul.mubr.f32.gmra.mxu0 %v2901
        %v3117 = vpop.f32.mrf.mxu0
        %v3118 = vadd.f32 0.0, %v3117
        %v3119 = vpop.f32.mrf.mxu0
        %3120 = vmatprep.mubr.f32.mxu0 0.0
        %3121 = vmatmul.mubr.f32.gmra.mxu0 %v2904
        %v3122 = vpop.f32.mrf.mxu0
        %v3123 = vadd.f32 0.0, %v3122
        %v3124 = vpop.f32.mrf.mxu0
        %3125 = vmatprep.mubr.f32.mxu0 0.0
        %3126 = vmatmul.mubr.f32.gmra.mxu0 %v2907
        %v3127 = vpop.f32.mrf.mxu0
        %v3128 = vadd.f32 0.0, %v3127
        %v3129 = vpop.f32.mrf.mxu0
        %3130 = vmatprep.mubr.f32.mxu0 0.0
        %3131 = vmatmul.mubr.f32.gmra.mxu0 %v2910
        %v3132 = vpop.f32.mrf.mxu0
        %v3133 = vadd.f32 0.0, %v3132
        %v3134 = vpop.f32.mrf.mxu0
        %3135 = vmatprep.mubr.f32.mxu0 0.0
        %3136 = vmatmul.mubr.f32.gmra.mxu0 %v2913
        %v3137 = vpop.f32.mrf.mxu0
        %v3138 = vadd.f32 0.0, %v3137
        %v3139 = vpop.f32.mrf.mxu0
        %3140 = vmatprep.mubr.f32.mxu0 0.0
        %3141 = vmatmul.mubr.f32.gmra.mxu0 %v2916
        %v3142 = vpop.f32.mrf.mxu0
        %v3143 = vadd.f32 0.0, %v3142
        %v3144 = vpop.f32.mrf.mxu0
        %3145 = vdwg.mxu0
        %v3146 = vadd.f32 %v2756, %v2988
        %v3147 = vadd.f32 %v2757, %v2993
        %v3148 = vadd.f32 %v2758, %v2998
        %v3149 = vadd.f32 %v2759, %v3003
        %v3150 = vadd.f32 %v2760, %v3008
        %v3151 = vadd.f32 %v2761, %v3013
        %v3152 = vadd.f32 %v2762, %v3018
        %v3153 = vadd.f32 %v2763, %v3023
        %v3154 = vadd.f32 %v2764, %v3028
        %v3155 = vadd.f32 %v2765, %v3033
        %v3156 = vadd.f32 %v2766, %v3038
        %v3157 = vadd.f32 %v2767, %v3043
        %v3158 = vadd.f32 %v2768, %v3048
        %v3159 = vadd.f32 %v2769, %v3053
        %v3160 = vadd.f32 %v2770, %v3058
        %v3161 = vadd.f32 %v2771, %v3063
        %v3162 = vadd.f32 %v2772, %v3068
        %v3163 = vadd.f32 %v2773, %v3073
        %v3164 = vadd.f32 %v2774, %v3078
        %v3165 = vadd.f32 %v2775, %v3083
        %v3166 = vadd.f32 %v2776, %v3088
        %v3167 = vadd.f32 %v2777, %v3093
        %v3168 = vadd.f32 %v2778, %v3098
        %v3169 = vadd.f32 %v2779, %v3103
        %v3170 = vadd.f32 %v2780, %v3108
        %v3171 = vadd.f32 %v2781, %v3113
        %v3172 = vadd.f32 %v2782, %v3118
        %v3173 = vadd.f32 %v2783, %v3123
        %v3174 = vadd.f32 %v2784, %v3128
        %v3175 = vadd.f32 %v2785, %v3133
        %v3176 = vadd.f32 %v2786, %v3138
        %v3177 = vadd.f32 %v2787, %v3143
        %v3178 = vld [vmem:[#allocation2 + $0x12] sm:$0xff]
        %v3179 = vld [vmem:[#allocation2 + $0x1a] sm:$0xff]
        %v3180 = vld [vmem:[#allocation2 + $0x22] sm:$0xff]
        %v3181 = vld [vmem:[#allocation2 + $0x2a] sm:$0xff]
        %v3182 = vld [vmem:[#allocation2 + $0x32] sm:$0xff]
        %v3183 = vld [vmem:[#allocation2 + $0x3a] sm:$0xff]
        %v3184 = vld [vmem:[#allocation2 + $0x42] sm:$0xff]
        %v3185 = vld [vmem:[#allocation2 + $0x4a] sm:$0xff]
        %v3186 = vld [vmem:[#allocation2 + $0x52] sm:$0xff]
        %v3187 = vld [vmem:[#allocation2 + $0x5a] sm:$0xff]
        %v3188 = vld [vmem:[#allocation2 + $0x62] sm:$0xff]
        %v3189 = vld [vmem:[#allocation2 + $0x6a] sm:$0xff]
        %v3190 = vld [vmem:[#allocation2 + $0x72] sm:$0xff]
        %v3191 = vld [vmem:[#allocation2 + $0x7a] sm:$0xff]
        %v3192 = vld [vmem:[#allocation2 + $0x82] sm:$0xff]
        %v3193 = vld [vmem:[#allocation2 + $0x8a] sm:$0xff]
        %v3194 = vld [vmem:[#allocation2 + $0x92] sm:$0xff]
        %v3195 = vld [vmem:[#allocation2 + $0x9a] sm:$0xff]
        %v3196 = vld [vmem:[#allocation2 + $0xa2] sm:$0xff]
        %v3197 = vld [vmem:[#allocation2 + $0xaa] sm:$0xff]
        %v3198 = vld [vmem:[#allocation2 + $0xb2] sm:$0xff]
        %v3199 = vld [vmem:[#allocation2 + $0xba] sm:$0xff]
        %v3200 = vld [vmem:[#allocation2 + $0xc2] sm:$0xff]
        %v3201 = vld [vmem:[#allocation2 + $0xca] sm:$0xff]
        %v3202 = vld [vmem:[#allocation2 + $0xd2] sm:$0xff]
        %v3203 = vld [vmem:[#allocation2 + $0xda] sm:$0xff]
        %v3204 = vld [vmem:[#allocation2 + $0xe2] sm:$0xff]
        %v3205 = vld [vmem:[#allocation2 + $0xea] sm:$0xff]
        %v3206 = vld [vmem:[#allocation2 + $0xf2] sm:$0xff]
        %v3207 = vld [vmem:[#allocation2 + $0xfa] sm:$0xff]
        %v3208 = vld [vmem:[#allocation2 + $0x102] sm:$0xff]
        %v3209 = vld [vmem:[#allocation2 + $0x10a] sm:$0xff]
        %v3210 = vsel %vm1164, %v3178, 0.0
        %v3211 = vsel %vm1165, %v3179, 0.0
        %v3212 = vsel %vm1166, %v3180, 0.0
        %v3213 = vsel %vm1167, %v3181, 0.0
        %v3214 = vsel %vm1168, %v3182, 0.0
        %v3215 = vsel %vm1169, %v3183, 0.0
        %v3216 = vsel %vm1170, %v3184, 0.0
        %v3217 = vsel %vm1171, %v3185, 0.0
        %v3218 = vsel %vm1172, %v3186, 0.0
        %v3219 = vsel %vm1173, %v3187, 0.0
        %v3220 = vsel %vm1174, %v3188, 0.0
        %v3221 = vsel %vm1175, %v3189, 0.0
        %v3222 = vsel %vm1176, %v3190, 0.0
        %v3223 = vsel %vm1177, %v3191, 0.0
        %v3224 = vsel %vm1178, %v3192, 0.0
        %v3225 = vsel %vm1179, %v3193, 0.0
        %v3226 = vsel %vm1180, %v3194, 0.0
        %v3227 = vsel %vm1181, %v3195, 0.0
        %v3228 = vsel %vm1182, %v3196, 0.0
        %v3229 = vsel %vm1183, %v3197, 0.0
        %v3230 = vsel %vm1184, %v3198, 0.0
        %v3231 = vsel %vm1185, %v3199, 0.0
        %v3232 = vsel %vm1186, %v3200, 0.0
        %v3233 = vsel %vm1187, %v3201, 0.0
        %v3234 = vsel %vm1188, %v3202, 0.0
        %v3235 = vsel %vm1189, %v3203, 0.0
        %v3236 = vsel %vm1190, %v3204, 0.0
        %v3237 = vsel %vm1191, %v3205, 0.0
        %v3238 = vsel %vm1192, %v3206, 0.0
        %v3239 = vsel %vm1193, %v3207, 0.0
        %v3240 = vsel %vm1194, %v3208, 0.0
        %v3241 = vsel %vm1195, %v3209, 0.0
        %s3242 = scalar_lea.vmem %s2, 20
        %v3243 = vld [vmem:[%s3242] sm:$0xf]
        %v3245 = vsel %vm675, %v3210, 0
        %v3248 = vsel %vm675, %v3211, 0
        %v3251 = vsel %vm675, %v3212, 0
        %v3254 = vsel %vm675, %v3213, 0
        %v3257 = vsel %vm675, %v3214, 0
        %v3260 = vsel %vm675, %v3215, 0
        %v3263 = vsel %vm675, %v3216, 0
        %v3266 = vsel %vm675, %v3217, 0
        %v3269 = vsel %vm675, %v3218, 0
        %v3272 = vsel %vm675, %v3219, 0
        %v3275 = vsel %vm675, %v3220, 0
        %v3278 = vsel %vm675, %v3221, 0
        %v3281 = vsel %vm675, %v3222, 0
        %v3284 = vsel %vm675, %v3223, 0
        %v3287 = vsel %vm675, %v3224, 0
        %v3290 = vsel %vm675, %v3225, 0
        %v3293 = vsel %vm675, %v3226, 0
        %v3296 = vsel %vm675, %v3227, 0
        %v3299 = vsel %vm675, %v3228, 0
        %v3302 = vsel %vm675, %v3229, 0
        %v3305 = vsel %vm675, %v3230, 0
        %v3308 = vsel %vm675, %v3231, 0
        %v3311 = vsel %vm675, %v3232, 0
        %v3314 = vsel %vm675, %v3233, 0
        %v3317 = vsel %vm675, %v3234, 0
        %v3320 = vsel %vm675, %v3235, 0
        %v3323 = vsel %vm675, %v3236, 0
        %v3326 = vsel %vm675, %v3237, 0
        %v3329 = vsel %vm675, %v3238, 0
        %v3332 = vsel %vm675, %v3239, 0
        %v3335 = vsel %vm675, %v3240, 0
        %v3338 = vsel %vm675, %v3241, 0
        %v3341 = vsel %vm1391, %v3243, 0
        %3343 = vmatprep.subr.mxu0 0.0
        %3344 = vmatpush1.msra.mxu0 0.0
        %3345 = vmatprep.subr.mxu0 0.0
        %3346 = vmatpush1.msra.mxu0 0.0
        %3347 = vmatprep.subr.mxu0 0.0
        %3348 = vmatpush1.msra.mxu0 0.0
        %3349 = vmatprep.subr.mxu0 0.0
        %3350 = vmatpush1.msra.mxu0 0.0
        %3351 = vmatprep.subr.mxu0 0.0
        %3352 = vmatpush1.msra.mxu0 0.0
        %3353 = vmatprep.subr.mxu0 0.0
        %3354 = vmatpush1.msra.mxu0 0.0
        %3355 = vmatprep.subr.mxu0 0.0
        %3356 = vmatpush1.msra.mxu0 0.0
        %3357 = vmatprep.subr.mxu0 0.0
        %3358 = vmatpush1.msra.mxu0 0.0
        %3359 = vmatprep.subr.mxu0 0.0
        %3360 = vmatpush1.msra.mxu0 0.0
        %3361 = vmatprep.subr.mxu0 0.0
        %3362 = vmatpush1.msra.mxu0 0.0
        %3363 = vmatprep.subr.mxu0 0.0
        %3364 = vmatpush1.msra.mxu0 0.0
        %3365 = vmatprep.subr.mxu0 0.0
        %3366 = vmatpush1.msra.mxu0 0.0
        %3367 = vmatprep.subr.mxu0 0.0
        %3368 = vmatpush1.msra.mxu0 0.0
        %3369 = vmatprep.subr.mxu0 0.0
        %3370 = vmatpush1.msra.mxu0 0.0
        %3371 = vmatprep.subr.mxu0 0.0
        %3372 = vmatpush1.msra.mxu0 0.0
        %3373 = vmatprep.subr.mxu0 0.0
        %3374 = vmatpush1.msra.mxu0 %v3341
        %3375 = vmatprep.subr.mxu0 0.0
        %3376 = vmatpush2.msra.mxu0 0.0
        %3377 = vmatprep.subr.mxu0 0.0
        %3378 = vmatpush2.msra.mxu0 0.0
        %3379 = vmatprep.subr.mxu0 0.0
        %3380 = vmatpush2.msra.mxu0 0.0
        %3381 = vmatprep.subr.mxu0 0.0
        %3382 = vmatpush2.msra.mxu0 0.0
        %3383 = vmatprep.subr.mxu0 0.0
        %3384 = vmatpush2.msra.mxu0 0.0
        %3385 = vmatprep.subr.mxu0 0.0
        %3386 = vmatpush2.msra.mxu0 0.0
        %3387 = vmatprep.subr.mxu0 0.0
        %3388 = vmatpush2.msra.mxu0 0.0
        %3389 = vmatprep.subr.mxu0 0.0
        %3390 = vmatpush2.msra.mxu0 0.0
        %3391 = vmatprep.subr.mxu0 0.0
        %3392 = vmatpush2.msra.mxu0 0.0
        %3393 = vmatprep.subr.mxu0 0.0
        %3394 = vmatpush2.msra.mxu0 0.0
        %3395 = vmatprep.subr.mxu0 0.0
        %3396 = vmatpush2.msra.mxu0 0.0
        %3397 = vmatprep.subr.mxu0 0.0
        %3398 = vmatpush2.msra.mxu0 0.0
        %3399 = vmatprep.subr.mxu0 0.0
        %3400 = vmatpush2.msra.mxu0 0.0
        %3401 = vmatprep.subr.mxu0 0.0
        %3402 = vmatpush2.msra.mxu0 0.0
        %3403 = vmatprep.subr.mxu0 0.0
        %3404 = vmatpush2.msra.mxu0 0.0
        %3405 = vmatprep.subr.mxu0 0.0
        %3406 = vmatpush2.msra.mxu0 0.0
        %3407 = vmatprep.mubr.f32.mxu0 0.0
        %3408 = vmatmul.mubr.f32.gmra.mxu0 %v3245
        %v3409 = vpop.f32.mrf.mxu0
        %v3410 = vadd.f32 0.0, %v3409
        %v3411 = vpop.f32.mrf.mxu0
        %3412 = vmatprep.mubr.f32.mxu0 0.0
        %3413 = vmatmul.mubr.f32.gmra.mxu0 %v3248
        %v3414 = vpop.f32.mrf.mxu0
        %v3415 = vadd.f32 0.0, %v3414
        %v3416 = vpop.f32.mrf.mxu0
        %3417 = vmatprep.mubr.f32.mxu0 0.0
        %3418 = vmatmul.mubr.f32.gmra.mxu0 %v3251
        %v3419 = vpop.f32.mrf.mxu0
        %v3420 = vadd.f32 0.0, %v3419
        %v3421 = vpop.f32.mrf.mxu0
        %3422 = vmatprep.mubr.f32.mxu0 0.0
        %3423 = vmatmul.mubr.f32.gmra.mxu0 %v3254
        %v3424 = vpop.f32.mrf.mxu0
        %v3425 = vadd.f32 0.0, %v3424
        %v3426 = vpop.f32.mrf.mxu0
        %3427 = vmatprep.mubr.f32.mxu0 0.0
        %3428 = vmatmul.mubr.f32.gmra.mxu0 %v3257
        %v3429 = vpop.f32.mrf.mxu0
        %v3430 = vadd.f32 0.0, %v3429
        %v3431 = vpop.f32.mrf.mxu0
        %3432 = vmatprep.mubr.f32.mxu0 0.0
        %3433 = vmatmul.mubr.f32.gmra.mxu0 %v3260
        %v3434 = vpop.f32.mrf.mxu0
        %v3435 = vadd.f32 0.0, %v3434
        %v3436 = vpop.f32.mrf.mxu0
        %3437 = vmatprep.mubr.f32.mxu0 0.0
        %3438 = vmatmul.mubr.f32.gmra.mxu0 %v3263
        %v3439 = vpop.f32.mrf.mxu0
        %v3440 = vadd.f32 0.0, %v3439
        %v3441 = vpop.f32.mrf.mxu0
        %3442 = vmatprep.mubr.f32.mxu0 0.0
        %3443 = vmatmul.mubr.f32.gmra.mxu0 %v3266
        %v3444 = vpop.f32.mrf.mxu0
        %v3445 = vadd.f32 0.0, %v3444
        %v3446 = vpop.f32.mrf.mxu0
        %3447 = vmatprep.mubr.f32.mxu0 0.0
        %3448 = vmatmul.mubr.f32.gmra.mxu0 %v3269
        %v3449 = vpop.f32.mrf.mxu0
        %v3450 = vadd.f32 0.0, %v3449
        %v3451 = vpop.f32.mrf.mxu0
        %3452 = vmatprep.mubr.f32.mxu0 0.0
        %3453 = vmatmul.mubr.f32.gmra.mxu0 %v3272
        %v3454 = vpop.f32.mrf.mxu0
        %v3455 = vadd.f32 0.0, %v3454
        %v3456 = vpop.f32.mrf.mxu0
        %3457 = vmatprep.mubr.f32.mxu0 0.0
        %3458 = vmatmul.mubr.f32.gmra.mxu0 %v3275
        %v3459 = vpop.f32.mrf.mxu0
        %v3460 = vadd.f32 0.0, %v3459
        %v3461 = vpop.f32.mrf.mxu0
        %3462 = vmatprep.mubr.f32.mxu0 0.0
        %3463 = vmatmul.mubr.f32.gmra.mxu0 %v3278
        %v3464 = vpop.f32.mrf.mxu0
        %v3465 = vadd.f32 0.0, %v3464
        %v3466 = vpop.f32.mrf.mxu0
        %3467 = vmatprep.mubr.f32.mxu0 0.0
        %3468 = vmatmul.mubr.f32.gmra.mxu0 %v3281
        %v3469 = vpop.f32.mrf.mxu0
        %v3470 = vadd.f32 0.0, %v3469
        %v3471 = vpop.f32.mrf.mxu0
        %3472 = vmatprep.mubr.f32.mxu0 0.0
        %3473 = vmatmul.mubr.f32.gmra.mxu0 %v3284
        %v3474 = vpop.f32.mrf.mxu0
        %v3475 = vadd.f32 0.0, %v3474
        %v3476 = vpop.f32.mrf.mxu0
        %3477 = vmatprep.mubr.f32.mxu0 0.0
        %3478 = vmatmul.mubr.f32.gmra.mxu0 %v3287
        %v3479 = vpop.f32.mrf.mxu0
        %v3480 = vadd.f32 0.0, %v3479
        %v3481 = vpop.f32.mrf.mxu0
        %3482 = vmatprep.mubr.f32.mxu0 0.0
        %3483 = vmatmul.mubr.f32.gmra.mxu0 %v3290
        %v3484 = vpop.f32.mrf.mxu0
        %v3485 = vadd.f32 0.0, %v3484
        %v3486 = vpop.f32.mrf.mxu0
        %3487 = vmatprep.mubr.f32.mxu0 0.0
        %3488 = vmatmul.mubr.f32.gmra.mxu0 %v3293
        %v3489 = vpop.f32.mrf.mxu0
        %v3490 = vadd.f32 0.0, %v3489
        %v3491 = vpop.f32.mrf.mxu0
        %3492 = vmatprep.mubr.f32.mxu0 0.0
        %3493 = vmatmul.mubr.f32.gmra.mxu0 %v3296
        %v3494 = vpop.f32.mrf.mxu0
        %v3495 = vadd.f32 0.0, %v3494
        %v3496 = vpop.f32.mrf.mxu0
        %3497 = vmatprep.mubr.f32.mxu0 0.0
        %3498 = vmatmul.mubr.f32.gmra.mxu0 %v3299
        %v3499 = vpop.f32.mrf.mxu0
        %v3500 = vadd.f32 0.0, %v3499
        %v3501 = vpop.f32.mrf.mxu0
        %3502 = vmatprep.mubr.f32.mxu0 0.0
        %3503 = vmatmul.mubr.f32.gmra.mxu0 %v3302
        %v3504 = vpop.f32.mrf.mxu0
        %v3505 = vadd.f32 0.0, %v3504
        %v3506 = vpop.f32.mrf.mxu0
        %3507 = vmatprep.mubr.f32.mxu0 0.0
        %3508 = vmatmul.mubr.f32.gmra.mxu0 %v3305
        %v3509 = vpop.f32.mrf.mxu0
        %v3510 = vadd.f32 0.0, %v3509
        %v3511 = vpop.f32.mrf.mxu0
        %3512 = vmatprep.mubr.f32.mxu0 0.0
        %3513 = vmatmul.mubr.f32.gmra.mxu0 %v3308
        %v3514 = vpop.f32.mrf.mxu0
        %v3515 = vadd.f32 0.0, %v3514
        %v3516 = vpop.f32.mrf.mxu0
        %3517 = vmatprep.mubr.f32.mxu0 0.0
        %3518 = vmatmul.mubr.f32.gmra.mxu0 %v3311
        %v3519 = vpop.f32.mrf.mxu0
        %v3520 = vadd.f32 0.0, %v3519
        %v3521 = vpop.f32.mrf.mxu0
        %3522 = vmatprep.mubr.f32.mxu0 0.0
        %3523 = vmatmul.mubr.f32.gmra.mxu0 %v3314
        %v3524 = vpop.f32.mrf.mxu0
        %v3525 = vadd.f32 0.0, %v3524
        %v3526 = vpop.f32.mrf.mxu0
        %3527 = vmatprep.mubr.f32.mxu0 0.0
        %3528 = vmatmul.mubr.f32.gmra.mxu0 %v3317
        %v3529 = vpop.f32.mrf.mxu0
        %v3530 = vadd.f32 0.0, %v3529
        %v3531 = vpop.f32.mrf.mxu0
        %3532 = vmatprep.mubr.f32.mxu0 0.0
        %3533 = vmatmul.mubr.f32.gmra.mxu0 %v3320
        %v3534 = vpop.f32.mrf.mxu0
        %v3535 = vadd.f32 0.0, %v3534
        %v3536 = vpop.f32.mrf.mxu0
        %3537 = vmatprep.mubr.f32.mxu0 0.0
        %3538 = vmatmul.mubr.f32.gmra.mxu0 %v3323
        %v3539 = vpop.f32.mrf.mxu0
        %v3540 = vadd.f32 0.0, %v3539
        %v3541 = vpop.f32.mrf.mxu0
        %3542 = vmatprep.mubr.f32.mxu0 0.0
        %3543 = vmatmul.mubr.f32.gmra.mxu0 %v3326
        %v3544 = vpop.f32.mrf.mxu0
        %v3545 = vadd.f32 0.0, %v3544
        %v3546 = vpop.f32.mrf.mxu0
        %3547 = vmatprep.mubr.f32.mxu0 0.0
        %3548 = vmatmul.mubr.f32.gmra.mxu0 %v3329
        %v3549 = vpop.f32.mrf.mxu0
        %v3550 = vadd.f32 0.0, %v3549
        %v3551 = vpop.f32.mrf.mxu0
        %3552 = vmatprep.mubr.f32.mxu0 0.0
        %3553 = vmatmul.mubr.f32.gmra.mxu0 %v3332
        %v3554 = vpop.f32.mrf.mxu0
        %v3555 = vadd.f32 0.0, %v3554
        %v3556 = vpop.f32.mrf.mxu0
        %3557 = vmatprep.mubr.f32.mxu0 0.0
        %3558 = vmatmul.mubr.f32.gmra.mxu0 %v3335
        %v3559 = vpop.f32.mrf.mxu0
        %v3560 = vadd.f32 0.0, %v3559
        %v3561 = vpop.f32.mrf.mxu0
        %3562 = vmatprep.mubr.f32.mxu0 0.0
        %3563 = vmatmul.mubr.f32.gmra.mxu0 %v3338
        %v3564 = vpop.f32.mrf.mxu0
        %v3565 = vadd.f32 0.0, %v3564
        %v3566 = vpop.f32.mrf.mxu0
        %3567 = vdwg.mxu0
        %v3568 = vadd.f32 %v3146, %v3410
        %v3569 = vadd.f32 %v3147, %v3415
        %v3570 = vadd.f32 %v3148, %v3420
        %v3571 = vadd.f32 %v3149, %v3425
        %v3572 = vadd.f32 %v3150, %v3430
        %v3573 = vadd.f32 %v3151, %v3435
        %v3574 = vadd.f32 %v3152, %v3440
        %v3575 = vadd.f32 %v3153, %v3445
        %v3576 = vadd.f32 %v3154, %v3450
        %v3577 = vadd.f32 %v3155, %v3455
        %v3578 = vadd.f32 %v3156, %v3460
        %v3579 = vadd.f32 %v3157, %v3465
        %v3580 = vadd.f32 %v3158, %v3470
        %v3581 = vadd.f32 %v3159, %v3475
        %v3582 = vadd.f32 %v3160, %v3480
        %v3583 = vadd.f32 %v3161, %v3485
        %v3584 = vadd.f32 %v3162, %v3490
        %v3585 = vadd.f32 %v3163, %v3495
        %v3586 = vadd.f32 %v3164, %v3500
        %v3587 = vadd.f32 %v3165, %v3505
        %v3588 = vadd.f32 %v3166, %v3510
        %v3589 = vadd.f32 %v3167, %v3515
        %v3590 = vadd.f32 %v3168, %v3520
        %v3591 = vadd.f32 %v3169, %v3525
        %v3592 = vadd.f32 %v3170, %v3530
        %v3593 = vadd.f32 %v3171, %v3535
        %v3594 = vadd.f32 %v3172, %v3540
        %v3595 = vadd.f32 %v3173, %v3545
        %v3596 = vadd.f32 %v3174, %v3550
        %v3597 = vadd.f32 %v3175, %v3555
        %v3598 = vadd.f32 %v3176, %v3560
        %v3599 = vadd.f32 %v3177, %v3565
        %v3600 = vld [vmem:[#allocation2 + $0x20] sm:$0xff]
        %v3601 = vld [vmem:[#allocation2 + $0x28] sm:$0xff]
        %v3602 = vld [vmem:[#allocation2 + $0x30] sm:$0xff]
        %v3603 = vld [vmem:[#allocation2 + $0x38] sm:$0xff]
        %v3604 = vld [vmem:[#allocation2 + $0x40] sm:$0xff]
        %v3605 = vld [vmem:[#allocation2 + $0x48] sm:$0xff]
        %v3606 = vld [vmem:[#allocation2 + $0x50] sm:$0xff]
        %v3607 = vld [vmem:[#allocation2 + $0x58] sm:$0xff]
        %v3608 = vld [vmem:[#allocation2 + $0x60] sm:$0xff]
        %v3609 = vld [vmem:[#allocation2 + $0x68] sm:$0xff]
        %v3610 = vld [vmem:[#allocation2 + $0x70] sm:$0xff]
        %v3611 = vld [vmem:[#allocation2 + $0x78] sm:$0xff]
        %v3612 = vld [vmem:[#allocation2 + $0x80] sm:$0xff]
        %v3613 = vld [vmem:[#allocation2 + $0x88] sm:$0xff]
        %v3614 = vld [vmem:[#allocation2 + $0x90] sm:$0xff]
        %v3615 = vld [vmem:[#allocation2 + $0x98] sm:$0xff]
        %v3616 = vld [vmem:[#allocation2 + $0xa0] sm:$0xff]
        %v3617 = vld [vmem:[#allocation2 + $0xa8] sm:$0xff]
        %v3618 = vld [vmem:[#allocation2 + $0xb0] sm:$0xff]
        %v3619 = vld [vmem:[#allocation2 + $0xb8] sm:$0xff]
        %v3620 = vld [vmem:[#allocation2 + $0xc0] sm:$0xff]
        %v3621 = vld [vmem:[#allocation2 + $0xc8] sm:$0xff]
        %v3622 = vld [vmem:[#allocation2 + $0xd0] sm:$0xff]
        %v3623 = vld [vmem:[#allocation2 + $0xd8] sm:$0xff]
        %v3624 = vld [vmem:[#allocation2 + $0xe0] sm:$0xff]
        %v3625 = vld [vmem:[#allocation2 + $0xe8] sm:$0xff]
        %v3626 = vld [vmem:[#allocation2 + $0xf0] sm:$0xff]
        %v3627 = vld [vmem:[#allocation2 + $0xf8] sm:$0xff]
        %v3628 = vld [vmem:[#allocation2 + $0x100] sm:$0xff]
        %v3629 = vld [vmem:[#allocation2 + $0x108] sm:$0xff]
        %v3630 = vld [vmem:[#allocation2 + $0x110] sm:$0xff]
        %v3631 = vld [vmem:[#allocation2 + $0x118] sm:$0xff]
        %v3632 = vsel %vm1132, %v3600, 0.0
        %v3633 = vsel %vm1133, %v3601, 0.0
        %v3634 = vsel %vm1134, %v3602, 0.0
        %v3635 = vsel %vm1135, %v3603, 0.0
        %v3636 = vsel %vm1136, %v3604, 0.0
        %v3637 = vsel %vm1137, %v3605, 0.0
        %v3638 = vsel %vm1138, %v3606, 0.0
        %v3639 = vsel %vm1139, %v3607, 0.0
        %v3640 = vsel %vm1140, %v3608, 0.0
        %v3641 = vsel %vm1141, %v3609, 0.0
        %v3642 = vsel %vm1142, %v3610, 0.0
        %v3643 = vsel %vm1143, %v3611, 0.0
        %v3644 = vsel %vm1144, %v3612, 0.0
        %v3645 = vsel %vm1145, %v3613, 0.0
        %v3646 = vsel %vm1146, %v3614, 0.0
        %v3647 = vsel %vm1147, %v3615, 0.0
        %v3648 = vsel %vm1148, %v3616, 0.0
        %v3649 = vsel %vm1149, %v3617, 0.0
        %v3650 = vsel %vm1150, %v3618, 0.0
        %v3651 = vsel %vm1151, %v3619, 0.0
        %v3652 = vsel %vm1152, %v3620, 0.0
        %v3653 = vsel %vm1153, %v3621, 0.0
        %v3654 = vsel %vm1154, %v3622, 0.0
        %v3655 = vsel %vm1155, %v3623, 0.0
        %v3656 = vsel %vm1156, %v3624, 0.0
        %v3657 = vsel %vm1157, %v3625, 0.0
        %v3658 = vsel %vm1158, %v3626, 0.0
        %v3659 = vsel %vm1159, %v3627, 0.0
        %v3660 = vsel %vm1160, %v3628, 0.0
        %v3661 = vsel %vm1161, %v3629, 0.0
        %v3662 = vsel %vm1162, %v3630, 0.0
        %v3663 = vsel %vm1163, %v3631, 0.0
        %s3664 = scalar_lea.vmem %s2, 24
        %v3665 = vld [vmem:[%s3664] sm:$0xf]
        %v3667 = vsel %vm675, %v3632, 0
        %v3670 = vsel %vm675, %v3633, 0
        %v3673 = vsel %vm675, %v3634, 0
        %v3676 = vsel %vm675, %v3635, 0
        %v3679 = vsel %vm675, %v3636, 0
        %v3682 = vsel %vm675, %v3637, 0
        %v3685 = vsel %vm675, %v3638, 0
        %v3688 = vsel %vm675, %v3639, 0
        %v3691 = vsel %vm675, %v3640, 0
        %v3694 = vsel %vm675, %v3641, 0
        %v3697 = vsel %vm675, %v3642, 0
        %v3700 = vsel %vm675, %v3643, 0
        %v3703 = vsel %vm675, %v3644, 0
        %v3706 = vsel %vm675, %v3645, 0
        %v3709 = vsel %vm675, %v3646, 0
        %v3712 = vsel %vm675, %v3647, 0
        %v3715 = vsel %vm675, %v3648, 0
        %v3718 = vsel %vm675, %v3649, 0
        %v3721 = vsel %vm675, %v3650, 0
        %v3724 = vsel %vm675, %v3651, 0
        %v3727 = vsel %vm675, %v3652, 0
        %v3730 = vsel %vm675, %v3653, 0
        %v3733 = vsel %vm675, %v3654, 0
        %v3736 = vsel %vm675, %v3655, 0
        %v3739 = vsel %vm675, %v3656, 0
        %v3742 = vsel %vm675, %v3657, 0
        %v3745 = vsel %vm675, %v3658, 0
        %v3748 = vsel %vm675, %v3659, 0
        %v3751 = vsel %vm675, %v3660, 0
        %v3754 = vsel %vm675, %v3661, 0
        %v3757 = vsel %vm675, %v3662, 0
        %v3760 = vsel %vm675, %v3663, 0
        %v3763 = vsel %vm1391, %v3665, 0
        %3765 = vmatprep.subr.mxu0 0.0
        %3766 = vmatpush1.msra.mxu0 0.0
        %3767 = vmatprep.subr.mxu0 0.0
        %3768 = vmatpush1.msra.mxu0 0.0
        %3769 = vmatprep.subr.mxu0 0.0
        %3770 = vmatpush1.msra.mxu0 0.0
        %3771 = vmatprep.subr.mxu0 0.0
        %3772 = vmatpush1.msra.mxu0 0.0
        %3773 = vmatprep.subr.mxu0 0.0
        %3774 = vmatpush1.msra.mxu0 0.0
        %3775 = vmatprep.subr.mxu0 0.0
        %3776 = vmatpush1.msra.mxu0 0.0
        %3777 = vmatprep.subr.mxu0 0.0
        %3778 = vmatpush1.msra.mxu0 0.0
        %3779 = vmatprep.subr.mxu0 0.0
        %3780 = vmatpush1.msra.mxu0 0.0
        %3781 = vmatprep.subr.mxu0 0.0
        %3782 = vmatpush1.msra.mxu0 0.0
        %3783 = vmatprep.subr.mxu0 0.0
        %3784 = vmatpush1.msra.mxu0 0.0
        %3785 = vmatprep.subr.mxu0 0.0
        %3786 = vmatpush1.msra.mxu0 0.0
        %3787 = vmatprep.subr.mxu0 0.0
        %3788 = vmatpush1.msra.mxu0 0.0
        %3789 = vmatprep.subr.mxu0 0.0
        %3790 = vmatpush1.msra.mxu0 0.0
        %3791 = vmatprep.subr.mxu0 0.0
        %3792 = vmatpush1.msra.mxu0 0.0
        %3793 = vmatprep.subr.mxu0 0.0
        %3794 = vmatpush1.msra.mxu0 0.0
        %3795 = vmatprep.subr.mxu0 0.0
        %3796 = vmatpush1.msra.mxu0 %v3763
        %3797 = vmatprep.subr.mxu0 0.0
        %3798 = vmatpush2.msra.mxu0 0.0
        %3799 = vmatprep.subr.mxu0 0.0
        %3800 = vmatpush2.msra.mxu0 0.0
        %3801 = vmatprep.subr.mxu0 0.0
        %3802 = vmatpush2.msra.mxu0 0.0
        %3803 = vmatprep.subr.mxu0 0.0
        %3804 = vmatpush2.msra.mxu0 0.0
        %3805 = vmatprep.subr.mxu0 0.0
        %3806 = vmatpush2.msra.mxu0 0.0
        %3807 = vmatprep.subr.mxu0 0.0
        %3808 = vmatpush2.msra.mxu0 0.0
        %3809 = vmatprep.subr.mxu0 0.0
        %3810 = vmatpush2.msra.mxu0 0.0
        %3811 = vmatprep.subr.mxu0 0.0
        %3812 = vmatpush2.msra.mxu0 0.0
        %3813 = vmatprep.subr.mxu0 0.0
        %3814 = vmatpush2.msra.mxu0 0.0
        %3815 = vmatprep.subr.mxu0 0.0
        %3816 = vmatpush2.msra.mxu0 0.0
        %3817 = vmatprep.subr.mxu0 0.0
        %3818 = vmatpush2.msra.mxu0 0.0
        %3819 = vmatprep.subr.mxu0 0.0
        %3820 = vmatpush2.msra.mxu0 0.0
        %3821 = vmatprep.subr.mxu0 0.0
        %3822 = vmatpush2.msra.mxu0 0.0
        %3823 = vmatprep.subr.mxu0 0.0
        %3824 = vmatpush2.msra.mxu0 0.0
        %3825 = vmatprep.subr.mxu0 0.0
        %3826 = vmatpush2.msra.mxu0 0.0
        %3827 = vmatprep.subr.mxu0 0.0
        %3828 = vmatpush2.msra.mxu0 0.0
        %3829 = vmatprep.mubr.f32.mxu0 0.0
        %3830 = vmatmul.mubr.f32.gmra.mxu0 %v3667
        %v3831 = vpop.f32.mrf.mxu0
        %v3832 = vadd.f32 0.0, %v3831
        %v3833 = vpop.f32.mrf.mxu0
        %3834 = vmatprep.mubr.f32.mxu0 0.0
        %3835 = vmatmul.mubr.f32.gmra.mxu0 %v3670
        %v3836 = vpop.f32.mrf.mxu0
        %v3837 = vadd.f32 0.0, %v3836
        %v3838 = vpop.f32.mrf.mxu0
        %3839 = vmatprep.mubr.f32.mxu0 0.0
        %3840 = vmatmul.mubr.f32.gmra.mxu0 %v3673
        %v3841 = vpop.f32.mrf.mxu0
        %v3842 = vadd.f32 0.0, %v3841
        %v3843 = vpop.f32.mrf.mxu0
        %3844 = vmatprep.mubr.f32.mxu0 0.0
        %3845 = vmatmul.mubr.f32.gmra.mxu0 %v3676
        %v3846 = vpop.f32.mrf.mxu0
        %v3847 = vadd.f32 0.0, %v3846
        %v3848 = vpop.f32.mrf.mxu0
        %3849 = vmatprep.mubr.f32.mxu0 0.0
        %3850 = vmatmul.mubr.f32.gmra.mxu0 %v3679
        %v3851 = vpop.f32.mrf.mxu0
        %v3852 = vadd.f32 0.0, %v3851
        %v3853 = vpop.f32.mrf.mxu0
        %3854 = vmatprep.mubr.f32.mxu0 0.0
        %3855 = vmatmul.mubr.f32.gmra.mxu0 %v3682
        %v3856 = vpop.f32.mrf.mxu0
        %v3857 = vadd.f32 0.0, %v3856
        %v3858 = vpop.f32.mrf.mxu0
        %3859 = vmatprep.mubr.f32.mxu0 0.0
        %3860 = vmatmul.mubr.f32.gmra.mxu0 %v3685
        %v3861 = vpop.f32.mrf.mxu0
        %v3862 = vadd.f32 0.0, %v3861
        %v3863 = vpop.f32.mrf.mxu0
        %3864 = vmatprep.mubr.f32.mxu0 0.0
        %3865 = vmatmul.mubr.f32.gmra.mxu0 %v3688
        %v3866 = vpop.f32.mrf.mxu0
        %v3867 = vadd.f32 0.0, %v3866
        %v3868 = vpop.f32.mrf.mxu0
        %3869 = vmatprep.mubr.f32.mxu0 0.0
        %3870 = vmatmul.mubr.f32.gmra.mxu0 %v3691
        %v3871 = vpop.f32.mrf.mxu0
        %v3872 = vadd.f32 0.0, %v3871
        %v3873 = vpop.f32.mrf.mxu0
        %3874 = vmatprep.mubr.f32.mxu0 0.0
        %3875 = vmatmul.mubr.f32.gmra.mxu0 %v3694
        %v3876 = vpop.f32.mrf.mxu0
        %v3877 = vadd.f32 0.0, %v3876
        %v3878 = vpop.f32.mrf.mxu0
        %3879 = vmatprep.mubr.f32.mxu0 0.0
        %3880 = vmatmul.mubr.f32.gmra.mxu0 %v3697
        %v3881 = vpop.f32.mrf.mxu0
        %v3882 = vadd.f32 0.0, %v3881
        %v3883 = vpop.f32.mrf.mxu0
        %3884 = vmatprep.mubr.f32.mxu0 0.0
        %3885 = vmatmul.mubr.f32.gmra.mxu0 %v3700
        %v3886 = vpop.f32.mrf.mxu0
        %v3887 = vadd.f32 0.0, %v3886
        %v3888 = vpop.f32.mrf.mxu0
        %3889 = vmatprep.mubr.f32.mxu0 0.0
        %3890 = vmatmul.mubr.f32.gmra.mxu0 %v3703
        %v3891 = vpop.f32.mrf.mxu0
        %v3892 = vadd.f32 0.0, %v3891
        %v3893 = vpop.f32.mrf.mxu0
        %3894 = vmatprep.mubr.f32.mxu0 0.0
        %3895 = vmatmul.mubr.f32.gmra.mxu0 %v3706
        %v3896 = vpop.f32.mrf.mxu0
        %v3897 = vadd.f32 0.0, %v3896
        %v3898 = vpop.f32.mrf.mxu0
        %3899 = vmatprep.mubr.f32.mxu0 0.0
        %3900 = vmatmul.mubr.f32.gmra.mxu0 %v3709
        %v3901 = vpop.f32.mrf.mxu0
        %v3902 = vadd.f32 0.0, %v3901
        %v3903 = vpop.f32.mrf.mxu0
        %3904 = vmatprep.mubr.f32.mxu0 0.0
        %3905 = vmatmul.mubr.f32.gmra.mxu0 %v3712
        %v3906 = vpop.f32.mrf.mxu0
        %v3907 = vadd.f32 0.0, %v3906
        %v3908 = vpop.f32.mrf.mxu0
        %3909 = vmatprep.mubr.f32.mxu0 0.0
        %3910 = vmatmul.mubr.f32.gmra.mxu0 %v3715
        %v3911 = vpop.f32.mrf.mxu0
        %v3912 = vadd.f32 0.0, %v3911
        %v3913 = vpop.f32.mrf.mxu0
        %3914 = vmatprep.mubr.f32.mxu0 0.0
        %3915 = vmatmul.mubr.f32.gmra.mxu0 %v3718
        %v3916 = vpop.f32.mrf.mxu0
        %v3917 = vadd.f32 0.0, %v3916
        %v3918 = vpop.f32.mrf.mxu0
        %3919 = vmatprep.mubr.f32.mxu0 0.0
        %3920 = vmatmul.mubr.f32.gmra.mxu0 %v3721
        %v3921 = vpop.f32.mrf.mxu0
        %v3922 = vadd.f32 0.0, %v3921
        %v3923 = vpop.f32.mrf.mxu0
        %3924 = vmatprep.mubr.f32.mxu0 0.0
        %3925 = vmatmul.mubr.f32.gmra.mxu0 %v3724
        %v3926 = vpop.f32.mrf.mxu0
        %v3927 = vadd.f32 0.0, %v3926
        %v3928 = vpop.f32.mrf.mxu0
        %3929 = vmatprep.mubr.f32.mxu0 0.0
        %3930 = vmatmul.mubr.f32.gmra.mxu0 %v3727
        %v3931 = vpop.f32.mrf.mxu0
        %v3932 = vadd.f32 0.0, %v3931
        %v3933 = vpop.f32.mrf.mxu0
        %3934 = vmatprep.mubr.f32.mxu0 0.0
        %3935 = vmatmul.mubr.f32.gmra.mxu0 %v3730
        %v3936 = vpop.f32.mrf.mxu0
        %v3937 = vadd.f32 0.0, %v3936
        %v3938 = vpop.f32.mrf.mxu0
        %3939 = vmatprep.mubr.f32.mxu0 0.0
        %3940 = vmatmul.mubr.f32.gmra.mxu0 %v3733
        %v3941 = vpop.f32.mrf.mxu0
        %v3942 = vadd.f32 0.0, %v3941
        %v3943 = vpop.f32.mrf.mxu0
        %3944 = vmatprep.mubr.f32.mxu0 0.0
        %3945 = vmatmul.mubr.f32.gmra.mxu0 %v3736
        %v3946 = vpop.f32.mrf.mxu0
        %v3947 = vadd.f32 0.0, %v3946
        %v3948 = vpop.f32.mrf.mxu0
        %3949 = vmatprep.mubr.f32.mxu0 0.0
        %3950 = vmatmul.mubr.f32.gmra.mxu0 %v3739
        %v3951 = vpop.f32.mrf.mxu0
        %v3952 = vadd.f32 0.0, %v3951
        %v3953 = vpop.f32.mrf.mxu0
        %3954 = vmatprep.mubr.f32.mxu0 0.0
        %3955 = vmatmul.mubr.f32.gmra.mxu0 %v3742
        %v3956 = vpop.f32.mrf.mxu0
        %v3957 = vadd.f32 0.0, %v3956
        %v3958 = vpop.f32.mrf.mxu0
        %3959 = vmatprep.mubr.f32.mxu0 0.0
        %3960 = vmatmul.mubr.f32.gmra.mxu0 %v3745
        %v3961 = vpop.f32.mrf.mxu0
        %v3962 = vadd.f32 0.0, %v3961
        %v3963 = vpop.f32.mrf.mxu0
        %3964 = vmatprep.mubr.f32.mxu0 0.0
        %3965 = vmatmul.mubr.f32.gmra.mxu0 %v3748
        %v3966 = vpop.f32.mrf.mxu0
        %v3967 = vadd.f32 0.0, %v3966
        %v3968 = vpop.f32.mrf.mxu0
        %3969 = vmatprep.mubr.f32.mxu0 0.0
        %3970 = vmatmul.mubr.f32.gmra.mxu0 %v3751
        %v3971 = vpop.f32.mrf.mxu0
        %v3972 = vadd.f32 0.0, %v3971
        %v3973 = vpop.f32.mrf.mxu0
        %3974 = vmatprep.mubr.f32.mxu0 0.0
        %3975 = vmatmul.mubr.f32.gmra.mxu0 %v3754
        %v3976 = vpop.f32.mrf.mxu0
        %v3977 = vadd.f32 0.0, %v3976
        %v3978 = vpop.f32.mrf.mxu0
        %3979 = vmatprep.mubr.f32.mxu0 0.0
        %3980 = vmatmul.mubr.f32.gmra.mxu0 %v3757
        %v3981 = vpop.f32.mrf.mxu0
        %v3982 = vadd.f32 0.0, %v3981
        %v3983 = vpop.f32.mrf.mxu0
        %3984 = vmatprep.mubr.f32.mxu0 0.0
        %3985 = vmatmul.mubr.f32.gmra.mxu0 %v3760
        %v3986 = vpop.f32.mrf.mxu0
        %v3987 = vadd.f32 0.0, %v3986
        %v3988 = vpop.f32.mrf.mxu0
        %3989 = vdwg.mxu0
        %v3990 = vadd.f32 %v3568, %v3832
        %v3991 = vadd.f32 %v3569, %v3837
        %v3992 = vadd.f32 %v3570, %v3842
        %v3993 = vadd.f32 %v3571, %v3847
        %v3994 = vadd.f32 %v3572, %v3852
        %v3995 = vadd.f32 %v3573, %v3857
        %v3996 = vadd.f32 %v3574, %v3862
        %v3997 = vadd.f32 %v3575, %v3867
        %v3998 = vadd.f32 %v3576, %v3872
        %v3999 = vadd.f32 %v3577, %v3877
        %v4000 = vadd.f32 %v3578, %v3882
        %v4001 = vadd.f32 %v3579, %v3887
        %v4002 = vadd.f32 %v3580, %v3892
        %v4003 = vadd.f32 %v3581, %v3897
        %v4004 = vadd.f32 %v3582, %v3902
        %v4005 = vadd.f32 %v3583, %v3907
        %v4006 = vadd.f32 %v3584, %v3912
        %v4007 = vadd.f32 %v3585, %v3917
        %v4008 = vadd.f32 %v3586, %v3922
        %v4009 = vadd.f32 %v3587, %v3927
        %v4010 = vadd.f32 %v3588, %v3932
        %v4011 = vadd.f32 %v3589, %v3937
        %v4012 = vadd.f32 %v3590, %v3942
        %v4013 = vadd.f32 %v3591, %v3947
        %v4014 = vadd.f32 %v3592, %v3952
        %v4015 = vadd.f32 %v3593, %v3957
        %v4016 = vadd.f32 %v3594, %v3962
        %v4017 = vadd.f32 %v3595, %v3967
        %v4018 = vadd.f32 %v3596, %v3972
        %v4019 = vadd.f32 %v3597, %v3977
        %v4020 = vadd.f32 %v3598, %v3982
        %v4021 = vadd.f32 %v3599, %v3987
        %v4022 = vld [vmem:[#allocation2 + $0x21] sm:$0xff]
        %v4023 = vld [vmem:[#allocation2 + $0x29] sm:$0xff]
        %v4024 = vld [vmem:[#allocation2 + $0x31] sm:$0xff]
        %v4025 = vld [vmem:[#allocation2 + $0x39] sm:$0xff]
        %v4026 = vld [vmem:[#allocation2 + $0x41] sm:$0xff]
        %v4027 = vld [vmem:[#allocation2 + $0x49] sm:$0xff]
        %v4028 = vld [vmem:[#allocation2 + $0x51] sm:$0xff]
        %v4029 = vld [vmem:[#allocation2 + $0x59] sm:$0xff]
        %v4030 = vld [vmem:[#allocation2 + $0x61] sm:$0xff]
        %v4031 = vld [vmem:[#allocation2 + $0x69] sm:$0xff]
        %v4032 = vld [vmem:[#allocation2 + $0x71] sm:$0xff]
        %v4033 = vld [vmem:[#allocation2 + $0x79] sm:$0xff]
        %v4034 = vld [vmem:[#allocation2 + $0x81] sm:$0xff]
        %v4035 = vld [vmem:[#allocation2 + $0x89] sm:$0xff]
        %v4036 = vld [vmem:[#allocation2 + $0x91] sm:$0xff]
        %v4037 = vld [vmem:[#allocation2 + $0x99] sm:$0xff]
        %v4038 = vld [vmem:[#allocation2 + $0xa1] sm:$0xff]
        %v4039 = vld [vmem:[#allocation2 + $0xa9] sm:$0xff]
        %v4040 = vld [vmem:[#allocation2 + $0xb1] sm:$0xff]
        %v4041 = vld [vmem:[#allocation2 + $0xb9] sm:$0xff]
        %v4042 = vld [vmem:[#allocation2 + $0xc1] sm:$0xff]
        %v4043 = vld [vmem:[#allocation2 + $0xc9] sm:$0xff]
        %v4044 = vld [vmem:[#allocation2 + $0xd1] sm:$0xff]
        %v4045 = vld [vmem:[#allocation2 + $0xd9] sm:$0xff]
        %v4046 = vld [vmem:[#allocation2 + $0xe1] sm:$0xff]
        %v4047 = vld [vmem:[#allocation2 + $0xe9] sm:$0xff]
        %v4048 = vld [vmem:[#allocation2 + $0xf1] sm:$0xff]
        %v4049 = vld [vmem:[#allocation2 + $0xf9] sm:$0xff]
        %v4050 = vld [vmem:[#allocation2 + $0x101] sm:$0xff]
        %v4051 = vld [vmem:[#allocation2 + $0x109] sm:$0xff]
        %v4052 = vld [vmem:[#allocation2 + $0x111] sm:$0xff]
        %v4053 = vld [vmem:[#allocation2 + $0x119] sm:$0xff]
        %s4054 = scalar_lea.vmem %s2, 28
        %v4055 = vld [vmem:[%s4054] sm:$0xf]
        %v4057 = vsel %vm675, %v4022, 0
        %v4060 = vsel %vm675, %v4023, 0
        %v4063 = vsel %vm675, %v4024, 0
        %v4066 = vsel %vm675, %v4025, 0
        %v4069 = vsel %vm675, %v4026, 0
        %v4072 = vsel %vm675, %v4027, 0
        %v4075 = vsel %vm675, %v4028, 0
        %v4078 = vsel %vm675, %v4029, 0
        %v4081 = vsel %vm675, %v4030, 0
        %v4084 = vsel %vm675, %v4031, 0
        %v4087 = vsel %vm675, %v4032, 0
        %v4090 = vsel %vm675, %v4033, 0
        %v4093 = vsel %vm675, %v4034, 0
        %v4096 = vsel %vm675, %v4035, 0
        %v4099 = vsel %vm675, %v4036, 0
        %v4102 = vsel %vm675, %v4037, 0
        %v4105 = vsel %vm675, %v4038, 0
        %v4108 = vsel %vm675, %v4039, 0
        %v4111 = vsel %vm675, %v4040, 0
        %v4114 = vsel %vm675, %v4041, 0
        %v4117 = vsel %vm675, %v4042, 0
        %v4120 = vsel %vm675, %v4043, 0
        %v4123 = vsel %vm675, %v4044, 0
        %v4126 = vsel %vm675, %v4045, 0
        %v4129 = vsel %vm675, %v4046, 0
        %v4132 = vsel %vm675, %v4047, 0
        %v4135 = vsel %vm675, %v4048, 0
        %v4138 = vsel %vm675, %v4049, 0
        %v4141 = vsel %vm675, %v4050, 0
        %v4144 = vsel %vm675, %v4051, 0
        %v4147 = vsel %vm675, %v4052, 0
        %v4150 = vsel %vm675, %v4053, 0
        %v4153 = vsel %vm1391, %v4055, 0
        %4155 = vmatprep.subr.mxu0 0.0
        %4156 = vmatpush1.msra.mxu0 0.0
        %4157 = vmatprep.subr.mxu0 0.0
        %4158 = vmatpush1.msra.mxu0 0.0
        %4159 = vmatprep.subr.mxu0 0.0
        %4160 = vmatpush1.msra.mxu0 0.0
        %4161 = vmatprep.subr.mxu0 0.0
        %4162 = vmatpush1.msra.mxu0 0.0
        %4163 = vmatprep.subr.mxu0 0.0
        %4164 = vmatpush1.msra.mxu0 0.0
        %4165 = vmatprep.subr.mxu0 0.0
        %4166 = vmatpush1.msra.mxu0 0.0
        %4167 = vmatprep.subr.mxu0 0.0
        %4168 = vmatpush1.msra.mxu0 0.0
        %4169 = vmatprep.subr.mxu0 0.0
        %4170 = vmatpush1.msra.mxu0 0.0
        %4171 = vmatprep.subr.mxu0 0.0
        %4172 = vmatpush1.msra.mxu0 0.0
        %4173 = vmatprep.subr.mxu0 0.0
        %4174 = vmatpush1.msra.mxu0 0.0
        %4175 = vmatprep.subr.mxu0 0.0
        %4176 = vmatpush1.msra.mxu0 0.0
        %4177 = vmatprep.subr.mxu0 0.0
        %4178 = vmatpush1.msra.mxu0 0.0
        %4179 = vmatprep.subr.mxu0 0.0
        %4180 = vmatpush1.msra.mxu0 0.0
        %4181 = vmatprep.subr.mxu0 0.0
        %4182 = vmatpush1.msra.mxu0 0.0
        %4183 = vmatprep.subr.mxu0 0.0
        %4184 = vmatpush1.msra.mxu0 0.0
        %4185 = vmatprep.subr.mxu0 0.0
        %4186 = vmatpush1.msra.mxu0 %v4153
        %4187 = vmatprep.subr.mxu0 0.0
        %4188 = vmatpush2.msra.mxu0 0.0
        %4189 = vmatprep.subr.mxu0 0.0
        %4190 = vmatpush2.msra.mxu0 0.0
        %4191 = vmatprep.subr.mxu0 0.0
        %4192 = vmatpush2.msra.mxu0 0.0
        %4193 = vmatprep.subr.mxu0 0.0
        %4194 = vmatpush2.msra.mxu0 0.0
        %4195 = vmatprep.subr.mxu0 0.0
        %4196 = vmatpush2.msra.mxu0 0.0
        %4197 = vmatprep.subr.mxu0 0.0
        %4198 = vmatpush2.msra.mxu0 0.0
        %4199 = vmatprep.subr.mxu0 0.0
        %4200 = vmatpush2.msra.mxu0 0.0
        %4201 = vmatprep.subr.mxu0 0.0
        %4202 = vmatpush2.msra.mxu0 0.0
        %4203 = vmatprep.subr.mxu0 0.0
        %4204 = vmatpush2.msra.mxu0 0.0
        %4205 = vmatprep.subr.mxu0 0.0
        %4206 = vmatpush2.msra.mxu0 0.0
        %4207 = vmatprep.subr.mxu0 0.0
        %4208 = vmatpush2.msra.mxu0 0.0
        %4209 = vmatprep.subr.mxu0 0.0
        %4210 = vmatpush2.msra.mxu0 0.0
        %4211 = vmatprep.subr.mxu0 0.0
        %4212 = vmatpush2.msra.mxu0 0.0
        %4213 = vmatprep.subr.mxu0 0.0
        %4214 = vmatpush2.msra.mxu0 0.0
        %4215 = vmatprep.subr.mxu0 0.0
        %4216 = vmatpush2.msra.mxu0 0.0
        %4217 = vmatprep.subr.mxu0 0.0
        %4218 = vmatpush2.msra.mxu0 0.0
        %4219 = vmatprep.mubr.f32.mxu0 0.0
        %4220 = vmatmul.mubr.f32.gmra.mxu0 %v4057
        %v4221 = vpop.f32.mrf.mxu0
        %v4222 = vadd.f32 0.0, %v4221
        %v4223 = vpop.f32.mrf.mxu0
        %4224 = vmatprep.mubr.f32.mxu0 0.0
        %4225 = vmatmul.mubr.f32.gmra.mxu0 %v4060
        %v4226 = vpop.f32.mrf.mxu0
        %v4227 = vadd.f32 0.0, %v4226
        %v4228 = vpop.f32.mrf.mxu0
        %4229 = vmatprep.mubr.f32.mxu0 0.0
        %4230 = vmatmul.mubr.f32.gmra.mxu0 %v4063
        %v4231 = vpop.f32.mrf.mxu0
        %v4232 = vadd.f32 0.0, %v4231
        %v4233 = vpop.f32.mrf.mxu0
        %4234 = vmatprep.mubr.f32.mxu0 0.0
        %4235 = vmatmul.mubr.f32.gmra.mxu0 %v4066
        %v4236 = vpop.f32.mrf.mxu0
        %v4237 = vadd.f32 0.0, %v4236
        %v4238 = vpop.f32.mrf.mxu0
        %4239 = vmatprep.mubr.f32.mxu0 0.0
        %4240 = vmatmul.mubr.f32.gmra.mxu0 %v4069
        %v4241 = vpop.f32.mrf.mxu0
        %v4242 = vadd.f32 0.0, %v4241
        %v4243 = vpop.f32.mrf.mxu0
        %4244 = vmatprep.mubr.f32.mxu0 0.0
        %4245 = vmatmul.mubr.f32.gmra.mxu0 %v4072
        %v4246 = vpop.f32.mrf.mxu0
        %v4247 = vadd.f32 0.0, %v4246
        %v4248 = vpop.f32.mrf.mxu0
        %4249 = vmatprep.mubr.f32.mxu0 0.0
        %4250 = vmatmul.mubr.f32.gmra.mxu0 %v4075
        %v4251 = vpop.f32.mrf.mxu0
        %v4252 = vadd.f32 0.0, %v4251
        %v4253 = vpop.f32.mrf.mxu0
        %4254 = vmatprep.mubr.f32.mxu0 0.0
        %4255 = vmatmul.mubr.f32.gmra.mxu0 %v4078
        %v4256 = vpop.f32.mrf.mxu0
        %v4257 = vadd.f32 0.0, %v4256
        %v4258 = vpop.f32.mrf.mxu0
        %4259 = vmatprep.mubr.f32.mxu0 0.0
        %4260 = vmatmul.mubr.f32.gmra.mxu0 %v4081
        %v4261 = vpop.f32.mrf.mxu0
        %v4262 = vadd.f32 0.0, %v4261
        %v4263 = vpop.f32.mrf.mxu0
        %4264 = vmatprep.mubr.f32.mxu0 0.0
        %4265 = vmatmul.mubr.f32.gmra.mxu0 %v4084
        %v4266 = vpop.f32.mrf.mxu0
        %v4267 = vadd.f32 0.0, %v4266
        %v4268 = vpop.f32.mrf.mxu0
        %4269 = vmatprep.mubr.f32.mxu0 0.0
        %4270 = vmatmul.mubr.f32.gmra.mxu0 %v4087
        %v4271 = vpop.f32.mrf.mxu0
        %v4272 = vadd.f32 0.0, %v4271
        %v4273 = vpop.f32.mrf.mxu0
        %4274 = vmatprep.mubr.f32.mxu0 0.0
        %4275 = vmatmul.mubr.f32.gmra.mxu0 %v4090
        %v4276 = vpop.f32.mrf.mxu0
        %v4277 = vadd.f32 0.0, %v4276
        %v4278 = vpop.f32.mrf.mxu0
        %4279 = vmatprep.mubr.f32.mxu0 0.0
        %4280 = vmatmul.mubr.f32.gmra.mxu0 %v4093
        %v4281 = vpop.f32.mrf.mxu0
        %v4282 = vadd.f32 0.0, %v4281
        %v4283 = vpop.f32.mrf.mxu0
        %4284 = vmatprep.mubr.f32.mxu0 0.0
        %4285 = vmatmul.mubr.f32.gmra.mxu0 %v4096
        %v4286 = vpop.f32.mrf.mxu0
        %v4287 = vadd.f32 0.0, %v4286
        %v4288 = vpop.f32.mrf.mxu0
        %4289 = vmatprep.mubr.f32.mxu0 0.0
        %4290 = vmatmul.mubr.f32.gmra.mxu0 %v4099
        %v4291 = vpop.f32.mrf.mxu0
        %v4292 = vadd.f32 0.0, %v4291
        %v4293 = vpop.f32.mrf.mxu0
        %4294 = vmatprep.mubr.f32.mxu0 0.0
        %4295 = vmatmul.mubr.f32.gmra.mxu0 %v4102
        %v4296 = vpop.f32.mrf.mxu0
        %v4297 = vadd.f32 0.0, %v4296
        %v4298 = vpop.f32.mrf.mxu0
        %4299 = vmatprep.mubr.f32.mxu0 0.0
        %4300 = vmatmul.mubr.f32.gmra.mxu0 %v4105
        %v4301 = vpop.f32.mrf.mxu0
        %v4302 = vadd.f32 0.0, %v4301
        %v4303 = vpop.f32.mrf.mxu0
        %4304 = vmatprep.mubr.f32.mxu0 0.0
        %4305 = vmatmul.mubr.f32.gmra.mxu0 %v4108
        %v4306 = vpop.f32.mrf.mxu0
        %v4307 = vadd.f32 0.0, %v4306
        %v4308 = vpop.f32.mrf.mxu0
        %4309 = vmatprep.mubr.f32.mxu0 0.0
        %4310 = vmatmul.mubr.f32.gmra.mxu0 %v4111
        %v4311 = vpop.f32.mrf.mxu0
        %v4312 = vadd.f32 0.0, %v4311
        %v4313 = vpop.f32.mrf.mxu0
        %4314 = vmatprep.mubr.f32.mxu0 0.0
        %4315 = vmatmul.mubr.f32.gmra.mxu0 %v4114
        %v4316 = vpop.f32.mrf.mxu0
        %v4317 = vadd.f32 0.0, %v4316
        %v4318 = vpop.f32.mrf.mxu0
        %4319 = vmatprep.mubr.f32.mxu0 0.0
        %4320 = vmatmul.mubr.f32.gmra.mxu0 %v4117
        %v4321 = vpop.f32.mrf.mxu0
        %v4322 = vadd.f32 0.0, %v4321
        %v4323 = vpop.f32.mrf.mxu0
        %4324 = vmatprep.mubr.f32.mxu0 0.0
        %4325 = vmatmul.mubr.f32.gmra.mxu0 %v4120
        %v4326 = vpop.f32.mrf.mxu0
        %v4327 = vadd.f32 0.0, %v4326
        %v4328 = vpop.f32.mrf.mxu0
        %4329 = vmatprep.mubr.f32.mxu0 0.0
        %4330 = vmatmul.mubr.f32.gmra.mxu0 %v4123
        %v4331 = vpop.f32.mrf.mxu0
        %v4332 = vadd.f32 0.0, %v4331
        %v4333 = vpop.f32.mrf.mxu0
        %4334 = vmatprep.mubr.f32.mxu0 0.0
        %4335 = vmatmul.mubr.f32.gmra.mxu0 %v4126
        %v4336 = vpop.f32.mrf.mxu0
        %v4337 = vadd.f32 0.0, %v4336
        %v4338 = vpop.f32.mrf.mxu0
        %4339 = vmatprep.mubr.f32.mxu0 0.0
        %4340 = vmatmul.mubr.f32.gmra.mxu0 %v4129
        %v4341 = vpop.f32.mrf.mxu0
        %v4342 = vadd.f32 0.0, %v4341
        %v4343 = vpop.f32.mrf.mxu0
        %4344 = vmatprep.mubr.f32.mxu0 0.0
        %4345 = vmatmul.mubr.f32.gmra.mxu0 %v4132
        %v4346 = vpop.f32.mrf.mxu0
        %v4347 = vadd.f32 0.0, %v4346
        %v4348 = vpop.f32.mrf.mxu0
        %4349 = vmatprep.mubr.f32.mxu0 0.0
        %4350 = vmatmul.mubr.f32.gmra.mxu0 %v4135
        %v4351 = vpop.f32.mrf.mxu0
        %v4352 = vadd.f32 0.0, %v4351
        %v4353 = vpop.f32.mrf.mxu0
        %4354 = vmatprep.mubr.f32.mxu0 0.0
        %4355 = vmatmul.mubr.f32.gmra.mxu0 %v4138
        %v4356 = vpop.f32.mrf.mxu0
        %v4357 = vadd.f32 0.0, %v4356
        %v4358 = vpop.f32.mrf.mxu0
        %4359 = vmatprep.mubr.f32.mxu0 0.0
        %4360 = vmatmul.mubr.f32.gmra.mxu0 %v4141
        %v4361 = vpop.f32.mrf.mxu0
        %v4362 = vadd.f32 0.0, %v4361
        %v4363 = vpop.f32.mrf.mxu0
        %4364 = vmatprep.mubr.f32.mxu0 0.0
        %4365 = vmatmul.mubr.f32.gmra.mxu0 %v4144
        %v4366 = vpop.f32.mrf.mxu0
        %v4367 = vadd.f32 0.0, %v4366
        %v4368 = vpop.f32.mrf.mxu0
        %4369 = vmatprep.mubr.f32.mxu0 0.0
        %4370 = vmatmul.mubr.f32.gmra.mxu0 %v4147
        %v4371 = vpop.f32.mrf.mxu0
        %v4372 = vadd.f32 0.0, %v4371
        %v4373 = vpop.f32.mrf.mxu0
        %4374 = vmatprep.mubr.f32.mxu0 0.0
        %4375 = vmatmul.mubr.f32.gmra.mxu0 %v4150
        %v4376 = vpop.f32.mrf.mxu0
        %v4377 = vadd.f32 0.0, %v4376
        %v4378 = vpop.f32.mrf.mxu0
        %4379 = vdwg.mxu0
        %v4380 = vadd.f32 %v3990, %v4222
        %v4381 = vadd.f32 %v3991, %v4227
        %v4382 = vadd.f32 %v3992, %v4232
        %v4383 = vadd.f32 %v3993, %v4237
        %v4384 = vadd.f32 %v3994, %v4242
        %v4385 = vadd.f32 %v3995, %v4247
        %v4386 = vadd.f32 %v3996, %v4252
        %v4387 = vadd.f32 %v3997, %v4257
        %v4388 = vadd.f32 %v3998, %v4262
        %v4389 = vadd.f32 %v3999, %v4267
        %v4390 = vadd.f32 %v4000, %v4272
        %v4391 = vadd.f32 %v4001, %v4277
        %v4392 = vadd.f32 %v4002, %v4282
        %v4393 = vadd.f32 %v4003, %v4287
        %v4394 = vadd.f32 %v4004, %v4292
        %v4395 = vadd.f32 %v4005, %v4297
        %v4396 = vadd.f32 %v4006, %v4302
        %v4397 = vadd.f32 %v4007, %v4307
        %v4398 = vadd.f32 %v4008, %v4312
        %v4399 = vadd.f32 %v4009, %v4317
        %v4400 = vadd.f32 %v4010, %v4322
        %v4401 = vadd.f32 %v4011, %v4327
        %v4402 = vadd.f32 %v4012, %v4332
        %v4403 = vadd.f32 %v4013, %v4337
        %v4404 = vadd.f32 %v4014, %v4342
        %v4405 = vadd.f32 %v4015, %v4347
        %v4406 = vadd.f32 %v4016, %v4352
        %v4407 = vadd.f32 %v4017, %v4357
        %v4408 = vadd.f32 %v4018, %v4362
        %v4409 = vadd.f32 %v4019, %v4367
        %v4410 = vadd.f32 %v4020, %v4372
        %v4411 = vadd.f32 %v4021, %v4377
        %v4412 = vld [vmem:[#allocation2 + $0x22] sm:$0xff]
        %v4413 = vld [vmem:[#allocation2 + $0x2a] sm:$0xff]
        %v4414 = vld [vmem:[#allocation2 + $0x32] sm:$0xff]
        %v4415 = vld [vmem:[#allocation2 + $0x3a] sm:$0xff]
        %v4416 = vld [vmem:[#allocation2 + $0x42] sm:$0xff]
        %v4417 = vld [vmem:[#allocation2 + $0x4a] sm:$0xff]
        %v4418 = vld [vmem:[#allocation2 + $0x52] sm:$0xff]
        %v4419 = vld [vmem:[#allocation2 + $0x5a] sm:$0xff]
        %v4420 = vld [vmem:[#allocation2 + $0x62] sm:$0xff]
        %v4421 = vld [vmem:[#allocation2 + $0x6a] sm:$0xff]
        %v4422 = vld [vmem:[#allocation2 + $0x72] sm:$0xff]
        %v4423 = vld [vmem:[#allocation2 + $0x7a] sm:$0xff]
        %v4424 = vld [vmem:[#allocation2 + $0x82] sm:$0xff]
        %v4425 = vld [vmem:[#allocation2 + $0x8a] sm:$0xff]
        %v4426 = vld [vmem:[#allocation2 + $0x92] sm:$0xff]
        %v4427 = vld [vmem:[#allocation2 + $0x9a] sm:$0xff]
        %v4428 = vld [vmem:[#allocation2 + $0xa2] sm:$0xff]
        %v4429 = vld [vmem:[#allocation2 + $0xaa] sm:$0xff]
        %v4430 = vld [vmem:[#allocation2 + $0xb2] sm:$0xff]
        %v4431 = vld [vmem:[#allocation2 + $0xba] sm:$0xff]
        %v4432 = vld [vmem:[#allocation2 + $0xc2] sm:$0xff]
        %v4433 = vld [vmem:[#allocation2 + $0xca] sm:$0xff]
        %v4434 = vld [vmem:[#allocation2 + $0xd2] sm:$0xff]
        %v4435 = vld [vmem:[#allocation2 + $0xda] sm:$0xff]
        %v4436 = vld [vmem:[#allocation2 + $0xe2] sm:$0xff]
        %v4437 = vld [vmem:[#allocation2 + $0xea] sm:$0xff]
        %v4438 = vld [vmem:[#allocation2 + $0xf2] sm:$0xff]
        %v4439 = vld [vmem:[#allocation2 + $0xfa] sm:$0xff]
        %v4440 = vld [vmem:[#allocation2 + $0x102] sm:$0xff]
        %v4441 = vld [vmem:[#allocation2 + $0x10a] sm:$0xff]
        %v4442 = vld [vmem:[#allocation2 + $0x112] sm:$0xff]
        %v4443 = vld [vmem:[#allocation2 + $0x11a] sm:$0xff]
        %v4444 = vsel %vm1164, %v4412, 0.0
        %v4445 = vsel %vm1165, %v4413, 0.0
        %v4446 = vsel %vm1166, %v4414, 0.0
        %v4447 = vsel %vm1167, %v4415, 0.0
        %v4448 = vsel %vm1168, %v4416, 0.0
        %v4449 = vsel %vm1169, %v4417, 0.0
        %v4450 = vsel %vm1170, %v4418, 0.0
        %v4451 = vsel %vm1171, %v4419, 0.0
        %v4452 = vsel %vm1172, %v4420, 0.0
        %v4453 = vsel %vm1173, %v4421, 0.0
        %v4454 = vsel %vm1174, %v4422, 0.0
        %v4455 = vsel %vm1175, %v4423, 0.0
        %v4456 = vsel %vm1176, %v4424, 0.0
        %v4457 = vsel %vm1177, %v4425, 0.0
        %v4458 = vsel %vm1178, %v4426, 0.0
        %v4459 = vsel %vm1179, %v4427, 0.0
        %v4460 = vsel %vm1180, %v4428, 0.0
        %v4461 = vsel %vm1181, %v4429, 0.0
        %v4462 = vsel %vm1182, %v4430, 0.0
        %v4463 = vsel %vm1183, %v4431, 0.0
        %v4464 = vsel %vm1184, %v4432, 0.0
        %v4465 = vsel %vm1185, %v4433, 0.0
        %v4466 = vsel %vm1186, %v4434, 0.0
        %v4467 = vsel %vm1187, %v4435, 0.0
        %v4468 = vsel %vm1188, %v4436, 0.0
        %v4469 = vsel %vm1189, %v4437, 0.0
        %v4470 = vsel %vm1190, %v4438, 0.0
        %v4471 = vsel %vm1191, %v4439, 0.0
        %v4472 = vsel %vm1192, %v4440, 0.0
        %v4473 = vsel %vm1193, %v4441, 0.0
        %v4474 = vsel %vm1194, %v4442, 0.0
        %v4475 = vsel %vm1195, %v4443, 0.0
        %s4476 = scalar_lea.vmem %s2, 32
        %v4477 = vld [vmem:[%s4476] sm:$0xf]
        %v4479 = vsel %vm675, %v4444, 0
        %v4482 = vsel %vm675, %v4445, 0
        %v4485 = vsel %vm675, %v4446, 0
        %v4488 = vsel %vm675, %v4447, 0
        %v4491 = vsel %vm675, %v4448, 0
        %v4494 = vsel %vm675, %v4449, 0
        %v4497 = vsel %vm675, %v4450, 0
        %v4500 = vsel %vm675, %v4451, 0
        %v4503 = vsel %vm675, %v4452, 0
        %v4506 = vsel %vm675, %v4453, 0
        %v4509 = vsel %vm675, %v4454, 0
        %v4512 = vsel %vm675, %v4455, 0
        %v4515 = vsel %vm675, %v4456, 0
        %v4518 = vsel %vm675, %v4457, 0
        %v4521 = vsel %vm675, %v4458, 0
        %v4524 = vsel %vm675, %v4459, 0
        %v4527 = vsel %vm675, %v4460, 0
        %v4530 = vsel %vm675, %v4461, 0
        %v4533 = vsel %vm675, %v4462, 0
        %v4536 = vsel %vm675, %v4463, 0
        %v4539 = vsel %vm675, %v4464, 0
        %v4542 = vsel %vm675, %v4465, 0
        %v4545 = vsel %vm675, %v4466, 0
        %v4548 = vsel %vm675, %v4467, 0
        %v4551 = vsel %vm675, %v4468, 0
        %v4554 = vsel %vm675, %v4469, 0
        %v4557 = vsel %vm675, %v4470, 0
        %v4560 = vsel %vm675, %v4471, 0
        %v4563 = vsel %vm675, %v4472, 0
        %v4566 = vsel %vm675, %v4473, 0
        %v4569 = vsel %vm675, %v4474, 0
        %v4572 = vsel %vm675, %v4475, 0
        %v4575 = vsel %vm1391, %v4477, 0
        %4577 = vmatprep.subr.mxu0 0.0
        %4578 = vmatpush1.msra.mxu0 0.0
        %4579 = vmatprep.subr.mxu0 0.0
        %4580 = vmatpush1.msra.mxu0 0.0
        %4581 = vmatprep.subr.mxu0 0.0
        %4582 = vmatpush1.msra.mxu0 0.0
        %4583 = vmatprep.subr.mxu0 0.0
        %4584 = vmatpush1.msra.mxu0 0.0
        %4585 = vmatprep.subr.mxu0 0.0
        %4586 = vmatpush1.msra.mxu0 0.0
        %4587 = vmatprep.subr.mxu0 0.0
        %4588 = vmatpush1.msra.mxu0 0.0
        %4589 = vmatprep.subr.mxu0 0.0
        %4590 = vmatpush1.msra.mxu0 0.0
        %4591 = vmatprep.subr.mxu0 0.0
        %4592 = vmatpush1.msra.mxu0 0.0
        %4593 = vmatprep.subr.mxu0 0.0
        %4594 = vmatpush1.msra.mxu0 0.0
        %4595 = vmatprep.subr.mxu0 0.0
        %4596 = vmatpush1.msra.mxu0 0.0
        %4597 = vmatprep.subr.mxu0 0.0
        %4598 = vmatpush1.msra.mxu0 0.0
        %4599 = vmatprep.subr.mxu0 0.0
        %4600 = vmatpush1.msra.mxu0 0.0
        %4601 = vmatprep.subr.mxu0 0.0
        %4602 = vmatpush1.msra.mxu0 0.0
        %4603 = vmatprep.subr.mxu0 0.0
        %4604 = vmatpush1.msra.mxu0 0.0
        %4605 = vmatprep.subr.mxu0 0.0
        %4606 = vmatpush1.msra.mxu0 0.0
        %4607 = vmatprep.subr.mxu0 0.0
        %4608 = vmatpush1.msra.mxu0 %v4575
        %4609 = vmatprep.subr.mxu0 0.0
        %4610 = vmatpush2.msra.mxu0 0.0
        %4611 = vmatprep.subr.mxu0 0.0
        %4612 = vmatpush2.msra.mxu0 0.0
        %4613 = vmatprep.subr.mxu0 0.0
        %4614 = vmatpush2.msra.mxu0 0.0
        %4615 = vmatprep.subr.mxu0 0.0
        %4616 = vmatpush2.msra.mxu0 0.0
        %4617 = vmatprep.subr.mxu0 0.0
        %4618 = vmatpush2.msra.mxu0 0.0
        %4619 = vmatprep.subr.mxu0 0.0
        %4620 = vmatpush2.msra.mxu0 0.0
        %4621 = vmatprep.subr.mxu0 0.0
        %4622 = vmatpush2.msra.mxu0 0.0
        %4623 = vmatprep.subr.mxu0 0.0
        %4624 = vmatpush2.msra.mxu0 0.0
        %4625 = vmatprep.subr.mxu0 0.0
        %4626 = vmatpush2.msra.mxu0 0.0
        %4627 = vmatprep.subr.mxu0 0.0
        %4628 = vmatpush2.msra.mxu0 0.0
        %4629 = vmatprep.subr.mxu0 0.0
        %4630 = vmatpush2.msra.mxu0 0.0
        %4631 = vmatprep.subr.mxu0 0.0
        %4632 = vmatpush2.msra.mxu0 0.0
        %4633 = vmatprep.subr.mxu0 0.0
        %4634 = vmatpush2.msra.mxu0 0.0
        %4635 = vmatprep.subr.mxu0 0.0
        %4636 = vmatpush2.msra.mxu0 0.0
        %4637 = vmatprep.subr.mxu0 0.0
        %4638 = vmatpush2.msra.mxu0 0.0
        %4639 = vmatprep.subr.mxu0 0.0
        %4640 = vmatpush2.msra.mxu0 0.0
        %4641 = vmatprep.mubr.f32.mxu0 0.0
        %4642 = vmatmul.mubr.f32.gmra.mxu0 %v4479
        %v4643 = vpop.f32.mrf.mxu0
        %v4644 = vadd.f32 0.0, %v4643
        %v4645 = vpop.f32.mrf.mxu0
        %4646 = vmatprep.mubr.f32.mxu0 0.0
        %4647 = vmatmul.mubr.f32.gmra.mxu0 %v4482
        %v4648 = vpop.f32.mrf.mxu0
        %v4649 = vadd.f32 0.0, %v4648
        %v4650 = vpop.f32.mrf.mxu0
        %4651 = vmatprep.mubr.f32.mxu0 0.0
        %4652 = vmatmul.mubr.f32.gmra.mxu0 %v4485
        %v4653 = vpop.f32.mrf.mxu0
        %v4654 = vadd.f32 0.0, %v4653
        %v4655 = vpop.f32.mrf.mxu0
        %4656 = vmatprep.mubr.f32.mxu0 0.0
        %4657 = vmatmul.mubr.f32.gmra.mxu0 %v4488
        %v4658 = vpop.f32.mrf.mxu0
        %v4659 = vadd.f32 0.0, %v4658
        %v4660 = vpop.f32.mrf.mxu0
        %4661 = vmatprep.mubr.f32.mxu0 0.0
        %4662 = vmatmul.mubr.f32.gmra.mxu0 %v4491
        %v4663 = vpop.f32.mrf.mxu0
        %v4664 = vadd.f32 0.0, %v4663
        %v4665 = vpop.f32.mrf.mxu0
        %4666 = vmatprep.mubr.f32.mxu0 0.0
        %4667 = vmatmul.mubr.f32.gmra.mxu0 %v4494
        %v4668 = vpop.f32.mrf.mxu0
        %v4669 = vadd.f32 0.0, %v4668
        %v4670 = vpop.f32.mrf.mxu0
        %4671 = vmatprep.mubr.f32.mxu0 0.0
        %4672 = vmatmul.mubr.f32.gmra.mxu0 %v4497
        %v4673 = vpop.f32.mrf.mxu0
        %v4674 = vadd.f32 0.0, %v4673
        %v4675 = vpop.f32.mrf.mxu0
        %4676 = vmatprep.mubr.f32.mxu0 0.0
        %4677 = vmatmul.mubr.f32.gmra.mxu0 %v4500
        %v4678 = vpop.f32.mrf.mxu0
        %v4679 = vadd.f32 0.0, %v4678
        %v4680 = vpop.f32.mrf.mxu0
        %4681 = vmatprep.mubr.f32.mxu0 0.0
        %4682 = vmatmul.mubr.f32.gmra.mxu0 %v4503
        %v4683 = vpop.f32.mrf.mxu0
        %v4684 = vadd.f32 0.0, %v4683
        %v4685 = vpop.f32.mrf.mxu0
        %4686 = vmatprep.mubr.f32.mxu0 0.0
        %4687 = vmatmul.mubr.f32.gmra.mxu0 %v4506
        %v4688 = vpop.f32.mrf.mxu0
        %v4689 = vadd.f32 0.0, %v4688
        %v4690 = vpop.f32.mrf.mxu0
        %4691 = vmatprep.mubr.f32.mxu0 0.0
        %4692 = vmatmul.mubr.f32.gmra.mxu0 %v4509
        %v4693 = vpop.f32.mrf.mxu0
        %v4694 = vadd.f32 0.0, %v4693
        %v4695 = vpop.f32.mrf.mxu0
        %4696 = vmatprep.mubr.f32.mxu0 0.0
        %4697 = vmatmul.mubr.f32.gmra.mxu0 %v4512
        %v4698 = vpop.f32.mrf.mxu0
        %v4699 = vadd.f32 0.0, %v4698
        %v4700 = vpop.f32.mrf.mxu0
        %4701 = vmatprep.mubr.f32.mxu0 0.0
        %4702 = vmatmul.mubr.f32.gmra.mxu0 %v4515
        %v4703 = vpop.f32.mrf.mxu0
        %v4704 = vadd.f32 0.0, %v4703
        %v4705 = vpop.f32.mrf.mxu0
        %4706 = vmatprep.mubr.f32.mxu0 0.0
        %4707 = vmatmul.mubr.f32.gmra.mxu0 %v4518
        %v4708 = vpop.f32.mrf.mxu0
        %v4709 = vadd.f32 0.0, %v4708
        %v4710 = vpop.f32.mrf.mxu0
        %4711 = vmatprep.mubr.f32.mxu0 0.0
        %4712 = vmatmul.mubr.f32.gmra.mxu0 %v4521
        %v4713 = vpop.f32.mrf.mxu0
        %v4714 = vadd.f32 0.0, %v4713
        %v4715 = vpop.f32.mrf.mxu0
        %4716 = vmatprep.mubr.f32.mxu0 0.0
        %4717 = vmatmul.mubr.f32.gmra.mxu0 %v4524
        %v4718 = vpop.f32.mrf.mxu0
        %v4719 = vadd.f32 0.0, %v4718
        %v4720 = vpop.f32.mrf.mxu0
        %4721 = vmatprep.mubr.f32.mxu0 0.0
        %4722 = vmatmul.mubr.f32.gmra.mxu0 %v4527
        %v4723 = vpop.f32.mrf.mxu0
        %v4724 = vadd.f32 0.0, %v4723
        %v4725 = vpop.f32.mrf.mxu0
        %4726 = vmatprep.mubr.f32.mxu0 0.0
        %4727 = vmatmul.mubr.f32.gmra.mxu0 %v4530
        %v4728 = vpop.f32.mrf.mxu0
        %v4729 = vadd.f32 0.0, %v4728
        %v4730 = vpop.f32.mrf.mxu0
        %4731 = vmatprep.mubr.f32.mxu0 0.0
        %4732 = vmatmul.mubr.f32.gmra.mxu0 %v4533
        %v4733 = vpop.f32.mrf.mxu0
        %v4734 = vadd.f32 0.0, %v4733
        %v4735 = vpop.f32.mrf.mxu0
        %4736 = vmatprep.mubr.f32.mxu0 0.0
        %4737 = vmatmul.mubr.f32.gmra.mxu0 %v4536
        %v4738 = vpop.f32.mrf.mxu0
        %v4739 = vadd.f32 0.0, %v4738
        %v4740 = vpop.f32.mrf.mxu0
        %4741 = vmatprep.mubr.f32.mxu0 0.0
        %4742 = vmatmul.mubr.f32.gmra.mxu0 %v4539
        %v4743 = vpop.f32.mrf.mxu0
        %v4744 = vadd.f32 0.0, %v4743
        %v4745 = vpop.f32.mrf.mxu0
        %4746 = vmatprep.mubr.f32.mxu0 0.0
        %4747 = vmatmul.mubr.f32.gmra.mxu0 %v4542
        %v4748 = vpop.f32.mrf.mxu0
        %v4749 = vadd.f32 0.0, %v4748
        %v4750 = vpop.f32.mrf.mxu0
        %4751 = vmatprep.mubr.f32.mxu0 0.0
        %4752 = vmatmul.mubr.f32.gmra.mxu0 %v4545
        %v4753 = vpop.f32.mrf.mxu0
        %v4754 = vadd.f32 0.0, %v4753
        %v4755 = vpop.f32.mrf.mxu0
        %4756 = vmatprep.mubr.f32.mxu0 0.0
        %4757 = vmatmul.mubr.f32.gmra.mxu0 %v4548
        %v4758 = vpop.f32.mrf.mxu0
        %v4759 = vadd.f32 0.0, %v4758
        %v4760 = vpop.f32.mrf.mxu0
        %4761 = vmatprep.mubr.f32.mxu0 0.0
        %4762 = vmatmul.mubr.f32.gmra.mxu0 %v4551
        %v4763 = vpop.f32.mrf.mxu0
        %v4764 = vadd.f32 0.0, %v4763
        %v4765 = vpop.f32.mrf.mxu0
        %4766 = vmatprep.mubr.f32.mxu0 0.0
        %4767 = vmatmul.mubr.f32.gmra.mxu0 %v4554
        %v4768 = vpop.f32.mrf.mxu0
        %v4769 = vadd.f32 0.0, %v4768
        %v4770 = vpop.f32.mrf.mxu0
        %4771 = vmatprep.mubr.f32.mxu0 0.0
        %4772 = vmatmul.mubr.f32.gmra.mxu0 %v4557
        %v4773 = vpop.f32.mrf.mxu0
        %v4774 = vadd.f32 0.0, %v4773
        %v4775 = vpop.f32.mrf.mxu0
        %4776 = vmatprep.mubr.f32.mxu0 0.0
        %4777 = vmatmul.mubr.f32.gmra.mxu0 %v4560
        %v4778 = vpop.f32.mrf.mxu0
        %v4779 = vadd.f32 0.0, %v4778
        %v4780 = vpop.f32.mrf.mxu0
        %4781 = vmatprep.mubr.f32.mxu0 0.0
        %4782 = vmatmul.mubr.f32.gmra.mxu0 %v4563
        %v4783 = vpop.f32.mrf.mxu0
        %v4784 = vadd.f32 0.0, %v4783
        %v4785 = vpop.f32.mrf.mxu0
        %4786 = vmatprep.mubr.f32.mxu0 0.0
        %4787 = vmatmul.mubr.f32.gmra.mxu0 %v4566
        %v4788 = vpop.f32.mrf.mxu0
        %v4789 = vadd.f32 0.0, %v4788
        %v4790 = vpop.f32.mrf.mxu0
        %4791 = vmatprep.mubr.f32.mxu0 0.0
        %4792 = vmatmul.mubr.f32.gmra.mxu0 %v4569
        %v4793 = vpop.f32.mrf.mxu0
        %v4794 = vadd.f32 0.0, %v4793
        %v4795 = vpop.f32.mrf.mxu0
        %4796 = vmatprep.mubr.f32.mxu0 0.0
        %4797 = vmatmul.mubr.f32.gmra.mxu0 %v4572
        %v4798 = vpop.f32.mrf.mxu0
        %v4799 = vadd.f32 0.0, %v4798
        %v4800 = vpop.f32.mrf.mxu0
        %4801 = vdwg.mxu0
        %v4802 = vadd.f32 %v4380, %v4644
        %v4803 = vadd.f32 %v4381, %v4649
        %v4804 = vadd.f32 %v4382, %v4654
        %v4805 = vadd.f32 %v4383, %v4659
        %v4806 = vadd.f32 %v4384, %v4664
        %v4807 = vadd.f32 %v4385, %v4669
        %v4808 = vadd.f32 %v4386, %v4674
        %v4809 = vadd.f32 %v4387, %v4679
        %v4810 = vadd.f32 %v4388, %v4684
        %v4811 = vadd.f32 %v4389, %v4689
        %v4812 = vadd.f32 %v4390, %v4694
        %v4813 = vadd.f32 %v4391, %v4699
        %v4814 = vadd.f32 %v4392, %v4704
        %v4815 = vadd.f32 %v4393, %v4709
        %v4816 = vadd.f32 %v4394, %v4714
        %v4817 = vadd.f32 %v4395, %v4719
        %v4818 = vadd.f32 %v4396, %v4724
        %v4819 = vadd.f32 %v4397, %v4729
        %v4820 = vadd.f32 %v4398, %v4734
        %v4821 = vadd.f32 %v4399, %v4739
        %v4822 = vadd.f32 %v4400, %v4744
        %v4823 = vadd.f32 %v4401, %v4749
        %v4824 = vadd.f32 %v4402, %v4754
        %v4825 = vadd.f32 %v4403, %v4759
        %v4826 = vadd.f32 %v4404, %v4764
        %v4827 = vadd.f32 %v4405, %v4769
        %v4828 = vadd.f32 %v4406, %v4774
        %v4829 = vadd.f32 %v4407, %v4779
        %v4830 = vadd.f32 %v4408, %v4784
        %v4831 = vadd.f32 %v4409, %v4789
        %v4832 = vadd.f32 %v4410, %v4794
        %v4833 = vadd.f32 %v4411, %v4799
        %v4834 = vld [vmem:[%s3] sm:$0x1]
        %v4836 = vlaneseq
        %v4837 = vshrl.u32 %v4836, 7
        %v4838 = vsub.s32 0, %v4837
        %v4839 = vrot.slane %v4834, %v4838
        %v4841 = vadd.f32 %v4802, %v4839
        %v4842 = vadd.f32 %v4803, %v4839
        %v4843 = vadd.f32 %v4804, %v4839
        %v4844 = vadd.f32 %v4805, %v4839
        %v4845 = vadd.f32 %v4806, %v4839
        %v4846 = vadd.f32 %v4807, %v4839
        %v4847 = vadd.f32 %v4808, %v4839
        %v4848 = vadd.f32 %v4809, %v4839
        %v4849 = vadd.f32 %v4810, %v4839
        %v4850 = vadd.f32 %v4811, %v4839
        %v4851 = vadd.f32 %v4812, %v4839
        %v4852 = vadd.f32 %v4813, %v4839
        %v4853 = vadd.f32 %v4814, %v4839
        %v4854 = vadd.f32 %v4815, %v4839
        %v4855 = vadd.f32 %v4816, %v4839
        %v4856 = vadd.f32 %v4817, %v4839
        %v4857 = vadd.f32 %v4818, %v4839
        %v4858 = vadd.f32 %v4819, %v4839
        %v4859 = vadd.f32 %v4820, %v4839
        %v4860 = vadd.f32 %v4821, %v4839
        %v4861 = vadd.f32 %v4822, %v4839
        %v4862 = vadd.f32 %v4823, %v4839
        %v4863 = vadd.f32 %v4824, %v4839
        %v4864 = vadd.f32 %v4825, %v4839
        %v4865 = vadd.f32 %v4826, %v4839
        %v4866 = vadd.f32 %v4827, %v4839
        %v4867 = vadd.f32 %v4828, %v4839
        %v4868 = vadd.f32 %v4829, %v4839
        %v4869 = vadd.f32 %v4830, %v4839
        %v4870 = vadd.f32 %v4831, %v4839
        %v4871 = vadd.f32 %v4832, %v4839
        %v4872 = vadd.f32 %v4833, %v4839
        %vm4873 = vcmp.gt.f32.partialorder %v4841, 0.0
        %vm4874 = vcmp.gt.f32.partialorder %v4842, 0.0
        %vm4875 = vcmp.gt.f32.partialorder %v4843, 0.0
        %vm4876 = vcmp.gt.f32.partialorder %v4844, 0.0
        %vm4877 = vcmp.gt.f32.partialorder %v4845, 0.0
        %vm4878 = vcmp.gt.f32.partialorder %v4846, 0.0
        %vm4879 = vcmp.gt.f32.partialorder %v4847, 0.0
        %vm4880 = vcmp.gt.f32.partialorder %v4848, 0.0
        %vm4881 = vcmp.gt.f32.partialorder %v4849, 0.0
        %vm4882 = vcmp.gt.f32.partialorder %v4850, 0.0
        %vm4883 = vcmp.gt.f32.partialorder %v4851, 0.0
        %vm4884 = vcmp.gt.f32.partialorder %v4852, 0.0
        %vm4885 = vcmp.gt.f32.partialorder %v4853, 0.0
        %vm4886 = vcmp.gt.f32.partialorder %v4854, 0.0
        %vm4887 = vcmp.gt.f32.partialorder %v4855, 0.0
        %vm4888 = vcmp.gt.f32.partialorder %v4856, 0.0
        %vm4889 = vcmp.gt.f32.partialorder %v4857, 0.0
        %vm4890 = vcmp.gt.f32.partialorder %v4858, 0.0
        %vm4891 = vcmp.gt.f32.partialorder %v4859, 0.0
        %vm4892 = vcmp.gt.f32.partialorder %v4860, 0.0
        %vm4893 = vcmp.gt.f32.partialorder %v4861, 0.0
        %vm4894 = vcmp.gt.f32.partialorder %v4862, 0.0
        %vm4895 = vcmp.gt.f32.partialorder %v4863, 0.0
        %vm4896 = vcmp.gt.f32.partialorder %v4864, 0.0
        %vm4897 = vcmp.gt.f32.partialorder %v4865, 0.0
        %vm4898 = vcmp.gt.f32.partialorder %v4866, 0.0
        %vm4899 = vcmp.gt.f32.partialorder %v4867, 0.0
        %vm4900 = vcmp.gt.f32.partialorder %v4868, 0.0
        %vm4901 = vcmp.gt.f32.partialorder %v4869, 0.0
        %vm4902 = vcmp.gt.f32.partialorder %v4870, 0.0
        %vm4903 = vcmp.gt.f32.partialorder %v4871, 0.0
        %vm4904 = vcmp.gt.f32.partialorder %v4872, 0.0
        %v4905 = vmul.f32 %v4841, 0.01
        %v4906 = vmul.f32 %v4842, 0.01
        %v4907 = vmul.f32 %v4843, 0.01
        %v4908 = vmul.f32 %v4844, 0.01
        %v4909 = vmul.f32 %v4845, 0.01
        %v4910 = vmul.f32 %v4846, 0.01
        %v4911 = vmul.f32 %v4847, 0.01
        %v4912 = vmul.f32 %v4848, 0.01
        %v4913 = vmul.f32 %v4849, 0.01
        %v4914 = vmul.f32 %v4850, 0.01
        %v4915 = vmul.f32 %v4851, 0.01
        %v4916 = vmul.f32 %v4852, 0.01
        %v4917 = vmul.f32 %v4853, 0.01
        %v4918 = vmul.f32 %v4854, 0.01
        %v4919 = vmul.f32 %v4855, 0.01
        %v4920 = vmul.f32 %v4856, 0.01
        %v4921 = vmul.f32 %v4857, 0.01
        %v4922 = vmul.f32 %v4858, 0.01
        %v4923 = vmul.f32 %v4859, 0.01
        %v4924 = vmul.f32 %v4860, 0.01
        %v4925 = vmul.f32 %v4861, 0.01
        %v4926 = vmul.f32 %v4862, 0.01
        %v4927 = vmul.f32 %v4863, 0.01
        %v4928 = vmul.f32 %v4864, 0.01
        %v4929 = vmul.f32 %v4865, 0.01
        %v4930 = vmul.f32 %v4866, 0.01
        %v4931 = vmul.f32 %v4867, 0.01
        %v4932 = vmul.f32 %v4868, 0.01
        %v4933 = vmul.f32 %v4869, 0.01
        %v4934 = vmul.f32 %v4870, 0.01
        %v4935 = vmul.f32 %v4871, 0.01
        %v4936 = vmul.f32 %v4872, 0.01
        %v4937 = vsel %vm4873, %v4841, %v4905
        %v4938 = vsel %vm4874, %v4842, %v4906
        %v4939 = vsel %vm4875, %v4843, %v4907
        %v4940 = vsel %vm4876, %v4844, %v4908
        %v4941 = vsel %vm4877, %v4845, %v4909
        %v4942 = vsel %vm4878, %v4846, %v4910
        %v4943 = vsel %vm4879, %v4847, %v4911
        %v4944 = vsel %vm4880, %v4848, %v4912
        %v4945 = vsel %vm4881, %v4849, %v4913
        %v4946 = vsel %vm4882, %v4850, %v4914
        %v4947 = vsel %vm4883, %v4851, %v4915
        %v4948 = vsel %vm4884, %v4852, %v4916
        %v4949 = vsel %vm4885, %v4853, %v4917
        %v4950 = vsel %vm4886, %v4854, %v4918
        %v4951 = vsel %vm4887, %v4855, %v4919
        %v4952 = vsel %vm4888, %v4856, %v4920
        %v4953 = vsel %vm4889, %v4857, %v4921
        %v4954 = vsel %vm4890, %v4858, %v4922
        %v4955 = vsel %vm4891, %v4859, %v4923
        %v4956 = vsel %vm4892, %v4860, %v4924
        %v4957 = vsel %vm4893, %v4861, %v4925
        %v4958 = vsel %vm4894, %v4862, %v4926
        %v4959 = vsel %vm4895, %v4863, %v4927
        %v4960 = vsel %vm4896, %v4864, %v4928
        %v4961 = vsel %vm4897, %v4865, %v4929
        %v4962 = vsel %vm4898, %v4866, %v4930
        %v4963 = vsel %vm4899, %v4867, %v4931
        %v4964 = vsel %vm4900, %v4868, %v4932
        %v4965 = vsel %vm4901, %v4869, %v4933
        %v4966 = vsel %vm4902, %v4870, %v4934
        %v4967 = vsel %vm4903, %v4871, %v4935
        %v4968 = vsel %vm4904, %v4872, %v4936
        %vm4969 = vcmask 64512
        %v4970 = vsel %vm4969, %v4937, 0.0
        %v4971 = vsel %vm4969, %v4938, 0.0
        %v4972 = vadd.f32 %v4970, %v4971
        %v4973 = vsel %vm4969, %v4939, 0.0
        %v4974 = vadd.f32 %v4972, %v4973
        %v4975 = vsel %vm4969, %v4940, 0.0
        %v4976 = vadd.f32 %v4974, %v4975
        %v4977 = vsel %vm4969, %v4941, 0.0
        %v4978 = vadd.f32 %v4976, %v4977
        %v4979 = vsel %vm4969, %v4942, 0.0
        %v4980 = vadd.f32 %v4978, %v4979
        %v4981 = vsel %vm4969, %v4943, 0.0
        %v4982 = vadd.f32 %v4980, %v4981
        %v4983 = vsel %vm4969, %v4944, 0.0
        %v4984 = vadd.f32 %v4982, %v4983
        %v4985 = vsel %vm4969, %v4945, 0.0
        %v4986 = vadd.f32 %v4984, %v4985
        %v4987 = vsel %vm4969, %v4946, 0.0
        %v4988 = vadd.f32 %v4986, %v4987
        %v4989 = vsel %vm4969, %v4947, 0.0
        %v4990 = vadd.f32 %v4988, %v4989
        %v4991 = vsel %vm4969, %v4948, 0.0
        %v4992 = vadd.f32 %v4990, %v4991
        %v4993 = vsel %vm4969, %v4949, 0.0
        %v4994 = vadd.f32 %v4992, %v4993
        %v4995 = vsel %vm4969, %v4950, 0.0
        %v4996 = vadd.f32 %v4994, %v4995
        %v4997 = vsel %vm4969, %v4951, 0.0
        %v4998 = vadd.f32 %v4996, %v4997
        %v4999 = vsel %vm4969, %v4952, 0.0
        %v5000 = vadd.f32 %v4998, %v4999
        %v5001 = vsel %vm4969, %v4953, 0.0
        %v5002 = vadd.f32 %v5000, %v5001
        %v5003 = vsel %vm4969, %v4954, 0.0
        %v5004 = vadd.f32 %v5002, %v5003
        %v5005 = vsel %vm4969, %v4955, 0.0
        %v5006 = vadd.f32 %v5004, %v5005
        %v5007 = vsel %vm4969, %v4956, 0.0
        %v5008 = vadd.f32 %v5006, %v5007
        %v5009 = vsel %vm4969, %v4957, 0.0
        %v5010 = vadd.f32 %v5008, %v5009
        %v5011 = vsel %vm4969, %v4958, 0.0
        %v5012 = vadd.f32 %v5010, %v5011
        %v5013 = vsel %vm4969, %v4959, 0.0
        %v5014 = vadd.f32 %v5012, %v5013
        %v5015 = vsel %vm4969, %v4960, 0.0
        %v5016 = vadd.f32 %v5014, %v5015
        %v5017 = vsel %vm4969, %v4961, 0.0
        %v5018 = vadd.f32 %v5016, %v5017
        %v5019 = vsel %vm4969, %v4962, 0.0
        %v5020 = vadd.f32 %v5018, %v5019
        %v5021 = vsel %vm4969, %v4963, 0.0
        %v5022 = vadd.f32 %v5020, %v5021
        %v5023 = vsel %vm4969, %v4964, 0.0
        %v5024 = vadd.f32 %v5022, %v5023
        %v5025 = vsel %vm4969, %v4965, 0.0
        %v5026 = vadd.f32 %v5024, %v5025
        %v5027 = vsel %vm4969, %v4966, 0.0
        %v5028 = vadd.f32 %v5026, %v5027
        %v5029 = vsel %vm4969, %v4967, 0.0
        %v5030 = vadd.f32 %v5028, %v5029
        %v5031 = vsel %vm4969, %v4968, 0.0
        %v5032 = vadd.f32 %v5030, %v5031
        %v5033 = vrot.slane %v5032, 4
        %v5034 = vadd.f32 %v5032, %v5033
        %v5035 = vrot.slane %v5034, 2
        %v5036 = vadd.f32 %v5034, %v5035
        %v5037 = vrot.slane %v5036, 1
        %v5038 = vadd.f32 %v5036, %v5037
        %v5039 = vmul.f32 %v4937, %v4937
        %v5040 = vmul.f32 %v4938, %v4938
        %v5041 = vmul.f32 %v4939, %v4939
        %v5042 = vmul.f32 %v4940, %v4940
        %v5043 = vmul.f32 %v4941, %v4941
        %v5044 = vmul.f32 %v4942, %v4942
        %v5045 = vmul.f32 %v4943, %v4943
        %v5046 = vmul.f32 %v4944, %v4944
        %v5047 = vmul.f32 %v4945, %v4945
        %v5048 = vmul.f32 %v4946, %v4946
        %v5049 = vmul.f32 %v4947, %v4947
        %v5050 = vmul.f32 %v4948, %v4948
        %v5051 = vmul.f32 %v4949, %v4949
        %v5052 = vmul.f32 %v4950, %v4950
        %v5053 = vmul.f32 %v4951, %v4951
        %v5054 = vmul.f32 %v4952, %v4952
        %v5055 = vmul.f32 %v4953, %v4953
        %v5056 = vmul.f32 %v4954, %v4954
        %v5057 = vmul.f32 %v4955, %v4955
        %v5058 = vmul.f32 %v4956, %v4956
        %v5059 = vmul.f32 %v4957, %v4957
        %v5060 = vmul.f32 %v4958, %v4958
        %v5061 = vmul.f32 %v4959, %v4959
        %v5062 = vmul.f32 %v4960, %v4960
        %v5063 = vmul.f32 %v4961, %v4961
        %v5064 = vmul.f32 %v4962, %v4962
        %v5065 = vmul.f32 %v4963, %v4963
        %v5066 = vmul.f32 %v4964, %v4964
        %v5067 = vmul.f32 %v4965, %v4965
        %v5068 = vmul.f32 %v4966, %v4966
        %v5069 = vmul.f32 %v4967, %v4967
        %v5070 = vmul.f32 %v4968, %v4968
        %v5071 = vsel %vm4969, %v5039, 0.0
        %v5072 = vsel %vm4969, %v5040, 0.0
        %v5073 = vadd.f32 %v5071, %v5072
        %v5074 = vsel %vm4969, %v5041, 0.0
        %v5075 = vadd.f32 %v5073, %v5074
        %v5076 = vsel %vm4969, %v5042, 0.0
        %v5077 = vadd.f32 %v5075, %v5076
        %v5078 = vsel %vm4969, %v5043, 0.0
        %v5079 = vadd.f32 %v5077, %v5078
        %v5080 = vsel %vm4969, %v5044, 0.0
        %v5081 = vadd.f32 %v5079, %v5080
        %v5082 = vsel %vm4969, %v5045, 0.0
        %v5083 = vadd.f32 %v5081, %v5082
        %v5084 = vsel %vm4969, %v5046, 0.0
        %v5085 = vadd.f32 %v5083, %v5084
        %v5086 = vsel %vm4969, %v5047, 0.0
        %v5087 = vadd.f32 %v5085, %v5086
        %v5088 = vsel %vm4969, %v5048, 0.0
        %v5089 = vadd.f32 %v5087, %v5088
        %v5090 = vsel %vm4969, %v5049, 0.0
        %v5091 = vadd.f32 %v5089, %v5090
        %v5092 = vsel %vm4969, %v5050, 0.0
        %v5093 = vadd.f32 %v5091, %v5092
        %v5094 = vsel %vm4969, %v5051, 0.0
        %v5095 = vadd.f32 %v5093, %v5094
        %v5096 = vsel %vm4969, %v5052, 0.0
        %v5097 = vadd.f32 %v5095, %v5096
        %v5098 = vsel %vm4969, %v5053, 0.0
        %v5099 = vadd.f32 %v5097, %v5098
        %v5100 = vsel %vm4969, %v5054, 0.0
        %v5101 = vadd.f32 %v5099, %v5100
        %v5102 = vsel %vm4969, %v5055, 0.0
        %v5103 = vadd.f32 %v5101, %v5102
        %v5104 = vsel %vm4969, %v5056, 0.0
        %v5105 = vadd.f32 %v5103, %v5104
        %v5106 = vsel %vm4969, %v5057, 0.0
        %v5107 = vadd.f32 %v5105, %v5106
        %v5108 = vsel %vm4969, %v5058, 0.0
        %v5109 = vadd.f32 %v5107, %v5108
        %v5110 = vsel %vm4969, %v5059, 0.0
        %v5111 = vadd.f32 %v5109, %v5110
        %v5112 = vsel %vm4969, %v5060, 0.0
        %v5113 = vadd.f32 %v5111, %v5112
        %v5114 = vsel %vm4969, %v5061, 0.0
        %v5115 = vadd.f32 %v5113, %v5114
        %v5116 = vsel %vm4969, %v5062, 0.0
        %v5117 = vadd.f32 %v5115, %v5116
        %v5118 = vsel %vm4969, %v5063, 0.0
        %v5119 = vadd.f32 %v5117, %v5118
        %v5120 = vsel %vm4969, %v5064, 0.0
        %v5121 = vadd.f32 %v5119, %v5120
        %v5122 = vsel %vm4969, %v5065, 0.0
        %v5123 = vadd.f32 %v5121, %v5122
        %v5124 = vsel %vm4969, %v5066, 0.0
        %v5125 = vadd.f32 %v5123, %v5124
        %v5126 = vsel %vm4969, %v5067, 0.0
        %v5127 = vadd.f32 %v5125, %v5126
        %v5128 = vsel %vm4969, %v5068, 0.0
        %v5129 = vadd.f32 %v5127, %v5128
        %v5130 = vsel %vm4969, %v5069, 0.0
        %v5131 = vadd.f32 %v5129, %v5130
        %v5132 = vsel %vm4969, %v5070, 0.0
        %v5133 = vadd.f32 %v5131, %v5132
        %v5134 = vrot.slane %v5133, 4
        %v5135 = vadd.f32 %v5133, %v5134
        %v5136 = vrot.slane %v5135, 2
        %v5137 = vadd.f32 %v5135, %v5136
        %v5138 = vrot.slane %v5137, 1
        %v5139 = vadd.f32 %v5137, %v5138
        %v5140 = vmul.f32 %v5038, 0.00390625
        %v5141 = vmul.f32 %v5139, 0.00390625
        %v5142 = vmul.f32 %v5140, %v5140
        %v5143 = vsub.f32 %v5141, %v5142
        %v5144 = vsub.f32 %v4937, %v5140
        %v5145 = vsub.f32 %v4938, %v5140
        %v5146 = vsub.f32 %v4939, %v5140
        %v5147 = vsub.f32 %v4940, %v5140
        %v5148 = vsub.f32 %v4941, %v5140
        %v5149 = vsub.f32 %v4942, %v5140
        %v5150 = vsub.f32 %v4943, %v5140
        %v5151 = vsub.f32 %v4944, %v5140
        %v5152 = vsub.f32 %v4945, %v5140
        %v5153 = vsub.f32 %v4946, %v5140
        %v5154 = vsub.f32 %v4947, %v5140
        %v5155 = vsub.f32 %v4948, %v5140
        %v5156 = vsub.f32 %v4949, %v5140
        %v5157 = vsub.f32 %v4950, %v5140
        %v5158 = vsub.f32 %v4951, %v5140
        %v5159 = vsub.f32 %v4952, %v5140
        %v5160 = vsub.f32 %v4953, %v5140
        %v5161 = vsub.f32 %v4954, %v5140
        %v5162 = vsub.f32 %v4955, %v5140
        %v5163 = vsub.f32 %v4956, %v5140
        %v5164 = vsub.f32 %v4957, %v5140
        %v5165 = vsub.f32 %v4958, %v5140
        %v5166 = vsub.f32 %v4959, %v5140
        %v5167 = vsub.f32 %v4960, %v5140
        %v5168 = vsub.f32 %v4961, %v5140
        %v5169 = vsub.f32 %v4962, %v5140
        %v5170 = vsub.f32 %v4963, %v5140
        %v5171 = vsub.f32 %v4964, %v5140
        %v5172 = vsub.f32 %v4965, %v5140
        %v5173 = vsub.f32 %v4966, %v5140
        %v5174 = vsub.f32 %v4967, %v5140
        %v5175 = vsub.f32 %v4968, %v5140
        %v5176 = vadd.f32 %v5143, 1e-05
        %v5177 = vrsqrt.pop %v5176
        %v5178 = vmul.f32 %v5144, %v5177
        %v5179 = vmul.f32 %v5145, %v5177
        %v5180 = vmul.f32 %v5146, %v5177
        %v5181 = vmul.f32 %v5147, %v5177
        %v5182 = vmul.f32 %v5148, %v5177
        %v5183 = vmul.f32 %v5149, %v5177
        %v5184 = vmul.f32 %v5150, %v5177
        %v5185 = vmul.f32 %v5151, %v5177
        %v5186 = vmul.f32 %v5152, %v5177
        %v5187 = vmul.f32 %v5153, %v5177
        %v5188 = vmul.f32 %v5154, %v5177
        %v5189 = vmul.f32 %v5155, %v5177
        %v5190 = vmul.f32 %v5156, %v5177
        %v5191 = vmul.f32 %v5157, %v5177
        %v5192 = vmul.f32 %v5158, %v5177
        %v5193 = vmul.f32 %v5159, %v5177
        %v5194 = vmul.f32 %v5160, %v5177
        %v5195 = vmul.f32 %v5161, %v5177
        %v5196 = vmul.f32 %v5162, %v5177
        %v5197 = vmul.f32 %v5163, %v5177
        %v5198 = vmul.f32 %v5164, %v5177
        %v5199 = vmul.f32 %v5165, %v5177
        %v5200 = vmul.f32 %v5166, %v5177
        %v5201 = vmul.f32 %v5167, %v5177
        %v5202 = vmul.f32 %v5168, %v5177
        %v5203 = vmul.f32 %v5169, %v5177
        %v5204 = vmul.f32 %v5170, %v5177
        %v5205 = vmul.f32 %v5171, %v5177
        %v5206 = vmul.f32 %v5172, %v5177
        %v5207 = vmul.f32 %v5173, %v5177
        %v5208 = vmul.f32 %v5174, %v5177
        %v5209 = vmul.f32 %v5175, %v5177
        %5210 = vst.msk [vmem:[#allocation3] sm:$0xff] %vm4969, %v5178
        %5211 = vst.msk [vmem:[#allocation3 + $0x8] sm:$0xff] %vm4969, %v5179
        %5212 = vst.msk [vmem:[#allocation3 + $0x10] sm:$0xff] %vm4969, %v5180
        %5213 = vst.msk [vmem:[#allocation3 + $0x18] sm:$0xff] %vm4969, %v5181
        %5214 = vst.msk [vmem:[#allocation3 + $0x20] sm:$0xff] %vm4969, %v5182
        %5215 = vst.msk [vmem:[#allocation3 + $0x28] sm:$0xff] %vm4969, %v5183
        %5216 = vst.msk [vmem:[#allocation3 + $0x30] sm:$0xff] %vm4969, %v5184
        %5217 = vst.msk [vmem:[#allocation3 + $0x38] sm:$0xff] %vm4969, %v5185
        %5218 = vst.msk [vmem:[#allocation3 + $0x40] sm:$0xff] %vm4969, %v5186
        %5219 = vst.msk [vmem:[#allocation3 + $0x48] sm:$0xff] %vm4969, %v5187
        %5220 = vst.msk [vmem:[#allocation3 + $0x50] sm:$0xff] %vm4969, %v5188
        %5221 = vst.msk [vmem:[#allocation3 + $0x58] sm:$0xff] %vm4969, %v5189
        %5222 = vst.msk [vmem:[#allocation3 + $0x60] sm:$0xff] %vm4969, %v5190
        %5223 = vst.msk [vmem:[#allocation3 + $0x68] sm:$0xff] %vm4969, %v5191
        %5224 = vst.msk [vmem:[#allocation3 + $0x70] sm:$0xff] %vm4969, %v5192
        %5225 = vst.msk [vmem:[#allocation3 + $0x78] sm:$0xff] %vm4969, %v5193
        %5226 = vst.msk [vmem:[#allocation3 + $0x80] sm:$0xff] %vm4969, %v5194
        %5227 = vst.msk [vmem:[#allocation3 + $0x88] sm:$0xff] %vm4969, %v5195
        %5228 = vst.msk [vmem:[#allocation3 + $0x90] sm:$0xff] %vm4969, %v5196
        %5229 = vst.msk [vmem:[#allocation3 + $0x98] sm:$0xff] %vm4969, %v5197
        %5230 = vst.msk [vmem:[#allocation3 + $0xa0] sm:$0xff] %vm4969, %v5198
        %5231 = vst.msk [vmem:[#allocation3 + $0xa8] sm:$0xff] %vm4969, %v5199
        %5232 = vst.msk [vmem:[#allocation3 + $0xb0] sm:$0xff] %vm4969, %v5200
        %5233 = vst.msk [vmem:[#allocation3 + $0xb8] sm:$0xff] %vm4969, %v5201
        %5234 = vst.msk [vmem:[#allocation3 + $0xc0] sm:$0xff] %vm4969, %v5202
        %5235 = vst.msk [vmem:[#allocation3 + $0xc8] sm:$0xff] %vm4969, %v5203
        %5236 = vst.msk [vmem:[#allocation3 + $0xd0] sm:$0xff] %vm4969, %v5204
        %5237 = vst.msk [vmem:[#allocation3 + $0xd8] sm:$0xff] %vm4969, %v5205
        %5238 = vst.msk [vmem:[#allocation3 + $0xe0] sm:$0xff] %vm4969, %v5206
        %5239 = vst.msk [vmem:[#allocation3 + $0xe8] sm:$0xff] %vm4969, %v5207
        %5240 = vst.msk [vmem:[#allocation3 + $0xf0] sm:$0xff] %vm4969, %v5208
        %5241 = vst.msk [vmem:[#allocation3 + $0xf8] sm:$0xff] %vm4969, %v5209
        %v5242 = vld [vmem:[#allocation3] sm:$0xff]
        %v5243 = vld [vmem:[#allocation3 + $0x8] sm:$0xff]
        %v5244 = vld [vmem:[#allocation3 + $0x10] sm:$0xff]
        %v5245 = vld [vmem:[#allocation3 + $0x18] sm:$0xff]
        %v5246 = vld [vmem:[#allocation3 + $0x20] sm:$0xff]
        %v5247 = vld [vmem:[#allocation3 + $0x28] sm:$0xff]
        %v5248 = vld [vmem:[#allocation3 + $0x30] sm:$0xff]
        %v5249 = vld [vmem:[#allocation3 + $0x38] sm:$0xff]
        %v5250 = vld [vmem:[#allocation3 + $0x40] sm:$0xff]
        %v5251 = vld [vmem:[#allocation3 + $0x48] sm:$0xff]
        %v5252 = vld [vmem:[#allocation3 + $0x50] sm:$0xff]
        %v5253 = vld [vmem:[#allocation3 + $0x58] sm:$0xff]
        %v5254 = vld [vmem:[#allocation3 + $0x60] sm:$0xff]
        %v5255 = vld [vmem:[#allocation3 + $0x68] sm:$0xff]
        %v5256 = vld [vmem:[#allocation3 + $0x70] sm:$0xff]
        %v5257 = vld [vmem:[#allocation3 + $0x78] sm:$0xff]
        %v5258 = vld [vmem:[#allocation3 + $0x80] sm:$0xff]
        %v5259 = vld [vmem:[#allocation3 + $0x88] sm:$0xff]
        %v5260 = vld [vmem:[#allocation3 + $0x90] sm:$0xff]
        %v5261 = vld [vmem:[#allocation3 + $0x98] sm:$0xff]
        %v5262 = vld [vmem:[#allocation3 + $0xa0] sm:$0xff]
        %v5263 = vld [vmem:[#allocation3 + $0xa8] sm:$0xff]
        %v5264 = vld [vmem:[#allocation3 + $0xb0] sm:$0xff]
        %v5265 = vld [vmem:[#allocation3 + $0xb8] sm:$0xff]
        %v5266 = vld [vmem:[#allocation3 + $0xc0] sm:$0xff]
        %v5267 = vld [vmem:[#allocation3 + $0xc8] sm:$0xff]
        %v5268 = vld [vmem:[#allocation3 + $0xd0] sm:$0xff]
        %v5269 = vld [vmem:[#allocation3 + $0xd8] sm:$0xff]
        %v5270 = vld [vmem:[#allocation3 + $0xe0] sm:$0xff]
        %v5271 = vld [vmem:[#allocation3 + $0xe8] sm:$0xff]
        %v5272 = vmax.f32 %v5242, %v5244
        %v5273 = vmax.f32 %v5243, %v5245
        %v5274 = vmax.f32 %v5244, %v5246
        %v5275 = vmax.f32 %v5245, %v5247
        %v5276 = vmax.f32 %v5246, %v5248
        %v5277 = vmax.f32 %v5247, %v5249
        %v5278 = vmax.f32 %v5248, %v5250
        %v5279 = vmax.f32 %v5249, %v5251
        %v5280 = vmax.f32 %v5250, %v5252
        %v5281 = vmax.f32 %v5251, %v5253
        %v5282 = vmax.f32 %v5252, %v5254
        %v5283 = vmax.f32 %v5253, %v5255
        %v5284 = vmax.f32 %v5254, %v5256
        %v5285 = vmax.f32 %v5255, %v5257
        %v5286 = vmax.f32 %v5256, %v5258
        %v5287 = vmax.f32 %v5257, %v5259
        %v5288 = vmax.f32 %v5258, %v5260
        %v5289 = vmax.f32 %v5259, %v5261
        %v5290 = vmax.f32 %v5260, %v5262
        %v5291 = vmax.f32 %v5261, %v5263
        %v5292 = vmax.f32 %v5262, %v5264
        %v5293 = vmax.f32 %v5263, %v5265
        %v5294 = vmax.f32 %v5264, %v5266
        %v5295 = vmax.f32 %v5265, %v5267
        %v5296 = vmax.f32 %v5266, %v5268
        %v5297 = vmax.f32 %v5267, %v5269
        %v5298 = vmax.f32 %v5268, %v5270
        %v5299 = vmax.f32 %v5269, %v5271
        %v5300 = vld [vmem:[#allocation3 + $0xf0] sm:$0xff]
        %v5301 = vld [vmem:[#allocation3 + $0xf8] sm:$0xff]
        %v5302 = vmax.f32 %v5272, %v5246
        %v5303 = vmax.f32 %v5273, %v5247
        %v5304 = vmax.f32 %v5274, %v5248
        %v5305 = vmax.f32 %v5275, %v5249
        %v5306 = vmax.f32 %v5276, %v5250
        %v5307 = vmax.f32 %v5277, %v5251
        %v5308 = vmax.f32 %v5278, %v5252
        %v5309 = vmax.f32 %v5279, %v5253
        %v5310 = vmax.f32 %v5280, %v5254
        %v5311 = vmax.f32 %v5281, %v5255
        %v5312 = vmax.f32 %v5282, %v5256
        %v5313 = vmax.f32 %v5283, %v5257
        %v5314 = vmax.f32 %v5284, %v5258
        %v5315 = vmax.f32 %v5285, %v5259
        %v5316 = vmax.f32 %v5286, %v5260
        %v5317 = vmax.f32 %v5287, %v5261
        %v5318 = vmax.f32 %v5288, %v5262
        %v5319 = vmax.f32 %v5289, %v5263
        %v5320 = vmax.f32 %v5290, %v5264
        %v5321 = vmax.f32 %v5291, %v5265
        %v5322 = vmax.f32 %v5292, %v5266
        %v5323 = vmax.f32 %v5293, %v5267
        %v5324 = vmax.f32 %v5294, %v5268
        %v5325 = vmax.f32 %v5295, %v5269
        %v5326 = vmax.f32 %v5296, %v5270
        %v5327 = vmax.f32 %v5297, %v5271
        %v5328 = vmax.f32 %v5298, %v5300
        %v5329 = vmax.f32 %v5299, %v5301
        %5330 = vst.msk [vmem:[#allocation4] sm:$0xff] %vm4969, %v5302
        %5331 = vst.msk [vmem:[#allocation4 + $0x8] sm:$0xff] %vm4969, %v5303
        %5332 = vst.msk [vmem:[#allocation4 + $0x10] sm:$0xff] %vm4969, %v5304
        %5333 = vst.msk [vmem:[#allocation4 + $0x18] sm:$0xff] %vm4969, %v5305
        %5334 = vst.msk [vmem:[#allocation4 + $0x20] sm:$0xff] %vm4969, %v5306
        %5335 = vst.msk [vmem:[#allocation4 + $0x28] sm:$0xff] %vm4969, %v5307
        %5336 = vst.msk [vmem:[#allocation4 + $0x30] sm:$0xff] %vm4969, %v5308
        %5337 = vst.msk [vmem:[#allocation4 + $0x38] sm:$0xff] %vm4969, %v5309
        %5338 = vst.msk [vmem:[#allocation4 + $0x40] sm:$0xff] %vm4969, %v5310
        %5339 = vst.msk [vmem:[#allocation4 + $0x48] sm:$0xff] %vm4969, %v5311
        %5340 = vst.msk [vmem:[#allocation4 + $0x50] sm:$0xff] %vm4969, %v5312
        %5341 = vst.msk [vmem:[#allocation4 + $0x58] sm:$0xff] %vm4969, %v5313
        %5342 = vst.msk [vmem:[#allocation4 + $0x60] sm:$0xff] %vm4969, %v5314
        %5343 = vst.msk [vmem:[#allocation4 + $0x68] sm:$0xff] %vm4969, %v5315
        %5344 = vst.msk [vmem:[#allocation4 + $0x70] sm:$0xff] %vm4969, %v5316
        %5345 = vst.msk [vmem:[#allocation4 + $0x78] sm:$0xff] %vm4969, %v5317
        %5346 = vst.msk [vmem:[#allocation4 + $0x80] sm:$0xff] %vm4969, %v5318
        %5347 = vst.msk [vmem:[#allocation4 + $0x88] sm:$0xff] %vm4969, %v5319
        %5348 = vst.msk [vmem:[#allocation4 + $0x90] sm:$0xff] %vm4969, %v5320
        %5349 = vst.msk [vmem:[#allocation4 + $0x98] sm:$0xff] %vm4969, %v5321
        %5350 = vst.msk [vmem:[#allocation4 + $0xa0] sm:$0xff] %vm4969, %v5322
        %5351 = vst.msk [vmem:[#allocation4 + $0xa8] sm:$0xff] %vm4969, %v5323
        %5352 = vst.msk [vmem:[#allocation4 + $0xb0] sm:$0xff] %vm4969, %v5324
        %5353 = vst.msk [vmem:[#allocation4 + $0xb8] sm:$0xff] %vm4969, %v5325
        %5354 = vst.msk [vmem:[#allocation4 + $0xc0] sm:$0xff] %vm4969, %v5326
        %5355 = vst.msk [vmem:[#allocation4 + $0xc8] sm:$0xff] %vm4969, %v5327
        %5356 = vst.msk [vmem:[#allocation4 + $0xd0] sm:$0xff] %vm4969, %v5328
        %5357 = vst.msk [vmem:[#allocation4 + $0xd8] sm:$0xff] %vm4969, %v5329
        %v5358 = vld [vmem:[#allocation4] sm:$0xff]
        %v5359 = vld [vmem:[#allocation4 + $0x8] sm:$0xff]
        %v5360 = vld [vmem:[#allocation4 + $0x10] sm:$0xff]
        %v5361 = vld [vmem:[#allocation4 + $0x18] sm:$0xff]
        %v5362 = vld [vmem:[#allocation4 + $0x20] sm:$0xff]
        %v5363 = vld [vmem:[#allocation4 + $0x28] sm:$0xff]
        %v5364 = vld [vmem:[#allocation4 + $0x30] sm:$0xff]
        %v5365 = vld [vmem:[#allocation4 + $0x38] sm:$0xff]
        %v5366 = vld [vmem:[#allocation4 + $0x40] sm:$0xff]
        %v5367 = vld [vmem:[#allocation4 + $0x48] sm:$0xff]
        %v5368 = vld [vmem:[#allocation4 + $0x50] sm:$0xff]
        %v5369 = vld [vmem:[#allocation4 + $0x58] sm:$0xff]
        %v5370 = vld [vmem:[#allocation4 + $0x60] sm:$0xff]
        %v5371 = vld [vmem:[#allocation4 + $0x68] sm:$0xff]
        %v5372 = vld [vmem:[#allocation4 + $0x70] sm:$0xff]
        %v5373 = vld [vmem:[#allocation4 + $0x78] sm:$0xff]
        %v5374 = vld [vmem:[#allocation4 + $0x80] sm:$0xff]
        %v5375 = vld [vmem:[#allocation4 + $0x88] sm:$0xff]
        %v5376 = vld [vmem:[#allocation4 + $0x90] sm:$0xff]
        %v5377 = vld [vmem:[#allocation4 + $0x98] sm:$0xff]
        %v5378 = vld [vmem:[#allocation4 + $0xa0] sm:$0xff]
        %v5379 = vld [vmem:[#allocation4 + $0xa8] sm:$0xff]
        %v5380 = vld [vmem:[#allocation4 + $0xb0] sm:$0xff]
        %v5381 = vld [vmem:[#allocation4 + $0xb8] sm:$0xff]
        %v5382 = vld [vmem:[#allocation4 + $0xc0] sm:$0xff]
        %v5383 = vld [vmem:[#allocation4 + $0xc8] sm:$0xff]
        %v5384 = vld [vmem:[#allocation4 + $0xd0] sm:$0xff]
        %v5385 = vld [vmem:[#allocation4 + $0xd8] sm:$0x3f]
        %v5386 = vld [vmem:[#allocation4 + $0x1] sm:$0xff]
        %v5387 = vld [vmem:[#allocation4 + $0x9] sm:$0xff]
        %v5388 = vld [vmem:[#allocation4 + $0x11] sm:$0xff]
        %v5389 = vld [vmem:[#allocation4 + $0x19] sm:$0xff]
        %v5390 = vld [vmem:[#allocation4 + $0x21] sm:$0xff]
        %v5391 = vld [vmem:[#allocation4 + $0x29] sm:$0xff]
        %v5392 = vld [vmem:[#allocation4 + $0x31] sm:$0xff]
        %v5393 = vld [vmem:[#allocation4 + $0x39] sm:$0xff]
        %v5394 = vld [vmem:[#allocation4 + $0x41] sm:$0xff]
        %v5395 = vld [vmem:[#allocation4 + $0x49] sm:$0xff]
        %v5396 = vld [vmem:[#allocation4 + $0x51] sm:$0xff]
        %v5397 = vld [vmem:[#allocation4 + $0x59] sm:$0xff]
        %v5398 = vld [vmem:[#allocation4 + $0x61] sm:$0xff]
        %v5399 = vld [vmem:[#allocation4 + $0x69] sm:$0xff]
        %v5400 = vld [vmem:[#allocation4 + $0x71] sm:$0xff]
        %v5401 = vld [vmem:[#allocation4 + $0x79] sm:$0xff]
        %v5402 = vld [vmem:[#allocation4 + $0x81] sm:$0xff]
        %v5403 = vld [vmem:[#allocation4 + $0x89] sm:$0xff]
        %v5404 = vld [vmem:[#allocation4 + $0x91] sm:$0xff]
        %v5405 = vld [vmem:[#allocation4 + $0x99] sm:$0xff]
        %v5406 = vld [vmem:[#allocation4 + $0xa1] sm:$0xff]
        %v5407 = vld [vmem:[#allocation4 + $0xa9] sm:$0xff]
        %v5408 = vld [vmem:[#allocation4 + $0xb1] sm:$0xff]
        %v5409 = vld [vmem:[#allocation4 + $0xb9] sm:$0xff]
        %v5410 = vld [vmem:[#allocation4 + $0xc1] sm:$0xff]
        %v5411 = vld [vmem:[#allocation4 + $0xc9] sm:$0xff]
        %v5412 = vld [vmem:[#allocation4 + $0xd1] sm:$0xff]
        %v5413 = vld [vmem:[#allocation4 + $0xd9] sm:$0x3f]
        %v5414 = vmax.f32 %v5358, %v5386
        %v5415 = vmax.f32 %v5359, %v5387
        %v5416 = vmax.f32 %v5360, %v5388
        %v5417 = vmax.f32 %v5361, %v5389
        %v5418 = vmax.f32 %v5362, %v5390
        %v5419 = vmax.f32 %v5363, %v5391
        %v5420 = vmax.f32 %v5364, %v5392
        %v5421 = vmax.f32 %v5365, %v5393
        %v5422 = vmax.f32 %v5366, %v5394
        %v5423 = vmax.f32 %v5367, %v5395
        %v5424 = vmax.f32 %v5368, %v5396
        %v5425 = vmax.f32 %v5369, %v5397
        %v5426 = vmax.f32 %v5370, %v5398
        %v5427 = vmax.f32 %v5371, %v5399
        %v5428 = vmax.f32 %v5372, %v5400
        %v5429 = vmax.f32 %v5373, %v5401
        %v5430 = vmax.f32 %v5374, %v5402
        %v5431 = vmax.f32 %v5375, %v5403
        %v5432 = vmax.f32 %v5376, %v5404
        %v5433 = vmax.f32 %v5377, %v5405
        %v5434 = vmax.f32 %v5378, %v5406
        %v5435 = vmax.f32 %v5379, %v5407
        %v5436 = vmax.f32 %v5380, %v5408
        %v5437 = vmax.f32 %v5381, %v5409
        %v5438 = vmax.f32 %v5382, %v5410
        %v5439 = vmax.f32 %v5383, %v5411
        %v5440 = vmax.f32 %v5384, %v5412
        %v5441 = vmax.f32 %v5385, %v5413
        %v5442 = vld [vmem:[#allocation4 + $0x2] sm:$0xff]
        %v5443 = vld [vmem:[#allocation4 + $0xa] sm:$0xff]
        %v5444 = vld [vmem:[#allocation4 + $0x12] sm:$0xff]
        %v5445 = vld [vmem:[#allocation4 + $0x1a] sm:$0xff]
        %v5446 = vld [vmem:[#allocation4 + $0x22] sm:$0xff]
        %v5447 = vld [vmem:[#allocation4 + $0x2a] sm:$0xff]
        %v5448 = vld [vmem:[#allocation4 + $0x32] sm:$0xff]
        %v5449 = vld [vmem:[#allocation4 + $0x3a] sm:$0xff]
        %v5450 = vld [vmem:[#allocation4 + $0x42] sm:$0xff]
        %v5451 = vld [vmem:[#allocation4 + $0x4a] sm:$0xff]
        %v5452 = vld [vmem:[#allocation4 + $0x52] sm:$0xff]
        %v5453 = vld [vmem:[#allocation4 + $0x5a] sm:$0xff]
        %v5454 = vld [vmem:[#allocation4 + $0x62] sm:$0xff]
        %v5455 = vld [vmem:[#allocation4 + $0x6a] sm:$0xff]
        %v5456 = vld [vmem:[#allocation4 + $0x72] sm:$0xff]
        %v5457 = vld [vmem:[#allocation4 + $0x7a] sm:$0xff]
        %v5458 = vld [vmem:[#allocation4 + $0x82] sm:$0xff]
        %v5459 = vld [vmem:[#allocation4 + $0x8a] sm:$0xff]
        %v5460 = vld [vmem:[#allocation4 + $0x92] sm:$0xff]
        %v5461 = vld [vmem:[#allocation4 + $0x9a] sm:$0xff]
        %v5462 = vld [vmem:[#allocation4 + $0xa2] sm:$0xff]
        %v5463 = vld [vmem:[#allocation4 + $0xaa] sm:$0xff]
        %v5464 = vld [vmem:[#allocation4 + $0xb2] sm:$0xff]
        %v5465 = vld [vmem:[#allocation4 + $0xba] sm:$0xff]
        %v5466 = vld [vmem:[#allocation4 + $0xc2] sm:$0xff]
        %v5467 = vld [vmem:[#allocation4 + $0xca] sm:$0xff]
        %v5468 = vld [vmem:[#allocation4 + $0xd2] sm:$0xff]
        %v5469 = vld [vmem:[#allocation4 + $0xda] sm:$0x3f]
        %v5470 = vmax.f32 %v5414, %v5442
        %v5471 = vmax.f32 %v5415, %v5443
        %v5472 = vmax.f32 %v5416, %v5444
        %v5473 = vmax.f32 %v5417, %v5445
        %v5474 = vmax.f32 %v5418, %v5446
        %v5475 = vmax.f32 %v5419, %v5447
        %v5476 = vmax.f32 %v5420, %v5448
        %v5477 = vmax.f32 %v5421, %v5449
        %v5478 = vmax.f32 %v5422, %v5450
        %v5479 = vmax.f32 %v5423, %v5451
        %v5480 = vmax.f32 %v5424, %v5452
        %v5481 = vmax.f32 %v5425, %v5453
        %v5482 = vmax.f32 %v5426, %v5454
        %v5483 = vmax.f32 %v5427, %v5455
        %v5484 = vmax.f32 %v5428, %v5456
        %v5485 = vmax.f32 %v5429, %v5457
        %v5486 = vmax.f32 %v5430, %v5458
        %v5487 = vmax.f32 %v5431, %v5459
        %v5488 = vmax.f32 %v5432, %v5460
        %v5489 = vmax.f32 %v5433, %v5461
        %v5490 = vmax.f32 %v5434, %v5462
        %v5491 = vmax.f32 %v5435, %v5463
        %v5492 = vmax.f32 %v5436, %v5464
        %v5493 = vmax.f32 %v5437, %v5465
        %v5494 = vmax.f32 %v5438, %v5466
        %v5495 = vmax.f32 %v5439, %v5467
        %v5496 = vmax.f32 %v5440, %v5468
        %v5497 = vmax.f32 %v5441, %v5469
        %v5498 = vld [vmem:[%s4] sm:$0xff]
        %v5499 = vld [vmem:[%s4 + $0x8] sm:$0xff]
        %v5500 = vld [vmem:[%s4 + $0x10] sm:$0xff]
        %v5501 = vld [vmem:[%s4 + $0x18] sm:$0xff]
        %v5502 = vld [vmem:[%s4 + $0x20] sm:$0xff]
        %v5503 = vld [vmem:[%s4 + $0x28] sm:$0xff]
        %v5504 = vld [vmem:[%s4 + $0x30] sm:$0xff]
        %v5505 = vld [vmem:[%s4 + $0x38] sm:$0xff]
        %v5506 = vld [vmem:[%s4 + $0x40] sm:$0xff]
        %v5507 = vld [vmem:[%s4 + $0x48] sm:$0xff]
        %v5508 = vld [vmem:[%s4 + $0x50] sm:$0xff]
        %v5509 = vld [vmem:[%s4 + $0x58] sm:$0xff]
        %v5510 = vld [vmem:[%s4 + $0x60] sm:$0x1]
        %v5511 = vld [vmem:[%s4 + $0x68] sm:$0x1]
        %vm5512 = vcmask 769024
        %v5514 = vsel %vm5512, %v5499, 0
        %v5517 = vsel %vm5512, %v5501, 0
        %v5520 = vsel %vm5512, %v5503, 0
        %v5523 = vsel %vm5512, %v5505, 0
        %v5526 = vsel %vm5512, %v5507, 0
        %v5529 = vsel %vm5512, %v5509, 0
        %v5532 = vsel %vm5512, %v5511, 0
        %vm5534 = vcmask 1045504
        %v5536 = vsel %vm5534, %v5497, 0
        %5538 = vmatprep.subr.mxu0 0.0
        %5539 = vmatpush1.msra.mxu0 %v5485
        %5540 = vmatprep.subr.mxu0 0.0
        %5541 = vmatpush1.msra.mxu0 %v5484
        %5542 = vmatprep.subr.mxu0 0.0
        %5543 = vmatpush1.msra.mxu0 %v5483
        %5544 = vmatprep.subr.mxu0 0.0
        %5545 = vmatpush1.msra.mxu0 %v5482
        %5546 = vmatprep.subr.mxu0 0.0
        %5547 = vmatpush1.msra.mxu0 %v5481
        %5548 = vmatprep.subr.mxu0 0.0
        %5549 = vmatpush1.msra.mxu0 %v5480
        %5550 = vmatprep.subr.mxu0 0.0
        %5551 = vmatpush1.msra.mxu0 %v5479
        %5552 = vmatprep.subr.mxu0 0.0
        %5553 = vmatpush1.msra.mxu0 %v5478
        %5554 = vmatprep.subr.mxu0 0.0
        %5555 = vmatpush1.msra.mxu0 %v5477
        %5556 = vmatprep.subr.mxu0 0.0
        %5557 = vmatpush1.msra.mxu0 %v5476
        %5558 = vmatprep.subr.mxu0 0.0
        %5559 = vmatpush1.msra.mxu0 %v5475
        %5560 = vmatprep.subr.mxu0 0.0
        %5561 = vmatpush1.msra.mxu0 %v5474
        %5562 = vmatprep.subr.mxu0 0.0
        %5563 = vmatpush1.msra.mxu0 %v5473
        %5564 = vmatprep.subr.mxu0 0.0
        %5565 = vmatpush1.msra.mxu0 %v5472
        %5566 = vmatprep.subr.mxu0 0.0
        %5567 = vmatpush1.msra.mxu0 %v5471
        %5568 = vmatprep.subr.mxu0 0.0
        %5569 = vmatpush1.msra.mxu0 %v5470
        %5570 = vmatprep.subr.mxu0 0.0
        %5571 = vmatpush2.msra.mxu0 0.0
        %5572 = vmatprep.subr.mxu0 0.0
        %5573 = vmatpush2.msra.mxu0 0.0
        %5574 = vmatprep.subr.mxu0 0.0
        %5575 = vmatpush2.msra.mxu0 0.0
        %5576 = vmatprep.subr.mxu0 0.0
        %5577 = vmatpush2.msra.mxu0 0.0
        %5578 = vmatprep.subr.mxu0 0.0
        %5579 = vmatpush2.msra.mxu0 %v5536
        %5580 = vmatprep.subr.mxu0 0.0
        %5581 = vmatpush2.msra.mxu0 %v5496
        %5582 = vmatprep.subr.mxu0 0.0
        %5583 = vmatpush2.msra.mxu0 %v5495
        %5584 = vmatprep.subr.mxu0 0.0
        %5585 = vmatpush2.msra.mxu0 %v5494
        %5586 = vmatprep.subr.mxu0 0.0
        %5587 = vmatpush2.msra.mxu0 %v5493
        %5588 = vmatprep.subr.mxu0 0.0
        %5589 = vmatpush2.msra.mxu0 %v5492
        %5590 = vmatprep.subr.mxu0 0.0
        %5591 = vmatpush2.msra.mxu0 %v5491
        %5592 = vmatprep.subr.mxu0 0.0
        %5593 = vmatpush2.msra.mxu0 %v5490
        %5594 = vmatprep.subr.mxu0 0.0
        %5595 = vmatpush2.msra.mxu0 %v5489
        %5596 = vmatprep.subr.mxu0 0.0
        %5597 = vmatpush2.msra.mxu0 %v5488
        %5598 = vmatprep.subr.mxu0 0.0
        %5599 = vmatpush2.msra.mxu0 %v5487
        %5600 = vmatprep.subr.mxu0 0.0
        %5601 = vmatpush2.msra.mxu0 %v5486
        %5602 = vmatprep.mubr.f32.mxu0 %v5514
        %5603 = vmatmul.mubr.f32.gmra.mxu0 %v5498
        %v5604 = vpop.f32.mrf.mxu0
        %v5605 = vadd.f32 0.0, %v5604
        %v5606 = vpop.f32.mrf.mxu0
        %5607 = vmatprep.mubr.f32.mxu0 %v5517
        %5608 = vmatmul.mubr.f32.gmra.mxu0 %v5500
        %v5609 = vpop.f32.mrf.mxu0
        %v5610 = vadd.f32 0.0, %v5609
        %v5611 = vpop.f32.mrf.mxu0
        %5612 = vmatprep.mubr.f32.mxu0 %v5520
        %5613 = vmatmul.mubr.f32.gmra.mxu0 %v5502
        %v5614 = vpop.f32.mrf.mxu0
        %v5615 = vadd.f32 0.0, %v5614
        %v5616 = vpop.f32.mrf.mxu0
        %5617 = vmatprep.mubr.f32.mxu0 %v5523
        %5618 = vmatmul.mubr.f32.gmra.mxu0 %v5504
        %v5619 = vpop.f32.mrf.mxu0
        %v5620 = vadd.f32 0.0, %v5619
        %v5621 = vpop.f32.mrf.mxu0
        %5622 = vmatprep.mubr.f32.mxu0 %v5526
        %5623 = vmatmul.mubr.f32.gmra.mxu0 %v5506
        %v5624 = vpop.f32.mrf.mxu0
        %v5625 = vadd.f32 0.0, %v5624
        %v5626 = vpop.f32.mrf.mxu0
        %5627 = vmatprep.mubr.f32.mxu0 %v5529
        %5628 = vmatmul.mubr.f32.gmra.mxu0 %v5508
        %v5629 = vpop.f32.mrf.mxu0
        %v5630 = vadd.f32 0.0, %v5629
        %v5631 = vpop.f32.mrf.mxu0
        %5632 = vmatprep.mubr.f32.mxu0 %v5532
        %5633 = vmatmul.mubr.f32.gmra.mxu0 %v5510
        %v5634 = vpop.f32.mrf.mxu0
        %v5635 = vadd.f32 0.0, %v5634
        %v5636 = vpop.f32.mrf.mxu0
        %5637 = vdwg.mxu0
        %5638 = vst.msk [vmem:[#allocation5] sm:$0xff] %vm4969, 0.0
        %5639 = vst.msk [vmem:[#allocation5 + $0x39] sm:$0xff] %vm4969, 0.0
        %5640 = vst.msk [vmem:[#allocation5 + $0x8] sm:$0xff] %vm4969, %v5605
        %5641 = vst.msk [vmem:[#allocation5 + $0x10] sm:$0xff] %vm4969, %v5610
        %5642 = vst.msk [vmem:[#allocation5 + $0x18] sm:$0xff] %vm4969, %v5615
        %5643 = vst.msk [vmem:[#allocation5 + $0x20] sm:$0xff] %vm4969, %v5620
        %5644 = vst.msk [vmem:[#allocation5 + $0x28] sm:$0xff] %vm4969, %v5625
        %5645 = vst.msk [vmem:[#allocation5 + $0x30] sm:$0xff] %vm4969, %v5630
        %vm5646 = vcmask 57344
        %5647 = vst.msk [vmem:[#allocation5 + $0x38] sm:$0x1] %vm5646, %v5635
        %vm5648 = vcmp.lt.s32.totalorder %v716, 0
        %v5649 = vsub.s32 0, %v716
        %v5650 = vsel %vm5648, %v5649, %v716
        %v5651 = vmul.u32.u64.compose %v5650, 2454267026
        %v5652 = vextract.low.u32 %v5651
        %v5653 = vextract.high.u32 %v5651
        %vm5654 = vc.u32 %v5652, 2454267026
        %v5655 = vsel %vm5654, 1, 0
        %v5656 = vadd.s32 %v5653, %v5655
        %v5657 = vshrl.u32 %v5656, 2
        %v5658 = vmul.u32 %v5657, 7
        %v5659 = vsub.s32 %v5650, %v5658
        %v5660 = vsub.s32 0, %v5659
        %v5661 = vsel %vm5648, %v5660, %v5659
        %vm5662 = vcmp.lt.s32.totalorder %v717, 0
        %v5663 = vsub.s32 0, %v717
        %v5664 = vsel %vm5662, %v5663, %v717
        %v5665 = vmul.u32.u64.compose %v5664, 2454267026
        %v5666 = vextract.low.u32 %v5665
        %v5667 = vextract.high.u32 %v5665
        %vm5668 = vc.u32 %v5666, 2454267026
        %v5669 = vsel %vm5668, 1, 0
        %v5670 = vadd.s32 %v5667, %v5669
        %v5671 = vshrl.u32 %v5670, 2
        %v5672 = vmul.u32 %v5671, 7
        %v5673 = vsub.s32 %v5664, %v5672
        %v5674 = vsub.s32 0, %v5673
        %v5675 = vsel %vm5662, %v5674, %v5673
        %vm5676 = vcmp.lt.s32.totalorder %v718, 0
        %v5677 = vsub.s32 0, %v718
        %v5678 = vsel %vm5676, %v5677, %v718
        %v5679 = vmul.u32.u64.compose %v5678, 2454267026
        %v5680 = vextract.low.u32 %v5679
        %v5681 = vextract.high.u32 %v5679
        %vm5682 = vc.u32 %v5680, 2454267026
        %v5683 = vsel %vm5682, 1, 0
        %v5684 = vadd.s32 %v5681, %v5683
        %v5685 = vshrl.u32 %v5684, 2
        %v5686 = vmul.u32 %v5685, 7
        %v5687 = vsub.s32 %v5678, %v5686
        %v5688 = vsub.s32 0, %v5687
        %v5689 = vsel %vm5676, %v5688, %v5687
        %vm5690 = vcmp.lt.s32.totalorder %v719, 0
        %v5691 = vsub.s32 0, %v719
        %v5692 = vsel %vm5690, %v5691, %v719
        %v5693 = vmul.u32.u64.compose %v5692, 2454267026
        %v5694 = vextract.low.u32 %v5693
        %v5695 = vextract.high.u32 %v5693
        %vm5696 = vc.u32 %v5694, 2454267026
        %v5697 = vsel %vm5696, 1, 0
        %v5698 = vadd.s32 %v5695, %v5697
        %v5699 = vshrl.u32 %v5698, 2
        %v5700 = vmul.u32 %v5699, 7
        %v5701 = vsub.s32 %v5692, %v5700
        %v5702 = vsub.s32 0, %v5701
        %v5703 = vsel %vm5690, %v5702, %v5701
        %vm5704 = vcmp.lt.s32.totalorder %v720, 0
        %v5705 = vsub.s32 0, %v720
        %v5706 = vsel %vm5704, %v5705, %v720
        %v5707 = vmul.u32.u64.compose %v5706, 2454267026
        %v5708 = vextract.low.u32 %v5707
        %v5709 = vextract.high.u32 %v5707
        %vm5710 = vc.u32 %v5708, 2454267026
        %v5711 = vsel %vm5710, 1, 0
        %v5712 = vadd.s32 %v5709, %v5711
        %v5713 = vshrl.u32 %v5712, 2
        %v5714 = vmul.u32 %v5713, 7
        %v5715 = vsub.s32 %v5706, %v5714
        %v5716 = vsub.s32 0, %v5715
        %v5717 = vsel %vm5704, %v5716, %v5715
        %vm5718 = vcmp.lt.s32.totalorder %v721, 0
        %v5719 = vsub.s32 0, %v721
        %v5720 = vsel %vm5718, %v5719, %v721
        %v5721 = vmul.u32.u64.compose %v5720, 2454267026
        %v5722 = vextract.low.u32 %v5721
        %v5723 = vextract.high.u32 %v5721
        %vm5724 = vc.u32 %v5722, 2454267026
        %v5725 = vsel %vm5724, 1, 0
        %v5726 = vadd.s32 %v5723, %v5725
        %v5727 = vshrl.u32 %v5726, 2
        %v5728 = vmul.u32 %v5727, 7
        %v5729 = vsub.s32 %v5720, %v5728
        %v5730 = vsub.s32 0, %v5729
        %v5731 = vsel %vm5718, %v5730, %v5729
        %vm5732 = vcmp.lt.s32.totalorder %v722, 0
        %v5733 = vsub.s32 0, %v722
        %v5734 = vsel %vm5732, %v5733, %v722
        %v5735 = vmul.u32.u64.compose %v5734, 2454267026
        %v5736 = vextract.low.u32 %v5735
        %v5737 = vextract.high.u32 %v5735
        %vm5738 = vc.u32 %v5736, 2454267026
        %v5739 = vsel %vm5738, 1, 0
        %v5740 = vadd.s32 %v5737, %v5739
        %v5741 = vshrl.u32 %v5740, 2
        %v5742 = vmul.u32 %v5741, 7
        %v5743 = vsub.s32 %v5734, %v5742
        %v5744 = vsub.s32 0, %v5743
        %v5745 = vsel %vm5732, %v5744, %v5743
        %vm5746 = vcmp.ne.s32.totalorder %v5661, 0
        %vm5747 = vcmp.ne.s32.totalorder %v5675, 0
        %vm5748 = vcmp.ne.s32.totalorder %v5689, 0
        %vm5749 = vcmp.ne.s32.totalorder %v5703, 0
        %vm5750 = vcmp.ne.s32.totalorder %v5717, 0
        %vm5751 = vcmp.ne.s32.totalorder %v5731, 0
        %vm5752 = vcmp.ne.s32.totalorder %v5745, 0
        %vm5753 = vcmp.lt.s32.totalorder %v5661, 0
        %vm5754 = vcmp.lt.s32.totalorder %v5675, 0
        %vm5755 = vcmp.lt.s32.totalorder %v5689, 0
        %vm5756 = vcmp.lt.s32.totalorder %v5703, 0
        %vm5757 = vcmp.lt.s32.totalorder %v5717, 0
        %vm5758 = vcmp.lt.s32.totalorder %v5731, 0
        %vm5759 = vcmp.lt.s32.totalorder %v5745, 0
        %vm5760 = vmand %vm5753, %vm5746
        %vm5761 = vmand %vm5754, %vm5747
        %vm5762 = vmand %vm5755, %vm5748
        %vm5763 = vmand %vm5756, %vm5749
        %vm5764 = vmand %vm5757, %vm5750
        %vm5765 = vmand %vm5758, %vm5751
        %vm5766 = vmand %vm5759, %vm5752
        %v5767 = vadd.s32 %v5661, 7
        %v5768 = vadd.s32 %v5675, 7
        %v5769 = vadd.s32 %v5689, 7
        %v5770 = vadd.s32 %v5703, 7
        %v5771 = vadd.s32 %v5717, 7
        %v5772 = vadd.s32 %v5731, 7
        %v5773 = vadd.s32 %v5745, 7
        %v5774 = vsel %vm5760, %v5767, %v5661
        %v5775 = vsel %vm5761, %v5768, %v5675
        %v5776 = vsel %vm5762, %v5769, %v5689
        %v5777 = vsel %vm5763, %v5770, %v5703
        %v5778 = vsel %vm5764, %v5771, %v5717
        %v5779 = vsel %vm5765, %v5772, %v5731
        %v5780 = vsel %vm5766, %v5773, %v5745
        %vm5781 = vcmp.ge.s32.totalorder %v5774, 1
        %vm5782 = vcmp.ge.s32.totalorder %v5775, 1
        %vm5783 = vcmp.ge.s32.totalorder %v5776, 1
        %vm5784 = vcmp.ge.s32.totalorder %v5777, 1
        %vm5785 = vcmp.ge.s32.totalorder %v5778, 1
        %vm5786 = vcmp.ge.s32.totalorder %v5779, 1
        %vm5787 = vcmp.ge.s32.totalorder %v5780, 1
        %vm5788 = vcmp.le.s32.totalorder %v5774, 5
        %vm5789 = vcmp.le.s32.totalorder %v5775, 5
        %vm5790 = vcmp.le.s32.totalorder %v5776, 5
        %vm5791 = vcmp.le.s32.totalorder %v5777, 5
        %vm5792 = vcmp.le.s32.totalorder %v5778, 5
        %vm5793 = vcmp.le.s32.totalorder %v5779, 5
        %vm5794 = vcmp.le.s32.totalorder %v5780, 5
        %v5795 = vld [vmem:[#allocation5] sm:$0xff]
        %v5796 = vld [vmem:[#allocation5 + $0x8] sm:$0xff]
        %v5797 = vld [vmem:[#allocation5 + $0x10] sm:$0xff]
        %v5798 = vld [vmem:[#allocation5 + $0x18] sm:$0xff]
        %v5799 = vld [vmem:[#allocation5 + $0x20] sm:$0xff]
        %v5800 = vld [vmem:[#allocation5 + $0x28] sm:$0xff]
        %v5801 = vld [vmem:[#allocation5 + $0x30] sm:$0x1]
        %v5802 = vsel %vm5781, %v5795, 0.0
        %v5803 = vsel %vm5782, %v5796, 0.0
        %v5804 = vsel %vm5783, %v5797, 0.0
        %v5805 = vsel %vm5784, %v5798, 0.0
        %v5806 = vsel %vm5785, %v5799, 0.0
        %v5807 = vsel %vm5786, %v5800, 0.0
        %v5808 = vsel %vm5787, %v5801, 0.0
        %v5809 = vld [vmem:[%s5] sm:$0xff]
        %v5810 = vld [vmem:[#allocation5 + $0x1] sm:$0xff]
        %v5811 = vld [vmem:[#allocation5 + $0x9] sm:$0xff]
        %v5812 = vld [vmem:[#allocation5 + $0x11] sm:$0xff]
        %v5813 = vld [vmem:[#allocation5 + $0x19] sm:$0xff]
        %v5814 = vld [vmem:[#allocation5 + $0x21] sm:$0xff]
        %v5815 = vld [vmem:[#allocation5 + $0x29] sm:$0xff]
        %v5816 = vld [vmem:[#allocation5 + $0x31] sm:$0x1]
        %s5817 = scalar_lea.vmem %s5, 8
        %v5818 = vld [vmem:[%s5817] sm:$0xff]
        %v5820 = vsel %vm4969, %v5810, 0
        %v5823 = vsel %vm4969, %v5811, 0
        %v5826 = vsel %vm4969, %v5812, 0
        %v5829 = vsel %vm4969, %v5813, 0
        %v5832 = vsel %vm4969, %v5814, 0
        %v5835 = vsel %vm4969, %v5815, 0
        %v5838 = vsel %vm4969, %v5816, 0
        %5840 = vmatprep.subr.mxu0 0.0
        %5841 = vmatpush1.msra.mxu0 0.0
        %5842 = vmatprep.subr.mxu0 0.0
        %5843 = vmatpush1.msra.mxu0 0.0
        %5844 = vmatprep.subr.mxu0 0.0
        %5845 = vmatpush1.msra.mxu0 0.0
        %5846 = vmatprep.subr.mxu0 0.0
        %5847 = vmatpush1.msra.mxu0 0.0
        %5848 = vmatprep.subr.mxu0 0.0
        %5849 = vmatpush1.msra.mxu0 0.0
        %5850 = vmatprep.subr.mxu0 0.0
        %5851 = vmatpush1.msra.mxu0 0.0
        %5852 = vmatprep.subr.mxu0 0.0
        %5853 = vmatpush1.msra.mxu0 0.0
        %5854 = vmatprep.subr.mxu0 0.0
        %5855 = vmatpush1.msra.mxu0 0.0
        %5856 = vmatprep.subr.mxu0 0.0
        %5857 = vmatpush1.msra.mxu0 0.0
        %5858 = vmatprep.subr.mxu0 0.0
        %5859 = vmatpush1.msra.mxu0 0.0
        %5860 = vmatprep.subr.mxu0 0.0
        %5861 = vmatpush1.msra.mxu0 0.0
        %5862 = vmatprep.subr.mxu0 0.0
        %5863 = vmatpush1.msra.mxu0 0.0
        %5864 = vmatprep.subr.mxu0 0.0
        %5865 = vmatpush1.msra.mxu0 0.0
        %5866 = vmatprep.subr.mxu0 0.0
        %5867 = vmatpush1.msra.mxu0 0.0
        %5868 = vmatprep.subr.mxu0 0.0
        %5869 = vmatpush1.msra.mxu0 0.0
        %5870 = vmatprep.subr.mxu0 0.0
        %5871 = vmatpush1.msra.mxu0 %v5818
        %5872 = vmatprep.subr.mxu0 0.0
        %5873 = vmatpush2.msra.mxu0 0.0
        %5874 = vmatprep.subr.mxu0 0.0
        %5875 = vmatpush2.msra.mxu0 0.0
        %5876 = vmatprep.subr.mxu0 0.0
        %5877 = vmatpush2.msra.mxu0 0.0
        %5878 = vmatprep.subr.mxu0 0.0
        %5879 = vmatpush2.msra.mxu0 0.0
        %5880 = vmatprep.subr.mxu0 0.0
        %5881 = vmatpush2.msra.mxu0 0.0
        %5882 = vmatprep.subr.mxu0 0.0
        %5883 = vmatpush2.msra.mxu0 0.0
        %5884 = vmatprep.subr.mxu0 0.0
        %5885 = vmatpush2.msra.mxu0 0.0
        %5886 = vmatprep.subr.mxu0 0.0
        %5887 = vmatpush2.msra.mxu0 0.0
        %5888 = vmatprep.subr.mxu0 0.0
        %5889 = vmatpush2.msra.mxu0 0.0
        %5890 = vmatprep.subr.mxu0 0.0
        %5891 = vmatpush2.msra.mxu0 0.0
        %5892 = vmatprep.subr.mxu0 0.0
        %5893 = vmatpush2.msra.mxu0 0.0
        %5894 = vmatprep.subr.mxu0 0.0
        %5895 = vmatpush2.msra.mxu0 0.0
        %5896 = vmatprep.subr.mxu0 0.0
        %5897 = vmatpush2.msra.mxu0 0.0
        %5898 = vmatprep.subr.mxu0 0.0
        %5899 = vmatpush2.msra.mxu0 0.0
        %5900 = vmatprep.subr.mxu0 0.0
        %5901 = vmatpush2.msra.mxu0 0.0
        %5902 = vmatprep.subr.mxu0 0.0
        %5903 = vmatpush2.msra.mxu0 0.0
        %5904 = vmatprep.mubr.f32.mxu0 0.0
        %5905 = vmatmul.mubr.f32.gmra.mxu0 %v5820
        %v5906 = vpop.f32.mrf.mxu0
        %v5907 = vadd.f32 0.0, %v5906
        %v5908 = vpop.f32.mrf.mxu0
        %5909 = vmatprep.mubr.f32.mxu0 0.0
        %5910 = vmatmul.mubr.f32.gmra.mxu0 %v5823
        %v5911 = vpop.f32.mrf.mxu0
        %v5912 = vadd.f32 0.0, %v5911
        %v5913 = vpop.f32.mrf.mxu0
        %5914 = vmatprep.mubr.f32.mxu0 0.0
        %5915 = vmatmul.mubr.f32.gmra.mxu0 %v5826
        %v5916 = vpop.f32.mrf.mxu0
        %v5917 = vadd.f32 0.0, %v5916
        %v5918 = vpop.f32.mrf.mxu0
        %5919 = vmatprep.mubr.f32.mxu0 0.0
        %5920 = vmatmul.mubr.f32.gmra.mxu0 %v5829
        %v5921 = vpop.f32.mrf.mxu0
        %v5922 = vadd.f32 0.0, %v5921
        %v5923 = vpop.f32.mrf.mxu0
        %5924 = vmatprep.mubr.f32.mxu0 0.0
        %5925 = vmatmul.mubr.f32.gmra.mxu0 %v5832
        %v5926 = vpop.f32.mrf.mxu0
        %v5927 = vadd.f32 0.0, %v5926
        %v5928 = vpop.f32.mrf.mxu0
        %5929 = vmatprep.mubr.f32.mxu0 0.0
        %5930 = vmatmul.mubr.f32.gmra.mxu0 %v5835
        %v5931 = vpop.f32.mrf.mxu0
        %v5932 = vadd.f32 0.0, %v5931
        %v5933 = vpop.f32.mrf.mxu0
        %5934 = vmatprep.mubr.f32.mxu0 0.0
        %5935 = vmatmul.mubr.f32.gmra.mxu0 %v5838
        %v5936 = vpop.f32.mrf.mxu0
        %v5937 = vadd.f32 0.0, %v5936
        %v5938 = vpop.f32.mrf.mxu0
        %5939 = vdwg.mxu0
        %v5941 = vsel %vm4969, %v5802, 0
        %v5944 = vsel %vm4969, %v5803, 0
        %v5947 = vsel %vm4969, %v5804, 0
        %v5950 = vsel %vm4969, %v5805, 0
        %v5953 = vsel %vm4969, %v5806, 0
        %v5956 = vsel %vm4969, %v5807, 0
        %v5959 = vsel %vm4969, %v5808, 0
        %5961 = vmatprep.subr.mxu0 0.0
        %5962 = vmatpush1.msra.mxu0 0.0
        %5963 = vmatprep.subr.mxu0 0.0
        %5964 = vmatpush1.msra.mxu0 0.0
        %5965 = vmatprep.subr.mxu0 0.0
        %5966 = vmatpush1.msra.mxu0 0.0
        %5967 = vmatprep.subr.mxu0 0.0
        %5968 = vmatpush1.msra.mxu0 0.0
        %5969 = vmatprep.subr.mxu0 0.0
        %5970 = vmatpush1.msra.mxu0 0.0
        %5971 = vmatprep.subr.mxu0 0.0
        %5972 = vmatpush1.msra.mxu0 0.0
        %5973 = vmatprep.subr.mxu0 0.0
        %5974 = vmatpush1.msra.mxu0 0.0
        %5975 = vmatprep.subr.mxu0 0.0
        %5976 = vmatpush1.msra.mxu0 0.0
        %5977 = vmatprep.subr.mxu0 0.0
        %5978 = vmatpush1.msra.mxu0 0.0
        %5979 = vmatprep.subr.mxu0 0.0
        %5980 = vmatpush1.msra.mxu0 0.0
        %5981 = vmatprep.subr.mxu0 0.0
        %5982 = vmatpush1.msra.mxu0 0.0
        %5983 = vmatprep.subr.mxu0 0.0
        %5984 = vmatpush1.msra.mxu0 0.0
        %5985 = vmatprep.subr.mxu0 0.0
        %5986 = vmatpush1.msra.mxu0 0.0
        %5987 = vmatprep.subr.mxu0 0.0
        %5988 = vmatpush1.msra.mxu0 0.0
        %5989 = vmatprep.subr.mxu0 0.0
        %5990 = vmatpush1.msra.mxu0 0.0
        %5991 = vmatprep.subr.mxu0 0.0
        %5992 = vmatpush1.msra.mxu0 %v5809
        %5993 = vmatprep.subr.mxu0 0.0
        %5994 = vmatpush2.msra.mxu0 0.0
        %5995 = vmatprep.subr.mxu0 0.0
        %5996 = vmatpush2.msra.mxu0 0.0
        %5997 = vmatprep.subr.mxu0 0.0
        %5998 = vmatpush2.msra.mxu0 0.0
        %5999 = vmatprep.subr.mxu0 0.0
        %6000 = vmatpush2.msra.mxu0 0.0
        %6001 = vmatprep.subr.mxu0 0.0
        %6002 = vmatpush2.msra.mxu0 0.0
        %6003 = vmatprep.subr.mxu0 0.0
        %6004 = vmatpush2.msra.mxu0 0.0
        %6005 = vmatprep.subr.mxu0 0.0
        %6006 = vmatpush2.msra.mxu0 0.0
        %6007 = vmatprep.subr.mxu0 0.0
        %6008 = vmatpush2.msra.mxu0 0.0
        %6009 = vmatprep.subr.mxu0 0.0
        %6010 = vmatpush2.msra.mxu0 0.0
        %6011 = vmatprep.subr.mxu0 0.0
        %6012 = vmatpush2.msra.mxu0 0.0
        %6013 = vmatprep.subr.mxu0 0.0
        %6014 = vmatpush2.msra.mxu0 0.0
        %6015 = vmatprep.subr.mxu0 0.0
        %6016 = vmatpush2.msra.mxu0 0.0
        %6017 = vmatprep.subr.mxu0 0.0
        %6018 = vmatpush2.msra.mxu0 0.0
        %6019 = vmatprep.subr.mxu0 0.0
        %6020 = vmatpush2.msra.mxu0 0.0
        %6021 = vmatprep.subr.mxu0 0.0
        %6022 = vmatpush2.msra.mxu0 0.0
        %6023 = vmatprep.subr.mxu0 0.0
        %6024 = vmatpush2.msra.mxu0 0.0
        %6025 = vmatprep.mubr.f32.mxu0 0.0
        %6026 = vmatmul.mubr.f32.gmra.mxu0 %v5941
        %v6027 = vpop.f32.mrf.mxu0
        %v6028 = vadd.f32 %v5907, %v6027
        %v6029 = vpop.f32.mrf.mxu0
        %6030 = vmatprep.mubr.f32.mxu0 0.0
        %6031 = vmatmul.mubr.f32.gmra.mxu0 %v5944
        %v6032 = vpop.f32.mrf.mxu0
        %v6033 = vadd.f32 %v5912, %v6032
        %v6034 = vpop.f32.mrf.mxu0
        %6035 = vmatprep.mubr.f32.mxu0 0.0
        %6036 = vmatmul.mubr.f32.gmra.mxu0 %v5947
        %v6037 = vpop.f32.mrf.mxu0
        %v6038 = vadd.f32 %v5917, %v6037
        %v6039 = vpop.f32.mrf.mxu0
        %6040 = vmatprep.mubr.f32.mxu0 0.0
        %6041 = vmatmul.mubr.f32.gmra.mxu0 %v5950
        %v6042 = vpop.f32.mrf.mxu0
        %v6043 = vadd.f32 %v5922, %v6042
        %v6044 = vpop.f32.mrf.mxu0
        %6045 = vmatprep.mubr.f32.mxu0 0.0
        %6046 = vmatmul.mubr.f32.gmra.mxu0 %v5953
        %v6047 = vpop.f32.mrf.mxu0
        %v6048 = vadd.f32 %v5927, %v6047
        %v6049 = vpop.f32.mrf.mxu0
        %6050 = vmatprep.mubr.f32.mxu0 0.0
        %6051 = vmatmul.mubr.f32.gmra.mxu0 %v5956
        %v6052 = vpop.f32.mrf.mxu0
        %v6053 = vadd.f32 %v5932, %v6052
        %v6054 = vpop.f32.mrf.mxu0
        %6055 = vmatprep.mubr.f32.mxu0 0.0
        %6056 = vmatmul.mubr.f32.gmra.mxu0 %v5959
        %v6057 = vpop.f32.mrf.mxu0
        %v6058 = vadd.f32 %v5937, %v6057
        %v6059 = vpop.f32.mrf.mxu0
        %6060 = vdwg.mxu0
        %v6061 = vld [vmem:[#allocation5 + $0x2] sm:$0xff]
        %v6062 = vld [vmem:[#allocation5 + $0xa] sm:$0xff]
        %v6063 = vld [vmem:[#allocation5 + $0x12] sm:$0xff]
        %v6064 = vld [vmem:[#allocation5 + $0x1a] sm:$0xff]
        %v6065 = vld [vmem:[#allocation5 + $0x22] sm:$0xff]
        %v6066 = vld [vmem:[#allocation5 + $0x2a] sm:$0xff]
        %v6067 = vld [vmem:[#allocation5 + $0x32] sm:$0x1]
        %v6068 = vsel %vm5788, %v6061, 0.0
        %v6069 = vsel %vm5789, %v6062, 0.0
        %v6070 = vsel %vm5790, %v6063, 0.0
        %v6071 = vsel %vm5791, %v6064, 0.0
        %v6072 = vsel %vm5792, %v6065, 0.0
        %v6073 = vsel %vm5793, %v6066, 0.0
        %v6074 = vsel %vm5794, %v6067, 0.0
        %s6075 = scalar_lea.vmem %s5, 16
        %v6076 = vld [vmem:[%s6075] sm:$0xff]
        %v6078 = vsel %vm4969, %v6068, 0
        %v6081 = vsel %vm4969, %v6069, 0
        %v6084 = vsel %vm4969, %v6070, 0
        %v6087 = vsel %vm4969, %v6071, 0
        %v6090 = vsel %vm4969, %v6072, 0
        %v6093 = vsel %vm4969, %v6073, 0
        %v6096 = vsel %vm4969, %v6074, 0
        %6098 = vmatprep.subr.mxu0 0.0
        %6099 = vmatpush1.msra.mxu0 0.0
        %6100 = vmatprep.subr.mxu0 0.0
        %6101 = vmatpush1.msra.mxu0 0.0
        %6102 = vmatprep.subr.mxu0 0.0
        %6103 = vmatpush1.msra.mxu0 0.0
        %6104 = vmatprep.subr.mxu0 0.0
        %6105 = vmatpush1.msra.mxu0 0.0
        %6106 = vmatprep.subr.mxu0 0.0
        %6107 = vmatpush1.msra.mxu0 0.0
        %6108 = vmatprep.subr.mxu0 0.0
        %6109 = vmatpush1.msra.mxu0 0.0
        %6110 = vmatprep.subr.mxu0 0.0
        %6111 = vmatpush1.msra.mxu0 0.0
        %6112 = vmatprep.subr.mxu0 0.0
        %6113 = vmatpush1.msra.mxu0 0.0
        %6114 = vmatprep.subr.mxu0 0.0
        %6115 = vmatpush1.msra.mxu0 0.0
        %6116 = vmatprep.subr.mxu0 0.0
        %6117 = vmatpush1.msra.mxu0 0.0
        %6118 = vmatprep.subr.mxu0 0.0
        %6119 = vmatpush1.msra.mxu0 0.0
        %6120 = vmatprep.subr.mxu0 0.0
        %6121 = vmatpush1.msra.mxu0 0.0
        %6122 = vmatprep.subr.mxu0 0.0
        %6123 = vmatpush1.msra.mxu0 0.0
        %6124 = vmatprep.subr.mxu0 0.0
        %6125 = vmatpush1.msra.mxu0 0.0
        %6126 = vmatprep.subr.mxu0 0.0
        %6127 = vmatpush1.msra.mxu0 0.0
        %6128 = vmatprep.subr.mxu0 0.0
        %6129 = vmatpush1.msra.mxu0 %v6076
        %6130 = vmatprep.subr.mxu0 0.0
        %6131 = vmatpush2.msra.mxu0 0.0
        %6132 = vmatprep.subr.mxu0 0.0
        %6133 = vmatpush2.msra.mxu0 0.0
        %6134 = vmatprep.subr.mxu0 0.0
        %6135 = vmatpush2.msra.mxu0 0.0
        %6136 = vmatprep.subr.mxu0 0.0
        %6137 = vmatpush2.msra.mxu0 0.0
        %6138 = vmatprep.subr.mxu0 0.0
        %6139 = vmatpush2.msra.mxu0 0.0
        %6140 = vmatprep.subr.mxu0 0.0
        %6141 = vmatpush2.msra.mxu0 0.0
        %6142 = vmatprep.subr.mxu0 0.0
        %6143 = vmatpush2.msra.mxu0 0.0
        %6144 = vmatprep.subr.mxu0 0.0
        %6145 = vmatpush2.msra.mxu0 0.0
        %6146 = vmatprep.subr.mxu0 0.0
        %6147 = vmatpush2.msra.mxu0 0.0
        %6148 = vmatprep.subr.mxu0 0.0
        %6149 = vmatpush2.msra.mxu0 0.0
        %6150 = vmatprep.subr.mxu0 0.0
        %6151 = vmatpush2.msra.mxu0 0.0
        %6152 = vmatprep.subr.mxu0 0.0
        %6153 = vmatpush2.msra.mxu0 0.0
        %6154 = vmatprep.subr.mxu0 0.0
        %6155 = vmatpush2.msra.mxu0 0.0
        %6156 = vmatprep.subr.mxu0 0.0
        %6157 = vmatpush2.msra.mxu0 0.0
        %6158 = vmatprep.subr.mxu0 0.0
        %6159 = vmatpush2.msra.mxu0 0.0
        %6160 = vmatprep.subr.mxu0 0.0
        %6161 = vmatpush2.msra.mxu0 0.0
        %6162 = vmatprep.mubr.f32.mxu0 0.0
        %6163 = vmatmul.mubr.f32.gmra.mxu0 %v6078
        %v6164 = vpop.f32.mrf.mxu0
        %v6165 = vadd.f32 0.0, %v6164
        %v6166 = vpop.f32.mrf.mxu0
        %6167 = vmatprep.mubr.f32.mxu0 0.0
        %6168 = vmatmul.mubr.f32.gmra.mxu0 %v6081
        %v6169 = vpop.f32.mrf.mxu0
        %v6170 = vadd.f32 0.0, %v6169
        %v6171 = vpop.f32.mrf.mxu0
        %6172 = vmatprep.mubr.f32.mxu0 0.0
        %6173 = vmatmul.mubr.f32.gmra.mxu0 %v6084
        %v6174 = vpop.f32.mrf.mxu0
        %v6175 = vadd.f32 0.0, %v6174
        %v6176 = vpop.f32.mrf.mxu0
        %6177 = vmatprep.mubr.f32.mxu0 0.0
        %6178 = vmatmul.mubr.f32.gmra.mxu0 %v6087
        %v6179 = vpop.f32.mrf.mxu0
        %v6180 = vadd.f32 0.0, %v6179
        %v6181 = vpop.f32.mrf.mxu0
        %6182 = vmatprep.mubr.f32.mxu0 0.0
        %6183 = vmatmul.mubr.f32.gmra.mxu0 %v6090
        %v6184 = vpop.f32.mrf.mxu0
        %v6185 = vadd.f32 0.0, %v6184
        %v6186 = vpop.f32.mrf.mxu0
        %6187 = vmatprep.mubr.f32.mxu0 0.0
        %6188 = vmatmul.mubr.f32.gmra.mxu0 %v6093
        %v6189 = vpop.f32.mrf.mxu0
        %v6190 = vadd.f32 0.0, %v6189
        %v6191 = vpop.f32.mrf.mxu0
        %6192 = vmatprep.mubr.f32.mxu0 0.0
        %6193 = vmatmul.mubr.f32.gmra.mxu0 %v6096
        %v6194 = vpop.f32.mrf.mxu0
        %v6195 = vadd.f32 0.0, %v6194
        %v6196 = vpop.f32.mrf.mxu0
        %6197 = vdwg.mxu0
        %v6198 = vadd.f32 %v6028, %v6165
        %v6199 = vadd.f32 %v6033, %v6170
        %v6200 = vadd.f32 %v6038, %v6175
        %v6201 = vadd.f32 %v6043, %v6180
        %v6202 = vadd.f32 %v6048, %v6185
        %v6203 = vadd.f32 %v6053, %v6190
        %v6204 = vadd.f32 %v6058, %v6195
        %v6205 = vld [vmem:[#allocation5 + $0x7] sm:$0xff]
        %v6206 = vld [vmem:[#allocation5 + $0xf] sm:$0xff]
        %v6207 = vld [vmem:[#allocation5 + $0x17] sm:$0xff]
        %v6208 = vld [vmem:[#allocation5 + $0x1f] sm:$0xff]
        %v6209 = vld [vmem:[#allocation5 + $0x27] sm:$0xff]
        %v6210 = vld [vmem:[#allocation5 + $0x2f] sm:$0xff]
        %v6211 = vld [vmem:[#allocation5 + $0x37] sm:$0x1]
        %v6212 = vsel %vm5781, %v6205, 0.0
        %v6213 = vsel %vm5782, %v6206, 0.0
        %v6214 = vsel %vm5783, %v6207, 0.0
        %v6215 = vsel %vm5784, %v6208, 0.0
        %v6216 = vsel %vm5785, %v6209, 0.0
        %v6217 = vsel %vm5786, %v6210, 0.0
        %v6218 = vsel %vm5787, %v6211, 0.0
        %s6219 = scalar_lea.vmem %s5, 24
        %v6220 = vld [vmem:[%s6219] sm:$0xff]
        %v6222 = vsel %vm4969, %v6212, 0
        %v6225 = vsel %vm4969, %v6213, 0
        %v6228 = vsel %vm4969, %v6214, 0
        %v6231 = vsel %vm4969, %v6215, 0
        %v6234 = vsel %vm4969, %v6216, 0
        %v6237 = vsel %vm4969, %v6217, 0
        %v6240 = vsel %vm4969, %v6218, 0
        %6242 = vmatprep.subr.mxu0 0.0
        %6243 = vmatpush1.msra.mxu0 0.0
        %6244 = vmatprep.subr.mxu0 0.0
        %6245 = vmatpush1.msra.mxu0 0.0
        %6246 = vmatprep.subr.mxu0 0.0
        %6247 = vmatpush1.msra.mxu0 0.0
        %6248 = vmatprep.subr.mxu0 0.0
        %6249 = vmatpush1.msra.mxu0 0.0
        %6250 = vmatprep.subr.mxu0 0.0
        %6251 = vmatpush1.msra.mxu0 0.0
        %6252 = vmatprep.subr.mxu0 0.0
        %6253 = vmatpush1.msra.mxu0 0.0
        %6254 = vmatprep.subr.mxu0 0.0
        %6255 = vmatpush1.msra.mxu0 0.0
        %6256 = vmatprep.subr.mxu0 0.0
        %6257 = vmatpush1.msra.mxu0 0.0
        %6258 = vmatprep.subr.mxu0 0.0
        %6259 = vmatpush1.msra.mxu0 0.0
        %6260 = vmatprep.subr.mxu0 0.0
        %6261 = vmatpush1.msra.mxu0 0.0
        %6262 = vmatprep.subr.mxu0 0.0
        %6263 = vmatpush1.msra.mxu0 0.0
        %6264 = vmatprep.subr.mxu0 0.0
        %6265 = vmatpush1.msra.mxu0 0.0
        %6266 = vmatprep.subr.mxu0 0.0
        %6267 = vmatpush1.msra.mxu0 0.0
        %6268 = vmatprep.subr.mxu0 0.0
        %6269 = vmatpush1.msra.mxu0 0.0
        %6270 = vmatprep.subr.mxu0 0.0
        %6271 = vmatpush1.msra.mxu0 0.0
        %6272 = vmatprep.subr.mxu0 0.0
        %6273 = vmatpush1.msra.mxu0 %v6220
        %6274 = vmatprep.subr.mxu0 0.0
        %6275 = vmatpush2.msra.mxu0 0.0
        %6276 = vmatprep.subr.mxu0 0.0
        %6277 = vmatpush2.msra.mxu0 0.0
        %6278 = vmatprep.subr.mxu0 0.0
        %6279 = vmatpush2.msra.mxu0 0.0
        %6280 = vmatprep.subr.mxu0 0.0
        %6281 = vmatpush2.msra.mxu0 0.0
        %6282 = vmatprep.subr.mxu0 0.0
        %6283 = vmatpush2.msra.mxu0 0.0
        %6284 = vmatprep.subr.mxu0 0.0
        %6285 = vmatpush2.msra.mxu0 0.0
        %6286 = vmatprep.subr.mxu0 0.0
        %6287 = vmatpush2.msra.mxu0 0.0
        %6288 = vmatprep.subr.mxu0 0.0
        %6289 = vmatpush2.msra.mxu0 0.0
        %6290 = vmatprep.subr.mxu0 0.0
        %6291 = vmatpush2.msra.mxu0 0.0
        %6292 = vmatprep.subr.mxu0 0.0
        %6293 = vmatpush2.msra.mxu0 0.0
        %6294 = vmatprep.subr.mxu0 0.0
        %6295 = vmatpush2.msra.mxu0 0.0
        %6296 = vmatprep.subr.mxu0 0.0
        %6297 = vmatpush2.msra.mxu0 0.0
        %6298 = vmatprep.subr.mxu0 0.0
        %6299 = vmatpush2.msra.mxu0 0.0
        %6300 = vmatprep.subr.mxu0 0.0
        %6301 = vmatpush2.msra.mxu0 0.0
        %6302 = vmatprep.subr.mxu0 0.0
        %6303 = vmatpush2.msra.mxu0 0.0
        %6304 = vmatprep.subr.mxu0 0.0
        %6305 = vmatpush2.msra.mxu0 0.0
        %6306 = vmatprep.mubr.f32.mxu0 0.0
        %6307 = vmatmul.mubr.f32.gmra.mxu0 %v6222
        %v6308 = vpop.f32.mrf.mxu0
        %v6309 = vadd.f32 0.0, %v6308
        %v6310 = vpop.f32.mrf.mxu0
        %6311 = vmatprep.mubr.f32.mxu0 0.0
        %6312 = vmatmul.mubr.f32.gmra.mxu0 %v6225
        %v6313 = vpop.f32.mrf.mxu0
        %v6314 = vadd.f32 0.0, %v6313
        %v6315 = vpop.f32.mrf.mxu0
        %6316 = vmatprep.mubr.f32.mxu0 0.0
        %6317 = vmatmul.mubr.f32.gmra.mxu0 %v6228
        %v6318 = vpop.f32.mrf.mxu0
        %v6319 = vadd.f32 0.0, %v6318
        %v6320 = vpop.f32.mrf.mxu0
        %6321 = vmatprep.mubr.f32.mxu0 0.0
        %6322 = vmatmul.mubr.f32.gmra.mxu0 %v6231
        %v6323 = vpop.f32.mrf.mxu0
        %v6324 = vadd.f32 0.0, %v6323
        %v6325 = vpop.f32.mrf.mxu0
        %6326 = vmatprep.mubr.f32.mxu0 0.0
        %6327 = vmatmul.mubr.f32.gmra.mxu0 %v6234
        %v6328 = vpop.f32.mrf.mxu0
        %v6329 = vadd.f32 0.0, %v6328
        %v6330 = vpop.f32.mrf.mxu0
        %6331 = vmatprep.mubr.f32.mxu0 0.0
        %6332 = vmatmul.mubr.f32.gmra.mxu0 %v6237
        %v6333 = vpop.f32.mrf.mxu0
        %v6334 = vadd.f32 0.0, %v6333
        %v6335 = vpop.f32.mrf.mxu0
        %6336 = vmatprep.mubr.f32.mxu0 0.0
        %6337 = vmatmul.mubr.f32.gmra.mxu0 %v6240
        %v6338 = vpop.f32.mrf.mxu0
        %v6339 = vadd.f32 0.0, %v6338
        %v6340 = vpop.f32.mrf.mxu0
        %6341 = vdwg.mxu0
        %v6342 = vadd.f32 %v6198, %v6309
        %v6343 = vadd.f32 %v6199, %v6314
        %v6344 = vadd.f32 %v6200, %v6319
        %v6345 = vadd.f32 %v6201, %v6324
        %v6346 = vadd.f32 %v6202, %v6329
        %v6347 = vadd.f32 %v6203, %v6334
        %v6348 = vadd.f32 %v6204, %v6339
        %v6349 = vld [vmem:[#allocation5 + $0x8] sm:$0xff]
        %v6350 = vld [vmem:[#allocation5 + $0x10] sm:$0xff]
        %v6351 = vld [vmem:[#allocation5 + $0x18] sm:$0xff]
        %v6352 = vld [vmem:[#allocation5 + $0x20] sm:$0xff]
        %v6353 = vld [vmem:[#allocation5 + $0x28] sm:$0xff]
        %v6354 = vld [vmem:[#allocation5 + $0x30] sm:$0xff]
        %v6355 = vld [vmem:[#allocation5 + $0x38] sm:$0x1]
        %s6356 = scalar_lea.vmem %s5, 32
        %v6357 = vld [vmem:[%s6356] sm:$0xff]
        %v6359 = vsel %vm4969, %v6349, 0
        %v6362 = vsel %vm4969, %v6350, 0
        %v6365 = vsel %vm4969, %v6351, 0
        %v6368 = vsel %vm4969, %v6352, 0
        %v6371 = vsel %vm4969, %v6353, 0
        %v6374 = vsel %vm4969, %v6354, 0
        %v6377 = vsel %vm4969, %v6355, 0
        %6379 = vmatprep.subr.mxu0 0.0
        %6380 = vmatpush1.msra.mxu0 0.0
        %6381 = vmatprep.subr.mxu0 0.0
        %6382 = vmatpush1.msra.mxu0 0.0
        %6383 = vmatprep.subr.mxu0 0.0
        %6384 = vmatpush1.msra.mxu0 0.0
        %6385 = vmatprep.subr.mxu0 0.0
        %6386 = vmatpush1.msra.mxu0 0.0
        %6387 = vmatprep.subr.mxu0 0.0
        %6388 = vmatpush1.msra.mxu0 0.0
        %6389 = vmatprep.subr.mxu0 0.0
        %6390 = vmatpush1.msra.mxu0 0.0
        %6391 = vmatprep.subr.mxu0 0.0
        %6392 = vmatpush1.msra.mxu0 0.0
        %6393 = vmatprep.subr.mxu0 0.0
        %6394 = vmatpush1.msra.mxu0 0.0
        %6395 = vmatprep.subr.mxu0 0.0
        %6396 = vmatpush1.msra.mxu0 0.0
        %6397 = vmatprep.subr.mxu0 0.0
        %6398 = vmatpush1.msra.mxu0 0.0
        %6399 = vmatprep.subr.mxu0 0.0
        %6400 = vmatpush1.msra.mxu0 0.0
        %6401 = vmatprep.subr.mxu0 0.0
        %6402 = vmatpush1.msra.mxu0 0.0
        %6403 = vmatprep.subr.mxu0 0.0
        %6404 = vmatpush1.msra.mxu0 0.0
        %6405 = vmatprep.subr.mxu0 0.0
        %6406 = vmatpush1.msra.mxu0 0.0
        %6407 = vmatprep.subr.mxu0 0.0
        %6408 = vmatpush1.msra.mxu0 0.0
        %6409 = vmatprep.subr.mxu0 0.0
        %6410 = vmatpush1.msra.mxu0 %v6357
        %6411 = vmatprep.subr.mxu0 0.0
        %6412 = vmatpush2.msra.mxu0 0.0
        %6413 = vmatprep.subr.mxu0 0.0
        %6414 = vmatpush2.msra.mxu0 0.0
        %6415 = vmatprep.subr.mxu0 0.0
        %6416 = vmatpush2.msra.mxu0 0.0
        %6417 = vmatprep.subr.mxu0 0.0
        %6418 = vmatpush2.msra.mxu0 0.0
        %6419 = vmatprep.subr.mxu0 0.0
        %6420 = vmatpush2.msra.mxu0 0.0
        %6421 = vmatprep.subr.mxu0 0.0
        %6422 = vmatpush2.msra.mxu0 0.0
        %6423 = vmatprep.subr.mxu0 0.0
        %6424 = vmatpush2.msra.mxu0 0.0
        %6425 = vmatprep.subr.mxu0 0.0
        %6426 = vmatpush2.msra.mxu0 0.0
        %6427 = vmatprep.subr.mxu0 0.0
        %6428 = vmatpush2.msra.mxu0 0.0
        %6429 = vmatprep.subr.mxu0 0.0
        %6430 = vmatpush2.msra.mxu0 0.0
        %6431 = vmatprep.subr.mxu0 0.0
        %6432 = vmatpush2.msra.mxu0 0.0
        %6433 = vmatprep.subr.mxu0 0.0
        %6434 = vmatpush2.msra.mxu0 0.0
        %6435 = vmatprep.subr.mxu0 0.0
        %6436 = vmatpush2.msra.mxu0 0.0
        %6437 = vmatprep.subr.mxu0 0.0
        %6438 = vmatpush2.msra.mxu0 0.0
        %6439 = vmatprep.subr.mxu0 0.0
        %6440 = vmatpush2.msra.mxu0 0.0
        %6441 = vmatprep.subr.mxu0 0.0
        %6442 = vmatpush2.msra.mxu0 0.0
        %6443 = vmatprep.mubr.f32.mxu0 0.0
        %6444 = vmatmul.mubr.f32.gmra.mxu0 %v6359
        %v6445 = vpop.f32.mrf.mxu0
        %v6446 = vadd.f32 0.0, %v6445
        %v6447 = vpop.f32.mrf.mxu0
        %6448 = vmatprep.mubr.f32.mxu0 0.0
        %6449 = vmatmul.mubr.f32.gmra.mxu0 %v6362
        %v6450 = vpop.f32.mrf.mxu0
        %v6451 = vadd.f32 0.0, %v6450
        %v6452 = vpop.f32.mrf.mxu0
        %6453 = vmatprep.mubr.f32.mxu0 0.0
        %6454 = vmatmul.mubr.f32.gmra.mxu0 %v6365
        %v6455 = vpop.f32.mrf.mxu0
        %v6456 = vadd.f32 0.0, %v6455
        %v6457 = vpop.f32.mrf.mxu0
        %6458 = vmatprep.mubr.f32.mxu0 0.0
        %6459 = vmatmul.mubr.f32.gmra.mxu0 %v6368
        %v6460 = vpop.f32.mrf.mxu0
        %v6461 = vadd.f32 0.0, %v6460
        %v6462 = vpop.f32.mrf.mxu0
        %6463 = vmatprep.mubr.f32.mxu0 0.0
        %6464 = vmatmul.mubr.f32.gmra.mxu0 %v6371
        %v6465 = vpop.f32.mrf.mxu0
        %v6466 = vadd.f32 0.0, %v6465
        %v6467 = vpop.f32.mrf.mxu0
        %6468 = vmatprep.mubr.f32.mxu0 0.0
        %6469 = vmatmul.mubr.f32.gmra.mxu0 %v6374
        %v6470 = vpop.f32.mrf.mxu0
        %v6471 = vadd.f32 0.0, %v6470
        %v6472 = vpop.f32.mrf.mxu0
        %6473 = vmatprep.mubr.f32.mxu0 0.0
        %6474 = vmatmul.mubr.f32.gmra.mxu0 %v6377
        %v6475 = vpop.f32.mrf.mxu0
        %v6476 = vadd.f32 0.0, %v6475
        %v6477 = vpop.f32.mrf.mxu0
        %6478 = vdwg.mxu0
        %v6479 = vadd.f32 %v6342, %v6446
        %v6480 = vadd.f32 %v6343, %v6451
        %v6481 = vadd.f32 %v6344, %v6456
        %v6482 = vadd.f32 %v6345, %v6461
        %v6483 = vadd.f32 %v6346, %v6466
        %v6484 = vadd.f32 %v6347, %v6471
        %v6485 = vadd.f32 %v6348, %v6476
        %v6486 = vld [vmem:[#allocation5 + $0x9] sm:$0xff]
        %v6487 = vld [vmem:[#allocation5 + $0x11] sm:$0xff]
        %v6488 = vld [vmem:[#allocation5 + $0x19] sm:$0xff]
        %v6489 = vld [vmem:[#allocation5 + $0x21] sm:$0xff]
        %v6490 = vld [vmem:[#allocation5 + $0x29] sm:$0xff]
        %v6491 = vld [vmem:[#allocation5 + $0x31] sm:$0xff]
        %v6492 = vld [vmem:[#allocation5 + $0x39] sm:$0x1]
        %v6493 = vsel %vm5788, %v6486, 0.0
        %v6494 = vsel %vm5789, %v6487, 0.0
        %v6495 = vsel %vm5790, %v6488, 0.0
        %v6496 = vsel %vm5791, %v6489, 0.0
        %v6497 = vsel %vm5792, %v6490, 0.0
        %v6498 = vsel %vm5793, %v6491, 0.0
        %v6499 = vsel %vm5794, %v6492, 0.0
        %s6500 = scalar_lea.vmem %s5, 40
        %v6501 = vld [vmem:[%s6500] sm:$0xff]
        %v6503 = vsel %vm4969, %v6493, 0
        %v6506 = vsel %vm4969, %v6494, 0
        %v6509 = vsel %vm4969, %v6495, 0
        %v6512 = vsel %vm4969, %v6496, 0
        %v6515 = vsel %vm4969, %v6497, 0
        %v6518 = vsel %vm4969, %v6498, 0
        %v6521 = vsel %vm4969, %v6499, 0
        %6523 = vmatprep.subr.mxu0 0.0
        %6524 = vmatpush1.msra.mxu0 0.0
        %6525 = vmatprep.subr.mxu0 0.0
        %6526 = vmatpush1.msra.mxu0 0.0
        %6527 = vmatprep.subr.mxu0 0.0
        %6528 = vmatpush1.msra.mxu0 0.0
        %6529 = vmatprep.subr.mxu0 0.0
        %6530 = vmatpush1.msra.mxu0 0.0
        %6531 = vmatprep.subr.mxu0 0.0
        %6532 = vmatpush1.msra.mxu0 0.0
        %6533 = vmatprep.subr.mxu0 0.0
        %6534 = vmatpush1.msra.mxu0 0.0
        %6535 = vmatprep.subr.mxu0 0.0
        %6536 = vmatpush1.msra.mxu0 0.0
        %6537 = vmatprep.subr.mxu0 0.0
        %6538 = vmatpush1.msra.mxu0 0.0
        %6539 = vmatprep.subr.mxu0 0.0
        %6540 = vmatpush1.msra.mxu0 0.0
        %6541 = vmatprep.subr.mxu0 0.0
        %6542 = vmatpush1.msra.mxu0 0.0
        %6543 = vmatprep.subr.mxu0 0.0
        %6544 = vmatpush1.msra.mxu0 0.0
        %6545 = vmatprep.subr.mxu0 0.0
        %6546 = vmatpush1.msra.mxu0 0.0
        %6547 = vmatprep.subr.mxu0 0.0
        %6548 = vmatpush1.msra.mxu0 0.0
        %6549 = vmatprep.subr.mxu0 0.0
        %6550 = vmatpush1.msra.mxu0 0.0
        %6551 = vmatprep.subr.mxu0 0.0
        %6552 = vmatpush1.msra.mxu0 0.0
        %6553 = vmatprep.subr.mxu0 0.0
        %6554 = vmatpush1.msra.mxu0 %v6501
        %6555 = vmatprep.subr.mxu0 0.0
        %6556 = vmatpush2.msra.mxu0 0.0
        %6557 = vmatprep.subr.mxu0 0.0
        %6558 = vmatpush2.msra.mxu0 0.0
        %6559 = vmatprep.subr.mxu0 0.0
        %6560 = vmatpush2.msra.mxu0 0.0
        %6561 = vmatprep.subr.mxu0 0.0
        %6562 = vmatpush2.msra.mxu0 0.0
        %6563 = vmatprep.subr.mxu0 0.0
        %6564 = vmatpush2.msra.mxu0 0.0
        %6565 = vmatprep.subr.mxu0 0.0
        %6566 = vmatpush2.msra.mxu0 0.0
        %6567 = vmatprep.subr.mxu0 0.0
        %6568 = vmatpush2.msra.mxu0 0.0
        %6569 = vmatprep.subr.mxu0 0.0
        %6570 = vmatpush2.msra.mxu0 0.0
        %6571 = vmatprep.subr.mxu0 0.0
        %6572 = vmatpush2.msra.mxu0 0.0
        %6573 = vmatprep.subr.mxu0 0.0
        %6574 = vmatpush2.msra.mxu0 0.0
        %6575 = vmatprep.subr.mxu0 0.0
        %6576 = vmatpush2.msra.mxu0 0.0
        %6577 = vmatprep.subr.mxu0 0.0
        %6578 = vmatpush2.msra.mxu0 0.0
        %6579 = vmatprep.subr.mxu0 0.0
        %6580 = vmatpush2.msra.mxu0 0.0
        %6581 = vmatprep.subr.mxu0 0.0
        %6582 = vmatpush2.msra.mxu0 0.0
        %6583 = vmatprep.subr.mxu0 0.0
        %6584 = vmatpush2.msra.mxu0 0.0
        %6585 = vmatprep.subr.mxu0 0.0
        %6586 = vmatpush2.msra.mxu0 0.0
        %6587 = vmatprep.mubr.f32.mxu0 0.0
        %6588 = vmatmul.mubr.f32.gmra.mxu0 %v6503
        %v6589 = vpop.f32.mrf.mxu0
        %v6590 = vadd.f32 0.0, %v6589
        %v6591 = vpop.f32.mrf.mxu0
        %6592 = vmatprep.mubr.f32.mxu0 0.0
        %6593 = vmatmul.mubr.f32.gmra.mxu0 %v6506
        %v6594 = vpop.f32.mrf.mxu0
        %v6595 = vadd.f32 0.0, %v6594
        %v6596 = vpop.f32.mrf.mxu0
        %6597 = vmatprep.mubr.f32.mxu0 0.0
        %6598 = vmatmul.mubr.f32.gmra.mxu0 %v6509
        %v6599 = vpop.f32.mrf.mxu0
        %v6600 = vadd.f32 0.0, %v6599
        %v6601 = vpop.f32.mrf.mxu0
        %6602 = vmatprep.mubr.f32.mxu0 0.0
        %6603 = vmatmul.mubr.f32.gmra.mxu0 %v6512
        %v6604 = vpop.f32.mrf.mxu0
        %v6605 = vadd.f32 0.0, %v6604
        %v6606 = vpop.f32.mrf.mxu0
        %6607 = vmatprep.mubr.f32.mxu0 0.0
        %6608 = vmatmul.mubr.f32.gmra.mxu0 %v6515
        %v6609 = vpop.f32.mrf.mxu0
        %v6610 = vadd.f32 0.0, %v6609
        %v6611 = vpop.f32.mrf.mxu0
        %6612 = vmatprep.mubr.f32.mxu0 0.0
        %6613 = vmatmul.mubr.f32.gmra.mxu0 %v6518
        %v6614 = vpop.f32.mrf.mxu0
        %v6615 = vadd.f32 0.0, %v6614
        %v6616 = vpop.f32.mrf.mxu0
        %6617 = vmatprep.mubr.f32.mxu0 0.0
        %6618 = vmatmul.mubr.f32.gmra.mxu0 %v6521
        %v6619 = vpop.f32.mrf.mxu0
        %v6620 = vadd.f32 0.0, %v6619
        %v6621 = vpop.f32.mrf.mxu0
        %6622 = vdwg.mxu0
        %v6623 = vadd.f32 %v6479, %v6590
        %v6624 = vadd.f32 %v6480, %v6595
        %v6625 = vadd.f32 %v6481, %v6600
        %v6626 = vadd.f32 %v6482, %v6605
        %v6627 = vadd.f32 %v6483, %v6610
        %v6628 = vadd.f32 %v6484, %v6615
        %v6629 = vadd.f32 %v6485, %v6620
        %v6630 = vld [vmem:[#allocation5 + $0xe] sm:$0xff]
        %v6631 = vld [vmem:[#allocation5 + $0x16] sm:$0xff]
        %v6632 = vld [vmem:[#allocation5 + $0x1e] sm:$0xff]
        %v6633 = vld [vmem:[#allocation5 + $0x26] sm:$0xff]
        %v6634 = vld [vmem:[#allocation5 + $0x2e] sm:$0xff]
        %v6635 = vld [vmem:[#allocation5 + $0x36] sm:$0xff]
        %v6636 = vld [vmem:[#allocation5 + $0x3e] sm:$0x1]
        %v6637 = vsel %vm5781, %v6630, 0.0
        %v6638 = vsel %vm5782, %v6631, 0.0
        %v6639 = vsel %vm5783, %v6632, 0.0
        %v6640 = vsel %vm5784, %v6633, 0.0
        %v6641 = vsel %vm5785, %v6634, 0.0
        %v6642 = vsel %vm5786, %v6635, 0.0
        %v6643 = vsel %vm5787, %v6636, 0.0
        %s6644 = scalar_lea.vmem %s5, 48
        %v6645 = vld [vmem:[%s6644] sm:$0xff]
        %v6647 = vsel %vm4969, %v6637, 0
        %v6650 = vsel %vm4969, %v6638, 0
        %v6653 = vsel %vm4969, %v6639, 0
        %v6656 = vsel %vm4969, %v6640, 0
        %v6659 = vsel %vm4969, %v6641, 0
        %v6662 = vsel %vm4969, %v6642, 0
        %v6665 = vsel %vm4969, %v6643, 0
        %6667 = vmatprep.subr.mxu0 0.0
        %6668 = vmatpush1.msra.mxu0 0.0
        %6669 = vmatprep.subr.mxu0 0.0
        %6670 = vmatpush1.msra.mxu0 0.0
        %6671 = vmatprep.subr.mxu0 0.0
        %6672 = vmatpush1.msra.mxu0 0.0
        %6673 = vmatprep.subr.mxu0 0.0
        %6674 = vmatpush1.msra.mxu0 0.0
        %6675 = vmatprep.subr.mxu0 0.0
        %6676 = vmatpush1.msra.mxu0 0.0
        %6677 = vmatprep.subr.mxu0 0.0
        %6678 = vmatpush1.msra.mxu0 0.0
        %6679 = vmatprep.subr.mxu0 0.0
        %6680 = vmatpush1.msra.mxu0 0.0
        %6681 = vmatprep.subr.mxu0 0.0
        %6682 = vmatpush1.msra.mxu0 0.0
        %6683 = vmatprep.subr.mxu0 0.0
        %6684 = vmatpush1.msra.mxu0 0.0
        %6685 = vmatprep.subr.mxu0 0.0
        %6686 = vmatpush1.msra.mxu0 0.0
        %6687 = vmatprep.subr.mxu0 0.0
        %6688 = vmatpush1.msra.mxu0 0.0
        %6689 = vmatprep.subr.mxu0 0.0
        %6690 = vmatpush1.msra.mxu0 0.0
        %6691 = vmatprep.subr.mxu0 0.0
        %6692 = vmatpush1.msra.mxu0 0.0
        %6693 = vmatprep.subr.mxu0 0.0
        %6694 = vmatpush1.msra.mxu0 0.0
        %6695 = vmatprep.subr.mxu0 0.0
        %6696 = vmatpush1.msra.mxu0 0.0
        %6697 = vmatprep.subr.mxu0 0.0
        %6698 = vmatpush1.msra.mxu0 %v6645
        %6699 = vmatprep.subr.mxu0 0.0
        %6700 = vmatpush2.msra.mxu0 0.0
        %6701 = vmatprep.subr.mxu0 0.0
        %6702 = vmatpush2.msra.mxu0 0.0
        %6703 = vmatprep.subr.mxu0 0.0
        %6704 = vmatpush2.msra.mxu0 0.0
        %6705 = vmatprep.subr.mxu0 0.0
        %6706 = vmatpush2.msra.mxu0 0.0
        %6707 = vmatprep.subr.mxu0 0.0
        %6708 = vmatpush2.msra.mxu0 0.0
        %6709 = vmatprep.subr.mxu0 0.0
        %6710 = vmatpush2.msra.mxu0 0.0
        %6711 = vmatprep.subr.mxu0 0.0
        %6712 = vmatpush2.msra.mxu0 0.0
        %6713 = vmatprep.subr.mxu0 0.0
        %6714 = vmatpush2.msra.mxu0 0.0
        %6715 = vmatprep.subr.mxu0 0.0
        %6716 = vmatpush2.msra.mxu0 0.0
        %6717 = vmatprep.subr.mxu0 0.0
        %6718 = vmatpush2.msra.mxu0 0.0
        %6719 = vmatprep.subr.mxu0 0.0
        %6720 = vmatpush2.msra.mxu0 0.0
        %6721 = vmatprep.subr.mxu0 0.0
        %6722 = vmatpush2.msra.mxu0 0.0
        %6723 = vmatprep.subr.mxu0 0.0
        %6724 = vmatpush2.msra.mxu0 0.0
        %6725 = vmatprep.subr.mxu0 0.0
        %6726 = vmatpush2.msra.mxu0 0.0
        %6727 = vmatprep.subr.mxu0 0.0
        %6728 = vmatpush2.msra.mxu0 0.0
        %6729 = vmatprep.subr.mxu0 0.0
        %6730 = vmatpush2.msra.mxu0 0.0
        %6731 = vmatprep.mubr.f32.mxu0 0.0
        %6732 = vmatmul.mubr.f32.gmra.mxu0 %v6647
        %v6733 = vpop.f32.mrf.mxu0
        %v6734 = vadd.f32 0.0, %v6733
        %v6735 = vpop.f32.mrf.mxu0
        %6736 = vmatprep.mubr.f32.mxu0 0.0
        %6737 = vmatmul.mubr.f32.gmra.mxu0 %v6650
        %v6738 = vpop.f32.mrf.mxu0
        %v6739 = vadd.f32 0.0, %v6738
        %v6740 = vpop.f32.mrf.mxu0
        %6741 = vmatprep.mubr.f32.mxu0 0.0
        %6742 = vmatmul.mubr.f32.gmra.mxu0 %v6653
        %v6743 = vpop.f32.mrf.mxu0
        %v6744 = vadd.f32 0.0, %v6743
        %v6745 = vpop.f32.mrf.mxu0
        %6746 = vmatprep.mubr.f32.mxu0 0.0
        %6747 = vmatmul.mubr.f32.gmra.mxu0 %v6656
        %v6748 = vpop.f32.mrf.mxu0
        %v6749 = vadd.f32 0.0, %v6748
        %v6750 = vpop.f32.mrf.mxu0
        %6751 = vmatprep.mubr.f32.mxu0 0.0
        %6752 = vmatmul.mubr.f32.gmra.mxu0 %v6659
        %v6753 = vpop.f32.mrf.mxu0
        %v6754 = vadd.f32 0.0, %v6753
        %v6755 = vpop.f32.mrf.mxu0
        %6756 = vmatprep.mubr.f32.mxu0 0.0
        %6757 = vmatmul.mubr.f32.gmra.mxu0 %v6662
        %v6758 = vpop.f32.mrf.mxu0
        %v6759 = vadd.f32 0.0, %v6758
        %v6760 = vpop.f32.mrf.mxu0
        %6761 = vmatprep.mubr.f32.mxu0 0.0
        %6762 = vmatmul.mubr.f32.gmra.mxu0 %v6665
        %v6763 = vpop.f32.mrf.mxu0
        %v6764 = vadd.f32 0.0, %v6763
        %v6765 = vpop.f32.mrf.mxu0
        %6766 = vdwg.mxu0
        %v6767 = vadd.f32 %v6623, %v6734
        %v6768 = vadd.f32 %v6624, %v6739
        %v6769 = vadd.f32 %v6625, %v6744
        %v6770 = vadd.f32 %v6626, %v6749
        %v6771 = vadd.f32 %v6627, %v6754
        %v6772 = vadd.f32 %v6628, %v6759
        %v6773 = vadd.f32 %v6629, %v6764
        %v6774 = vld [vmem:[#allocation5 + $0xf] sm:$0xff]
        %v6775 = vld [vmem:[#allocation5 + $0x17] sm:$0xff]
        %v6776 = vld [vmem:[#allocation5 + $0x1f] sm:$0xff]
        %v6777 = vld [vmem:[#allocation5 + $0x27] sm:$0xff]
        %v6778 = vld [vmem:[#allocation5 + $0x2f] sm:$0xff]
        %v6779 = vld [vmem:[#allocation5 + $0x37] sm:$0xff]
        %v6780 = vld [vmem:[#allocation5 + $0x3f] sm:$0x1]
        %s6781 = scalar_lea.vmem %s5, 56
        %v6782 = vld [vmem:[%s6781] sm:$0xff]
        %v6784 = vsel %vm4969, %v6774, 0
        %v6787 = vsel %vm4969, %v6775, 0
        %v6790 = vsel %vm4969, %v6776, 0
        %v6793 = vsel %vm4969, %v6777, 0
        %v6796 = vsel %vm4969, %v6778, 0
        %v6799 = vsel %vm4969, %v6779, 0
        %v6802 = vsel %vm4969, %v6780, 0
        %6804 = vmatprep.subr.mxu0 0.0
        %6805 = vmatpush1.msra.mxu0 0.0
        %6806 = vmatprep.subr.mxu0 0.0
        %6807 = vmatpush1.msra.mxu0 0.0
        %6808 = vmatprep.subr.mxu0 0.0
        %6809 = vmatpush1.msra.mxu0 0.0
        %6810 = vmatprep.subr.mxu0 0.0
        %6811 = vmatpush1.msra.mxu0 0.0
        %6812 = vmatprep.subr.mxu0 0.0
        %6813 = vmatpush1.msra.mxu0 0.0
        %6814 = vmatprep.subr.mxu0 0.0
        %6815 = vmatpush1.msra.mxu0 0.0
        %6816 = vmatprep.subr.mxu0 0.0
        %6817 = vmatpush1.msra.mxu0 0.0
        %6818 = vmatprep.subr.mxu0 0.0
        %6819 = vmatpush1.msra.mxu0 0.0
        %6820 = vmatprep.subr.mxu0 0.0
        %6821 = vmatpush1.msra.mxu0 0.0
        %6822 = vmatprep.subr.mxu0 0.0
        %6823 = vmatpush1.msra.mxu0 0.0
        %6824 = vmatprep.subr.mxu0 0.0
        %6825 = vmatpush1.msra.mxu0 0.0
        %6826 = vmatprep.subr.mxu0 0.0
        %6827 = vmatpush1.msra.mxu0 0.0
        %6828 = vmatprep.subr.mxu0 0.0
        %6829 = vmatpush1.msra.mxu0 0.0
        %6830 = vmatprep.subr.mxu0 0.0
        %6831 = vmatpush1.msra.mxu0 0.0
        %6832 = vmatprep.subr.mxu0 0.0
        %6833 = vmatpush1.msra.mxu0 0.0
        %6834 = vmatprep.subr.mxu0 0.0
        %6835 = vmatpush1.msra.mxu0 %v6782
        %6836 = vmatprep.subr.mxu0 0.0
        %6837 = vmatpush2.msra.mxu0 0.0
        %6838 = vmatprep.subr.mxu0 0.0
        %6839 = vmatpush2.msra.mxu0 0.0
        %6840 = vmatprep.subr.mxu0 0.0
        %6841 = vmatpush2.msra.mxu0 0.0
        %6842 = vmatprep.subr.mxu0 0.0
        %6843 = vmatpush2.msra.mxu0 0.0
        %6844 = vmatprep.subr.mxu0 0.0
        %6845 = vmatpush2.msra.mxu0 0.0
        %6846 = vmatprep.subr.mxu0 0.0
        %6847 = vmatpush2.msra.mxu0 0.0
        %6848 = vmatprep.subr.mxu0 0.0
        %6849 = vmatpush2.msra.mxu0 0.0
        %6850 = vmatprep.subr.mxu0 0.0
        %6851 = vmatpush2.msra.mxu0 0.0
        %6852 = vmatprep.subr.mxu0 0.0
        %6853 = vmatpush2.msra.mxu0 0.0
        %6854 = vmatprep.subr.mxu0 0.0
        %6855 = vmatpush2.msra.mxu0 0.0
        %6856 = vmatprep.subr.mxu0 0.0
        %6857 = vmatpush2.msra.mxu0 0.0
        %6858 = vmatprep.subr.mxu0 0.0
        %6859 = vmatpush2.msra.mxu0 0.0
        %6860 = vmatprep.subr.mxu0 0.0
        %6861 = vmatpush2.msra.mxu0 0.0
        %6862 = vmatprep.subr.mxu0 0.0
        %6863 = vmatpush2.msra.mxu0 0.0
        %6864 = vmatprep.subr.mxu0 0.0
        %6865 = vmatpush2.msra.mxu0 0.0
        %6866 = vmatprep.subr.mxu0 0.0
        %6867 = vmatpush2.msra.mxu0 0.0
        %6868 = vmatprep.mubr.f32.mxu0 0.0
        %6869 = vmatmul.mubr.f32.gmra.mxu0 %v6784
        %v6870 = vpop.f32.mrf.mxu0
        %v6871 = vadd.f32 0.0, %v6870
        %v6872 = vpop.f32.mrf.mxu0
        %6873 = vmatprep.mubr.f32.mxu0 0.0
        %6874 = vmatmul.mubr.f32.gmra.mxu0 %v6787
        %v6875 = vpop.f32.mrf.mxu0
        %v6876 = vadd.f32 0.0, %v6875
        %v6877 = vpop.f32.mrf.mxu0
        %6878 = vmatprep.mubr.f32.mxu0 0.0
        %6879 = vmatmul.mubr.f32.gmra.mxu0 %v6790
        %v6880 = vpop.f32.mrf.mxu0
        %v6881 = vadd.f32 0.0, %v6880
        %v6882 = vpop.f32.mrf.mxu0
        %6883 = vmatprep.mubr.f32.mxu0 0.0
        %6884 = vmatmul.mubr.f32.gmra.mxu0 %v6793
        %v6885 = vpop.f32.mrf.mxu0
        %v6886 = vadd.f32 0.0, %v6885
        %v6887 = vpop.f32.mrf.mxu0
        %6888 = vmatprep.mubr.f32.mxu0 0.0
        %6889 = vmatmul.mubr.f32.gmra.mxu0 %v6796
        %v6890 = vpop.f32.mrf.mxu0
        %v6891 = vadd.f32 0.0, %v6890
        %v6892 = vpop.f32.mrf.mxu0
        %6893 = vmatprep.mubr.f32.mxu0 0.0
        %6894 = vmatmul.mubr.f32.gmra.mxu0 %v6799
        %v6895 = vpop.f32.mrf.mxu0
        %v6896 = vadd.f32 0.0, %v6895
        %v6897 = vpop.f32.mrf.mxu0
        %6898 = vmatprep.mubr.f32.mxu0 0.0
        %6899 = vmatmul.mubr.f32.gmra.mxu0 %v6802
        %v6900 = vpop.f32.mrf.mxu0
        %v6901 = vadd.f32 0.0, %v6900
        %v6902 = vpop.f32.mrf.mxu0
        %6903 = vdwg.mxu0
        %v6904 = vadd.f32 %v6767, %v6871
        %v6905 = vadd.f32 %v6768, %v6876
        %v6906 = vadd.f32 %v6769, %v6881
        %v6907 = vadd.f32 %v6770, %v6886
        %v6908 = vadd.f32 %v6771, %v6891
        %v6909 = vadd.f32 %v6772, %v6896
        %v6910 = vadd.f32 %v6773, %v6901
        %v6911 = vld [vmem:[#allocation5 + $0x10] sm:$0xff]
        %v6912 = vld [vmem:[#allocation5 + $0x18] sm:$0xff]
        %v6913 = vld [vmem:[#allocation5 + $0x20] sm:$0xff]
        %v6914 = vld [vmem:[#allocation5 + $0x28] sm:$0xff]
        %v6915 = vld [vmem:[#allocation5 + $0x30] sm:$0xff]
        %v6916 = vld [vmem:[#allocation5 + $0x38] sm:$0xff]
        %v6917 = vld [vmem:[#allocation5 + $0x40] sm:$0x1]
        %v6918 = vsel %vm5788, %v6911, 0.0
        %v6919 = vsel %vm5789, %v6912, 0.0
        %v6920 = vsel %vm5790, %v6913, 0.0
        %v6921 = vsel %vm5791, %v6914, 0.0
        %v6922 = vsel %vm5792, %v6915, 0.0
        %v6923 = vsel %vm5793, %v6916, 0.0
        %v6924 = vsel %vm5794, %v6917, 0.0
        %s6925 = scalar_lea.vmem %s5, 64
        %v6926 = vld [vmem:[%s6925] sm:$0xff]
        %v6928 = vsel %vm4969, %v6918, 0
        %v6931 = vsel %vm4969, %v6919, 0
        %v6934 = vsel %vm4969, %v6920, 0
        %v6937 = vsel %vm4969, %v6921, 0
        %v6940 = vsel %vm4969, %v6922, 0
        %v6943 = vsel %vm4969, %v6923, 0
        %v6946 = vsel %vm4969, %v6924, 0
        %6948 = vmatprep.subr.mxu0 0.0
        %6949 = vmatpush1.msra.mxu0 0.0
        %6950 = vmatprep.subr.mxu0 0.0
        %6951 = vmatpush1.msra.mxu0 0.0
        %6952 = vmatprep.subr.mxu0 0.0
        %6953 = vmatpush1.msra.mxu0 0.0
        %6954 = vmatprep.subr.mxu0 0.0
        %6955 = vmatpush1.msra.mxu0 0.0
        %6956 = vmatprep.subr.mxu0 0.0
        %6957 = vmatpush1.msra.mxu0 0.0
        %6958 = vmatprep.subr.mxu0 0.0
        %6959 = vmatpush1.msra.mxu0 0.0
        %6960 = vmatprep.subr.mxu0 0.0
        %6961 = vmatpush1.msra.mxu0 0.0
        %6962 = vmatprep.subr.mxu0 0.0
        %6963 = vmatpush1.msra.mxu0 0.0
        %6964 = vmatprep.subr.mxu0 0.0
        %6965 = vmatpush1.msra.mxu0 0.0
        %6966 = vmatprep.subr.mxu0 0.0
        %6967 = vmatpush1.msra.mxu0 0.0
        %6968 = vmatprep.subr.mxu0 0.0
        %6969 = vmatpush1.msra.mxu0 0.0
        %6970 = vmatprep.subr.mxu0 0.0
        %6971 = vmatpush1.msra.mxu0 0.0
        %6972 = vmatprep.subr.mxu0 0.0
        %6973 = vmatpush1.msra.mxu0 0.0
        %6974 = vmatprep.subr.mxu0 0.0
        %6975 = vmatpush1.msra.mxu0 0.0
        %6976 = vmatprep.subr.mxu0 0.0
        %6977 = vmatpush1.msra.mxu0 0.0
        %6978 = vmatprep.subr.mxu0 0.0
        %6979 = vmatpush1.msra.mxu0 %v6926
        %6980 = vmatprep.subr.mxu0 0.0
        %6981 = vmatpush2.msra.mxu0 0.0
        %6982 = vmatprep.subr.mxu0 0.0
        %6983 = vmatpush2.msra.mxu0 0.0
        %6984 = vmatprep.subr.mxu0 0.0
        %6985 = vmatpush2.msra.mxu0 0.0
        %6986 = vmatprep.subr.mxu0 0.0
        %6987 = vmatpush2.msra.mxu0 0.0
        %6988 = vmatprep.subr.mxu0 0.0
        %6989 = vmatpush2.msra.mxu0 0.0
        %6990 = vmatprep.subr.mxu0 0.0
        %6991 = vmatpush2.msra.mxu0 0.0
        %6992 = vmatprep.subr.mxu0 0.0
        %6993 = vmatpush2.msra.mxu0 0.0
        %6994 = vmatprep.subr.mxu0 0.0
        %6995 = vmatpush2.msra.mxu0 0.0
        %6996 = vmatprep.subr.mxu0 0.0
        %6997 = vmatpush2.msra.mxu0 0.0
        %6998 = vmatprep.subr.mxu0 0.0
        %6999 = vmatpush2.msra.mxu0 0.0
        %7000 = vmatprep.subr.mxu0 0.0
        %7001 = vmatpush2.msra.mxu0 0.0
        %7002 = vmatprep.subr.mxu0 0.0
        %7003 = vmatpush2.msra.mxu0 0.0
        %7004 = vmatprep.subr.mxu0 0.0
        %7005 = vmatpush2.msra.mxu0 0.0
        %7006 = vmatprep.subr.mxu0 0.0
        %7007 = vmatpush2.msra.mxu0 0.0
        %7008 = vmatprep.subr.mxu0 0.0
        %7009 = vmatpush2.msra.mxu0 0.0
        %7010 = vmatprep.subr.mxu0 0.0
        %7011 = vmatpush2.msra.mxu0 0.0
        %7012 = vmatprep.mubr.f32.mxu0 0.0
        %7013 = vmatmul.mubr.f32.gmra.mxu0 %v6928
        %v7014 = vpop.f32.mrf.mxu0
        %v7015 = vadd.f32 0.0, %v7014
        %v7016 = vpop.f32.mrf.mxu0
        %7017 = vmatprep.mubr.f32.mxu0 0.0
        %7018 = vmatmul.mubr.f32.gmra.mxu0 %v6931
        %v7019 = vpop.f32.mrf.mxu0
        %v7020 = vadd.f32 0.0, %v7019
        %v7021 = vpop.f32.mrf.mxu0
        %7022 = vmatprep.mubr.f32.mxu0 0.0
        %7023 = vmatmul.mubr.f32.gmra.mxu0 %v6934
        %v7024 = vpop.f32.mrf.mxu0
        %v7025 = vadd.f32 0.0, %v7024
        %v7026 = vpop.f32.mrf.mxu0
        %7027 = vmatprep.mubr.f32.mxu0 0.0
        %7028 = vmatmul.mubr.f32.gmra.mxu0 %v6937
        %v7029 = vpop.f32.mrf.mxu0
        %v7030 = vadd.f32 0.0, %v7029
        %v7031 = vpop.f32.mrf.mxu0
        %7032 = vmatprep.mubr.f32.mxu0 0.0
        %7033 = vmatmul.mubr.f32.gmra.mxu0 %v6940
        %v7034 = vpop.f32.mrf.mxu0
        %v7035 = vadd.f32 0.0, %v7034
        %v7036 = vpop.f32.mrf.mxu0
        %7037 = vmatprep.mubr.f32.mxu0 0.0
        %7038 = vmatmul.mubr.f32.gmra.mxu0 %v6943
        %v7039 = vpop.f32.mrf.mxu0
        %v7040 = vadd.f32 0.0, %v7039
        %v7041 = vpop.f32.mrf.mxu0
        %7042 = vmatprep.mubr.f32.mxu0 0.0
        %7043 = vmatmul.mubr.f32.gmra.mxu0 %v6946
        %v7044 = vpop.f32.mrf.mxu0
        %v7045 = vadd.f32 0.0, %v7044
        %v7046 = vpop.f32.mrf.mxu0
        %7047 = vdwg.mxu0
        %v7048 = vadd.f32 %v6904, %v7015
        %v7049 = vadd.f32 %v6905, %v7020
        %v7050 = vadd.f32 %v6906, %v7025
        %v7051 = vadd.f32 %v6907, %v7030
        %v7052 = vadd.f32 %v6908, %v7035
        %v7053 = vadd.f32 %v6909, %v7040
        %v7054 = vadd.f32 %v6910, %v7045
        %v7055 = vld [vmem:[%s6] sm:$0x1]
        %v7057 = vlaneseq
        %v7058 = vshrl.u32 %v7057, 7
        %v7059 = vsub.s32 0, %v7058
        %v7060 = vrot.slane %v7055, %v7059
        %v7062 = vadd.f32 %v7048, %v7060
        %v7063 = vadd.f32 %v7049, %v7060
        %v7064 = vadd.f32 %v7050, %v7060
        %v7065 = vadd.f32 %v7051, %v7060
        %v7066 = vadd.f32 %v7052, %v7060
        %v7067 = vadd.f32 %v7053, %v7060
        %v7068 = vadd.f32 %v7054, %v7060
        %vm7069 = vcmp.gt.f32.partialorder %v7062, 0.0
        %vm7070 = vcmp.gt.f32.partialorder %v7063, 0.0
        %vm7071 = vcmp.gt.f32.partialorder %v7064, 0.0
        %vm7072 = vcmp.gt.f32.partialorder %v7065, 0.0
        %vm7073 = vcmp.gt.f32.partialorder %v7066, 0.0
        %vm7074 = vcmp.gt.f32.partialorder %v7067, 0.0
        %vm7075 = vcmp.gt.f32.partialorder %v7068, 0.0
        %v7076 = vmul.f32 %v7062, 0.01
        %v7077 = vmul.f32 %v7063, 0.01
        %v7078 = vmul.f32 %v7064, 0.01
        %v7079 = vmul.f32 %v7065, 0.01
        %v7080 = vmul.f32 %v7066, 0.01
        %v7081 = vmul.f32 %v7067, 0.01
        %v7082 = vmul.f32 %v7068, 0.01
        %v7083 = vsel %vm7069, %v7062, %v7076
        %v7084 = vsel %vm7070, %v7063, %v7077
        %v7085 = vsel %vm7071, %v7064, %v7078
        %v7086 = vsel %vm7072, %v7065, %v7079
        %v7087 = vsel %vm7073, %v7066, %v7080
        %v7088 = vsel %vm7074, %v7067, %v7081
        %v7089 = vsel %vm7075, %v7068, %v7082
        %vm7090 = vcmask 130048
        %v7091 = vsel %vm7090, %v7083, 0.0
        %v7092 = vsel %vm7090, %v7084, 0.0
        %v7093 = vadd.f32 %v7091, %v7092
        %v7094 = vsel %vm7090, %v7085, 0.0
        %v7095 = vadd.f32 %v7093, %v7094
        %v7096 = vsel %vm7090, %v7086, 0.0
        %v7097 = vadd.f32 %v7095, %v7096
        %v7098 = vsel %vm7090, %v7087, 0.0
        %v7099 = vadd.f32 %v7097, %v7098
        %v7100 = vsel %vm7090, %v7088, 0.0
        %v7101 = vadd.f32 %v7099, %v7100
        %vm7102 = vcmask 122880
        %v7103 = vsel %vm7102, %v7089, 0.0
        %v7104 = vadd.f32 %v7101, %v7103
        %v7105 = vrot.slane %v7104, 4
        %v7106 = vadd.f32 %v7104, %v7105
        %v7107 = vrot.slane %v7106, 2
        %v7108 = vadd.f32 %v7106, %v7107
        %v7109 = vrot.slane %v7108, 1
        %v7110 = vadd.f32 %v7108, %v7109
        %v7111 = vmul.f32 %v7083, %v7083
        %v7112 = vmul.f32 %v7084, %v7084
        %v7113 = vmul.f32 %v7085, %v7085
        %v7114 = vmul.f32 %v7086, %v7086
        %v7115 = vmul.f32 %v7087, %v7087
        %v7116 = vmul.f32 %v7088, %v7088
        %v7117 = vmul.f32 %v7089, %v7089
        %v7118 = vsel %vm7090, %v7111, 0.0
        %v7119 = vsel %vm7090, %v7112, 0.0
        %v7120 = vadd.f32 %v7118, %v7119
        %v7121 = vsel %vm7090, %v7113, 0.0
        %v7122 = vadd.f32 %v7120, %v7121
        %v7123 = vsel %vm7090, %v7114, 0.0
        %v7124 = vadd.f32 %v7122, %v7123
        %v7125 = vsel %vm7090, %v7115, 0.0
        %v7126 = vadd.f32 %v7124, %v7125
        %v7127 = vsel %vm7090, %v7116, 0.0
        %v7128 = vadd.f32 %v7126, %v7127
        %v7129 = vsel %vm7102, %v7117, 0.0
        %v7130 = vadd.f32 %v7128, %v7129
        %v7131 = vrot.slane %v7130, 4
        %v7132 = vadd.f32 %v7130, %v7131
        %v7133 = vrot.slane %v7132, 2
        %v7134 = vadd.f32 %v7132, %v7133
        %v7135 = vrot.slane %v7134, 1
        %v7136 = vadd.f32 %v7134, %v7135
        %v7137 = vmul.f32 %v7110, 0.020408163
        %v7138 = vmul.f32 %v7136, 0.020408163
        %v7139 = vmul.f32 %v7137, %v7137
        %v7140 = vsub.f32 %v7138, %v7139
        %v7141 = vsub.f32 %v7083, %v7137
        %v7142 = vsub.f32 %v7084, %v7137
        %v7143 = vsub.f32 %v7085, %v7137
        %v7144 = vsub.f32 %v7086, %v7137
        %v7145 = vsub.f32 %v7087, %v7137
        %v7146 = vsub.f32 %v7088, %v7137
        %v7147 = vsub.f32 %v7089, %v7137
        %v7148 = vadd.f32 %v7140, 1e-05
        %v7149 = vrsqrt.pop %v7148
        %v7150 = vmul.f32 %v7141, %v7149
        %v7151 = vmul.f32 %v7142, %v7149
        %v7152 = vmul.f32 %v7143, %v7149
        %v7153 = vmul.f32 %v7144, %v7149
        %v7154 = vmul.f32 %v7145, %v7149
        %v7155 = vmul.f32 %v7146, %v7149
        %v7156 = vmul.f32 %v7147, %v7149
        %7157 = vst.msk [vmem:[#allocation6] sm:$0xff] %vm7090, %v7150
        %7158 = vst.msk [vmem:[#allocation6 + $0x8] sm:$0xff] %vm7090, %v7151
        %7159 = vst.msk [vmem:[#allocation6 + $0x10] sm:$0xff] %vm7090, %v7152
        %7160 = vst.msk [vmem:[#allocation6 + $0x18] sm:$0xff] %vm7090, %v7153
        %7161 = vst.msk [vmem:[#allocation6 + $0x20] sm:$0xff] %vm7090, %v7154
        %7162 = vst.msk [vmem:[#allocation6 + $0x28] sm:$0xff] %vm7090, %v7155
        %7163 = vst.msk [vmem:[#allocation6 + $0x30] sm:$0x1] %vm7102, %v7156
        %v7164 = vld [vmem:[#allocation6] sm:$0xff]
        %v7165 = vld [vmem:[#allocation6 + $0x8] sm:$0xff]
        %v7166 = vld [vmem:[#allocation6 + $0x10] sm:$0xff]
        %v7167 = vld [vmem:[#allocation6 + $0x18] sm:$0xff]
        %v7168 = vld [vmem:[#allocation6 + $0x20] sm:$0x7]
        %v7169 = vld [vmem:[#allocation6 + $0x7] sm:$0xff]
        %v7170 = vld [vmem:[#allocation6 + $0xf] sm:$0xff]
        %v7171 = vld [vmem:[#allocation6 + $0x17] sm:$0xff]
        %v7172 = vld [vmem:[#allocation6 + $0x1f] sm:$0xff]
        %v7173 = vld [vmem:[#allocation6 + $0x27] sm:$0x7]
        %v7174 = vmax.f32 %v7164, %v7169
        %v7175 = vmax.f32 %v7165, %v7170
        %v7176 = vmax.f32 %v7166, %v7171
        %v7177 = vmax.f32 %v7167, %v7172
        %v7178 = vmax.f32 %v7168, %v7173
        %v7179 = vld [vmem:[#allocation6 + $0xe] sm:$0xff]
        %v7180 = vld [vmem:[#allocation6 + $0x16] sm:$0xff]
        %v7181 = vld [vmem:[#allocation6 + $0x1e] sm:$0xff]
        %v7182 = vld [vmem:[#allocation6 + $0x26] sm:$0xff]
        %v7183 = vld [vmem:[#allocation6 + $0x2e] sm:$0x7]
        %v7184 = vmax.f32 %v7174, %v7179
        %v7185 = vmax.f32 %v7175, %v7180
        %v7186 = vmax.f32 %v7176, %v7181
        %v7187 = vmax.f32 %v7177, %v7182
        %v7188 = vmax.f32 %v7178, %v7183
        %7189 = vst.msk [vmem:[#allocation7] sm:$0xff] %vm7090, %v7184
        %7190 = vst.msk [vmem:[#allocation7 + $0x8] sm:$0xff] %vm7090, %v7185
        %7191 = vst.msk [vmem:[#allocation7 + $0x10] sm:$0xff] %vm7090, %v7186
        %7192 = vst.msk [vmem:[#allocation7 + $0x18] sm:$0xff] %vm7090, %v7187
        %vm7193 = vcmask 124928
        %7194 = vst.msk [vmem:[#allocation7 + $0x20] sm:$0x7] %vm7193, %v7188
        %v7195 = vld [vmem:[#allocation7] sm:$0xff]
        %v7196 = vld [vmem:[#allocation7 + $0x8] sm:$0xff]
        %v7197 = vld [vmem:[#allocation7 + $0x10] sm:$0xff]
        %v7198 = vld [vmem:[#allocation7 + $0x18] sm:$0xff]
        %v7199 = vld [vmem:[#allocation7 + $0x20] sm:$0x1]
        %v7200 = vld [vmem:[#allocation7 + $0x1] sm:$0xff]
        %v7201 = vld [vmem:[#allocation7 + $0x9] sm:$0xff]
        %v7202 = vld [vmem:[#allocation7 + $0x11] sm:$0xff]
        %v7203 = vld [vmem:[#allocation7 + $0x19] sm:$0xff]
        %v7204 = vld [vmem:[#allocation7 + $0x21] sm:$0x1]
        %v7205 = vmax.f32 %v7195, %v7200
        %v7206 = vmax.f32 %v7196, %v7201
        %v7207 = vmax.f32 %v7197, %v7202
        %v7208 = vmax.f32 %v7198, %v7203
        %v7209 = vmax.f32 %v7199, %v7204
        %v7210 = vld [vmem:[#allocation7 + $0x2] sm:$0xff]
        %v7211 = vld [vmem:[#allocation7 + $0xa] sm:$0xff]
        %v7212 = vld [vmem:[#allocation7 + $0x12] sm:$0xff]
        %v7213 = vld [vmem:[#allocation7 + $0x1a] sm:$0xff]
        %v7214 = vld [vmem:[#allocation7 + $0x22] sm:$0x1]
        %v7215 = vmax.f32 %v7205, %v7210
        %v7216 = vmax.f32 %v7206, %v7211
        %v7217 = vmax.f32 %v7207, %v7212
        %v7218 = vmax.f32 %v7208, %v7213
        %v7219 = vmax.f32 %v7209, %v7214
        %v7220 = vld [vmem:[%s7] sm:$0xff]
        %v7221 = vld [vmem:[%s7 + $0x8] sm:$0x1]
        %vm7222 = vcmask 269312
        %v7224 = vsel %vm7222, %v7220, 0
        %v7227 = vsel %vm7222, %v7221, 0
        %vm7229 = vcmask 1040384
        %v7231 = vsel %vm7229, %v7219, 0
        %7233 = vmatprep.subr.mxu0 0.0
        %7234 = vmatpush1.msra.mxu0 0.0
        %7235 = vmatprep.subr.mxu0 0.0
        %7236 = vmatpush1.msra.mxu0 0.0
        %7237 = vmatprep.subr.mxu0 0.0
        %7238 = vmatpush1.msra.mxu0 0.0
        %7239 = vmatprep.subr.mxu0 0.0
        %7240 = vmatpush1.msra.mxu0 0.0
        %7241 = vmatprep.subr.mxu0 0.0
        %7242 = vmatpush1.msra.mxu0 0.0
        %7243 = vmatprep.subr.mxu0 0.0
        %7244 = vmatpush1.msra.mxu0 0.0
        %7245 = vmatprep.subr.mxu0 0.0
        %7246 = vmatpush1.msra.mxu0 0.0
        %7247 = vmatprep.subr.mxu0 0.0
        %7248 = vmatpush1.msra.mxu0 0.0
        %7249 = vmatprep.subr.mxu0 0.0
        %7250 = vmatpush1.msra.mxu0 0.0
        %7251 = vmatprep.subr.mxu0 0.0
        %7252 = vmatpush1.msra.mxu0 0.0
        %7253 = vmatprep.subr.mxu0 0.0
        %7254 = vmatpush1.msra.mxu0 0.0
        %7255 = vmatprep.subr.mxu0 0.0
        %7256 = vmatpush1.msra.mxu0 %v7231
        %7257 = vmatprep.subr.mxu0 0.0
        %7258 = vmatpush1.msra.mxu0 %v7218
        %7259 = vmatprep.subr.mxu0 0.0
        %7260 = vmatpush1.msra.mxu0 %v7217
        %7261 = vmatprep.subr.mxu0 0.0
        %7262 = vmatpush1.msra.mxu0 %v7216
        %7263 = vmatprep.subr.mxu0 0.0
        %7264 = vmatpush1.msra.mxu0 %v7215
        %7265 = vmatprep.subr.mxu0 0.0
        %7266 = vmatpush2.msra.mxu0 0.0
        %7267 = vmatprep.subr.mxu0 0.0
        %7268 = vmatpush2.msra.mxu0 0.0
        %7269 = vmatprep.subr.mxu0 0.0
        %7270 = vmatpush2.msra.mxu0 0.0
        %7271 = vmatprep.subr.mxu0 0.0
        %7272 = vmatpush2.msra.mxu0 0.0
        %7273 = vmatprep.subr.mxu0 0.0
        %7274 = vmatpush2.msra.mxu0 0.0
        %7275 = vmatprep.subr.mxu0 0.0
        %7276 = vmatpush2.msra.mxu0 0.0
        %7277 = vmatprep.subr.mxu0 0.0
        %7278 = vmatpush2.msra.mxu0 0.0
        %7279 = vmatprep.subr.mxu0 0.0
        %7280 = vmatpush2.msra.mxu0 0.0
        %7281 = vmatprep.subr.mxu0 0.0
        %7282 = vmatpush2.msra.mxu0 0.0
        %7283 = vmatprep.subr.mxu0 0.0
        %7284 = vmatpush2.msra.mxu0 0.0
        %7285 = vmatprep.subr.mxu0 0.0
        %7286 = vmatpush2.msra.mxu0 0.0
        %7287 = vmatprep.subr.mxu0 0.0
        %7288 = vmatpush2.msra.mxu0 0.0
        %7289 = vmatprep.subr.mxu0 0.0
        %7290 = vmatpush2.msra.mxu0 0.0
        %7291 = vmatprep.subr.mxu0 0.0
        %7292 = vmatpush2.msra.mxu0 0.0
        %7293 = vmatprep.subr.mxu0 0.0
        %7294 = vmatpush2.msra.mxu0 0.0
        %7295 = vmatprep.subr.mxu0 0.0
        %7296 = vmatpush2.msra.mxu0 0.0
        %7297 = vmatprep.mubr.f32.mxu0 0.0
        %7298 = vmatmul.mubr.f32.gmra.mxu0 %v7224
        %v7299 = vpop.f32.mrf.mxu0
        %v7300 = vadd.f32 0.0, %v7299
        %v7301 = vpop.f32.mrf.mxu0
        %7302 = vmatprep.mubr.f32.mxu0 0.0
        %7303 = vmatmul.mubr.f32.gmra.mxu0 %v7227
        %v7304 = vpop.f32.mrf.mxu0
        %v7305 = vadd.f32 0.0, %v7304
        %v7306 = vpop.f32.mrf.mxu0
        %7307 = vdwg.mxu0
        %vm7308 = vcmask 125952
        %7309 = vst.msk [vmem:[#allocation8] sm:$0xf] %vm7308, 0.0
        %7310 = vst.msk [vmem:[#allocation8 + $0xd] sm:$0xf] %vm7308, 0.0
        %7311 = vst.msk [vmem:[#allocation8 + $0x4] sm:$0xff] %vm7090, %v7300
        %7312 = vst.msk [vmem:[#allocation8 + $0xc] sm:$0x1] %vm7102, %v7305
        %vm7313 = vcmp.lt.s32.totalorder %v716, 0
        %v7314 = vsub.s32 0, %v716
        %v7315 = vsel %vm7313, %v7314, %v716
        %v7316 = vmul.u32.u64.compose %v7315, 2863311531
        %v7317 = vextract.low.u32 %v7316
        %v7318 = vextract.high.u32 %v7316
        %v7319 = vshrl.u32 %v7318, 1
        %v7320 = vmul.u32 %v7319, 3
        %v7321 = vsub.s32 %v7315, %v7320
        %v7322 = vsub.s32 0, %v7321
        %v7323 = vsel %vm7313, %v7322, %v7321
        %vm7324 = vcmp.lt.s32.totalorder %v717, 0
        %v7325 = vsub.s32 0, %v717
        %v7326 = vsel %vm7324, %v7325, %v717
        %v7327 = vmul.u32.u64.compose %v7326, 2863311531
        %v7328 = vextract.low.u32 %v7327
        %v7329 = vextract.high.u32 %v7327
        %v7330 = vshrl.u32 %v7329, 1
        %v7331 = vmul.u32 %v7330, 3
        %v7332 = vsub.s32 %v7326, %v7331
        %v7333 = vsub.s32 0, %v7332
        %v7334 = vsel %vm7324, %v7333, %v7332
        %vm7335 = vcmp.ne.s32.totalorder %v7323, 0
        %vm7336 = vcmp.ne.s32.totalorder %v7334, 0
        %vm7337 = vcmp.lt.s32.totalorder %v7323, 0
        %vm7338 = vcmp.lt.s32.totalorder %v7334, 0
        %vm7339 = vmand %vm7337, %vm7335
        %vm7340 = vmand %vm7338, %vm7336
        %v7341 = vadd.s32 %v7323, 3
        %v7342 = vadd.s32 %v7334, 3
        %v7343 = vsel %vm7339, %v7341, %v7323
        %v7344 = vsel %vm7340, %v7342, %v7334
        %vm7345 = vcmp.ge.s32.totalorder %v7343, 1
        %vm7346 = vcmp.ge.s32.totalorder %v7344, 1
        %vm7347 = vcmp.le.s32.totalorder %v7343, 1
        %vm7348 = vcmp.le.s32.totalorder %v7344, 1
        %v7349 = vld [vmem:[#allocation8] sm:$0xff]
        %v7350 = vld [vmem:[#allocation8 + $0x8] sm:$0x1]
        %v7351 = vsel %vm7345, %v7349, 0.0
        %v7352 = vsel %vm7346, %v7350, 0.0
        %v7353 = vld [vmem:[%s8] sm:$0xff]
        %v7354 = vld [vmem:[%s8 + $0x8] sm:$0xff]
        %v7355 = vld [vmem:[#allocation8 + $0x1] sm:$0xff]
        %v7356 = vld [vmem:[#allocation8 + $0x9] sm:$0x1]
        %s7357 = scalar_lea.vmem %s8, 16
        %v7358 = vld [vmem:[%s7357] sm:$0xff]
        %v7359 = vld [vmem:[%s7357 + $0x8] sm:$0xff]
        %v7361 = vsel %vm7090, %v7355, 0
        %v7364 = vsel %vm7090, %v7356, 0
        %7366 = vmatprep.subr.mxu0 0.0
        %7367 = vmatpush1.msra.mxu0 0.0
        %7368 = vmatprep.subr.mxu0 0.0
        %7369 = vmatpush1.msra.mxu0 0.0
        %7370 = vmatprep.subr.mxu0 0.0
        %7371 = vmatpush1.msra.mxu0 0.0
        %7372 = vmatprep.subr.mxu0 0.0
        %7373 = vmatpush1.msra.mxu0 0.0
        %7374 = vmatprep.subr.mxu0 0.0
        %7375 = vmatpush1.msra.mxu0 0.0
        %7376 = vmatprep.subr.mxu0 0.0
        %7377 = vmatpush1.msra.mxu0 0.0
        %7378 = vmatprep.subr.mxu0 0.0
        %7379 = vmatpush1.msra.mxu0 0.0
        %7380 = vmatprep.subr.mxu0 0.0
        %7381 = vmatpush1.msra.mxu0 0.0
        %7382 = vmatprep.subr.mxu0 0.0
        %7383 = vmatpush1.msra.mxu0 0.0
        %7384 = vmatprep.subr.mxu0 0.0
        %7385 = vmatpush1.msra.mxu0 0.0
        %7386 = vmatprep.subr.mxu0 0.0
        %7387 = vmatpush1.msra.mxu0 0.0
        %7388 = vmatprep.subr.mxu0 0.0
        %7389 = vmatpush1.msra.mxu0 0.0
        %7390 = vmatprep.subr.mxu0 0.0
        %7391 = vmatpush1.msra.mxu0 0.0
        %7392 = vmatprep.subr.mxu0 0.0
        %7393 = vmatpush1.msra.mxu0 0.0
        %7394 = vmatprep.subr.mxu0 0.0
        %7395 = vmatpush1.msra.mxu0 %v7359
        %7396 = vmatprep.subr.mxu0 0.0
        %7397 = vmatpush1.msra.mxu0 %v7358
        %7398 = vmatprep.subr.mxu0 0.0
        %7399 = vmatpush2.msra.mxu0 0.0
        %7400 = vmatprep.subr.mxu0 0.0
        %7401 = vmatpush2.msra.mxu0 0.0
        %7402 = vmatprep.subr.mxu0 0.0
        %7403 = vmatpush2.msra.mxu0 0.0
        %7404 = vmatprep.subr.mxu0 0.0
        %7405 = vmatpush2.msra.mxu0 0.0
        %7406 = vmatprep.subr.mxu0 0.0
        %7407 = vmatpush2.msra.mxu0 0.0
        %7408 = vmatprep.subr.mxu0 0.0
        %7409 = vmatpush2.msra.mxu0 0.0
        %7410 = vmatprep.subr.mxu0 0.0
        %7411 = vmatpush2.msra.mxu0 0.0
        %7412 = vmatprep.subr.mxu0 0.0
        %7413 = vmatpush2.msra.mxu0 0.0
        %7414 = vmatprep.subr.mxu0 0.0
        %7415 = vmatpush2.msra.mxu0 0.0
        %7416 = vmatprep.subr.mxu0 0.0
        %7417 = vmatpush2.msra.mxu0 0.0
        %7418 = vmatprep.subr.mxu0 0.0
        %7419 = vmatpush2.msra.mxu0 0.0
        %7420 = vmatprep.subr.mxu0 0.0
        %7421 = vmatpush2.msra.mxu0 0.0
        %7422 = vmatprep.subr.mxu0 0.0
        %7423 = vmatpush2.msra.mxu0 0.0
        %7424 = vmatprep.subr.mxu0 0.0
        %7425 = vmatpush2.msra.mxu0 0.0
        %7426 = vmatprep.subr.mxu0 0.0
        %7427 = vmatpush2.msra.mxu0 0.0
        %7428 = vmatprep.subr.mxu0 0.0
        %7429 = vmatpush2.msra.mxu0 0.0
        %7430 = vmatprep.mubr.f32.mxu0 0.0
        %7431 = vmatmul.mubr.f32.gmra.mxu0 %v7361
        %v7432 = vpop.f32.mrf.mxu0
        %v7433 = vadd.f32 0.0, %v7432
        %v7434 = vpop.f32.mrf.mxu0
        %7435 = vmatprep.mubr.f32.mxu0 0.0
        %7436 = vmatmul.mubr.f32.gmra.mxu0 %v7364
        %v7437 = vpop.f32.mrf.mxu0
        %v7438 = vadd.f32 0.0, %v7437
        %v7439 = vpop.f32.mrf.mxu0
        %7440 = vdwg.mxu0
        %v7442 = vsel %vm7090, %v7351, 0
        %v7445 = vsel %vm7090, %v7352, 0
        %7447 = vmatprep.subr.mxu0 0.0
        %7448 = vmatpush1.msra.mxu0 0.0
        %7449 = vmatprep.subr.mxu0 0.0
        %7450 = vmatpush1.msra.mxu0 0.0
        %7451 = vmatprep.subr.mxu0 0.0
        %7452 = vmatpush1.msra.mxu0 0.0
        %7453 = vmatprep.subr.mxu0 0.0
        %7454 = vmatpush1.msra.mxu0 0.0
        %7455 = vmatprep.subr.mxu0 0.0
        %7456 = vmatpush1.msra.mxu0 0.0
        %7457 = vmatprep.subr.mxu0 0.0
        %7458 = vmatpush1.msra.mxu0 0.0
        %7459 = vmatprep.subr.mxu0 0.0
        %7460 = vmatpush1.msra.mxu0 0.0
        %7461 = vmatprep.subr.mxu0 0.0
        %7462 = vmatpush1.msra.mxu0 0.0
        %7463 = vmatprep.subr.mxu0 0.0
        %7464 = vmatpush1.msra.mxu0 0.0
        %7465 = vmatprep.subr.mxu0 0.0
        %7466 = vmatpush1.msra.mxu0 0.0
        %7467 = vmatprep.subr.mxu0 0.0
        %7468 = vmatpush1.msra.mxu0 0.0
        %7469 = vmatprep.subr.mxu0 0.0
        %7470 = vmatpush1.msra.mxu0 0.0
        %7471 = vmatprep.subr.mxu0 0.0
        %7472 = vmatpush1.msra.mxu0 0.0
        %7473 = vmatprep.subr.mxu0 0.0
        %7474 = vmatpush1.msra.mxu0 0.0
        %7475 = vmatprep.subr.mxu0 0.0
        %7476 = vmatpush1.msra.mxu0 %v7354
        %7477 = vmatprep.subr.mxu0 0.0
        %7478 = vmatpush1.msra.mxu0 %v7353
        %7479 = vmatprep.subr.mxu0 0.0
        %7480 = vmatpush2.msra.mxu0 0.0
        %7481 = vmatprep.subr.mxu0 0.0
        %7482 = vmatpush2.msra.mxu0 0.0
        %7483 = vmatprep.subr.mxu0 0.0
        %7484 = vmatpush2.msra.mxu0 0.0
        %7485 = vmatprep.subr.mxu0 0.0
        %7486 = vmatpush2.msra.mxu0 0.0
        %7487 = vmatprep.subr.mxu0 0.0
        %7488 = vmatpush2.msra.mxu0 0.0
        %7489 = vmatprep.subr.mxu0 0.0
        %7490 = vmatpush2.msra.mxu0 0.0
        %7491 = vmatprep.subr.mxu0 0.0
        %7492 = vmatpush2.msra.mxu0 0.0
        %7493 = vmatprep.subr.mxu0 0.0
        %7494 = vmatpush2.msra.mxu0 0.0
        %7495 = vmatprep.subr.mxu0 0.0
        %7496 = vmatpush2.msra.mxu0 0.0
        %7497 = vmatprep.subr.mxu0 0.0
        %7498 = vmatpush2.msra.mxu0 0.0
        %7499 = vmatprep.subr.mxu0 0.0
        %7500 = vmatpush2.msra.mxu0 0.0
        %7501 = vmatprep.subr.mxu0 0.0
        %7502 = vmatpush2.msra.mxu0 0.0
        %7503 = vmatprep.subr.mxu0 0.0
        %7504 = vmatpush2.msra.mxu0 0.0
        %7505 = vmatprep.subr.mxu0 0.0
        %7506 = vmatpush2.msra.mxu0 0.0
        %7507 = vmatprep.subr.mxu0 0.0
        %7508 = vmatpush2.msra.mxu0 0.0
        %7509 = vmatprep.subr.mxu0 0.0
        %7510 = vmatpush2.msra.mxu0 0.0
        %7511 = vmatprep.mubr.f32.mxu0 0.0
        %7512 = vmatmul.mubr.f32.gmra.mxu0 %v7442
        %v7513 = vpop.f32.mrf.mxu0
        %v7514 = vadd.f32 %v7433, %v7513
        %v7515 = vpop.f32.mrf.mxu0
        %7516 = vmatprep.mubr.f32.mxu0 0.0
        %7517 = vmatmul.mubr.f32.gmra.mxu0 %v7445
        %v7518 = vpop.f32.mrf.mxu0
        %v7519 = vadd.f32 %v7438, %v7518
        %v7520 = vpop.f32.mrf.mxu0
        %7521 = vdwg.mxu0
        %v7522 = vld [vmem:[#allocation8 + $0x2] sm:$0xff]
        %v7523 = vld [vmem:[#allocation8 + $0xa] sm:$0x1]
        %v7524 = vsel %vm7347, %v7522, 0.0
        %v7525 = vsel %vm7348, %v7523, 0.0
        %s7526 = scalar_lea.vmem %s8, 32
        %v7527 = vld [vmem:[%s7526] sm:$0xff]
        %v7528 = vld [vmem:[%s7526 + $0x8] sm:$0xff]
        %v7530 = vsel %vm7090, %v7524, 0
        %v7533 = vsel %vm7090, %v7525, 0
        %7535 = vmatprep.subr.mxu0 0.0
        %7536 = vmatpush1.msra.mxu0 0.0
        %7537 = vmatprep.subr.mxu0 0.0
        %7538 = vmatpush1.msra.mxu0 0.0
        %7539 = vmatprep.subr.mxu0 0.0
        %7540 = vmatpush1.msra.mxu0 0.0
        %7541 = vmatprep.subr.mxu0 0.0
        %7542 = vmatpush1.msra.mxu0 0.0
        %7543 = vmatprep.subr.mxu0 0.0
        %7544 = vmatpush1.msra.mxu0 0.0
        %7545 = vmatprep.subr.mxu0 0.0
        %7546 = vmatpush1.msra.mxu0 0.0
        %7547 = vmatprep.subr.mxu0 0.0
        %7548 = vmatpush1.msra.mxu0 0.0
        %7549 = vmatprep.subr.mxu0 0.0
        %7550 = vmatpush1.msra.mxu0 0.0
        %7551 = vmatprep.subr.mxu0 0.0
        %7552 = vmatpush1.msra.mxu0 0.0
        %7553 = vmatprep.subr.mxu0 0.0
        %7554 = vmatpush1.msra.mxu0 0.0
        %7555 = vmatprep.subr.mxu0 0.0
        %7556 = vmatpush1.msra.mxu0 0.0
        %7557 = vmatprep.subr.mxu0 0.0
        %7558 = vmatpush1.msra.mxu0 0.0
        %7559 = vmatprep.subr.mxu0 0.0
        %7560 = vmatpush1.msra.mxu0 0.0
        %7561 = vmatprep.subr.mxu0 0.0
        %7562 = vmatpush1.msra.mxu0 0.0
        %7563 = vmatprep.subr.mxu0 0.0
        %7564 = vmatpush1.msra.mxu0 %v7528
        %7565 = vmatprep.subr.mxu0 0.0
        %7566 = vmatpush1.msra.mxu0 %v7527
        %7567 = vmatprep.subr.mxu0 0.0
        %7568 = vmatpush2.msra.mxu0 0.0
        %7569 = vmatprep.subr.mxu0 0.0
        %7570 = vmatpush2.msra.mxu0 0.0
        %7571 = vmatprep.subr.mxu0 0.0
        %7572 = vmatpush2.msra.mxu0 0.0
        %7573 = vmatprep.subr.mxu0 0.0
        %7574 = vmatpush2.msra.mxu0 0.0
        %7575 = vmatprep.subr.mxu0 0.0
        %7576 = vmatpush2.msra.mxu0 0.0
        %7577 = vmatprep.subr.mxu0 0.0
        %7578 = vmatpush2.msra.mxu0 0.0
        %7579 = vmatprep.subr.mxu0 0.0
        %7580 = vmatpush2.msra.mxu0 0.0
        %7581 = vmatprep.subr.mxu0 0.0
        %7582 = vmatpush2.msra.mxu0 0.0
        %7583 = vmatprep.subr.mxu0 0.0
        %7584 = vmatpush2.msra.mxu0 0.0
        %7585 = vmatprep.subr.mxu0 0.0
        %7586 = vmatpush2.msra.mxu0 0.0
        %7587 = vmatprep.subr.mxu0 0.0
        %7588 = vmatpush2.msra.mxu0 0.0
        %7589 = vmatprep.subr.mxu0 0.0
        %7590 = vmatpush2.msra.mxu0 0.0
        %7591 = vmatprep.subr.mxu0 0.0
        %7592 = vmatpush2.msra.mxu0 0.0
        %7593 = vmatprep.subr.mxu0 0.0
        %7594 = vmatpush2.msra.mxu0 0.0
        %7595 = vmatprep.subr.mxu0 0.0
        %7596 = vmatpush2.msra.mxu0 0.0
        %7597 = vmatprep.subr.mxu0 0.0
        %7598 = vmatpush2.msra.mxu0 0.0
        %7599 = vmatprep.mubr.f32.mxu0 0.0
        %7600 = vmatmul.mubr.f32.gmra.mxu0 %v7530
        %v7601 = vpop.f32.mrf.mxu0
        %v7602 = vadd.f32 0.0, %v7601
        %v7603 = vpop.f32.mrf.mxu0
        %7604 = vmatprep.mubr.f32.mxu0 0.0
        %7605 = vmatmul.mubr.f32.gmra.mxu0 %v7533
        %v7606 = vpop.f32.mrf.mxu0
        %v7607 = vadd.f32 0.0, %v7606
        %v7608 = vpop.f32.mrf.mxu0
        %7609 = vdwg.mxu0
        %v7610 = vadd.f32 %v7514, %v7602
        %v7611 = vadd.f32 %v7519, %v7607
        %v7612 = vld [vmem:[#allocation8 + $0x3] sm:$0xff]
        %v7613 = vld [vmem:[#allocation8 + $0xb] sm:$0x1]
        %v7614 = vsel %vm7345, %v7612, 0.0
        %v7615 = vsel %vm7346, %v7613, 0.0
        %s7616 = scalar_lea.vmem %s8, 48
        %v7617 = vld [vmem:[%s7616] sm:$0xff]
        %v7618 = vld [vmem:[%s7616 + $0x8] sm:$0xff]
        %v7620 = vsel %vm7090, %v7614, 0
        %v7623 = vsel %vm7090, %v7615, 0
        %7625 = vmatprep.subr.mxu0 0.0
        %7626 = vmatpush1.msra.mxu0 0.0
        %7627 = vmatprep.subr.mxu0 0.0
        %7628 = vmatpush1.msra.mxu0 0.0
        %7629 = vmatprep.subr.mxu0 0.0
        %7630 = vmatpush1.msra.mxu0 0.0
        %7631 = vmatprep.subr.mxu0 0.0
        %7632 = vmatpush1.msra.mxu0 0.0
        %7633 = vmatprep.subr.mxu0 0.0
        %7634 = vmatpush1.msra.mxu0 0.0
        %7635 = vmatprep.subr.mxu0 0.0
        %7636 = vmatpush1.msra.mxu0 0.0
        %7637 = vmatprep.subr.mxu0 0.0
        %7638 = vmatpush1.msra.mxu0 0.0
        %7639 = vmatprep.subr.mxu0 0.0
        %7640 = vmatpush1.msra.mxu0 0.0
        %7641 = vmatprep.subr.mxu0 0.0
        %7642 = vmatpush1.msra.mxu0 0.0
        %7643 = vmatprep.subr.mxu0 0.0
        %7644 = vmatpush1.msra.mxu0 0.0
        %7645 = vmatprep.subr.mxu0 0.0
        %7646 = vmatpush1.msra.mxu0 0.0
        %7647 = vmatprep.subr.mxu0 0.0
        %7648 = vmatpush1.msra.mxu0 0.0
        %7649 = vmatprep.subr.mxu0 0.0
        %7650 = vmatpush1.msra.mxu0 0.0
        %7651 = vmatprep.subr.mxu0 0.0
        %7652 = vmatpush1.msra.mxu0 0.0
        %7653 = vmatprep.subr.mxu0 0.0
        %7654 = vmatpush1.msra.mxu0 %v7618
        %7655 = vmatprep.subr.mxu0 0.0
        %7656 = vmatpush1.msra.mxu0 %v7617
        %7657 = vmatprep.subr.mxu0 0.0
        %7658 = vmatpush2.msra.mxu0 0.0
        %7659 = vmatprep.subr.mxu0 0.0
        %7660 = vmatpush2.msra.mxu0 0.0
        %7661 = vmatprep.subr.mxu0 0.0
        %7662 = vmatpush2.msra.mxu0 0.0
        %7663 = vmatprep.subr.mxu0 0.0
        %7664 = vmatpush2.msra.mxu0 0.0
        %7665 = vmatprep.subr.mxu0 0.0
        %7666 = vmatpush2.msra.mxu0 0.0
        %7667 = vmatprep.subr.mxu0 0.0
        %7668 = vmatpush2.msra.mxu0 0.0
        %7669 = vmatprep.subr.mxu0 0.0
        %7670 = vmatpush2.msra.mxu0 0.0
        %7671 = vmatprep.subr.mxu0 0.0
        %7672 = vmatpush2.msra.mxu0 0.0
        %7673 = vmatprep.subr.mxu0 0.0
        %7674 = vmatpush2.msra.mxu0 0.0
        %7675 = vmatprep.subr.mxu0 0.0
        %7676 = vmatpush2.msra.mxu0 0.0
        %7677 = vmatprep.subr.mxu0 0.0
        %7678 = vmatpush2.msra.mxu0 0.0
        %7679 = vmatprep.subr.mxu0 0.0
        %7680 = vmatpush2.msra.mxu0 0.0
        %7681 = vmatprep.subr.mxu0 0.0
        %7682 = vmatpush2.msra.mxu0 0.0
        %7683 = vmatprep.subr.mxu0 0.0
        %7684 = vmatpush2.msra.mxu0 0.0
        %7685 = vmatprep.subr.mxu0 0.0
        %7686 = vmatpush2.msra.mxu0 0.0
        %7687 = vmatprep.subr.mxu0 0.0
        %7688 = vmatpush2.msra.mxu0 0.0
        %7689 = vmatprep.mubr.f32.mxu0 0.0
        %7690 = vmatmul.mubr.f32.gmra.mxu0 %v7620
        %v7691 = vpop.f32.mrf.mxu0
        %v7692 = vadd.f32 0.0, %v7691
        %v7693 = vpop.f32.mrf.mxu0
        %7694 = vmatprep.mubr.f32.mxu0 0.0
        %7695 = vmatmul.mubr.f32.gmra.mxu0 %v7623
        %v7696 = vpop.f32.mrf.mxu0
        %v7697 = vadd.f32 0.0, %v7696
        %v7698 = vpop.f32.mrf.mxu0
        %7699 = vdwg.mxu0
        %v7700 = vadd.f32 %v7610, %v7692
        %v7701 = vadd.f32 %v7611, %v7697
        %v7702 = vld [vmem:[#allocation8 + $0x4] sm:$0xff]
        %v7703 = vld [vmem:[#allocation8 + $0xc] sm:$0x1]
        %s7704 = scalar_lea.vmem %s8, 64
        %v7705 = vld [vmem:[%s7704] sm:$0xff]
        %v7706 = vld [vmem:[%s7704 + $0x8] sm:$0xff]
        %v7708 = vsel %vm7090, %v7702, 0
        %v7711 = vsel %vm7090, %v7703, 0
        %7713 = vmatprep.subr.mxu0 0.0
        %7714 = vmatpush1.msra.mxu0 0.0
        %7715 = vmatprep.subr.mxu0 0.0
        %7716 = vmatpush1.msra.mxu0 0.0
        %7717 = vmatprep.subr.mxu0 0.0
        %7718 = vmatpush1.msra.mxu0 0.0
        %7719 = vmatprep.subr.mxu0 0.0
        %7720 = vmatpush1.msra.mxu0 0.0
        %7721 = vmatprep.subr.mxu0 0.0
        %7722 = vmatpush1.msra.mxu0 0.0
        %7723 = vmatprep.subr.mxu0 0.0
        %7724 = vmatpush1.msra.mxu0 0.0
        %7725 = vmatprep.subr.mxu0 0.0
        %7726 = vmatpush1.msra.mxu0 0.0
        %7727 = vmatprep.subr.mxu0 0.0
        %7728 = vmatpush1.msra.mxu0 0.0
        %7729 = vmatprep.subr.mxu0 0.0
        %7730 = vmatpush1.msra.mxu0 0.0
        %7731 = vmatprep.subr.mxu0 0.0
        %7732 = vmatpush1.msra.mxu0 0.0
        %7733 = vmatprep.subr.mxu0 0.0
        %7734 = vmatpush1.msra.mxu0 0.0
        %7735 = vmatprep.subr.mxu0 0.0
        %7736 = vmatpush1.msra.mxu0 0.0
        %7737 = vmatprep.subr.mxu0 0.0
        %7738 = vmatpush1.msra.mxu0 0.0
        %7739 = vmatprep.subr.mxu0 0.0
        %7740 = vmatpush1.msra.mxu0 0.0
        %7741 = vmatprep.subr.mxu0 0.0
        %7742 = vmatpush1.msra.mxu0 %v7706
        %7743 = vmatprep.subr.mxu0 0.0
        %7744 = vmatpush1.msra.mxu0 %v7705
        %7745 = vmatprep.subr.mxu0 0.0
        %7746 = vmatpush2.msra.mxu0 0.0
        %7747 = vmatprep.subr.mxu0 0.0
        %7748 = vmatpush2.msra.mxu0 0.0
        %7749 = vmatprep.subr.mxu0 0.0
        %7750 = vmatpush2.msra.mxu0 0.0
        %7751 = vmatprep.subr.mxu0 0.0
        %7752 = vmatpush2.msra.mxu0 0.0
        %7753 = vmatprep.subr.mxu0 0.0
        %7754 = vmatpush2.msra.mxu0 0.0
        %7755 = vmatprep.subr.mxu0 0.0
        %7756 = vmatpush2.msra.mxu0 0.0
        %7757 = vmatprep.subr.mxu0 0.0
        %7758 = vmatpush2.msra.mxu0 0.0
        %7759 = vmatprep.subr.mxu0 0.0
        %7760 = vmatpush2.msra.mxu0 0.0
        %7761 = vmatprep.subr.mxu0 0.0
        %7762 = vmatpush2.msra.mxu0 0.0
        %7763 = vmatprep.subr.mxu0 0.0
        %7764 = vmatpush2.msra.mxu0 0.0
        %7765 = vmatprep.subr.mxu0 0.0
        %7766 = vmatpush2.msra.mxu0 0.0
        %7767 = vmatprep.subr.mxu0 0.0
        %7768 = vmatpush2.msra.mxu0 0.0
        %7769 = vmatprep.subr.mxu0 0.0
        %7770 = vmatpush2.msra.mxu0 0.0
        %7771 = vmatprep.subr.mxu0 0.0
        %7772 = vmatpush2.msra.mxu0 0.0
        %7773 = vmatprep.subr.mxu0 0.0
        %7774 = vmatpush2.msra.mxu0 0.0
        %7775 = vmatprep.subr.mxu0 0.0
        %7776 = vmatpush2.msra.mxu0 0.0
        %7777 = vmatprep.mubr.f32.mxu0 0.0
        %7778 = vmatmul.mubr.f32.gmra.mxu0 %v7708
        %v7779 = vpop.f32.mrf.mxu0
        %v7780 = vadd.f32 0.0, %v7779
        %v7781 = vpop.f32.mrf.mxu0
        %7782 = vmatprep.mubr.f32.mxu0 0.0
        %7783 = vmatmul.mubr.f32.gmra.mxu0 %v7711
        %v7784 = vpop.f32.mrf.mxu0
        %v7785 = vadd.f32 0.0, %v7784
        %v7786 = vpop.f32.mrf.mxu0
        %7787 = vdwg.mxu0
        %v7788 = vadd.f32 %v7700, %v7780
        %v7789 = vadd.f32 %v7701, %v7785
        %v7790 = vld [vmem:[#allocation8 + $0x5] sm:$0xff]
        %v7791 = vld [vmem:[#allocation8 + $0xd] sm:$0x1]
        %v7792 = vsel %vm7347, %v7790, 0.0
        %v7793 = vsel %vm7348, %v7791, 0.0
        %s7794 = scalar_lea.vmem %s8, 80
        %v7795 = vld [vmem:[%s7794] sm:$0xff]
        %v7796 = vld [vmem:[%s7794 + $0x8] sm:$0xff]
        %v7798 = vsel %vm7090, %v7792, 0
        %v7801 = vsel %vm7090, %v7793, 0
        %7803 = vmatprep.subr.mxu0 0.0
        %7804 = vmatpush1.msra.mxu0 0.0
        %7805 = vmatprep.subr.mxu0 0.0
        %7806 = vmatpush1.msra.mxu0 0.0
        %7807 = vmatprep.subr.mxu0 0.0
        %7808 = vmatpush1.msra.mxu0 0.0
        %7809 = vmatprep.subr.mxu0 0.0
        %7810 = vmatpush1.msra.mxu0 0.0
        %7811 = vmatprep.subr.mxu0 0.0
        %7812 = vmatpush1.msra.mxu0 0.0
        %7813 = vmatprep.subr.mxu0 0.0
        %7814 = vmatpush1.msra.mxu0 0.0
        %7815 = vmatprep.subr.mxu0 0.0
        %7816 = vmatpush1.msra.mxu0 0.0
        %7817 = vmatprep.subr.mxu0 0.0
        %7818 = vmatpush1.msra.mxu0 0.0
        %7819 = vmatprep.subr.mxu0 0.0
        %7820 = vmatpush1.msra.mxu0 0.0
        %7821 = vmatprep.subr.mxu0 0.0
        %7822 = vmatpush1.msra.mxu0 0.0
        %7823 = vmatprep.subr.mxu0 0.0
        %7824 = vmatpush1.msra.mxu0 0.0
        %7825 = vmatprep.subr.mxu0 0.0
        %7826 = vmatpush1.msra.mxu0 0.0
        %7827 = vmatprep.subr.mxu0 0.0
        %7828 = vmatpush1.msra.mxu0 0.0
        %7829 = vmatprep.subr.mxu0 0.0
        %7830 = vmatpush1.msra.mxu0 0.0
        %7831 = vmatprep.subr.mxu0 0.0
        %7832 = vmatpush1.msra.mxu0 %v7796
        %7833 = vmatprep.subr.mxu0 0.0
        %7834 = vmatpush1.msra.mxu0 %v7795
        %7835 = vmatprep.subr.mxu0 0.0
        %7836 = vmatpush2.msra.mxu0 0.0
        %7837 = vmatprep.subr.mxu0 0.0
        %7838 = vmatpush2.msra.mxu0 0.0
        %7839 = vmatprep.subr.mxu0 0.0
        %7840 = vmatpush2.msra.mxu0 0.0
        %7841 = vmatprep.subr.mxu0 0.0
        %7842 = vmatpush2.msra.mxu0 0.0
        %7843 = vmatprep.subr.mxu0 0.0
        %7844 = vmatpush2.msra.mxu0 0.0
        %7845 = vmatprep.subr.mxu0 0.0
        %7846 = vmatpush2.msra.mxu0 0.0
        %7847 = vmatprep.subr.mxu0 0.0
        %7848 = vmatpush2.msra.mxu0 0.0
        %7849 = vmatprep.subr.mxu0 0.0
        %7850 = vmatpush2.msra.mxu0 0.0
        %7851 = vmatprep.subr.mxu0 0.0
        %7852 = vmatpush2.msra.mxu0 0.0
        %7853 = vmatprep.subr.mxu0 0.0
        %7854 = vmatpush2.msra.mxu0 0.0
        %7855 = vmatprep.subr.mxu0 0.0
        %7856 = vmatpush2.msra.mxu0 0.0
        %7857 = vmatprep.subr.mxu0 0.0
        %7858 = vmatpush2.msra.mxu0 0.0
        %7859 = vmatprep.subr.mxu0 0.0
        %7860 = vmatpush2.msra.mxu0 0.0
        %7861 = vmatprep.subr.mxu0 0.0
        %7862 = vmatpush2.msra.mxu0 0.0
        %7863 = vmatprep.subr.mxu0 0.0
        %7864 = vmatpush2.msra.mxu0 0.0
        %7865 = vmatprep.subr.mxu0 0.0
        %7866 = vmatpush2.msra.mxu0 0.0
        %7867 = vmatprep.mubr.f32.mxu0 0.0
        %7868 = vmatmul.mubr.f32.gmra.mxu0 %v7798
        %v7869 = vpop.f32.mrf.mxu0
        %v7870 = vadd.f32 0.0, %v7869
        %v7871 = vpop.f32.mrf.mxu0
        %7872 = vmatprep.mubr.f32.mxu0 0.0
        %7873 = vmatmul.mubr.f32.gmra.mxu0 %v7801
        %v7874 = vpop.f32.mrf.mxu0
        %v7875 = vadd.f32 0.0, %v7874
        %v7876 = vpop.f32.mrf.mxu0
        %7877 = vdwg.mxu0
        %v7878 = vadd.f32 %v7788, %v7870
        %v7879 = vadd.f32 %v7789, %v7875
        %v7880 = vld [vmem:[#allocation8 + $0x6] sm:$0xff]
        %v7881 = vld [vmem:[#allocation8 + $0xe] sm:$0x1]
        %v7882 = vsel %vm7345, %v7880, 0.0
        %v7883 = vsel %vm7346, %v7881, 0.0
        %s7884 = scalar_lea.vmem %s8, 96
        %v7885 = vld [vmem:[%s7884] sm:$0xff]
        %v7886 = vld [vmem:[%s7884 + $0x8] sm:$0xff]
        %v7888 = vsel %vm7090, %v7882, 0
        %v7891 = vsel %vm7090, %v7883, 0
        %7893 = vmatprep.subr.mxu0 0.0
        %7894 = vmatpush1.msra.mxu0 0.0
        %7895 = vmatprep.subr.mxu0 0.0
        %7896 = vmatpush1.msra.mxu0 0.0
        %7897 = vmatprep.subr.mxu0 0.0
        %7898 = vmatpush1.msra.mxu0 0.0
        %7899 = vmatprep.subr.mxu0 0.0
        %7900 = vmatpush1.msra.mxu0 0.0
        %7901 = vmatprep.subr.mxu0 0.0
        %7902 = vmatpush1.msra.mxu0 0.0
        %7903 = vmatprep.subr.mxu0 0.0
        %7904 = vmatpush1.msra.mxu0 0.0
        %7905 = vmatprep.subr.mxu0 0.0
        %7906 = vmatpush1.msra.mxu0 0.0
        %7907 = vmatprep.subr.mxu0 0.0
        %7908 = vmatpush1.msra.mxu0 0.0
        %7909 = vmatprep.subr.mxu0 0.0
        %7910 = vmatpush1.msra.mxu0 0.0
        %7911 = vmatprep.subr.mxu0 0.0
        %7912 = vmatpush1.msra.mxu0 0.0
        %7913 = vmatprep.subr.mxu0 0.0
        %7914 = vmatpush1.msra.mxu0 0.0
        %7915 = vmatprep.subr.mxu0 0.0
        %7916 = vmatpush1.msra.mxu0 0.0
        %7917 = vmatprep.subr.mxu0 0.0
        %7918 = vmatpush1.msra.mxu0 0.0
        %7919 = vmatprep.subr.mxu0 0.0
        %7920 = vmatpush1.msra.mxu0 0.0
        %7921 = vmatprep.subr.mxu0 0.0
        %7922 = vmatpush1.msra.mxu0 %v7886
        %7923 = vmatprep.subr.mxu0 0.0
        %7924 = vmatpush1.msra.mxu0 %v7885
        %7925 = vmatprep.subr.mxu0 0.0
        %7926 = vmatpush2.msra.mxu0 0.0
        %7927 = vmatprep.subr.mxu0 0.0
        %7928 = vmatpush2.msra.mxu0 0.0
        %7929 = vmatprep.subr.mxu0 0.0
        %7930 = vmatpush2.msra.mxu0 0.0
        %7931 = vmatprep.subr.mxu0 0.0
        %7932 = vmatpush2.msra.mxu0 0.0
        %7933 = vmatprep.subr.mxu0 0.0
        %7934 = vmatpush2.msra.mxu0 0.0
        %7935 = vmatprep.subr.mxu0 0.0
        %7936 = vmatpush2.msra.mxu0 0.0
        %7937 = vmatprep.subr.mxu0 0.0
        %7938 = vmatpush2.msra.mxu0 0.0
        %7939 = vmatprep.subr.mxu0 0.0
        %7940 = vmatpush2.msra.mxu0 0.0
        %7941 = vmatprep.subr.mxu0 0.0
        %7942 = vmatpush2.msra.mxu0 0.0
        %7943 = vmatprep.subr.mxu0 0.0
        %7944 = vmatpush2.msra.mxu0 0.0
        %7945 = vmatprep.subr.mxu0 0.0
        %7946 = vmatpush2.msra.mxu0 0.0
        %7947 = vmatprep.subr.mxu0 0.0
        %7948 = vmatpush2.msra.mxu0 0.0
        %7949 = vmatprep.subr.mxu0 0.0
        %7950 = vmatpush2.msra.mxu0 0.0
        %7951 = vmatprep.subr.mxu0 0.0
        %7952 = vmatpush2.msra.mxu0 0.0
        %7953 = vmatprep.subr.mxu0 0.0
        %7954 = vmatpush2.msra.mxu0 0.0
        %7955 = vmatprep.subr.mxu0 0.0
        %7956 = vmatpush2.msra.mxu0 0.0
        %7957 = vmatprep.mubr.f32.mxu0 0.0
        %7958 = vmatmul.mubr.f32.gmra.mxu0 %v7888
        %v7959 = vpop.f32.mrf.mxu0
        %v7960 = vadd.f32 0.0, %v7959
        %v7961 = vpop.f32.mrf.mxu0
        %7962 = vmatprep.mubr.f32.mxu0 0.0
        %7963 = vmatmul.mubr.f32.gmra.mxu0 %v7891
        %v7964 = vpop.f32.mrf.mxu0
        %v7965 = vadd.f32 0.0, %v7964
        %v7966 = vpop.f32.mrf.mxu0
        %7967 = vdwg.mxu0
        %v7968 = vadd.f32 %v7878, %v7960
        %v7969 = vadd.f32 %v7879, %v7965
        %v7970 = vld [vmem:[#allocation8 + $0x7] sm:$0xff]
        %v7971 = vld [vmem:[#allocation8 + $0xf] sm:$0x1]
        %s7972 = scalar_lea.vmem %s8, 112
        %v7973 = vld [vmem:[%s7972] sm:$0xff]
        %v7974 = vld [vmem:[%s7972 + $0x8] sm:$0xff]
        %v7976 = vsel %vm7090, %v7970, 0
        %v7979 = vsel %vm7090, %v7971, 0
        %7981 = vmatprep.subr.mxu0 0.0
        %7982 = vmatpush1.msra.mxu0 0.0
        %7983 = vmatprep.subr.mxu0 0.0
        %7984 = vmatpush1.msra.mxu0 0.0
        %7985 = vmatprep.subr.mxu0 0.0
        %7986 = vmatpush1.msra.mxu0 0.0
        %7987 = vmatprep.subr.mxu0 0.0
        %7988 = vmatpush1.msra.mxu0 0.0
        %7989 = vmatprep.subr.mxu0 0.0
        %7990 = vmatpush1.msra.mxu0 0.0
        %7991 = vmatprep.subr.mxu0 0.0
        %7992 = vmatpush1.msra.mxu0 0.0
        %7993 = vmatprep.subr.mxu0 0.0
        %7994 = vmatpush1.msra.mxu0 0.0
        %7995 = vmatprep.subr.mxu0 0.0
        %7996 = vmatpush1.msra.mxu0 0.0
        %7997 = vmatprep.subr.mxu0 0.0
        %7998 = vmatpush1.msra.mxu0 0.0
        %7999 = vmatprep.subr.mxu0 0.0
        %8000 = vmatpush1.msra.mxu0 0.0
        %8001 = vmatprep.subr.mxu0 0.0
        %8002 = vmatpush1.msra.mxu0 0.0
        %8003 = vmatprep.subr.mxu0 0.0
        %8004 = vmatpush1.msra.mxu0 0.0
        %8005 = vmatprep.subr.mxu0 0.0
        %8006 = vmatpush1.msra.mxu0 0.0
        %8007 = vmatprep.subr.mxu0 0.0
        %8008 = vmatpush1.msra.mxu0 0.0
        %8009 = vmatprep.subr.mxu0 0.0
        %8010 = vmatpush1.msra.mxu0 %v7974
        %8011 = vmatprep.subr.mxu0 0.0
        %8012 = vmatpush1.msra.mxu0 %v7973
        %8013 = vmatprep.subr.mxu0 0.0
        %8014 = vmatpush2.msra.mxu0 0.0
        %8015 = vmatprep.subr.mxu0 0.0
        %8016 = vmatpush2.msra.mxu0 0.0
        %8017 = vmatprep.subr.mxu0 0.0
        %8018 = vmatpush2.msra.mxu0 0.0
        %8019 = vmatprep.subr.mxu0 0.0
        %8020 = vmatpush2.msra.mxu0 0.0
        %8021 = vmatprep.subr.mxu0 0.0
        %8022 = vmatpush2.msra.mxu0 0.0
        %8023 = vmatprep.subr.mxu0 0.0
        %8024 = vmatpush2.msra.mxu0 0.0
        %8025 = vmatprep.subr.mxu0 0.0
        %8026 = vmatpush2.msra.mxu0 0.0
        %8027 = vmatprep.subr.mxu0 0.0
        %8028 = vmatpush2.msra.mxu0 0.0
        %8029 = vmatprep.subr.mxu0 0.0
        %8030 = vmatpush2.msra.mxu0 0.0
        %8031 = vmatprep.subr.mxu0 0.0
        %8032 = vmatpush2.msra.mxu0 0.0
        %8033 = vmatprep.subr.mxu0 0.0
        %8034 = vmatpush2.msra.mxu0 0.0
        %8035 = vmatprep.subr.mxu0 0.0
        %8036 = vmatpush2.msra.mxu0 0.0
        %8037 = vmatprep.subr.mxu0 0.0
        %8038 = vmatpush2.msra.mxu0 0.0
        %8039 = vmatprep.subr.mxu0 0.0
        %8040 = vmatpush2.msra.mxu0 0.0
        %8041 = vmatprep.subr.mxu0 0.0
        %8042 = vmatpush2.msra.mxu0 0.0
        %8043 = vmatprep.subr.mxu0 0.0
        %8044 = vmatpush2.msra.mxu0 0.0
        %8045 = vmatprep.mubr.f32.mxu0 0.0
        %8046 = vmatmul.mubr.f32.gmra.mxu0 %v7976
        %v8047 = vpop.f32.mrf.mxu0
        %v8048 = vadd.f32 0.0, %v8047
        %v8049 = vpop.f32.mrf.mxu0
        %8050 = vmatprep.mubr.f32.mxu0 0.0
        %8051 = vmatmul.mubr.f32.gmra.mxu0 %v7979
        %v8052 = vpop.f32.mrf.mxu0
        %v8053 = vadd.f32 0.0, %v8052
        %v8054 = vpop.f32.mrf.mxu0
        %8055 = vdwg.mxu0
        %v8056 = vadd.f32 %v7968, %v8048
        %v8057 = vadd.f32 %v7969, %v8053
        %v8058 = vld [vmem:[#allocation8 + $0x8] sm:$0xff]
        %v8059 = vld [vmem:[#allocation8 + $0x10] sm:$0x1]
        %v8060 = vsel %vm7347, %v8058, 0.0
        %v8061 = vsel %vm7348, %v8059, 0.0
        %s8062 = scalar_lea.vmem %s8, 128
        %v8063 = vld [vmem:[%s8062] sm:$0xff]
        %v8064 = vld [vmem:[%s8062 + $0x8] sm:$0xff]
        %v8066 = vsel %vm7090, %v8060, 0
        %v8069 = vsel %vm7090, %v8061, 0
        %8071 = vmatprep.subr.mxu0 0.0
        %8072 = vmatpush1.msra.mxu0 0.0
        %8073 = vmatprep.subr.mxu0 0.0
        %8074 = vmatpush1.msra.mxu0 0.0
        %8075 = vmatprep.subr.mxu0 0.0
        %8076 = vmatpush1.msra.mxu0 0.0
        %8077 = vmatprep.subr.mxu0 0.0
        %8078 = vmatpush1.msra.mxu0 0.0
        %8079 = vmatprep.subr.mxu0 0.0
        %8080 = vmatpush1.msra.mxu0 0.0
        %8081 = vmatprep.subr.mxu0 0.0
        %8082 = vmatpush1.msra.mxu0 0.0
        %8083 = vmatprep.subr.mxu0 0.0
        %8084 = vmatpush1.msra.mxu0 0.0
        %8085 = vmatprep.subr.mxu0 0.0
        %8086 = vmatpush1.msra.mxu0 0.0
        %8087 = vmatprep.subr.mxu0 0.0
        %8088 = vmatpush1.msra.mxu0 0.0
        %8089 = vmatprep.subr.mxu0 0.0
        %8090 = vmatpush1.msra.mxu0 0.0
        %8091 = vmatprep.subr.mxu0 0.0
        %8092 = vmatpush1.msra.mxu0 0.0
        %8093 = vmatprep.subr.mxu0 0.0
        %8094 = vmatpush1.msra.mxu0 0.0
        %8095 = vmatprep.subr.mxu0 0.0
        %8096 = vmatpush1.msra.mxu0 0.0
        %8097 = vmatprep.subr.mxu0 0.0
        %8098 = vmatpush1.msra.mxu0 0.0
        %8099 = vmatprep.subr.mxu0 0.0
        %8100 = vmatpush1.msra.mxu0 %v8064
        %8101 = vmatprep.subr.mxu0 0.0
        %8102 = vmatpush1.msra.mxu0 %v8063
        %8103 = vmatprep.subr.mxu0 0.0
        %8104 = vmatpush2.msra.mxu0 0.0
        %8105 = vmatprep.subr.mxu0 0.0
        %8106 = vmatpush2.msra.mxu0 0.0
        %8107 = vmatprep.subr.mxu0 0.0
        %8108 = vmatpush2.msra.mxu0 0.0
        %8109 = vmatprep.subr.mxu0 0.0
        %8110 = vmatpush2.msra.mxu0 0.0
        %8111 = vmatprep.subr.mxu0 0.0
        %8112 = vmatpush2.msra.mxu0 0.0
        %8113 = vmatprep.subr.mxu0 0.0
        %8114 = vmatpush2.msra.mxu0 0.0
        %8115 = vmatprep.subr.mxu0 0.0
        %8116 = vmatpush2.msra.mxu0 0.0
        %8117 = vmatprep.subr.mxu0 0.0
        %8118 = vmatpush2.msra.mxu0 0.0
        %8119 = vmatprep.subr.mxu0 0.0
        %8120 = vmatpush2.msra.mxu0 0.0
        %8121 = vmatprep.subr.mxu0 0.0
        %8122 = vmatpush2.msra.mxu0 0.0
        %8123 = vmatprep.subr.mxu0 0.0
        %8124 = vmatpush2.msra.mxu0 0.0
        %8125 = vmatprep.subr.mxu0 0.0
        %8126 = vmatpush2.msra.mxu0 0.0
        %8127 = vmatprep.subr.mxu0 0.0
        %8128 = vmatpush2.msra.mxu0 0.0
        %8129 = vmatprep.subr.mxu0 0.0
        %8130 = vmatpush2.msra.mxu0 0.0
        %8131 = vmatprep.subr.mxu0 0.0
        %8132 = vmatpush2.msra.mxu0 0.0
        %8133 = vmatprep.subr.mxu0 0.0
        %8134 = vmatpush2.msra.mxu0 0.0
        %8135 = vmatprep.mubr.f32.mxu0 0.0
        %8136 = vmatmul.mubr.f32.gmra.mxu0 %v8066
        %v8137 = vpop.f32.mrf.mxu0
        %v8138 = vadd.f32 0.0, %v8137
        %v8139 = vpop.f32.mrf.mxu0
        %8140 = vmatprep.mubr.f32.mxu0 0.0
        %8141 = vmatmul.mubr.f32.gmra.mxu0 %v8069
        %v8142 = vpop.f32.mrf.mxu0
        %v8143 = vadd.f32 0.0, %v8142
        %v8144 = vpop.f32.mrf.mxu0
        %8145 = vdwg.mxu0
        %v8146 = vadd.f32 %v8056, %v8138
        %v8147 = vadd.f32 %v8057, %v8143
        %v8148 = vld [vmem:[%s9] sm:$0x1]
        %v8150 = vlaneseq
        %v8151 = vshrl.u32 %v8150, 7
        %v8152 = vsub.s32 0, %v8151
        %v8153 = vrot.slane %v8148, %v8152
        %v8155 = vadd.f32 %v8146, %v8153
        %v8156 = vadd.f32 %v8147, %v8153
        %vm8157 = vcmp.gt.f32.partialorder %v8155, 0.0
        %vm8158 = vcmp.gt.f32.partialorder %v8156, 0.0
        %v8159 = vmul.f32 %v8155, 0.01
        %v8160 = vmul.f32 %v8156, 0.01
        %v8161 = vsel %vm8157, %v8155, %v8159
        %v8162 = vsel %vm8158, %v8156, %v8160
        %vm8163 = vcmask 261120
        %v8164 = vsel %vm8163, %v8161, 0.0
        %vm8165 = vcmask 253952
        %v8166 = vsel %vm8165, %v8162, 0.0
        %v8167 = vadd.f32 %v8164, %v8166
        %v8168 = vrot.slane %v8167, 4
        %v8169 = vadd.f32 %v8167, %v8168
        %v8170 = vrot.slane %v8169, 2
        %v8171 = vadd.f32 %v8169, %v8170
        %v8172 = vrot.slane %v8171, 1
        %v8173 = vadd.f32 %v8171, %v8172
        %v8174 = vmul.f32 %v8161, %v8161
        %v8175 = vmul.f32 %v8162, %v8162
        %v8176 = vsel %vm8163, %v8174, 0.0
        %v8177 = vsel %vm8165, %v8175, 0.0
        %v8178 = vadd.f32 %v8176, %v8177
        %v8179 = vrot.slane %v8178, 4
        %v8180 = vadd.f32 %v8178, %v8179
        %v8181 = vrot.slane %v8180, 2
        %v8182 = vadd.f32 %v8180, %v8181
        %v8183 = vrot.slane %v8182, 1
        %v8184 = vadd.f32 %v8182, %v8183
        %v8185 = vmul.f32 %v8173, 0.11111111
        %v8186 = vmul.f32 %v8184, 0.11111111
        %v8187 = vmul.f32 %v8185, %v8185
        %v8188 = vsub.f32 %v8186, %v8187
        %v8189 = vsub.f32 %v8161, %v8185
        %v8190 = vsub.f32 %v8162, %v8185
        %v8191 = vadd.f32 %v8188, 1e-05
        %v8192 = vrsqrt.pop %v8191
        %v8193 = vmul.f32 %v8189, %v8192
        %v8194 = vmul.f32 %v8190, %v8192
        %8195 = vst.msk [vmem:[#allocation9] sm:$0xff] %vm8163, %v8193
        %8196 = vst.msk [vmem:[#allocation9 + $0x8] sm:$0x1] %vm8165, %v8194
        %v8197 = vld [vmem:[#allocation9] sm:$0x7]
        %v8198 = vld [vmem:[#allocation9 + $0x3] sm:$0x7]
        %v8199 = vmax.f32 %v8197, %v8198
        %v8200 = vld [vmem:[#allocation9 + $0x6] sm:$0x7]
        %v8201 = vmax.f32 %v8199, %v8200
        %vm8202 = vcmask 256000
        %8203 = vst.msk [vmem:[#allocation10] sm:$0x7] %vm8202, %v8201
        %v8204 = vld [vmem:[#allocation10] sm:$0x1]
        %v8205 = vld [vmem:[#allocation10 + $0x1] sm:$0x1]
        %v8206 = vmax.f32 %v8204, %v8205
        %v8207 = vld [vmem:[#allocation10 + $0x2] sm:$0x1]
        %v8208 = vmax.f32 %v8206, %v8207
        %v8209 = vld [vmem:[#allocation11] sm:$0x1]
        %vm8210 = vcmask 7168
        %v8212 = vsel %vm8210, %v8209, 0
        %v8215 = vsel %vm7229, %v8208, 0
        %8217 = vmatprep.subr.mxu0 0.0
        %8218 = vmatpush1.msra.mxu0 0.0
        %8219 = vmatprep.subr.mxu0 0.0
        %8220 = vmatpush1.msra.mxu0 0.0
        %8221 = vmatprep.subr.mxu0 0.0
        %8222 = vmatpush1.msra.mxu0 0.0
        %8223 = vmatprep.subr.mxu0 0.0
        %8224 = vmatpush1.msra.mxu0 0.0
        %8225 = vmatprep.subr.mxu0 0.0
        %8226 = vmatpush1.msra.mxu0 0.0
        %8227 = vmatprep.subr.mxu0 0.0
        %8228 = vmatpush1.msra.mxu0 0.0
        %8229 = vmatprep.subr.mxu0 0.0
        %8230 = vmatpush1.msra.mxu0 0.0
        %8231 = vmatprep.subr.mxu0 0.0
        %8232 = vmatpush1.msra.mxu0 0.0
        %8233 = vmatprep.subr.mxu0 0.0
        %8234 = vmatpush1.msra.mxu0 0.0
        %8235 = vmatprep.subr.mxu0 0.0
        %8236 = vmatpush1.msra.mxu0 0.0
        %8237 = vmatprep.subr.mxu0 0.0
        %8238 = vmatpush1.msra.mxu0 0.0
        %8239 = vmatprep.subr.mxu0 0.0
        %8240 = vmatpush1.msra.mxu0 0.0
        %8241 = vmatprep.subr.mxu0 0.0
        %8242 = vmatpush1.msra.mxu0 0.0
        %8243 = vmatprep.subr.mxu0 0.0
        %8244 = vmatpush1.msra.mxu0 0.0
        %8245 = vmatprep.subr.mxu0 0.0
        %8246 = vmatpush1.msra.mxu0 0.0
        %8247 = vmatprep.subr.mxu0 0.0
        %8248 = vmatpush1.msra.mxu0 %v8215
        %8249 = vmatprep.subr.mxu0 0.0
        %8250 = vmatpush2.msra.mxu0 0.0
        %8251 = vmatprep.subr.mxu0 0.0
        %8252 = vmatpush2.msra.mxu0 0.0
        %8253 = vmatprep.subr.mxu0 0.0
        %8254 = vmatpush2.msra.mxu0 0.0
        %8255 = vmatprep.subr.mxu0 0.0
        %8256 = vmatpush2.msra.mxu0 0.0
        %8257 = vmatprep.subr.mxu0 0.0
        %8258 = vmatpush2.msra.mxu0 0.0
        %8259 = vmatprep.subr.mxu0 0.0
        %8260 = vmatpush2.msra.mxu0 0.0
        %8261 = vmatprep.subr.mxu0 0.0
        %8262 = vmatpush2.msra.mxu0 0.0
        %8263 = vmatprep.subr.mxu0 0.0
        %8264 = vmatpush2.msra.mxu0 0.0
        %8265 = vmatprep.subr.mxu0 0.0
        %8266 = vmatpush2.msra.mxu0 0.0
        %8267 = vmatprep.subr.mxu0 0.0
        %8268 = vmatpush2.msra.mxu0 0.0
        %8269 = vmatprep.subr.mxu0 0.0
        %8270 = vmatpush2.msra.mxu0 0.0
        %8271 = vmatprep.subr.mxu0 0.0
        %8272 = vmatpush2.msra.mxu0 0.0
        %8273 = vmatprep.subr.mxu0 0.0
        %8274 = vmatpush2.msra.mxu0 0.0
        %8275 = vmatprep.subr.mxu0 0.0
        %8276 = vmatpush2.msra.mxu0 0.0
        %8277 = vmatprep.subr.mxu0 0.0
        %8278 = vmatpush2.msra.mxu0 0.0
        %8279 = vmatprep.subr.mxu0 0.0
        %8280 = vmatpush2.msra.mxu0 0.0
        %8281 = vmatprep.mubr.f32.mxu0 0.0
        %8282 = vmatmul.mubr.f32.gmra.mxu0 %v8212
        %v8283 = vpop.f32.mrf.mxu0
        %v8284 = vadd.f32 0.0, %v8283
        %v8285 = vpop.f32.mrf.mxu0
        %8286 = vdwg.mxu0
        %v8287 = vld [vmem:[%s11] sm:$0xff]
        %v8288 = vld [vmem:[%s11 + $0x8] sm:$0xff]
        %v8289 = vld [vmem:[%s11 + $0x10] sm:$0xff]
        %v8290 = vld [vmem:[%s11 + $0x18] sm:$0xff]
        %v8291 = vld [vmem:[%s12] sm:$0x1]
        %v8293 = vsel %vm8163, %v8284, 0
        %8295 = vmatprep.subr.mxu0 0.0
        %8296 = vmatpush1.msra.mxu0 0.0
        %8297 = vmatprep.subr.mxu0 0.0
        %8298 = vmatpush1.msra.mxu0 0.0
        %8299 = vmatprep.subr.mxu0 0.0
        %8300 = vmatpush1.msra.mxu0 0.0
        %8301 = vmatprep.subr.mxu0 0.0
        %8302 = vmatpush1.msra.mxu0 0.0
        %8303 = vmatprep.subr.mxu0 0.0
        %8304 = vmatpush1.msra.mxu0 0.0
        %8305 = vmatprep.subr.mxu0 0.0
        %8306 = vmatpush1.msra.mxu0 0.0
        %8307 = vmatprep.subr.mxu0 0.0
        %8308 = vmatpush1.msra.mxu0 0.0
        %8309 = vmatprep.subr.mxu0 0.0
        %8310 = vmatpush1.msra.mxu0 0.0
        %8311 = vmatprep.subr.mxu0 0.0
        %8312 = vmatpush1.msra.mxu0 0.0
        %8313 = vmatprep.subr.mxu0 0.0
        %8314 = vmatpush1.msra.mxu0 0.0
        %8315 = vmatprep.subr.mxu0 0.0
        %8316 = vmatpush1.msra.mxu0 0.0
        %8317 = vmatprep.subr.mxu0 0.0
        %8318 = vmatpush1.msra.mxu0 0.0
        %8319 = vmatprep.subr.mxu0 0.0
        %8320 = vmatpush1.msra.mxu0 %v8290
        %8321 = vmatprep.subr.mxu0 0.0
        %8322 = vmatpush1.msra.mxu0 %v8289
        %8323 = vmatprep.subr.mxu0 0.0
        %8324 = vmatpush1.msra.mxu0 %v8288
        %8325 = vmatprep.subr.mxu0 0.0
        %8326 = vmatpush1.msra.mxu0 %v8287
        %8327 = vmatprep.subr.mxu0 0.0
        %8328 = vmatpush2.msra.mxu0 0.0
        %8329 = vmatprep.subr.mxu0 0.0
        %8330 = vmatpush2.msra.mxu0 0.0
        %8331 = vmatprep.subr.mxu0 0.0
        %8332 = vmatpush2.msra.mxu0 0.0
        %8333 = vmatprep.subr.mxu0 0.0
        %8334 = vmatpush2.msra.mxu0 0.0
        %8335 = vmatprep.subr.mxu0 0.0
        %8336 = vmatpush2.msra.mxu0 0.0
        %8337 = vmatprep.subr.mxu0 0.0
        %8338 = vmatpush2.msra.mxu0 0.0
        %8339 = vmatprep.subr.mxu0 0.0
        %8340 = vmatpush2.msra.mxu0 0.0
        %8341 = vmatprep.subr.mxu0 0.0
        %8342 = vmatpush2.msra.mxu0 0.0
        %8343 = vmatprep.subr.mxu0 0.0
        %8344 = vmatpush2.msra.mxu0 0.0
        %8345 = vmatprep.subr.mxu0 0.0
        %8346 = vmatpush2.msra.mxu0 0.0
        %8347 = vmatprep.subr.mxu0 0.0
        %8348 = vmatpush2.msra.mxu0 0.0
        %8349 = vmatprep.subr.mxu0 0.0
        %8350 = vmatpush2.msra.mxu0 0.0
        %8351 = vmatprep.subr.mxu0 0.0
        %8352 = vmatpush2.msra.mxu0 0.0
        %8353 = vmatprep.subr.mxu0 0.0
        %8354 = vmatpush2.msra.mxu0 0.0
        %8355 = vmatprep.subr.mxu0 0.0
        %8356 = vmatpush2.msra.mxu0 0.0
        %8357 = vmatprep.subr.mxu0 0.0
        %8358 = vmatpush2.msra.mxu0 0.0
        %8359 = vmatprep.mubr.f32.mxu0 0.0
        %8360 = vmatmul.mubr.f32.gmra.mxu0 %v8293
        %v8361 = vpop.f32.mrf.mxu0
        %v8362 = vadd.f32 %v8291, %v8361
        %v8363 = vpop.f32.mrf.mxu0
        %8364 = vdwg.mxu0
        %vm8365 = vcmp.gt.f32.partialorder %v8362, 0.0
        %v8366 = vmul.f32 %v8362, 0.01
        %v8367 = vsel %vm8365, %v8362, %v8366
        %v8368 = vld [vmem:[%s13] sm:$0xff]
        %v8369 = vld [vmem:[%s13 + $0x8] sm:$0xff]
        %v8370 = vld [vmem:[%s14] sm:$0x1]
        %v8372 = vsel %vm7090, %v8367, 0
        %8374 = vmatprep.subr.mxu0 0.0
        %8375 = vmatpush1.msra.mxu0 0.0
        %8376 = vmatprep.subr.mxu0 0.0
        %8377 = vmatpush1.msra.mxu0 0.0
        %8378 = vmatprep.subr.mxu0 0.0
        %8379 = vmatpush1.msra.mxu0 0.0
        %8380 = vmatprep.subr.mxu0 0.0
        %8381 = vmatpush1.msra.mxu0 0.0
        %8382 = vmatprep.subr.mxu0 0.0
        %8383 = vmatpush1.msra.mxu0 0.0
        %8384 = vmatprep.subr.mxu0 0.0
        %8385 = vmatpush1.msra.mxu0 0.0
        %8386 = vmatprep.subr.mxu0 0.0
        %8387 = vmatpush1.msra.mxu0 0.0
        %8388 = vmatprep.subr.mxu0 0.0
        %8389 = vmatpush1.msra.mxu0 0.0
        %8390 = vmatprep.subr.mxu0 0.0
        %8391 = vmatpush1.msra.mxu0 0.0
        %8392 = vmatprep.subr.mxu0 0.0
        %8393 = vmatpush1.msra.mxu0 0.0
        %8394 = vmatprep.subr.mxu0 0.0
        %8395 = vmatpush1.msra.mxu0 0.0
        %8396 = vmatprep.subr.mxu0 0.0
        %8397 = vmatpush1.msra.mxu0 0.0
        %8398 = vmatprep.subr.mxu0 0.0
        %8399 = vmatpush1.msra.mxu0 0.0
        %8400 = vmatprep.subr.mxu0 0.0
        %8401 = vmatpush1.msra.mxu0 0.0
        %8402 = vmatprep.subr.mxu0 0.0
        %8403 = vmatpush1.msra.mxu0 %v8369
        %8404 = vmatprep.subr.mxu0 0.0
        %8405 = vmatpush1.msra.mxu0 %v8368
        %8406 = vmatprep.subr.mxu0 0.0
        %8407 = vmatpush2.msra.mxu0 0.0
        %8408 = vmatprep.subr.mxu0 0.0
        %8409 = vmatpush2.msra.mxu0 0.0
        %8410 = vmatprep.subr.mxu0 0.0
        %8411 = vmatpush2.msra.mxu0 0.0
        %8412 = vmatprep.subr.mxu0 0.0
        %8413 = vmatpush2.msra.mxu0 0.0
        %8414 = vmatprep.subr.mxu0 0.0
        %8415 = vmatpush2.msra.mxu0 0.0
        %8416 = vmatprep.subr.mxu0 0.0
        %8417 = vmatpush2.msra.mxu0 0.0
        %8418 = vmatprep.subr.mxu0 0.0
        %8419 = vmatpush2.msra.mxu0 0.0
        %8420 = vmatprep.subr.mxu0 0.0
        %8421 = vmatpush2.msra.mxu0 0.0
        %8422 = vmatprep.subr.mxu0 0.0
        %8423 = vmatpush2.msra.mxu0 0.0
        %8424 = vmatprep.subr.mxu0 0.0
        %8425 = vmatpush2.msra.mxu0 0.0
        %8426 = vmatprep.subr.mxu0 0.0
        %8427 = vmatpush2.msra.mxu0 0.0
        %8428 = vmatprep.subr.mxu0 0.0
        %8429 = vmatpush2.msra.mxu0 0.0
        %8430 = vmatprep.subr.mxu0 0.0
        %8431 = vmatpush2.msra.mxu0 0.0
        %8432 = vmatprep.subr.mxu0 0.0
        %8433 = vmatpush2.msra.mxu0 0.0
        %8434 = vmatprep.subr.mxu0 0.0
        %8435 = vmatpush2.msra.mxu0 0.0
        %8436 = vmatprep.subr.mxu0 0.0
        %8437 = vmatpush2.msra.mxu0 0.0
        %8438 = vmatprep.mubr.f32.mxu0 0.0
        %8439 = vmatmul.mubr.f32.gmra.mxu0 %v8372
        %v8440 = vpop.f32.mrf.mxu0
        %v8441 = vadd.f32 %v8370, %v8440
        %v8442 = vpop.f32.mrf.mxu0
        %8443 = vdwg.mxu0
        %vm8444 = vcmp.gt.f32.partialorder %v8441, 0.0
        %v8445 = vmul.f32 %v8441, 0.01
        %v8446 = vsel %vm8444, %v8441, %v8445
        %v8447 = vld [vmem:[%s642] sm:$0x1]
        %v8448 = vld [vmem:[%s15] sm:$0xff]
        %v8449 = vld [vmem:[%s16] sm:$0x3f]
        %vm8450 = vcmask 48128
        %v8452 = vsel %vm8450, %v8447, 0
        %v8455 = vsel %vm5534, %v8449, 0
        %8457 = vmatprep.subr.mxu0 0.0
        %8458 = vmatpush1.msra.mxu0 0.0
        %8459 = vmatprep.subr.mxu0 0.0
        %8460 = vmatpush1.msra.mxu0 0.0
        %8461 = vmatprep.subr.mxu0 0.0
        %8462 = vmatpush1.msra.mxu0 0.0
        %8463 = vmatprep.subr.mxu0 0.0
        %8464 = vmatpush1.msra.mxu0 0.0
        %8465 = vmatprep.subr.mxu0 0.0
        %8466 = vmatpush1.msra.mxu0 0.0
        %8467 = vmatprep.subr.mxu0 0.0
        %8468 = vmatpush1.msra.mxu0 0.0
        %8469 = vmatprep.subr.mxu0 0.0
        %8470 = vmatpush1.msra.mxu0 0.0
        %8471 = vmatprep.subr.mxu0 0.0
        %8472 = vmatpush1.msra.mxu0 0.0
        %8473 = vmatprep.subr.mxu0 0.0
        %8474 = vmatpush1.msra.mxu0 0.0
        %8475 = vmatprep.subr.mxu0 0.0
        %8476 = vmatpush1.msra.mxu0 0.0
        %8477 = vmatprep.subr.mxu0 0.0
        %8478 = vmatpush1.msra.mxu0 0.0
        %8479 = vmatprep.subr.mxu0 0.0
        %8480 = vmatpush1.msra.mxu0 0.0
        %8481 = vmatprep.subr.mxu0 0.0
        %8482 = vmatpush1.msra.mxu0 0.0
        %8483 = vmatprep.subr.mxu0 0.0
        %8484 = vmatpush1.msra.mxu0 0.0
        %8485 = vmatprep.subr.mxu0 0.0
        %8486 = vmatpush1.msra.mxu0 0.0
        %8487 = vmatprep.subr.mxu0 0.0
        %8488 = vmatpush1.msra.mxu0 %v8455
        %8489 = vmatprep.subr.mxu0 0.0
        %8490 = vmatpush2.msra.mxu0 0.0
        %8491 = vmatprep.subr.mxu0 0.0
        %8492 = vmatpush2.msra.mxu0 0.0
        %8493 = vmatprep.subr.mxu0 0.0
        %8494 = vmatpush2.msra.mxu0 0.0
        %8495 = vmatprep.subr.mxu0 0.0
        %8496 = vmatpush2.msra.mxu0 0.0
        %8497 = vmatprep.subr.mxu0 0.0
        %8498 = vmatpush2.msra.mxu0 0.0
        %8499 = vmatprep.subr.mxu0 0.0
        %8500 = vmatpush2.msra.mxu0 0.0
        %8501 = vmatprep.subr.mxu0 0.0
        %8502 = vmatpush2.msra.mxu0 0.0
        %8503 = vmatprep.subr.mxu0 0.0
        %8504 = vmatpush2.msra.mxu0 0.0
        %8505 = vmatprep.subr.mxu0 0.0
        %8506 = vmatpush2.msra.mxu0 0.0
        %8507 = vmatprep.subr.mxu0 0.0
        %8508 = vmatpush2.msra.mxu0 0.0
        %8509 = vmatprep.subr.mxu0 0.0
        %8510 = vmatpush2.msra.mxu0 0.0
        %8511 = vmatprep.subr.mxu0 0.0
        %8512 = vmatpush2.msra.mxu0 0.0
        %8513 = vmatprep.subr.mxu0 0.0
        %8514 = vmatpush2.msra.mxu0 0.0
        %8515 = vmatprep.subr.mxu0 0.0
        %8516 = vmatpush2.msra.mxu0 0.0
        %8517 = vmatprep.subr.mxu0 0.0
        %8518 = vmatpush2.msra.mxu0 0.0
        %8519 = vmatprep.subr.mxu0 0.0
        %8520 = vmatpush2.msra.mxu0 0.0
        %8521 = vmatprep.mubr.f32.mxu0 0.0
        %8522 = vmatmul.mubr.f32.gmra.mxu0 %v8452
        %v8523 = vpop.f32.mrf.mxu0
        %v8524 = vadd.f32 0.0, %v8523
        %v8525 = vpop.f32.mrf.mxu0
        %8526 = vdwg.mxu0
        %v8528 = vsel %vm4969, %v8446, 0
        %8530 = vmatprep.subr.mxu0 0.0
        %8531 = vmatpush1.msra.mxu0 0.0
        %8532 = vmatprep.subr.mxu0 0.0
        %8533 = vmatpush1.msra.mxu0 0.0
        %8534 = vmatprep.subr.mxu0 0.0
        %8535 = vmatpush1.msra.mxu0 0.0
        %8536 = vmatprep.subr.mxu0 0.0
        %8537 = vmatpush1.msra.mxu0 0.0
        %8538 = vmatprep.subr.mxu0 0.0
        %8539 = vmatpush1.msra.mxu0 0.0
        %8540 = vmatprep.subr.mxu0 0.0
        %8541 = vmatpush1.msra.mxu0 0.0
        %8542 = vmatprep.subr.mxu0 0.0
        %8543 = vmatpush1.msra.mxu0 0.0
        %8544 = vmatprep.subr.mxu0 0.0
        %8545 = vmatpush1.msra.mxu0 0.0
        %8546 = vmatprep.subr.mxu0 0.0
        %8547 = vmatpush1.msra.mxu0 0.0
        %8548 = vmatprep.subr.mxu0 0.0
        %8549 = vmatpush1.msra.mxu0 0.0
        %8550 = vmatprep.subr.mxu0 0.0
        %8551 = vmatpush1.msra.mxu0 0.0
        %8552 = vmatprep.subr.mxu0 0.0
        %8553 = vmatpush1.msra.mxu0 0.0
        %8554 = vmatprep.subr.mxu0 0.0
        %8555 = vmatpush1.msra.mxu0 0.0
        %8556 = vmatprep.subr.mxu0 0.0
        %8557 = vmatpush1.msra.mxu0 0.0
        %8558 = vmatprep.subr.mxu0 0.0
        %8559 = vmatpush1.msra.mxu0 0.0
        %8560 = vmatprep.subr.mxu0 0.0
        %8561 = vmatpush1.msra.mxu0 %v8448
        %8562 = vmatprep.subr.mxu0 0.0
        %8563 = vmatpush2.msra.mxu0 0.0
        %8564 = vmatprep.subr.mxu0 0.0
        %8565 = vmatpush2.msra.mxu0 0.0
        %8566 = vmatprep.subr.mxu0 0.0
        %8567 = vmatpush2.msra.mxu0 0.0
        %8568 = vmatprep.subr.mxu0 0.0
        %8569 = vmatpush2.msra.mxu0 0.0
        %8570 = vmatprep.subr.mxu0 0.0
        %8571 = vmatpush2.msra.mxu0 0.0
        %8572 = vmatprep.subr.mxu0 0.0
        %8573 = vmatpush2.msra.mxu0 0.0
        %8574 = vmatprep.subr.mxu0 0.0
        %8575 = vmatpush2.msra.mxu0 0.0
        %8576 = vmatprep.subr.mxu0 0.0
        %8577 = vmatpush2.msra.mxu0 0.0
        %8578 = vmatprep.subr.mxu0 0.0
        %8579 = vmatpush2.msra.mxu0 0.0
        %8580 = vmatprep.subr.mxu0 0.0
        %8581 = vmatpush2.msra.mxu0 0.0
        %8582 = vmatprep.subr.mxu0 0.0
        %8583 = vmatpush2.msra.mxu0 0.0
        %8584 = vmatprep.subr.mxu0 0.0
        %8585 = vmatpush2.msra.mxu0 0.0
        %8586 = vmatprep.subr.mxu0 0.0
        %8587 = vmatpush2.msra.mxu0 0.0
        %8588 = vmatprep.subr.mxu0 0.0
        %8589 = vmatpush2.msra.mxu0 0.0
        %8590 = vmatprep.subr.mxu0 0.0
        %8591 = vmatpush2.msra.mxu0 0.0
        %8592 = vmatprep.subr.mxu0 0.0
        %8593 = vmatpush2.msra.mxu0 0.0
        %8594 = vmatprep.mubr.f32.mxu0 0.0
        %8595 = vmatmul.mubr.f32.gmra.mxu0 %v8528
        %v8596 = vpop.f32.mrf.mxu0
        %v8597 = vadd.f32 %v8524, %v8596
        %v8598 = vpop.f32.mrf.mxu0
        %8599 = vdwg.mxu0
        %v8600 = vld [vmem:[%s17] sm:$0x1]
        %v8601 = vadd.f32 %v8597, %v8600
        %vm8602 = vcmp.gt.f32.partialorder %v8601, 0.0
        %v8603 = vmul.f32 %v8601, 0.01
        %v8604 = vsel %vm8602, %v8601, %v8603
        %v8605 = vld [vmem:[%s18] sm:$0xff]
        %v8606 = vld [vmem:[%s19] sm:$0x1]
        %v8608 = vsel %vm4969, %v8604, 0
        %8610 = vmatprep.subr.mxu0 0.0
        %8611 = vmatpush1.msra.mxu0 0.0
        %8612 = vmatprep.subr.mxu0 0.0
        %8613 = vmatpush1.msra.mxu0 0.0
        %8614 = vmatprep.subr.mxu0 0.0
        %8615 = vmatpush1.msra.mxu0 0.0
        %8616 = vmatprep.subr.mxu0 0.0
        %8617 = vmatpush1.msra.mxu0 0.0
        %8618 = vmatprep.subr.mxu0 0.0
        %8619 = vmatpush1.msra.mxu0 0.0
        %8620 = vmatprep.subr.mxu0 0.0
        %8621 = vmatpush1.msra.mxu0 0.0
        %8622 = vmatprep.subr.mxu0 0.0
        %8623 = vmatpush1.msra.mxu0 0.0
        %8624 = vmatprep.subr.mxu0 0.0
        %8625 = vmatpush1.msra.mxu0 0.0
        %8626 = vmatprep.subr.mxu0 0.0
        %8627 = vmatpush1.msra.mxu0 0.0
        %8628 = vmatprep.subr.mxu0 0.0
        %8629 = vmatpush1.msra.mxu0 0.0
        %8630 = vmatprep.subr.mxu0 0.0
        %8631 = vmatpush1.msra.mxu0 0.0
        %8632 = vmatprep.subr.mxu0 0.0
        %8633 = vmatpush1.msra.mxu0 0.0
        %8634 = vmatprep.subr.mxu0 0.0
        %8635 = vmatpush1.msra.mxu0 0.0
        %8636 = vmatprep.subr.mxu0 0.0
        %8637 = vmatpush1.msra.mxu0 0.0
        %8638 = vmatprep.subr.mxu0 0.0
        %8639 = vmatpush1.msra.mxu0 0.0
        %8640 = vmatprep.subr.mxu0 0.0
        %8641 = vmatpush1.msra.mxu0 %v8605
        %8642 = vmatprep.subr.mxu0 0.0
        %8643 = vmatpush2.msra.mxu0 0.0
        %8644 = vmatprep.subr.mxu0 0.0
        %8645 = vmatpush2.msra.mxu0 0.0
        %8646 = vmatprep.subr.mxu0 0.0
        %8647 = vmatpush2.msra.mxu0 0.0
        %8648 = vmatprep.subr.mxu0 0.0
        %8649 = vmatpush2.msra.mxu0 0.0
        %8650 = vmatprep.subr.mxu0 0.0
        %8651 = vmatpush2.msra.mxu0 0.0
        %8652 = vmatprep.subr.mxu0 0.0
        %8653 = vmatpush2.msra.mxu0 0.0
        %8654 = vmatprep.subr.mxu0 0.0
        %8655 = vmatpush2.msra.mxu0 0.0
        %8656 = vmatprep.subr.mxu0 0.0
        %8657 = vmatpush2.msra.mxu0 0.0
        %8658 = vmatprep.subr.mxu0 0.0
        %8659 = vmatpush2.msra.mxu0 0.0
        %8660 = vmatprep.subr.mxu0 0.0
        %8661 = vmatpush2.msra.mxu0 0.0
        %8662 = vmatprep.subr.mxu0 0.0
        %8663 = vmatpush2.msra.mxu0 0.0
        %8664 = vmatprep.subr.mxu0 0.0
        %8665 = vmatpush2.msra.mxu0 0.0
        %8666 = vmatprep.subr.mxu0 0.0
        %8667 = vmatpush2.msra.mxu0 0.0
        %8668 = vmatprep.subr.mxu0 0.0
        %8669 = vmatpush2.msra.mxu0 0.0
        %8670 = vmatprep.subr.mxu0 0.0
        %8671 = vmatpush2.msra.mxu0 0.0
        %8672 = vmatprep.subr.mxu0 0.0
        %8673 = vmatpush2.msra.mxu0 0.0
        %8674 = vmatprep.mubr.f32.mxu0 0.0
        %8675 = vmatmul.mubr.f32.gmra.mxu0 %v8608
        %v8676 = vpop.f32.mrf.mxu0
        %v8677 = vadd.f32 %v8606, %v8676
        %v8678 = vpop.f32.mrf.mxu0
        %8679 = vdwg.mxu0
        %vm8680 = vcmask 8192
        %8681 = vst.msk [vmem:[%s634] sm:$0x1] %vm8680, %v8677
        %s8682 = sand.u32 %s474, 1
        %s8683 = scalar_lea.sflag [#allocation13], %s8682
        %s8684 = sand.u32 %s474, 1
        %s8685 = scalar_lea.vmem [#allocation12], %s8684
        // Predicated region
        $region101: #{baseline_forward.1} parent=99 // pred_check
          %p8686 = pneg %p484
        $region102: #{baseline_forward.1} parent=99 // pred_check_branch
          %8688 = sbr.rel (%p8686) target = $region104
        $region103: #{baseline_forward.1} parent=99 // pred_region
          %s8690 = ssub.s32 16, 16
          %8691 = vsyncadd %s8683, %s8690
          %s8692 = smul.addr %s36, 16
          %s8693 = scalar_lea.hbm %s20, %s8692
          %s8695 = sshll.u32 %s8685, 4
          %s8696 = int_to_ptr.vmem [resolvable:$true] %s8695
          %8698 = dma.vmem_to_hbm [thread:$0]  %s8696, 16, %s8693, %s8683
        $region104: #{baseline_forward.1} parent=99 // pred_fallthru
          _
      $region100: #{baseline_forward.1} parent=5 // pred_fallthru
        _
      %p8699 = scmp.le.s32.totalorder 2, %s31
      // Predicated region
      $region105: #{baseline_forward.1} parent=5 // pred_check
        %p8700 = pneg %p8699
      $region106: #{baseline_forward.1} parent=5 // pred_check_branch
        %8702 = sbr.rel (%p8700) target = $region108
      $region107: #{baseline_forward.1} parent=5 // pred_region
        %s8703 = ssub.s32 %s31, 2
        // Predicated region
        $region109: #{baseline_forward.1} parent=107 // pred_check
          %p8704 = pneg %p490
        $region110: #{baseline_forward.1} parent=107 // pred_check_branch
          %8706 = sbr.rel (%p8704) target = $region112
        $region111: #{baseline_forward.1} parent=107 // pred_region
          %s8707 = sand.u32 %s475, 1
          %s8708 = scalar_lea.sflag [#allocation13], %s8707
          %s8709 = sand.u32 %s475, 1
          %s8710 = scalar_lea.vmem [#allocation12], %s8709
          %8711 = dma.done %s8708, 16
        $region112: #{baseline_forward.1} parent=107 // pred_fallthru
          _
      $region108: #{baseline_forward.1} parent=5 // pred_fallthru
        _
    $region6: #{baseline_forward.1} parent=1 // loop_footer
      %s35 = sadd.s32 1, %s31
    $region7: #{baseline_forward.1} parent=1 // loop_footer_branch
      %30 = sbr.rel target = $region3
    $region8: #{baseline_forward.1} parent=1 // loop_exit
      _
    %8712 = vsyncpa [#allocation13], 1
    %s8713 = scalar_lea.sflag [#allocation13], 1
    %8714 = vsyncpa %s8713, 1

</llo_original>
